<compile_context>
chip_gen: v7x
topology: tpu7x:2x2x1
jax: 0.10.0
libtpu: 0.0.40
codegen_flags: <defaults>
</compile_context>

<pallas_src>
import jax
import jax.numpy as jnp
import numpy as np
from jax.experimental import pallas as pl
from jax.experimental.pallas import tpu as pltpu

# Shapes: hidden/output/layers/batch match the torch module (hidden=128, output=88,
# layers=2, batch=1); input_size scaled down 1025 -> 128 (lane aligned), short src seq.
INPUT_SIZE = 128
HIDDEN_SIZE = 128     # real module value; keeps gate slices 128-lane aligned
NUM_LAYERS = 2        # kernel hard-codes the 2-layer stack
OUTPUT_SIZE = 88      # real module value
OUT_PAD = 128         # lane-padded output width (unmasked stores); sliced off in wrapper
BATCH = 1             # torch Decoder.forward only works for batch_size == 1
SRC_LEN = 4
TRG_MULT = 22         # trg_len = src.shape[1] * 22 in the trg=False branch
DEC_UNROLL = 8        # one full (8,128) output tile per unrolled group


def _sigmoid(z):
    # sigmoid(z) == 0.5 * (1 + tanh(z/2)); used by the pure-JAX reference (the kernel has
    # the 0.5 pre-scale folded into its weights, so it only does tanh + FMA).
    return 0.5 * jnp.tanh(0.5 * z) + 0.5


def _gates(g, c, H):
    """LSTM gate nonlinearities (PyTorch i, f, g, o order). The 0.5 pre-scale of the
    sigmoid-as-tanh identity is folded into the i/f/o weight columns + biases at prep
    time, so each sigmoid gate here is just tanh + FMA."""
    i = 0.5 * jnp.tanh(g[:, 0 * H:1 * H]) + 0.5
    f = 0.5 * jnp.tanh(g[:, 1 * H:2 * H]) + 0.5
    gg = jnp.tanh(g[:, 2 * H:3 * H])
    o = 0.5 * jnp.tanh(g[:, 3 * H:4 * H]) + 0.5
    c_new = f * c + i * gg
    h_new = o * jnp.tanh(c_new)
    return h_new, c_new


def seq2seq_kernel(src_ref, ew0, eb0, ew1, eb1,
                   dw0x, dw0h, db0, dw1x, dw1h, db1, dwo, dbo,
                   out_ref, out_buf):
    # src_ref: [S, B, IN] f32 (time-major); out_ref: [T, OUT_PAD] f32; out_buf: [8, OUT_PAD].
    S, B, _ = src_ref.shape
    T = out_ref.shape[0]
    H = HIDDEN_SIZE

    # Hoist all weight/bias loads out of the recurrent loops. Weights are bf16 (MXU
    # native, half the VMEM fill); biases stay f32 (added to the f32 accumulators).
    Ew0, Eb0 = ew0[...], eb0[...]
    Ew1, Eb1 = ew1[...], eb1[...]
    Dw0x, Dw0h, Db0 = dw0x[...], dw0h[...], db0[...]
    Dw1x, Dw1h, Db1 = dw1x[...], dw1h[...], db1[...]
    Dwo, Dbo = dwo[...], dbo[...]

    # ---- encoder: 2-layer LSTM over src, zero init state, fully unrolled (S static).
    # Fused concat(x, h) matmul kept here (only S=4 steps, not on the long critical path).
    h0 = c0 = h1 = c1 = jnp.zeros((B, H), jnp.float32)
    for t in range(S):
        xh0 = jnp.concatenate([src_ref[t], h0], axis=1).astype(jnp.bfloat16)
        g0 = jnp.dot(xh0, Ew0, preferred_element_type=jnp.float32) + Eb0
        h0, c0 = _gates(g0, c0, H)
        xh1 = jnp.concatenate([h0, h1], axis=1).astype(jnp.bfloat16)
        g1 = jnp.dot(xh1, Ew1, preferred_element_type=jnp.float32) + Eb1
        h1, c1 = _gates(g1, c1, H)

    # ---- decoder: autoregressive; outputs[0] stays zero (matches torch).
    # The per-step matmuls are split into x-part / h-part: the h-part of step t+1 depends
    # only on step t's hidden state, so it is computed early (carried as gh0/gh1) and can
    # overlap with step t's fc_out matmul + output sigmoid.
    def step(u, carry):
        x, dh0, dc0, dh1, dc1, gh0, gh1 = carry
        g0 = jnp.dot(x.astype(jnp.bfloat16), Dw0x,
                     preferred_element_type=jnp.float32) + gh0 + Db0
        dh0, dc0 = _gates(g0, dc0, H)
        dh0b = dh0.astype(jnp.bfloat16)
        gh0_next = jnp.dot(dh0b, Dw0h, preferred_element_type=jnp.float32)   # early issue
        g1 = jnp.dot(dh0b, Dw1x, preferred_element_type=jnp.float32) + gh1 + Db1
        dh1, dc1 = _gates(g1, dc1, H)
        dh1b = dh1.astype(jnp.bfloat16)
        gh1_next = jnp.dot(dh1b, Dw1h, preferred_element_type=jnp.float32)   # early issue
        # fc_out columns [OUTPUT_SIZE:OUT_PAD] and bias pad are zero; the resulting 0.5
        # pad lanes of pred only ever hit the zero rows of Dw0x, so they never leak.
        pred = 0.5 * jnp.tanh(jnp.dot(dh1b, Dwo,
                                      preferred_element_type=jnp.float32) + Dbo) + 0.5
        out_buf[pl.ds(u, 1), :] = pred          # static sublane slot in the staging tile
        return (pred, dh0, dc0, dh1, dc1, gh0_next, gh1_next)

    carry = (jnp.zeros((B, OUT_PAD), jnp.float32), h0, c0, h1, c1,
             jnp.dot(h0.astype(jnp.bfloat16), Dw0h, preferred_element_type=jnp.float32),
             jnp.dot(h1.astype(jnp.bfloat16), Dw1h, preferred_element_type=jnp.float32))

    # Tile 0: row 0 = zeros (outputs[0]), rows 1..7 = first 7 decoder steps.
    out_buf[pl.ds(0, 1), :] = jnp.zeros((1, OUT_PAD), jnp.float32)
    for u in range(1, DEC_UNROLL):
        carry = step(u, carry)
    out_ref[pl.ds(0, DEC_UNROLL), :] = out_buf[...]

    # Tiles 1..T/8-1: 8 decoder steps each (manual unroll inside the fori body so the LLO
    # scheduler can overlap MXU/EUP/VPU work across steps), then one full unmasked,
    # lane/sublane-dense (8,128) store.
    def tile_body(i, carry):
        for u in range(DEC_UNROLL):
            carry = step(u, carry)
        base = pl.multiple_of(DEC_UNROLL * (i + 1), DEC_UNROLL)
        out_ref[pl.ds(base, DEC_UNROLL), :] = out_buf[...]
        return carry

    _ = jax.lax.fori_loop(0, T // DEC_UNROLL - 1, tile_body, carry)

    # TODO(synk): the teacher-forcing branch (trg tensor provided) draws random.random()
    # on the host per step; not reproducible inside a kernel and left unimplemented.
    # TODO(synk): a further ~2-4x on the decoder loop is available by keeping Dw0*/Dw1*/Dwo
    # resident in MXU staging (pltpu.matmul_push_rhs / matmul_acc_lhs / matmul_pop); skipped
    # to keep the kernel simple and portable across v5e/v6e/v7x.
    # TODO(synk): with B == 1 there is one serial sequence; multiple independent sequences
    # should be batched into sublanes (up to 8) and/or sharded over a leading "parallel"
    # grid axis (2nd TensorCore on v7x).


_VMEM = pl.BlockSpec(memory_space=pltpu.MemorySpace.VMEM)


@jax.jit
def seq2seq_forward(src, kparams):
    """src: [B, S, IN] (batch_first, like torch). Returns [trg_len, B, OUTPUT_SIZE]."""
    B, S, _ = src.shape
    assert B == 1                       # torch Decoder.forward only works for batch 1
    T = S * TRG_MULT
    assert T % DEC_UNROLL == 0
    src_tm = jnp.transpose(src, (1, 0, 2))              # -> time-major [S, B, IN]
    out_pad = pl.pallas_call(
        seq2seq_kernel,
        out_shape=jax.ShapeDtypeStruct((T, OUT_PAD), jnp.float32),
        in_specs=[_VMEM] * 13,
        out_specs=_VMEM,
        scratch_shapes=[pltpu.VMEM((DEC_UNROLL, OUT_PAD), jnp.float32)],
    )(src_tm,
      kparams['enc_w0'], kparams['enc_b0'], kparams['enc_w1'], kparams['enc_b1'],
      kparams['dec_w0x'], kparams['dec_w0h'], kparams['dec_b0'],
      kparams['dec_w1x'], kparams['dec_w1h'], kparams['dec_b1'],
      kparams['dec_wo'], kparams['dec_bo'])
    # drop lane padding, restore the (trg_len, batch, output) layout of the torch module
    return out_pad[:, :OUTPUT_SIZE][:, None, :]


def init_params(key):
    """Logical (torch-like) parameters in f32: per LSTM layer the fused (W_ih^T | W_hh^T)
    matrix and combined bias b_ih + b_hh, plus fc_out. Used directly by the reference."""
    H, IN, N = HIDDEN_SIZE, INPUT_SIZE, OUTPUT_SIZE
    ks = jax.random.split(key, 10)

    def u(k, shape):
        return jax.random.uniform(k, shape, jnp.float32, -0.1, 0.1)

    return dict(
        enc_w0=u(ks[0], (IN + H, 4 * H)), enc_b0=u(ks[1], (1, 4 * H)),
        enc_w1=u(ks[2], (H + H, 4 * H)), enc_b1=u(ks[3], (1, 4 * H)),
        dec_w0=u(ks[4], (N + H, 4 * H)), dec_b0=u(ks[5], (1, 4 * H)),
        dec_w1=u(ks[6], (H + H, 4 * H)), dec_b1=u(ks[7], (1, 4 * H)),
        dec_wo=u(ks[8], (H, N)), dec_bo=u(ks[9], (1, N)),
    )


def prepare_kernel_params(p):
    """Kernel-layout parameters:
      * 0.5 pre-scale of sigmoid-as-tanh folded into i/f/o gate columns + biases and into
        fc_out (exact power-of-two scaling),
      * decoder LSTM weights split into x-part / h-part (early-issue of the recurrent half),
      * decoder layer-0 input rows zero-padded 88 -> 128 and fc_out columns/bias zero-padded
        88 -> 128, so the 0.5 values in pred's pad lanes can never reach the gates,
      * weight matrices cast to bf16 (MXU-native); biases stay f32."""
    H, N, NP = HIDDEN_SIZE, OUTPUT_SIZE, OUT_PAD

    gate_scale = jnp.concatenate([jnp.full((H,), 0.5), jnp.full((H,), 0.5),
                                  jnp.ones((H,)), jnp.full((H,), 0.5)]).astype(jnp.float32)

    def fold(w, b):
        return w * gate_scale[None, :], b * gate_scale[None, :]

    ew0, eb0 = fold(p['enc_w0'], p['enc_b0'])
    ew1, eb1 = fold(p['enc_w1'], p['enc_b1'])
    dw0, db0 = fold(p['dec_w0'], p['dec_b0'])
    dw1, db1 = fold(p['dec_w1'], p['dec_b1'])

    dw0x = jnp.zeros((NP, 4 * H), jnp.float32).at[:N].set(dw0[:N])   # pad rows are zero
    dw0h = dw0[N:N + H]
    dw1x, dw1h = dw1[:H], dw1[H:2 * H]

    dwo = jnp.zeros((H, NP), jnp.float32).at[:, :N].set(0.5 * p['dec_wo'])
    dbo = jnp.zeros((1, NP), jnp.float32).at[:, :N].set(0.5 * p['dec_bo'])

    bf = lambda x: x.astype(jnp.bfloat16)
    return dict(
        enc_w0=bf(ew0), enc_b0=eb0, enc_w1=bf(ew1), enc_b1=eb1,
        dec_w0x=bf(dw0x), dec_w0h=bf(dw0h), dec_b0=db0,
        dec_w1x=bf(dw1x), dec_w1h=bf(dw1h), dec_b1=db1,
        dec_wo=bf(dwo), dec_bo=dbo,
    )


def _lstm_cell_ref(x, h, c, w, b, H):
    """Reference LSTM step: fused concat(x, h) matmul, same bf16-operand / f32-accumulation
    precision as the kernel, unscaled weights + explicit sigmoid-via-tanh."""
    xh = jnp.concatenate([x, h], axis=1).astype(jnp.bfloat16)
    g = jnp.dot(xh, w.astype(jnp.bfloat16), preferred_element_type=jnp.float32) + b
    i = _sigmoid(g[:, 0 * H:1 * H])
    f = _sigmoid(g[:, 1 * H:2 * H])
    gg = jnp.tanh(g[:, 2 * H:3 * H])
    o = _sigmoid(g[:, 3 * H:4 * H])
    c_new = f * c + i * gg
    return o * jnp.tanh(c_new), c_new


def reference_forward(src, p):
    """Pure-JAX reference with the unpadded, unscaled, unsplit (logical) parameters; also
    validates that the kernel's lane padding and weight-folding never leak into outputs."""
    H, N = HIDDEN_SIZE, OUTPUT_SIZE
    B, S, _ = src.shape
    h0 = c0 = h1 = c1 = jnp.zeros((B, H), jnp.float32)
    for t in range(S):
        x = src[:, t, :]
        h0, c0 = _lstm_cell_ref(x, h0, c0, p['enc_w0'], p['enc_b0'], H)
        h1, c1 = _lstm_cell_ref(h0, h1, c1, p['enc_w1'], p['enc_b1'], H)
    T = S * TRG_MULT
    outs = [jnp.zeros((B, N), jnp.float32)]
    x = jnp.zeros((B, N), jnp.float32)
    for t in range(1, T):
        h0, c0 = _lstm_cell_ref(x, h0, c0, p['dec_w0'], p['dec_b0'], H)
        h1, c1 = _lstm_cell_ref(h0, h1, c1, p['dec_w1'], p['dec_b1'], H)
        pred = _sigmoid(jnp.dot(h1.astype(jnp.bfloat16), p['dec_wo'].astype(jnp.bfloat16),
                                preferred_element_type=jnp.float32) + p['dec_bo'])
        outs.append(pred)
        x = pred
    return jnp.stack(outs, axis=0)


if __name__ == "__main__":
    key = jax.random.PRNGKey(0)
    pkey, xkey = jax.random.split(key)
    params = init_params(pkey)
    kparams = prepare_kernel_params(params)
    src = jax.random.normal(xkey, (BATCH, SRC_LEN, INPUT_SIZE), jnp.float32)

    out = jax.block_until_ready(seq2seq_forward(src, kparams))
    assert out.shape == (SRC_LEN * TRG_MULT, BATCH, OUTPUT_SIZE), out.shape

    ref = jax.block_until_ready(reference_forward(src, params))
    np.testing.assert_allclose(np.asarray(out), np.asarray(ref), rtol=1e-3, atol=1e-3)

    print("KERNEL_OK")
</pallas_src>

<mosaic_0001>
module attributes {stable_mosaic.version = 11 : i64} {
  func.func @seq2seq_kernel(%arg0: memref<4x1x128xf32, #tpu.memory_space<vmem>>, %arg1: memref<256x512xbf16, #tpu.memory_space<vmem>>, %arg2: memref<1x512xf32, #tpu.memory_space<vmem>>, %arg3: memref<256x512xbf16, #tpu.memory_space<vmem>>, %arg4: memref<1x512xf32, #tpu.memory_space<vmem>>, %arg5: memref<128x512xbf16, #tpu.memory_space<vmem>>, %arg6: memref<128x512xbf16, #tpu.memory_space<vmem>>, %arg7: memref<1x512xf32, #tpu.memory_space<vmem>>, %arg8: memref<128x512xbf16, #tpu.memory_space<vmem>>, %arg9: memref<128x512xbf16, #tpu.memory_space<vmem>>, %arg10: memref<1x512xf32, #tpu.memory_space<vmem>>, %arg11: memref<128x128xbf16, #tpu.memory_space<vmem>>, %arg12: memref<1x128xf32, #tpu.memory_space<vmem>>, %arg13: memref<88x128xf32, #tpu.memory_space<vmem>>, %arg14: memref<8x128xf32, #tpu.memory_space<vmem>>) attributes {dimension_semantics = [], scalar_prefetch = 0 : i64, scratch_operands = 1 : i64, tpu.core_type = #tpu.core_type<tc>} {
    %c0 = arith.constant 0 : index
    %c0_0 = arith.constant 0 : index
    %0 = vector.load %arg1[%c0, %c0_0] : memref<256x512xbf16, #tpu.memory_space<vmem>>, vector<256x512xbf16>
    %c0_1 = arith.constant 0 : index
    %c0_2 = arith.constant 0 : index
    %1 = vector.load %arg2[%c0_1, %c0_2] : memref<1x512xf32, #tpu.memory_space<vmem>>, vector<1x512xf32>
    %c0_3 = arith.constant 0 : index
    %c0_4 = arith.constant 0 : index
    %2 = vector.load %arg3[%c0_3, %c0_4] : memref<256x512xbf16, #tpu.memory_space<vmem>>, vector<256x512xbf16>
    %c0_5 = arith.constant 0 : index
    %c0_6 = arith.constant 0 : index
    %3 = vector.load %arg4[%c0_5, %c0_6] : memref<1x512xf32, #tpu.memory_space<vmem>>, vector<1x512xf32>
    %c0_7 = arith.constant 0 : index
    %c0_8 = arith.constant 0 : index
    %4 = vector.load %arg5[%c0_7, %c0_8] : memref<128x512xbf16, #tpu.memory_space<vmem>>, vector<128x512xbf16>
    %c0_9 = arith.constant 0 : index
    %c0_10 = arith.constant 0 : index
    %5 = vector.load %arg6[%c0_9, %c0_10] : memref<128x512xbf16, #tpu.memory_space<vmem>>, vector<128x512xbf16>
    %c0_11 = arith.constant 0 : index
    %c0_12 = arith.constant 0 : index
    %6 = vector.load %arg7[%c0_11, %c0_12] : memref<1x512xf32, #tpu.memory_space<vmem>>, vector<1x512xf32>
    %c0_13 = arith.constant 0 : index
    %c0_14 = arith.constant 0 : index
    %7 = vector.load %arg8[%c0_13, %c0_14] : memref<128x512xbf16, #tpu.memory_space<vmem>>, vector<128x512xbf16>
    %c0_15 = arith.constant 0 : index
    %c0_16 = arith.constant 0 : index
    %8 = vector.load %arg9[%c0_15, %c0_16] : memref<128x512xbf16, #tpu.memory_space<vmem>>, vector<128x512xbf16>
    %c0_17 = arith.constant 0 : index
    %c0_18 = arith.constant 0 : index
    %9 = vector.load %arg10[%c0_17, %c0_18] : memref<1x512xf32, #tpu.memory_space<vmem>>, vector<1x512xf32>
    %c0_19 = arith.constant 0 : index
    %c0_20 = arith.constant 0 : index
    %10 = vector.load %arg11[%c0_19, %c0_20] : memref<128x128xbf16, #tpu.memory_space<vmem>>, vector<128x128xbf16>
    %c0_21 = arith.constant 0 : index
    %c0_22 = arith.constant 0 : index
    %11 = vector.load %arg12[%c0_21, %c0_22] : memref<1x128xf32, #tpu.memory_space<vmem>>, vector<1x128xf32>
    %cst = arith.constant 0.000000e+00 : f32
    %12 = vector.broadcast %cst : f32 to vector<1x128xf32>
    %c0_23 = arith.constant 0 : index
    %c0_24 = arith.constant 0 : index
    %c0_25 = arith.constant 0 : index
    %13 = vector.load %arg0[%c0_23, %c0_24, %c0_25] : memref<4x1x128xf32, #tpu.memory_space<vmem>>, vector<1x1x128xf32>
    %14 = vector.shape_cast %13 : vector<1x1x128xf32> to vector<1x128xf32>
    %15 = tpu.concatenate %14, %12 in 1 : vector<1x128xf32>, vector<1x128xf32> -> vector<1x256xf32>
    %16 = arith.truncf %15 : vector<1x256xf32> to vector<1x256xbf16>
    %cst_26 = arith.constant dense<0.000000e+00> : vector<1x512xf32>
    %17 = tpu.matmul %16, %0, %cst_26 {dimension_numbers = #tpu.dot_dimension_numbers<[1], [0], [0], [1], [0, 0, 1, 1], [], []>} : vector<1x256xbf16>, vector<256x512xbf16>, vector<1x512xf32> -> vector<1x512xf32>
    %18 = arith.addf %17, %1 : vector<1x512xf32>
    %19 = vector.extract_strided_slice %18 {offsets = [0, 0], sizes = [1, 128], strides = [1, 1]} : vector<1x512xf32> to vector<1x128xf32>
    %20 = math.tanh %19 : vector<1x128xf32>
    %cst_27 = arith.constant 5.000000e-01 : f32
    %21 = vector.broadcast %cst_27 : f32 to vector<1x128xf32>
    %22 = arith.mulf %21, %20 : vector<1x128xf32>
    %cst_28 = arith.constant 5.000000e-01 : f32
    %23 = vector.broadcast %cst_28 : f32 to vector<1x128xf32>
    %24 = arith.addf %22, %23 : vector<1x128xf32>
    %25 = vector.extract_strided_slice %18 {offsets = [0, 128], sizes = [1, 128], strides = [1, 1]} : vector<1x512xf32> to vector<1x128xf32>
    %26 = math.tanh %25 : vector<1x128xf32>
    %cst_29 = arith.constant 5.000000e-01 : f32
    %27 = vector.broadcast %cst_29 : f32 to vector<1x128xf32>
    %28 = arith.mulf %27, %26 : vector<1x128xf32>
    %cst_30 = arith.constant 5.000000e-01 : f32
    %29 = vector.broadcast %cst_30 : f32 to vector<1x128xf32>
    %30 = arith.addf %28, %29 : vector<1x128xf32>
    %31 = vector.extract_strided_slice %18 {offsets = [0, 256], sizes = [1, 128], strides = [1, 1]} : vector<1x512xf32> to vector<1x128xf32>
    %32 = math.tanh %31 : vector<1x128xf32>
    %33 = vector.extract_strided_slice %18 {offsets = [0, 384], sizes = [1, 128], strides = [1, 1]} : vector<1x512xf32> to vector<1x128xf32>
    %34 = math.tanh %33 : vector<1x128xf32>
    %cst_31 = arith.constant 5.000000e-01 : f32
    %35 = vector.broadcast %cst_31 : f32 to vector<1x128xf32>
    %36 = arith.mulf %35, %34 : vector<1x128xf32>
    %cst_32 = arith.constant 5.000000e-01 : f32
    %37 = vector.broadcast %cst_32 : f32 to vector<1x128xf32>
    %38 = arith.addf %36, %37 : vector<1x128xf32>
    %39 = arith.mulf %30, %12 : vector<1x128xf32>
    %40 = arith.mulf %24, %32 : vector<1x128xf32>
    %41 = arith.addf %39, %40 : vector<1x128xf32>
    %42 = math.tanh %41 : vector<1x128xf32>
    %43 = arith.mulf %38, %42 : vector<1x128xf32>
    %44 = tpu.concatenate %43, %12 in 1 : vector<1x128xf32>, vector<1x128xf32> -> vector<1x256xf32>
    %45 = arith.truncf %44 : vector<1x256xf32> to vector<1x256xbf16>
    %cst_33 = arith.constant dense<0.000000e+00> : vector<1x512xf32>
    %46 = tpu.matmul %45, %2, %cst_33 {dimension_numbers = #tpu.dot_dimension_numbers<[1], [0], [0], [1], [0, 0, 1, 1], [], []>} : vector<1x256xbf16>, vector<256x512xbf16>, vector<1x512xf32> -> vector<1x512xf32>
    %47 = arith.addf %46, %3 : vector<1x512xf32>
    %48 = vector.extract_strided_slice %47 {offsets = [0, 0], sizes = [1, 128], strides = [1, 1]} : vector<1x512xf32> to vector<1x128xf32>
    %49 = math.tanh %48 : vector<1x128xf32>
    %cst_34 = arith.constant 5.000000e-01 : f32
    %50 = vector.broadcast %cst_34 : f32 to vector<1x128xf32>
    %51 = arith.mulf %50, %49 : vector<1x128xf32>
    %cst_35 = arith.constant 5.000000e-01 : f32
    %52 = vector.broadcast %cst_35 : f32 to vector<1x128xf32>
    %53 = arith.addf %51, %52 : vector<1x128xf32>
    %54 = vector.extract_strided_slice %47 {offsets = [0, 128], sizes = [1, 128], strides = [1, 1]} : vector<1x512xf32> to vector<1x128xf32>
    %55 = math.tanh %54 : vector<1x128xf32>
    %cst_36 = arith.constant 5.000000e-01 : f32
    %56 = vector.broadcast %cst_36 : f32 to vector<1x128xf32>
    %57 = arith.mulf %56, %55 : vector<1x128xf32>
    %cst_37 = arith.constant 5.000000e-01 : f32
    %58 = vector.broadcast %cst_37 : f32 to vector<1x128xf32>
    %59 = arith.addf %57, %58 : vector<1x128xf32>
    %60 = vector.extract_strided_slice %47 {offsets = [0, 256], sizes = [1, 128], strides = [1, 1]} : vector<1x512xf32> to vector<1x128xf32>
    %61 = math.tanh %60 : vector<1x128xf32>
    %62 = vector.extract_strided_slice %47 {offsets = [0, 384], sizes = [1, 128], strides = [1, 1]} : vector<1x512xf32> to vector<1x128xf32>
    %63 = math.tanh %62 : vector<1x128xf32>
    %cst_38 = arith.constant 5.000000e-01 : f32
    %64 = vector.broadcast %cst_38 : f32 to vector<1x128xf32>
    %65 = arith.mulf %64, %63 : vector<1x128xf32>
    %cst_39 = arith.constant 5.000000e-01 : f32
    %66 = vector.broadcast %cst_39 : f32 to vector<1x128xf32>
    %67 = arith.addf %65, %66 : vector<1x128xf32>
    %68 = arith.mulf %59, %12 : vector<1x128xf32>
    %69 = arith.mulf %53, %61 : vector<1x128xf32>
    %70 = arith.addf %68, %69 : vector<1x128xf32>
    %71 = math.tanh %70 : vector<1x128xf32>
    %72 = arith.mulf %67, %71 : vector<1x128xf32>
    %c1 = arith.constant 1 : index
    %c0_40 = arith.constant 0 : index
    %c0_41 = arith.constant 0 : index
    %73 = vector.load %arg0[%c1, %c0_40, %c0_41] : memref<4x1x128xf32, #tpu.memory_space<vmem>>, vector<1x1x128xf32>
    %74 = vector.shape_cast %73 : vector<1x1x128xf32> to vector<1x128xf32>
    %75 = tpu.concatenate %74, %43 in 1 : vector<1x128xf32>, vector<1x128xf32> -> vector<1x256xf32>
    %76 = arith.truncf %75 : vector<1x256xf32> to vector<1x256xbf16>
    %cst_42 = arith.constant dense<0.000000e+00> : vector<1x512xf32>
    %77 = tpu.matmul %76, %0, %cst_42 {dimension_numbers = #tpu.dot_dimension_numbers<[1], [0], [0], [1], [0, 0, 1, 1], [], []>} : vector<1x256xbf16>, vector<256x512xbf16>, vector<1x512xf32> -> vector<1x512xf32>
    %78 = arith.addf %77, %1 : vector<1x512xf32>
    %79 = vector.extract_strided_slice %78 {offsets = [0, 0], sizes = [1, 128], strides = [1, 1]} : vector<1x512xf32> to vector<1x128xf32>
    %80 = math.tanh %79 : vector<1x128xf32>
    %cst_43 = arith.constant 5.000000e-01 : f32
    %81 = vector.broadcast %cst_43 : f32 to vector<1x128xf32>
    %82 = arith.mulf %81, %80 : vector<1x128xf32>
    %cst_44 = arith.constant 5.000000e-01 : f32
    %83 = vector.broadcast %cst_44 : f32 to vector<1x128xf32>
    %84 = arith.addf %82, %83 : vector<1x128xf32>
    %85 = vector.extract_strided_slice %78 {offsets = [0, 128], sizes = [1, 128], strides = [1, 1]} : vector<1x512xf32> to vector<1x128xf32>
    %86 = math.tanh %85 : vector<1x128xf32>
    %cst_45 = arith.constant 5.000000e-01 : f32
    %87 = vector.broadcast %cst_45 : f32 to vector<1x128xf32>
    %88 = arith.mulf %87, %86 : vector<1x128xf32>
    %cst_46 = arith.constant 5.000000e-01 : f32
    %89 = vector.broadcast %cst_46 : f32 to vector<1x128xf32>
    %90 = arith.addf %88, %89 : vector<1x128xf32>
    %91 = vector.extract_strided_slice %78 {offsets = [0, 256], sizes = [1, 128], strides = [1, 1]} : vector<1x512xf32> to vector<1x128xf32>
    %92 = math.tanh %91 : vector<1x128xf32>
    %93 = vector.extract_strided_slice %78 {offsets = [0, 384], sizes = [1, 128], strides = [1, 1]} : vector<1x512xf32> to vector<1x128xf32>
    %94 = math.tanh %93 : vector<1x128xf32>
    %cst_47 = arith.constant 5.000000e-01 : f32
    %95 = vector.broadcast %cst_47 : f32 to vector<1x128xf32>
    %96 = arith.mulf %95, %94 : vector<1x128xf32>
    %cst_48 = arith.constant 5.000000e-01 : f32
    %97 = vector.broadcast %cst_48 : f32 to vector<1x128xf32>
    %98 = arith.addf %96, %97 : vector<1x128xf32>
    %99 = arith.mulf %90, %41 : vector<1x128xf32>
    %100 = arith.mulf %84, %92 : vector<1x128xf32>
    %101 = arith.addf %99, %100 : vector<1x128xf32>
    %102 = math.tanh %101 : vector<1x128xf32>
    %103 = arith.mulf %98, %102 : vector<1x128xf32>
    %104 = tpu.concatenate %103, %72 in 1 : vector<1x128xf32>, vector<1x128xf32> -> vector<1x256xf32>
    %105 = arith.truncf %104 : vector<1x256xf32> to vector<1x256xbf16>
    %cst_49 = arith.constant dense<0.000000e+00> : vector<1x512xf32>
    %106 = tpu.matmul %105, %2, %cst_49 {dimension_numbers = #tpu.dot_dimension_numbers<[1], [0], [0], [1], [0, 0, 1, 1], [], []>} : vector<1x256xbf16>, vector<256x512xbf16>, vector<1x512xf32> -> vector<1x512xf32>
    %107 = arith.addf %106, %3 : vector<1x512xf32>
    %108 = vector.extract_strided_slice %107 {offsets = [0, 0], sizes = [1, 128], strides = [1, 1]} : vector<1x512xf32> to vector<1x128xf32>
    %109 = math.tanh %108 : vector<1x128xf32>
    %cst_50 = arith.constant 5.000000e-01 : f32
    %110 = vector.broadcast %cst_50 : f32 to vector<1x128xf32>
    %111 = arith.mulf %110, %109 : vector<1x128xf32>
    %cst_51 = arith.constant 5.000000e-01 : f32
    %112 = vector.broadcast %cst_51 : f32 to vector<1x128xf32>
    %113 = arith.addf %111, %112 : vector<1x128xf32>
    %114 = vector.extract_strided_slice %107 {offsets = [0, 128], sizes = [1, 128], strides = [1, 1]} : vector<1x512xf32> to vector<1x128xf32>
    %115 = math.tanh %114 : vector<1x128xf32>
    %cst_52 = arith.constant 5.000000e-01 : f32
    %116 = vector.broadcast %cst_52 : f32 to vector<1x128xf32>
    %117 = arith.mulf %116, %115 : vector<1x128xf32>
    %cst_53 = arith.constant 5.000000e-01 : f32
    %118 = vector.broadcast %cst_53 : f32 to vector<1x128xf32>
    %119 = arith.addf %117, %118 : vector<1x128xf32>
    %120 = vector.extract_strided_slice %107 {offsets = [0, 256], sizes = [1, 128], strides = [1, 1]} : vector<1x512xf32> to vector<1x128xf32>
    %121 = math.tanh %120 : vector<1x128xf32>
    %122 = vector.extract_strided_slice %107 {offsets = [0, 384], sizes = [1, 128], strides = [1, 1]} : vector<1x512xf32> to vector<1x128xf32>
    %123 = math.tanh %122 : vector<1x128xf32>
    %cst_54 = arith.constant 5.000000e-01 : f32
    %124 = vector.broadcast %cst_54 : f32 to vector<1x128xf32>
    %125 = arith.mulf %124, %123 : vector<1x128xf32>
    %cst_55 = arith.constant 5.000000e-01 : f32
    %126 = vector.broadcast %cst_55 : f32 to vector<1x128xf32>
    %127 = arith.addf %125, %126 : vector<1x128xf32>
    %128 = arith.mulf %119, %70 : vector<1x128xf32>
    %129 = arith.mulf %113, %121 : vector<1x128xf32>
    %130 = arith.addf %128, %129 : vector<1x128xf32>
    %131 = math.tanh %130 : vector<1x128xf32>
    %132 = arith.mulf %127, %131 : vector<1x128xf32>
    %c2 = arith.constant 2 : index
    %c0_56 = arith.constant 0 : index
    %c0_57 = arith.constant 0 : index
    %133 = vector.load %arg0[%c2, %c0_56, %c0_57] : memref<4x1x128xf32, #tpu.memory_space<vmem>>, vector<1x1x128xf32>
    %134 = vector.shape_cast %133 : vector<1x1x128xf32> to vector<1x128xf32>
    %135 = tpu.concatenate %134, %103 in 1 : vector<1x128xf32>, vector<1x128xf32> -> vector<1x256xf32>
    %136 = arith.truncf %135 : vector<1x256xf32> to vector<1x256xbf16>
    %cst_58 = arith.constant dense<0.000000e+00> : vector<1x512xf32>
    %137 = tpu.matmul %136, %0, %cst_58 {dimension_numbers = #tpu.dot_dimension_numbers<[1], [0], [0], [1], [0, 0, 1, 1], [], []>} : vector<1x256xbf16>, vector<256x512xbf16>, vector<1x512xf32> -> vector<1x512xf32>
    %138 = arith.addf %137, %1 : vector<1x512xf32>
    %139 = vector.extract_strided_slice %138 {offsets = [0, 0], sizes = [1, 128], strides = [1, 1]} : vector<1x512xf32> to vector<1x128xf32>
    %140 = math.tanh %139 : vector<1x128xf32>
    %cst_59 = arith.constant 5.000000e-01 : f32
    %141 = vector.broadcast %cst_59 : f32 to vector<1x128xf32>
    %142 = arith.mulf %141, %140 : vector<1x128xf32>
    %cst_60 = arith.constant 5.000000e-01 : f32
    %143 = vector.broadcast %cst_60 : f32 to vector<1x128xf32>
    %144 = arith.addf %142, %143 : vector<1x128xf32>
    %145 = vector.extract_strided_slice %138 {offsets = [0, 128], sizes = [1, 128], strides = [1, 1]} : vector<1x512xf32> to vector<1x128xf32>
    %146 = math.tanh %145 : vector<1x128xf32>
    %cst_61 = arith.constant 5.000000e-01 : f32
    %147 = vector.broadcast %cst_61 : f32 to vector<1x128xf32>
    %148 = arith.mulf %147, %146 : vector<1x128xf32>
    %cst_62 = arith.constant 5.000000e-01 : f32
    %149 = vector.broadcast %cst_62 : f32 to vector<1x128xf32>
    %150 = arith.addf %148, %149 : vector<1x128xf32>
    %151 = vector.extract_strided_slice %138 {offsets = [0, 256], sizes = [1, 128], strides = [1, 1]} : vector<1x512xf32> to vector<1x128xf32>
    %152 = math.tanh %151 : vector<1x128xf32>
    %153 = vector.extract_strided_slice %138 {offsets = [0, 384], sizes = [1, 128], strides = [1, 1]} : vector<1x512xf32> to vector<1x128xf32>
    %154 = math.tanh %153 : vector<1x128xf32>
    %cst_63 = arith.constant 5.000000e-01 : f32
    %155 = vector.broadcast %cst_63 : f32 to vector<1x128xf32>
    %156 = arith.mulf %155, %154 : vector<1x128xf32>
    %cst_64 = arith.constant 5.000000e-01 : f32
    %157 = vector.broadcast %cst_64 : f32 to vector<1x128xf32>
    %158 = arith.addf %156, %157 : vector<1x128xf32>
    %159 = arith.mulf %150, %101 : vector<1x128xf32>
    %160 = arith.mulf %144, %152 : vector<1x128xf32>
    %161 = arith.addf %159, %160 : vector<1x128xf32>
    %162 = math.tanh %161 : vector<1x128xf32>
    %163 = arith.mulf %158, %162 : vector<1x128xf32>
    %164 = tpu.concatenate %163, %132 in 1 : vector<1x128xf32>, vector<1x128xf32> -> vector<1x256xf32>
    %165 = arith.truncf %164 : vector<1x256xf32> to vector<1x256xbf16>
    %cst_65 = arith.constant dense<0.000000e+00> : vector<1x512xf32>
    %166 = tpu.matmul %165, %2, %cst_65 {dimension_numbers = #tpu.dot_dimension_numbers<[1], [0], [0], [1], [0, 0, 1, 1], [], []>} : vector<1x256xbf16>, vector<256x512xbf16>, vector<1x512xf32> -> vector<1x512xf32>
    %167 = arith.addf %166, %3 : vector<1x512xf32>
    %168 = vector.extract_strided_slice %167 {offsets = [0, 0], sizes = [1, 128], strides = [1, 1]} : vector<1x512xf32> to vector<1x128xf32>
    %169 = math.tanh %168 : vector<1x128xf32>
    %cst_66 = arith.constant 5.000000e-01 : f32
    %170 = vector.broadcast %cst_66 : f32 to vector<1x128xf32>
    %171 = arith.mulf %170, %169 : vector<1x128xf32>
    %cst_67 = arith.constant 5.000000e-01 : f32
    %172 = vector.broadcast %cst_67 : f32 to vector<1x128xf32>
    %173 = arith.addf %171, %172 : vector<1x128xf32>
    %174 = vector.extract_strided_slice %167 {offsets = [0, 128], sizes = [1, 128], strides = [1, 1]} : vector<1x512xf32> to vector<1x128xf32>
    %175 = math.tanh %174 : vector<1x128xf32>
    %cst_68 = arith.constant 5.000000e-01 : f32
    %176 = vector.broadcast %cst_68 : f32 to vector<1x128xf32>
    %177 = arith.mulf %176, %175 : vector<1x128xf32>
    %cst_69 = arith.constant 5.000000e-01 : f32
    %178 = vector.broadcast %cst_69 : f32 to vector<1x128xf32>
    %179 = arith.addf %177, %178 : vector<1x128xf32>
    %180 = vector.extract_strided_slice %167 {offsets = [0, 256], sizes = [1, 128], strides = [1, 1]} : vector<1x512xf32> to vector<1x128xf32>
    %181 = math.tanh %180 : vector<1x128xf32>
    %182 = vector.extract_strided_slice %167 {offsets = [0, 384], sizes = [1, 128], strides = [1, 1]} : vector<1x512xf32> to vector<1x128xf32>
    %183 = math.tanh %182 : vector<1x128xf32>
    %cst_70 = arith.constant 5.000000e-01 : f32
    %184 = vector.broadcast %cst_70 : f32 to vector<1x128xf32>
    %185 = arith.mulf %184, %183 : vector<1x128xf32>
    %cst_71 = arith.constant 5.000000e-01 : f32
    %186 = vector.broadcast %cst_71 : f32 to vector<1x128xf32>
    %187 = arith.addf %185, %186 : vector<1x128xf32>
    %188 = arith.mulf %179, %130 : vector<1x128xf32>
    %189 = arith.mulf %173, %181 : vector<1x128xf32>
    %190 = arith.addf %188, %189 : vector<1x128xf32>
    %191 = math.tanh %190 : vector<1x128xf32>
    %192 = arith.mulf %187, %191 : vector<1x128xf32>
    %c3 = arith.constant 3 : index
    %c0_72 = arith.constant 0 : index
    %c0_73 = arith.constant 0 : index
    %193 = vector.load %arg0[%c3, %c0_72, %c0_73] : memref<4x1x128xf32, #tpu.memory_space<vmem>>, vector<1x1x128xf32>
    %194 = vector.shape_cast %193 : vector<1x1x128xf32> to vector<1x128xf32>
    %195 = tpu.concatenate %194, %163 in 1 : vector<1x128xf32>, vector<1x128xf32> -> vector<1x256xf32>
    %196 = arith.truncf %195 : vector<1x256xf32> to vector<1x256xbf16>
    %cst_74 = arith.constant dense<0.000000e+00> : vector<1x512xf32>
    %197 = tpu.matmul %196, %0, %cst_74 {dimension_numbers = #tpu.dot_dimension_numbers<[1], [0], [0], [1], [0, 0, 1, 1], [], []>} : vector<1x256xbf16>, vector<256x512xbf16>, vector<1x512xf32> -> vector<1x512xf32>
    %198 = arith.addf %197, %1 : vector<1x512xf32>
    %199 = vector.extract_strided_slice %198 {offsets = [0, 0], sizes = [1, 128], strides = [1, 1]} : vector<1x512xf32> to vector<1x128xf32>
    %200 = math.tanh %199 : vector<1x128xf32>
    %cst_75 = arith.constant 5.000000e-01 : f32
    %201 = vector.broadcast %cst_75 : f32 to vector<1x128xf32>
    %202 = arith.mulf %201, %200 : vector<1x128xf32>
    %cst_76 = arith.constant 5.000000e-01 : f32
    %203 = vector.broadcast %cst_76 : f32 to vector<1x128xf32>
    %204 = arith.addf %202, %203 : vector<1x128xf32>
    %205 = vector.extract_strided_slice %198 {offsets = [0, 128], sizes = [1, 128], strides = [1, 1]} : vector<1x512xf32> to vector<1x128xf32>
    %206 = math.tanh %205 : vector<1x128xf32>
    %cst_77 = arith.constant 5.000000e-01 : f32
    %207 = vector.broadcast %cst_77 : f32 to vector<1x128xf32>
    %208 = arith.mulf %207, %206 : vector<1x128xf32>
    %cst_78 = arith.constant 5.000000e-01 : f32
    %209 = vector.broadcast %cst_78 : f32 to vector<1x128xf32>
    %210 = arith.addf %208, %209 : vector<1x128xf32>
    %211 = vector.extract_strided_slice %198 {offsets = [0, 256], sizes = [1, 128], strides = [1, 1]} : vector<1x512xf32> to vector<1x128xf32>
    %212 = math.tanh %211 : vector<1x128xf32>
    %213 = vector.extract_strided_slice %198 {offsets = [0, 384], sizes = [1, 128], strides = [1, 1]} : vector<1x512xf32> to vector<1x128xf32>
    %214 = math.tanh %213 : vector<1x128xf32>
    %cst_79 = arith.constant 5.000000e-01 : f32
    %215 = vector.broadcast %cst_79 : f32 to vector<1x128xf32>
    %216 = arith.mulf %215, %214 : vector<1x128xf32>
    %cst_80 = arith.constant 5.000000e-01 : f32
    %217 = vector.broadcast %cst_80 : f32 to vector<1x128xf32>
    %218 = arith.addf %216, %217 : vector<1x128xf32>
    %219 = arith.mulf %210, %161 : vector<1x128xf32>
    %220 = arith.mulf %204, %212 : vector<1x128xf32>
    %221 = arith.addf %219, %220 : vector<1x128xf32>
    %222 = math.tanh %221 : vector<1x128xf32>
    %223 = arith.mulf %218, %222 : vector<1x128xf32>
    %224 = tpu.concatenate %223, %192 in 1 : vector<1x128xf32>, vector<1x128xf32> -> vector<1x256xf32>
    %225 = arith.truncf %224 : vector<1x256xf32> to vector<1x256xbf16>
    %cst_81 = arith.constant dense<0.000000e+00> : vector<1x512xf32>
    %226 = tpu.matmul %225, %2, %cst_81 {dimension_numbers = #tpu.dot_dimension_numbers<[1], [0], [0], [1], [0, 0, 1, 1], [], []>} : vector<1x256xbf16>, vector<256x512xbf16>, vector<1x512xf32> -> vector<1x512xf32>
    %227 = arith.addf %226, %3 : vector<1x512xf32>
    %228 = vector.extract_strided_slice %227 {offsets = [0, 0], sizes = [1, 128], strides = [1, 1]} : vector<1x512xf32> to vector<1x128xf32>
    %229 = math.tanh %228 : vector<1x128xf32>
    %cst_82 = arith.constant 5.000000e-01 : f32
    %230 = vector.broadcast %cst_82 : f32 to vector<1x128xf32>
    %231 = arith.mulf %230, %229 : vector<1x128xf32>
    %cst_83 = arith.constant 5.000000e-01 : f32
    %232 = vector.broadcast %cst_83 : f32 to vector<1x128xf32>
    %233 = arith.addf %231, %232 : vector<1x128xf32>
    %234 = vector.extract_strided_slice %227 {offsets = [0, 128], sizes = [1, 128], strides = [1, 1]} : vector<1x512xf32> to vector<1x128xf32>
    %235 = math.tanh %234 : vector<1x128xf32>
    %cst_84 = arith.constant 5.000000e-01 : f32
    %236 = vector.broadcast %cst_84 : f32 to vector<1x128xf32>
    %237 = arith.mulf %236, %235 : vector<1x128xf32>
    %cst_85 = arith.constant 5.000000e-01 : f32
    %238 = vector.broadcast %cst_85 : f32 to vector<1x128xf32>
    %239 = arith.addf %237, %238 : vector<1x128xf32>
    %240 = vector.extract_strided_slice %227 {offsets = [0, 256], sizes = [1, 128], strides = [1, 1]} : vector<1x512xf32> to vector<1x128xf32>
    %241 = math.tanh %240 : vector<1x128xf32>
    %242 = vector.extract_strided_slice %227 {offsets = [0, 384], sizes = [1, 128], strides = [1, 1]} : vector<1x512xf32> to vector<1x128xf32>
    %243 = math.tanh %242 : vector<1x128xf32>
    %cst_86 = arith.constant 5.000000e-01 : f32
    %244 = vector.broadcast %cst_86 : f32 to vector<1x128xf32>
    %245 = arith.mulf %244, %243 : vector<1x128xf32>
    %cst_87 = arith.constant 5.000000e-01 : f32
    %246 = vector.broadcast %cst_87 : f32 to vector<1x128xf32>
    %247 = arith.addf %245, %246 : vector<1x128xf32>
    %248 = arith.mulf %239, %190 : vector<1x128xf32>
    %249 = arith.mulf %233, %241 : vector<1x128xf32>
    %250 = arith.addf %248, %249 : vector<1x128xf32>
    %251 = math.tanh %250 : vector<1x128xf32>
    %252 = arith.mulf %247, %251 : vector<1x128xf32>
    %cst_88 = arith.constant 0.000000e+00 : f32
    %253 = vector.broadcast %cst_88 : f32 to vector<1x128xf32>
    %254 = arith.truncf %223 : vector<1x128xf32> to vector<1x128xbf16>
    %cst_89 = arith.constant dense<0.000000e+00> : vector<1x512xf32>
    %255 = tpu.matmul %254, %5, %cst_89 {dimension_numbers = #tpu.dot_dimension_numbers<[1], [0], [0], [1], [0, 0, 1, 1], [], []>} : vector<1x128xbf16>, vector<128x512xbf16>, vector<1x512xf32> -> vector<1x512xf32>
    %256 = arith.truncf %252 : vector<1x128xf32> to vector<1x128xbf16>
    %cst_90 = arith.constant dense<0.000000e+00> : vector<1x512xf32>
    %257 = tpu.matmul %256, %8, %cst_90 {dimension_numbers = #tpu.dot_dimension_numbers<[1], [0], [0], [1], [0, 0, 1, 1], [], []>} : vector<1x128xbf16>, vector<128x512xbf16>, vector<1x512xf32> -> vector<1x512xf32>
    %cst_91 = arith.constant 0.000000e+00 : f32
    %258 = vector.broadcast %cst_91 : f32 to vector<1x128xf32>
    %c0_92 = arith.constant 0 : index
    %c0_93 = arith.constant 0 : index
    %259 = vector.load %arg14[%c0_92, %c0_93] : memref<8x128xf32, #tpu.memory_space<vmem>>, vector<1x128xf32>
    tpu.vector_store %arg14[%c0_92, %c0_93], %258 {strides = array<i32>} : memref<8x128xf32, #tpu.memory_space<vmem>>, vector<1x128xf32>,
    %260 = arith.truncf %253 : vector<1x128xf32> to vector<1x128xbf16>
    %cst_94 = arith.constant dense<0.000000e+00> : vector<1x512xf32>
    %261 = tpu.matmul %260, %4, %cst_94 {dimension_numbers = #tpu.dot_dimension_numbers<[1], [0], [0], [1], [0, 0, 1, 1], [], []>} : vector<1x128xbf16>, vector<128x512xbf16>, vector<1x512xf32> -> vector<1x512xf32>
    %262 = arith.addf %261, %255 : vector<1x512xf32>
    %263 = arith.addf %262, %6 : vector<1x512xf32>
    %264 = vector.extract_strided_slice %263 {offsets = [0, 0], sizes = [1, 128], strides = [1, 1]} : vector<1x512xf32> to vector<1x128xf32>
    %265 = math.tanh %264 : vector<1x128xf32>
    %cst_95 = arith.constant 5.000000e-01 : f32
    %266 = vector.broadcast %cst_95 : f32 to vector<1x128xf32>
    %267 = arith.mulf %266, %265 : vector<1x128xf32>
    %cst_96 = arith.constant 5.000000e-01 : f32
    %268 = vector.broadcast %cst_96 : f32 to vector<1x128xf32>
    %269 = arith.addf %267, %268 : vector<1x128xf32>
    %270 = vector.extract_strided_slice %263 {offsets = [0, 128], sizes = [1, 128], strides = [1, 1]} : vector<1x512xf32> to vector<1x128xf32>
    %271 = math.tanh %270 : vector<1x128xf32>
    %cst_97 = arith.constant 5.000000e-01 : f32
    %272 = vector.broadcast %cst_97 : f32 to vector<1x128xf32>
    %273 = arith.mulf %272, %271 : vector<1x128xf32>
    %cst_98 = arith.constant 5.000000e-01 : f32
    %274 = vector.broadcast %cst_98 : f32 to vector<1x128xf32>
    %275 = arith.addf %273, %274 : vector<1x128xf32>
    %276 = vector.extract_strided_slice %263 {offsets = [0, 256], sizes = [1, 128], strides = [1, 1]} : vector<1x512xf32> to vector<1x128xf32>
    %277 = math.tanh %276 : vector<1x128xf32>
    %278 = vector.extract_strided_slice %263 {offsets = [0, 384], sizes = [1, 128], strides = [1, 1]} : vector<1x512xf32> to vector<1x128xf32>
    %279 = math.tanh %278 : vector<1x128xf32>
    %cst_99 = arith.constant 5.000000e-01 : f32
    %280 = vector.broadcast %cst_99 : f32 to vector<1x128xf32>
    %281 = arith.mulf %280, %279 : vector<1x128xf32>
    %cst_100 = arith.constant 5.000000e-01 : f32
    %282 = vector.broadcast %cst_100 : f32 to vector<1x128xf32>
    %283 = arith.addf %281, %282 : vector<1x128xf32>
    %284 = arith.mulf %275, %221 : vector<1x128xf32>
    %285 = arith.mulf %269, %277 : vector<1x128xf32>
    %286 = arith.addf %284, %285 : vector<1x128xf32>
    %287 = math.tanh %286 : vector<1x128xf32>
    %288 = arith.mulf %283, %287 : vector<1x128xf32>
    %289 = arith.truncf %288 : vector<1x128xf32> to vector<1x128xbf16>
    %cst_101 = arith.constant dense<0.000000e+00> : vector<1x512xf32>
    %290 = tpu.matmul %289, %5, %cst_101 {dimension_numbers = #tpu.dot_dimension_numbers<[1], [0], [0], [1], [0, 0, 1, 1], [], []>} : vector<1x128xbf16>, vector<128x512xbf16>, vector<1x512xf32> -> vector<1x512xf32>
    %cst_102 = arith.constant dense<0.000000e+00> : vector<1x512xf32>
    %291 = tpu.matmul %289, %7, %cst_102 {dimension_numbers = #tpu.dot_dimension_numbers<[1], [0], [0], [1], [0, 0, 1, 1], [], []>} : vector<1x128xbf16>, vector<128x512xbf16>, vector<1x512xf32> -> vector<1x512xf32>
    %292 = arith.addf %291, %257 : vector<1x512xf32>
    %293 = arith.addf %292, %9 : vector<1x512xf32>
    %294 = vector.extract_strided_slice %293 {offsets = [0, 0], sizes = [1, 128], strides = [1, 1]} : vector<1x512xf32> to vector<1x128xf32>
    %295 = math.tanh %294 : vector<1x128xf32>
    %cst_103 = arith.constant 5.000000e-01 : f32
    %296 = vector.broadcast %cst_103 : f32 to vector<1x128xf32>
    %297 = arith.mulf %296, %295 : vector<1x128xf32>
    %cst_104 = arith.constant 5.000000e-01 : f32
    %298 = vector.broadcast %cst_104 : f32 to vector<1x128xf32>
    %299 = arith.addf %297, %298 : vector<1x128xf32>
    %300 = vector.extract_strided_slice %293 {offsets = [0, 128], sizes = [1, 128], strides = [1, 1]} : vector<1x512xf32> to vector<1x128xf32>
    %301 = math.tanh %300 : vector<1x128xf32>
    %cst_105 = arith.constant 5.000000e-01 : f32
    %302 = vector.broadcast %cst_105 : f32 to vector<1x128xf32>
    %303 = arith.mulf %302, %301 : vector<1x128xf32>
    %cst_106 = arith.constant 5.000000e-01 : f32
    %304 = vector.broadcast %cst_106 : f32 to vector<1x128xf32>
    %305 = arith.addf %303, %304 : vector<1x128xf32>
    %306 = vector.extract_strided_slice %293 {offsets = [0, 256], sizes = [1, 128], strides = [1, 1]} : vector<1x512xf32> to vector<1x128xf32>
    %307 = math.tanh %306 : vector<1x128xf32>
    %308 = vector.extract_strided_slice %293 {offsets = [0, 384], sizes = [1, 128], strides = [1, 1]} : vector<1x512xf32> to vector<1x128xf32>
    %309 = math.tanh %308 : vector<1x128xf32>
    %cst_107 = arith.constant 5.000000e-01 : f32
    %310 = vector.broadcast %cst_107 : f32 to vector<1x128xf32>
    %311 = arith.mulf %310, %309 : vector<1x128xf32>
    %cst_108 = arith.constant 5.000000e-01 : f32
    %312 = vector.broadcast %cst_108 : f32 to vector<1x128xf32>
    %313 = arith.addf %311, %312 : vector<1x128xf32>
    %314 = arith.mulf %305, %250 : vector<1x128xf32>
    %315 = arith.mulf %299, %307 : vector<1x128xf32>
    %316 = arith.addf %314, %315 : vector<1x128xf32>
    %317 = math.tanh %316 : vector<1x128xf32>
    %318 = arith.mulf %313, %317 : vector<1x128xf32>
    %319 = arith.truncf %318 : vector<1x128xf32> to vector<1x128xbf16>
    %cst_109 = arith.constant dense<0.000000e+00> : vector<1x512xf32>
    %320 = tpu.matmul %319, %8, %cst_109 {dimension_numbers = #tpu.dot_dimension_numbers<[1], [0], [0], [1], [0, 0, 1, 1], [], []>} : vector<1x128xbf16>, vector<128x512xbf16>, vector<1x512xf32> -> vector<1x512xf32>
    %cst_110 = arith.constant dense<0.000000e+00> : vector<1x128xf32>
    %321 = tpu.matmul %319, %10, %cst_110 {dimension_numbers = #tpu.dot_dimension_numbers<[1], [0], [0], [1], [0, 0, 1, 1], [], []>} : vector<1x128xbf16>, vector<128x128xbf16>, vector<1x128xf32> -> vector<1x128xf32>
    %322 = arith.addf %321, %11 : vector<1x128xf32>
    %323 = math.tanh %322 : vector<1x128xf32>
    %cst_111 = arith.constant 5.000000e-01 : f32
    %324 = vector.broadcast %cst_111 : f32 to vector<1x128xf32>
    %325 = arith.mulf %324, %323 : vector<1x128xf32>
    %cst_112 = arith.constant 5.000000e-01 : f32
    %326 = vector.broadcast %cst_112 : f32 to vector<1x128xf32>
    %327 = arith.addf %325, %326 : vector<1x128xf32>
    %c1_113 = arith.constant 1 : index
    %c0_114 = arith.constant 0 : index
    %328 = vector.load %arg14[%c1_113, %c0_114] : memref<8x128xf32, #tpu.memory_space<vmem>>, vector<1x128xf32>
    tpu.vector_store %arg14[%c1_113, %c0_114], %327 {strides = array<i32>} : memref<8x128xf32, #tpu.memory_space<vmem>>, vector<1x128xf32>,
    %329 = arith.truncf %327 : vector<1x128xf32> to vector<1x128xbf16>
    %cst_115 = arith.constant dense<0.000000e+00> : vector<1x512xf32>
    %330 = tpu.matmul %329, %4, %cst_115 {dimension_numbers = #tpu.dot_dimension_numbers<[1], [0], [0], [1], [0, 0, 1, 1], [], []>} : vector<1x128xbf16>, vector<128x512xbf16>, vector<1x512xf32> -> vector<1x512xf32>
    %331 = arith.addf %330, %290 : vector<1x512xf32>
    %332 = arith.addf %331, %6 : vector<1x512xf32>
    %333 = vector.extract_strided_slice %332 {offsets = [0, 0], sizes = [1, 128], strides = [1, 1]} : vector<1x512xf32> to vector<1x128xf32>
    %334 = math.tanh %333 : vector<1x128xf32>
    %cst_116 = arith.constant 5.000000e-01 : f32
    %335 = vector.broadcast %cst_116 : f32 to vector<1x128xf32>
    %336 = arith.mulf %335, %334 : vector<1x128xf32>
    %cst_117 = arith.constant 5.000000e-01 : f32
    %337 = vector.broadcast %cst_117 : f32 to vector<1x128xf32>
    %338 = arith.addf %336, %337 : vector<1x128xf32>
    %339 = vector.extract_strided_slice %332 {offsets = [0, 128], sizes = [1, 128], strides = [1, 1]} : vector<1x512xf32> to vector<1x128xf32>
    %340 = math.tanh %339 : vector<1x128xf32>
    %cst_118 = arith.constant 5.000000e-01 : f32
    %341 = vector.broadcast %cst_118 : f32 to vector<1x128xf32>
    %342 = arith.mulf %341, %340 : vector<1x128xf32>
    %cst_119 = arith.constant 5.000000e-01 : f32
    %343 = vector.broadcast %cst_119 : f32 to vector<1x128xf32>
    %344 = arith.addf %342, %343 : vector<1x128xf32>
    %345 = vector.extract_strided_slice %332 {offsets = [0, 256], sizes = [1, 128], strides = [1, 1]} : vector<1x512xf32> to vector<1x128xf32>
    %346 = math.tanh %345 : vector<1x128xf32>
    %347 = vector.extract_strided_slice %332 {offsets = [0, 384], sizes = [1, 128], strides = [1, 1]} : vector<1x512xf32> to vector<1x128xf32>
    %348 = math.tanh %347 : vector<1x128xf32>
    %cst_120 = arith.constant 5.000000e-01 : f32
    %349 = vector.broadcast %cst_120 : f32 to vector<1x128xf32>
    %350 = arith.mulf %349, %348 : vector<1x128xf32>
    %cst_121 = arith.constant 5.000000e-01 : f32
    %351 = vector.broadcast %cst_121 : f32 to vector<1x128xf32>
    %352 = arith.addf %350, %351 : vector<1x128xf32>
    %353 = arith.mulf %344, %286 : vector<1x128xf32>
    %354 = arith.mulf %338, %346 : vector<1x128xf32>
    %355 = arith.addf %353, %354 : vector<1x128xf32>
    %356 = math.tanh %355 : vector<1x128xf32>
    %357 = arith.mulf %352, %356 : vector<1x128xf32>
    %358 = arith.truncf %357 : vector<1x128xf32> to vector<1x128xbf16>
    %cst_122 = arith.constant dense<0.000000e+00> : vector<1x512xf32>
    %359 = tpu.matmul %358, %5, %cst_122 {dimension_numbers = #tpu.dot_dimension_numbers<[1], [0], [0], [1], [0, 0, 1, 1], [], []>} : vector<1x128xbf16>, vector<128x512xbf16>, vector<1x512xf32> -> vector<1x512xf32>
    %cst_123 = arith.constant dense<0.000000e+00> : vector<1x512xf32>
    %360 = tpu.matmul %358, %7, %cst_123 {dimension_numbers = #tpu.dot_dimension_numbers<[1], [0], [0], [1], [0, 0, 1, 1], [], []>} : vector<1x128xbf16>, vector<128x512xbf16>, vector<1x512xf32> -> vector<1x512xf32>
    %361 = arith.addf %360, %320 : vector<1x512xf32>
    %362 = arith.addf %361, %9 : vector<1x512xf32>
    %363 = vector.extract_strided_slice %362 {offsets = [0, 0], sizes = [1, 128], strides = [1, 1]} : vector<1x512xf32> to vector<1x128xf32>
    %364 = math.tanh %363 : vector<1x128xf32>
    %cst_124 = arith.constant 5.000000e-01 : f32
    %365 = vector.broadcast %cst_124 : f32 to vector<1x128xf32>
    %366 = arith.mulf %365, %364 : vector<1x128xf32>
    %cst_125 = arith.constant 5.000000e-01 : f32
    %367 = vector.broadcast %cst_125 : f32 to vector<1x128xf32>
    %368 = arith.addf %366, %367 : vector<1x128xf32>
    %369 = vector.extract_strided_slice %362 {offsets = [0, 128], sizes = [1, 128], strides = [1, 1]} : vector<1x512xf32> to vector<1x128xf32>
    %370 = math.tanh %369 : vector<1x128xf32>
    %cst_126 = arith.constant 5.000000e-01 : f32
    %371 = vector.broadcast %cst_126 : f32 to vector<1x128xf32>
    %372 = arith.mulf %371, %370 : vector<1x128xf32>
    %cst_127 = arith.constant 5.000000e-01 : f32
    %373 = vector.broadcast %cst_127 : f32 to vector<1x128xf32>
    %374 = arith.addf %372, %373 : vector<1x128xf32>
    %375 = vector.extract_strided_slice %362 {offsets = [0, 256], sizes = [1, 128], strides = [1, 1]} : vector<1x512xf32> to vector<1x128xf32>
    %376 = math.tanh %375 : vector<1x128xf32>
    %377 = vector.extract_strided_slice %362 {offsets = [0, 384], sizes = [1, 128], strides = [1, 1]} : vector<1x512xf32> to vector<1x128xf32>
    %378 = math.tanh %377 : vector<1x128xf32>
    %cst_128 = arith.constant 5.000000e-01 : f32
    %379 = vector.broadcast %cst_128 : f32 to vector<1x128xf32>
    %380 = arith.mulf %379, %378 : vector<1x128xf32>
    %cst_129 = arith.constant 5.000000e-01 : f32
    %381 = vector.broadcast %cst_129 : f32 to vector<1x128xf32>
    %382 = arith.addf %380, %381 : vector<1x128xf32>
    %383 = arith.mulf %374, %316 : vector<1x128xf32>
    %384 = arith.mulf %368, %376 : vector<1x128xf32>
    %385 = arith.addf %383, %384 : vector<1x128xf32>
    %386 = math.tanh %385 : vector<1x128xf32>
    %387 = arith.mulf %382, %386 : vector<1x128xf32>
    %388 = arith.truncf %387 : vector<1x128xf32> to vector<1x128xbf16>
    %cst_130 = arith.constant dense<0.000000e+00> : vector<1x512xf32>
    %389 = tpu.matmul %388, %8, %cst_130 {dimension_numbers = #tpu.dot_dimension_numbers<[1], [0], [0], [1], [0, 0, 1, 1], [], []>} : vector<1x128xbf16>, vector<128x512xbf16>, vector<1x512xf32> -> vector<1x512xf32>
    %cst_131 = arith.constant dense<0.000000e+00> : vector<1x128xf32>
    %390 = tpu.matmul %388, %10, %cst_131 {dimension_numbers = #tpu.dot_dimension_numbers<[1], [0], [0], [1], [0, 0, 1, 1], [], []>} : vector<1x128xbf16>, vector<128x128xbf16>, vector<1x128xf32> -> vector<1x128xf32>
    %391 = arith.addf %390, %11 : vector<1x128xf32>
    %392 = math.tanh %391 : vector<1x128xf32>
    %cst_132 = arith.constant 5.000000e-01 : f32
    %393 = vector.broadcast %cst_132 : f32 to vector<1x128xf32>
    %394 = arith.mulf %393, %392 : vector<1x128xf32>
    %cst_133 = arith.constant 5.000000e-01 : f32
    %395 = vector.broadcast %cst_133 : f32 to vector<1x128xf32>
    %396 = arith.addf %394, %395 : vector<1x128xf32>
    %c2_134 = arith.constant 2 : index
    %c0_135 = arith.constant 0 : index
    %397 = vector.load %arg14[%c2_134, %c0_135] : memref<8x128xf32, #tpu.memory_space<vmem>>, vector<1x128xf32>
    tpu.vector_store %arg14[%c2_134, %c0_135], %396 {strides = array<i32>} : memref<8x128xf32, #tpu.memory_space<vmem>>, vector<1x128xf32>,
    %398 = arith.truncf %396 : vector<1x128xf32> to vector<1x128xbf16>
    %cst_136 = arith.constant dense<0.000000e+00> : vector<1x512xf32>
    %399 = tpu.matmul %398, %4, %cst_136 {dimension_numbers = #tpu.dot_dimension_numbers<[1], [0], [0], [1], [0, 0, 1, 1], [], []>} : vector<1x128xbf16>, vector<128x512xbf16>, vector<1x512xf32> -> vector<1x512xf32>
    %400 = arith.addf %399, %359 : vector<1x512xf32>
    %401 = arith.addf %400, %6 : vector<1x512xf32>
    %402 = vector.extract_strided_slice %401 {offsets = [0, 0], sizes = [1, 128], strides = [1, 1]} : vector<1x512xf32> to vector<1x128xf32>
    %403 = math.tanh %402 : vector<1x128xf32>
    %cst_137 = arith.constant 5.000000e-01 : f32
    %404 = vector.broadcast %cst_137 : f32 to vector<1x128xf32>
    %405 = arith.mulf %404, %403 : vector<1x128xf32>
    %cst_138 = arith.constant 5.000000e-01 : f32
    %406 = vector.broadcast %cst_138 : f32 to vector<1x128xf32>
    %407 = arith.addf %405, %406 : vector<1x128xf32>
    %408 = vector.extract_strided_slice %401 {offsets = [0, 128], sizes = [1, 128], strides = [1, 1]} : vector<1x512xf32> to vector<1x128xf32>
    %409 = math.tanh %408 : vector<1x128xf32>
    %cst_139 = arith.constant 5.000000e-01 : f32
    %410 = vector.broadcast %cst_139 : f32 to vector<1x128xf32>
    %411 = arith.mulf %410, %409 : vector<1x128xf32>
    %cst_140 = arith.constant 5.000000e-01 : f32
    %412 = vector.broadcast %cst_140 : f32 to vector<1x128xf32>
    %413 = arith.addf %411, %412 : vector<1x128xf32>
    %414 = vector.extract_strided_slice %401 {offsets = [0, 256], sizes = [1, 128], strides = [1, 1]} : vector<1x512xf32> to vector<1x128xf32>
    %415 = math.tanh %414 : vector<1x128xf32>
    %416 = vector.extract_strided_slice %401 {offsets = [0, 384], sizes = [1, 128], strides = [1, 1]} : vector<1x512xf32> to vector<1x128xf32>
    %417 = math.tanh %416 : vector<1x128xf32>
    %cst_141 = arith.constant 5.000000e-01 : f32
    %418 = vector.broadcast %cst_141 : f32 to vector<1x128xf32>
    %419 = arith.mulf %418, %417 : vector<1x128xf32>
    %cst_142 = arith.constant 5.000000e-01 : f32
    %420 = vector.broadcast %cst_142 : f32 to vector<1x128xf32>
    %421 = arith.addf %419, %420 : vector<1x128xf32>
    %422 = arith.mulf %413, %355 : vector<1x128xf32>
    %423 = arith.mulf %407, %415 : vector<1x128xf32>
    %424 = arith.addf %422, %423 : vector<1x128xf32>
    %425 = math.tanh %424 : vector<1x128xf32>
    %426 = arith.mulf %421, %425 : vector<1x128xf32>
    %427 = arith.truncf %426 : vector<1x128xf32> to vector<1x128xbf16>
    %cst_143 = arith.constant dense<0.000000e+00> : vector<1x512xf32>
    %428 = tpu.matmul %427, %5, %cst_143 {dimension_numbers = #tpu.dot_dimension_numbers<[1], [0], [0], [1], [0, 0, 1, 1], [], []>} : vector<1x128xbf16>, vector<128x512xbf16>, vector<1x512xf32> -> vector<1x512xf32>
    %cst_144 = arith.constant dense<0.000000e+00> : vector<1x512xf32>
    %429 = tpu.matmul %427, %7, %cst_144 {dimension_numbers = #tpu.dot_dimension_numbers<[1], [0], [0], [1], [0, 0, 1, 1], [], []>} : vector<1x128xbf16>, vector<128x512xbf16>, vector<1x512xf32> -> vector<1x512xf32>
    %430 = arith.addf %429, %389 : vector<1x512xf32>
    %431 = arith.addf %430, %9 : vector<1x512xf32>
    %432 = vector.extract_strided_slice %431 {offsets = [0, 0], sizes = [1, 128], strides = [1, 1]} : vector<1x512xf32> to vector<1x128xf32>
    %433 = math.tanh %432 : vector<1x128xf32>
    %cst_145 = arith.constant 5.000000e-01 : f32
    %434 = vector.broadcast %cst_145 : f32 to vector<1x128xf32>
    %435 = arith.mulf %434, %433 : vector<1x128xf32>
    %cst_146 = arith.constant 5.000000e-01 : f32
    %436 = vector.broadcast %cst_146 : f32 to vector<1x128xf32>
    %437 = arith.addf %435, %436 : vector<1x128xf32>
    %438 = vector.extract_strided_slice %431 {offsets = [0, 128], sizes = [1, 128], strides = [1, 1]} : vector<1x512xf32> to vector<1x128xf32>
    %439 = math.tanh %438 : vector<1x128xf32>
    %cst_147 = arith.constant 5.000000e-01 : f32
    %440 = vector.broadcast %cst_147 : f32 to vector<1x128xf32>
    %441 = arith.mulf %440, %439 : vector<1x128xf32>
    %cst_148 = arith.constant 5.000000e-01 : f32
    %442 = vector.broadcast %cst_148 : f32 to vector<1x128xf32>
    %443 = arith.addf %441, %442 : vector<1x128xf32>
    %444 = vector.extract_strided_slice %431 {offsets = [0, 256], sizes = [1, 128], strides = [1, 1]} : vector<1x512xf32> to vector<1x128xf32>
    %445 = math.tanh %444 : vector<1x128xf32>
    %446 = vector.extract_strided_slice %431 {offsets = [0, 384], sizes = [1, 128], strides = [1, 1]} : vector<1x512xf32> to vector<1x128xf32>
    %447 = math.tanh %446 : vector<1x128xf32>
    %cst_149 = arith.constant 5.000000e-01 : f32
    %448 = vector.broadcast %cst_149 : f32 to vector<1x128xf32>
    %449 = arith.mulf %448, %447 : vector<1x128xf32>
    %cst_150 = arith.constant 5.000000e-01 : f32
    %450 = vector.broadcast %cst_150 : f32 to vector<1x128xf32>
    %451 = arith.addf %449, %450 : vector<1x128xf32>
    %452 = arith.mulf %443, %385 : vector<1x128xf32>
    %453 = arith.mulf %437, %445 : vector<1x128xf32>
    %454 = arith.addf %452, %453 : vector<1x128xf32>
    %455 = math.tanh %454 : vector<1x128xf32>
    %456 = arith.mulf %451, %455 : vector<1x128xf32>
    %457 = arith.truncf %456 : vector<1x128xf32> to vector<1x128xbf16>
    %cst_151 = arith.constant dense<0.000000e+00> : vector<1x512xf32>
    %458 = tpu.matmul %457, %8, %cst_151 {dimension_numbers = #tpu.dot_dimension_numbers<[1], [0], [0], [1], [0, 0, 1, 1], [], []>} : vector<1x128xbf16>, vector<128x512xbf16>, vector<1x512xf32> -> vector<1x512xf32>
    %cst_152 = arith.constant dense<0.000000e+00> : vector<1x128xf32>
    %459 = tpu.matmul %457, %10, %cst_152 {dimension_numbers = #tpu.dot_dimension_numbers<[1], [0], [0], [1], [0, 0, 1, 1], [], []>} : vector<1x128xbf16>, vector<128x128xbf16>, vector<1x128xf32> -> vector<1x128xf32>
    %460 = arith.addf %459, %11 : vector<1x128xf32>
    %461 = math.tanh %460 : vector<1x128xf32>
    %cst_153 = arith.constant 5.000000e-01 : f32
    %462 = vector.broadcast %cst_153 : f32 to vector<1x128xf32>
    %463 = arith.mulf %462, %461 : vector<1x128xf32>
    %cst_154 = arith.constant 5.000000e-01 : f32
    %464 = vector.broadcast %cst_154 : f32 to vector<1x128xf32>
    %465 = arith.addf %463, %464 : vector<1x128xf32>
    %c3_155 = arith.constant 3 : index
    %c0_156 = arith.constant 0 : index
    %466 = vector.load %arg14[%c3_155, %c0_156] : memref<8x128xf32, #tpu.memory_space<vmem>>, vector<1x128xf32>
    tpu.vector_store %arg14[%c3_155, %c0_156], %465 {strides = array<i32>} : memref<8x128xf32, #tpu.memory_space<vmem>>, vector<1x128xf32>,
    %467 = arith.truncf %465 : vector<1x128xf32> to vector<1x128xbf16>
    %cst_157 = arith.constant dense<0.000000e+00> : vector<1x512xf32>
    %468 = tpu.matmul %467, %4, %cst_157 {dimension_numbers = #tpu.dot_dimension_numbers<[1], [0], [0], [1], [0, 0, 1, 1], [], []>} : vector<1x128xbf16>, vector<128x512xbf16>, vector<1x512xf32> -> vector<1x512xf32>
    %469 = arith.addf %468, %428 : vector<1x512xf32>
    %470 = arith.addf %469, %6 : vector<1x512xf32>
    %471 = vector.extract_strided_slice %470 {offsets = [0, 0], sizes = [1, 128], strides = [1, 1]} : vector<1x512xf32> to vector<1x128xf32>
    %472 = math.tanh %471 : vector<1x128xf32>
    %cst_158 = arith.constant 5.000000e-01 : f32
    %473 = vector.broadcast %cst_158 : f32 to vector<1x128xf32>
    %474 = arith.mulf %473, %472 : vector<1x128xf32>
    %cst_159 = arith.constant 5.000000e-01 : f32
    %475 = vector.broadcast %cst_159 : f32 to vector<1x128xf32>
    %476 = arith.addf %474, %475 : vector<1x128xf32>
    %477 = vector.extract_strided_slice %470 {offsets = [0, 128], sizes = [1, 128], strides = [1, 1]} : vector<1x512xf32> to vector<1x128xf32>
    %478 = math.tanh %477 : vector<1x128xf32>
    %cst_160 = arith.constant 5.000000e-01 : f32
    %479 = vector.broadcast %cst_160 : f32 to vector<1x128xf32>
    %480 = arith.mulf %479, %478 : vector<1x128xf32>
    %cst_161 = arith.constant 5.000000e-01 : f32
    %481 = vector.broadcast %cst_161 : f32 to vector<1x128xf32>
    %482 = arith.addf %480, %481 : vector<1x128xf32>
    %483 = vector.extract_strided_slice %470 {offsets = [0, 256], sizes = [1, 128], strides = [1, 1]} : vector<1x512xf32> to vector<1x128xf32>
    %484 = math.tanh %483 : vector<1x128xf32>
    %485 = vector.extract_strided_slice %470 {offsets = [0, 384], sizes = [1, 128], strides = [1, 1]} : vector<1x512xf32> to vector<1x128xf32>
    %486 = math.tanh %485 : vector<1x128xf32>
    %cst_162 = arith.constant 5.000000e-01 : f32
    %487 = vector.broadcast %cst_162 : f32 to vector<1x128xf32>
    %488 = arith.mulf %487, %486 : vector<1x128xf32>
    %cst_163 = arith.constant 5.000000e-01 : f32
    %489 = vector.broadcast %cst_163 : f32 to vector<1x128xf32>
    %490 = arith.addf %488, %489 : vector<1x128xf32>
    %491 = arith.mulf %482, %424 : vector<1x128xf32>
    %492 = arith.mulf %476, %484 : vector<1x128xf32>
    %493 = arith.addf %491, %492 : vector<1x128xf32>
    %494 = math.tanh %493 : vector<1x128xf32>
    %495 = arith.mulf %490, %494 : vector<1x128xf32>
    %496 = arith.truncf %495 : vector<1x128xf32> to vector<1x128xbf16>
    %cst_164 = arith.constant dense<0.000000e+00> : vector<1x512xf32>
    %497 = tpu.matmul %496, %5, %cst_164 {dimension_numbers = #tpu.dot_dimension_numbers<[1], [0], [0], [1], [0, 0, 1, 1], [], []>} : vector<1x128xbf16>, vector<128x512xbf16>, vector<1x512xf32> -> vector<1x512xf32>
    %cst_165 = arith.constant dense<0.000000e+00> : vector<1x512xf32>
    %498 = tpu.matmul %496, %7, %cst_165 {dimension_numbers = #tpu.dot_dimension_numbers<[1], [0], [0], [1], [0, 0, 1, 1], [], []>} : vector<1x128xbf16>, vector<128x512xbf16>, vector<1x512xf32> -> vector<1x512xf32>
    %499 = arith.addf %498, %458 : vector<1x512xf32>
    %500 = arith.addf %499, %9 : vector<1x512xf32>
    %501 = vector.extract_strided_slice %500 {offsets = [0, 0], sizes = [1, 128], strides = [1, 1]} : vector<1x512xf32> to vector<1x128xf32>
    %502 = math.tanh %501 : vector<1x128xf32>
    %cst_166 = arith.constant 5.000000e-01 : f32
    %503 = vector.broadcast %cst_166 : f32 to vector<1x128xf32>
    %504 = arith.mulf %503, %502 : vector<1x128xf32>
    %cst_167 = arith.constant 5.000000e-01 : f32
    %505 = vector.broadcast %cst_167 : f32 to vector<1x128xf32>
    %506 = arith.addf %504, %505 : vector<1x128xf32>
    %507 = vector.extract_strided_slice %500 {offsets = [0, 128], sizes = [1, 128], strides = [1, 1]} : vector<1x512xf32> to vector<1x128xf32>
    %508 = math.tanh %507 : vector<1x128xf32>
    %cst_168 = arith.constant 5.000000e-01 : f32
    %509 = vector.broadcast %cst_168 : f32 to vector<1x128xf32>
    %510 = arith.mulf %509, %508 : vector<1x128xf32>
    %cst_169 = arith.constant 5.000000e-01 : f32
    %511 = vector.broadcast %cst_169 : f32 to vector<1x128xf32>
    %512 = arith.addf %510, %511 : vector<1x128xf32>
    %513 = vector.extract_strided_slice %500 {offsets = [0, 256], sizes = [1, 128], strides = [1, 1]} : vector<1x512xf32> to vector<1x128xf32>
    %514 = math.tanh %513 : vector<1x128xf32>
    %515 = vector.extract_strided_slice %500 {offsets = [0, 384], sizes = [1, 128], strides = [1, 1]} : vector<1x512xf32> to vector<1x128xf32>
    %516 = math.tanh %515 : vector<1x128xf32>
    %cst_170 = arith.constant 5.000000e-01 : f32
    %517 = vector.broadcast %cst_170 : f32 to vector<1x128xf32>
    %518 = arith.mulf %517, %516 : vector<1x128xf32>
    %cst_171 = arith.constant 5.000000e-01 : f32
    %519 = vector.broadcast %cst_171 : f32 to vector<1x128xf32>
    %520 = arith.addf %518, %519 : vector<1x128xf32>
    %521 = arith.mulf %512, %454 : vector<1x128xf32>
    %522 = arith.mulf %506, %514 : vector<1x128xf32>
    %523 = arith.addf %521, %522 : vector<1x128xf32>
    %524 = math.tanh %523 : vector<1x128xf32>
    %525 = arith.mulf %520, %524 : vector<1x128xf32>
    %526 = arith.truncf %525 : vector<1x128xf32> to vector<1x128xbf16>
    %cst_172 = arith.constant dense<0.000000e+00> : vector<1x512xf32>
    %527 = tpu.matmul %526, %8, %cst_172 {dimension_numbers = #tpu.dot_dimension_numbers<[1], [0], [0], [1], [0, 0, 1, 1], [], []>} : vector<1x128xbf16>, vector<128x512xbf16>, vector<1x512xf32> -> vector<1x512xf32>
    %cst_173 = arith.constant dense<0.000000e+00> : vector<1x128xf32>
    %528 = tpu.matmul %526, %10, %cst_173 {dimension_numbers = #tpu.dot_dimension_numbers<[1], [0], [0], [1], [0, 0, 1, 1], [], []>} : vector<1x128xbf16>, vector<128x128xbf16>, vector<1x128xf32> -> vector<1x128xf32>
    %529 = arith.addf %528, %11 : vector<1x128xf32>
    %530 = math.tanh %529 : vector<1x128xf32>
    %cst_174 = arith.constant 5.000000e-01 : f32
    %531 = vector.broadcast %cst_174 : f32 to vector<1x128xf32>
    %532 = arith.mulf %531, %530 : vector<1x128xf32>
    %cst_175 = arith.constant 5.000000e-01 : f32
    %533 = vector.broadcast %cst_175 : f32 to vector<1x128xf32>
    %534 = arith.addf %532, %533 : vector<1x128xf32>
    %c4 = arith.constant 4 : index
    %c0_176 = arith.constant 0 : index
    %535 = vector.load %arg14[%c4, %c0_176] : memref<8x128xf32, #tpu.memory_space<vmem>>, vector<1x128xf32>
    tpu.vector_store %arg14[%c4, %c0_176], %534 {strides = array<i32>} : memref<8x128xf32, #tpu.memory_space<vmem>>, vector<1x128xf32>,
    %536 = arith.truncf %534 : vector<1x128xf32> to vector<1x128xbf16>
    %cst_177 = arith.constant dense<0.000000e+00> : vector<1x512xf32>
    %537 = tpu.matmul %536, %4, %cst_177 {dimension_numbers = #tpu.dot_dimension_numbers<[1], [0], [0], [1], [0, 0, 1, 1], [], []>} : vector<1x128xbf16>, vector<128x512xbf16>, vector<1x512xf32> -> vector<1x512xf32>
    %538 = arith.addf %537, %497 : vector<1x512xf32>
    %539 = arith.addf %538, %6 : vector<1x512xf32>
    %540 = vector.extract_strided_slice %539 {offsets = [0, 0], sizes = [1, 128], strides = [1, 1]} : vector<1x512xf32> to vector<1x128xf32>
    %541 = math.tanh %540 : vector<1x128xf32>
    %cst_178 = arith.constant 5.000000e-01 : f32
    %542 = vector.broadcast %cst_178 : f32 to vector<1x128xf32>
    %543 = arith.mulf %542, %541 : vector<1x128xf32>
    %cst_179 = arith.constant 5.000000e-01 : f32
    %544 = vector.broadcast %cst_179 : f32 to vector<1x128xf32>
    %545 = arith.addf %543, %544 : vector<1x128xf32>
    %546 = vector.extract_strided_slice %539 {offsets = [0, 128], sizes = [1, 128], strides = [1, 1]} : vector<1x512xf32> to vector<1x128xf32>
    %547 = math.tanh %546 : vector<1x128xf32>
    %cst_180 = arith.constant 5.000000e-01 : f32
    %548 = vector.broadcast %cst_180 : f32 to vector<1x128xf32>
    %549 = arith.mulf %548, %547 : vector<1x128xf32>
    %cst_181 = arith.constant 5.000000e-01 : f32
    %550 = vector.broadcast %cst_181 : f32 to vector<1x128xf32>
    %551 = arith.addf %549, %550 : vector<1x128xf32>
    %552 = vector.extract_strided_slice %539 {offsets = [0, 256], sizes = [1, 128], strides = [1, 1]} : vector<1x512xf32> to vector<1x128xf32>
    %553 = math.tanh %552 : vector<1x128xf32>
    %554 = vector.extract_strided_slice %539 {offsets = [0, 384], sizes = [1, 128], strides = [1, 1]} : vector<1x512xf32> to vector<1x128xf32>
    %555 = math.tanh %554 : vector<1x128xf32>
    %cst_182 = arith.constant 5.000000e-01 : f32
    %556 = vector.broadcast %cst_182 : f32 to vector<1x128xf32>
    %557 = arith.mulf %556, %555 : vector<1x128xf32>
    %cst_183 = arith.constant 5.000000e-01 : f32
    %558 = vector.broadcast %cst_183 : f32 to vector<1x128xf32>
    %559 = arith.addf %557, %558 : vector<1x128xf32>
    %560 = arith.mulf %551, %493 : vector<1x128xf32>
    %561 = arith.mulf %545, %553 : vector<1x128xf32>
    %562 = arith.addf %560, %561 : vector<1x128xf32>
    %563 = math.tanh %562 : vector<1x128xf32>
    %564 = arith.mulf %559, %563 : vector<1x128xf32>
    %565 = arith.truncf %564 : vector<1x128xf32> to vector<1x128xbf16>
    %cst_184 = arith.constant dense<0.000000e+00> : vector<1x512xf32>
    %566 = tpu.matmul %565, %5, %cst_184 {dimension_numbers = #tpu.dot_dimension_numbers<[1], [0], [0], [1], [0, 0, 1, 1], [], []>} : vector<1x128xbf16>, vector<128x512xbf16>, vector<1x512xf32> -> vector<1x512xf32>
    %cst_185 = arith.constant dense<0.000000e+00> : vector<1x512xf32>
    %567 = tpu.matmul %565, %7, %cst_185 {dimension_numbers = #tpu.dot_dimension_numbers<[1], [0], [0], [1], [0, 0, 1, 1], [], []>} : vector<1x128xbf16>, vector<128x512xbf16>, vector<1x512xf32> -> vector<1x512xf32>
    %568 = arith.addf %567, %527 : vector<1x512xf32>
    %569 = arith.addf %568, %9 : vector<1x512xf32>
    %570 = vector.extract_strided_slice %569 {offsets = [0, 0], sizes = [1, 128], strides = [1, 1]} : vector<1x512xf32> to vector<1x128xf32>
    %571 = math.tanh %570 : vector<1x128xf32>
    %cst_186 = arith.constant 5.000000e-01 : f32
    %572 = vector.broadcast %cst_186 : f32 to vector<1x128xf32>
    %573 = arith.mulf %572, %571 : vector<1x128xf32>
    %cst_187 = arith.constant 5.000000e-01 : f32
    %574 = vector.broadcast %cst_187 : f32 to vector<1x128xf32>
    %575 = arith.addf %573, %574 : vector<1x128xf32>
    %576 = vector.extract_strided_slice %569 {offsets = [0, 128], sizes = [1, 128], strides = [1, 1]} : vector<1x512xf32> to vector<1x128xf32>
    %577 = math.tanh %576 : vector<1x128xf32>
    %cst_188 = arith.constant 5.000000e-01 : f32
    %578 = vector.broadcast %cst_188 : f32 to vector<1x128xf32>
    %579 = arith.mulf %578, %577 : vector<1x128xf32>
    %cst_189 = arith.constant 5.000000e-01 : f32
    %580 = vector.broadcast %cst_189 : f32 to vector<1x128xf32>
    %581 = arith.addf %579, %580 : vector<1x128xf32>
    %582 = vector.extract_strided_slice %569 {offsets = [0, 256], sizes = [1, 128], strides = [1, 1]} : vector<1x512xf32> to vector<1x128xf32>
    %583 = math.tanh %582 : vector<1x128xf32>
    %584 = vector.extract_strided_slice %569 {offsets = [0, 384], sizes = [1, 128], strides = [1, 1]} : vector<1x512xf32> to vector<1x128xf32>
    %585 = math.tanh %584 : vector<1x128xf32>
    %cst_190 = arith.constant 5.000000e-01 : f32
    %586 = vector.broadcast %cst_190 : f32 to vector<1x128xf32>
    %587 = arith.mulf %586, %585 : vector<1x128xf32>
    %cst_191 = arith.constant 5.000000e-01 : f32
    %588 = vector.broadcast %cst_191 : f32 to vector<1x128xf32>
    %589 = arith.addf %587, %588 : vector<1x128xf32>
    %590 = arith.mulf %581, %523 : vector<1x128xf32>
    %591 = arith.mulf %575, %583 : vector<1x128xf32>
    %592 = arith.addf %590, %591 : vector<1x128xf32>
    %593 = math.tanh %592 : vector<1x128xf32>
    %594 = arith.mulf %589, %593 : vector<1x128xf32>
    %595 = arith.truncf %594 : vector<1x128xf32> to vector<1x128xbf16>
    %cst_192 = arith.constant dense<0.000000e+00> : vector<1x512xf32>
    %596 = tpu.matmul %595, %8, %cst_192 {dimension_numbers = #tpu.dot_dimension_numbers<[1], [0], [0], [1], [0, 0, 1, 1], [], []>} : vector<1x128xbf16>, vector<128x512xbf16>, vector<1x512xf32> -> vector<1x512xf32>
    %cst_193 = arith.constant dense<0.000000e+00> : vector<1x128xf32>
    %597 = tpu.matmul %595, %10, %cst_193 {dimension_numbers = #tpu.dot_dimension_numbers<[1], [0], [0], [1], [0, 0, 1, 1], [], []>} : vector<1x128xbf16>, vector<128x128xbf16>, vector<1x128xf32> -> vector<1x128xf32>
    %598 = arith.addf %597, %11 : vector<1x128xf32>
    %599 = math.tanh %598 : vector<1x128xf32>
    %cst_194 = arith.constant 5.000000e-01 : f32
    %600 = vector.broadcast %cst_194 : f32 to vector<1x128xf32>
    %601 = arith.mulf %600, %599 : vector<1x128xf32>
    %cst_195 = arith.constant 5.000000e-01 : f32
    %602 = vector.broadcast %cst_195 : f32 to vector<1x128xf32>
    %603 = arith.addf %601, %602 : vector<1x128xf32>
    %c5 = arith.constant 5 : index
    %c0_196 = arith.constant 0 : index
    %604 = vector.load %arg14[%c5, %c0_196] : memref<8x128xf32, #tpu.memory_space<vmem>>, vector<1x128xf32>
    tpu.vector_store %arg14[%c5, %c0_196], %603 {strides = array<i32>} : memref<8x128xf32, #tpu.memory_space<vmem>>, vector<1x128xf32>,
    %605 = arith.truncf %603 : vector<1x128xf32> to vector<1x128xbf16>
    %cst_197 = arith.constant dense<0.000000e+00> : vector<1x512xf32>
    %606 = tpu.matmul %605, %4, %cst_197 {dimension_numbers = #tpu.dot_dimension_numbers<[1], [0], [0], [1], [0, 0, 1, 1], [], []>} : vector<1x128xbf16>, vector<128x512xbf16>, vector<1x512xf32> -> vector<1x512xf32>
    %607 = arith.addf %606, %566 : vector<1x512xf32>
    %608 = arith.addf %607, %6 : vector<1x512xf32>
    %609 = vector.extract_strided_slice %608 {offsets = [0, 0], sizes = [1, 128], strides = [1, 1]} : vector<1x512xf32> to vector<1x128xf32>
    %610 = math.tanh %609 : vector<1x128xf32>
    %cst_198 = arith.constant 5.000000e-01 : f32
    %611 = vector.broadcast %cst_198 : f32 to vector<1x128xf32>
    %612 = arith.mulf %611, %610 : vector<1x128xf32>
    %cst_199 = arith.constant 5.000000e-01 : f32
    %613 = vector.broadcast %cst_199 : f32 to vector<1x128xf32>
    %614 = arith.addf %612, %613 : vector<1x128xf32>
    %615 = vector.extract_strided_slice %608 {offsets = [0, 128], sizes = [1, 128], strides = [1, 1]} : vector<1x512xf32> to vector<1x128xf32>
    %616 = math.tanh %615 : vector<1x128xf32>
    %cst_200 = arith.constant 5.000000e-01 : f32
    %617 = vector.broadcast %cst_200 : f32 to vector<1x128xf32>
    %618 = arith.mulf %617, %616 : vector<1x128xf32>
    %cst_201 = arith.constant 5.000000e-01 : f32
    %619 = vector.broadcast %cst_201 : f32 to vector<1x128xf32>
    %620 = arith.addf %618, %619 : vector<1x128xf32>
    %621 = vector.extract_strided_slice %608 {offsets = [0, 256], sizes = [1, 128], strides = [1, 1]} : vector<1x512xf32> to vector<1x128xf32>
    %622 = math.tanh %621 : vector<1x128xf32>
    %623 = vector.extract_strided_slice %608 {offsets = [0, 384], sizes = [1, 128], strides = [1, 1]} : vector<1x512xf32> to vector<1x128xf32>
    %624 = math.tanh %623 : vector<1x128xf32>
    %cst_202 = arith.constant 5.000000e-01 : f32
    %625 = vector.broadcast %cst_202 : f32 to vector<1x128xf32>
    %626 = arith.mulf %625, %624 : vector<1x128xf32>
    %cst_203 = arith.constant 5.000000e-01 : f32
    %627 = vector.broadcast %cst_203 : f32 to vector<1x128xf32>
    %628 = arith.addf %626, %627 : vector<1x128xf32>
    %629 = arith.mulf %620, %562 : vector<1x128xf32>
    %630 = arith.mulf %614, %622 : vector<1x128xf32>
    %631 = arith.addf %629, %630 : vector<1x128xf32>
    %632 = math.tanh %631 : vector<1x128xf32>
    %633 = arith.mulf %628, %632 : vector<1x128xf32>
    %634 = arith.truncf %633 : vector<1x128xf32> to vector<1x128xbf16>
    %cst_204 = arith.constant dense<0.000000e+00> : vector<1x512xf32>
    %635 = tpu.matmul %634, %5, %cst_204 {dimension_numbers = #tpu.dot_dimension_numbers<[1], [0], [0], [1], [0, 0, 1, 1], [], []>} : vector<1x128xbf16>, vector<128x512xbf16>, vector<1x512xf32> -> vector<1x512xf32>
    %cst_205 = arith.constant dense<0.000000e+00> : vector<1x512xf32>
    %636 = tpu.matmul %634, %7, %cst_205 {dimension_numbers = #tpu.dot_dimension_numbers<[1], [0], [0], [1], [0, 0, 1, 1], [], []>} : vector<1x128xbf16>, vector<128x512xbf16>, vector<1x512xf32> -> vector<1x512xf32>
    %637 = arith.addf %636, %596 : vector<1x512xf32>
    %638 = arith.addf %637, %9 : vector<1x512xf32>
    %639 = vector.extract_strided_slice %638 {offsets = [0, 0], sizes = [1, 128], strides = [1, 1]} : vector<1x512xf32> to vector<1x128xf32>
    %640 = math.tanh %639 : vector<1x128xf32>
    %cst_206 = arith.constant 5.000000e-01 : f32
    %641 = vector.broadcast %cst_206 : f32 to vector<1x128xf32>
    %642 = arith.mulf %641, %640 : vector<1x128xf32>
    %cst_207 = arith.constant 5.000000e-01 : f32
    %643 = vector.broadcast %cst_207 : f32 to vector<1x128xf32>
    %644 = arith.addf %642, %643 : vector<1x128xf32>
    %645 = vector.extract_strided_slice %638 {offsets = [0, 128], sizes = [1, 128], strides = [1, 1]} : vector<1x512xf32> to vector<1x128xf32>
    %646 = math.tanh %645 : vector<1x128xf32>
    %cst_208 = arith.constant 5.000000e-01 : f32
    %647 = vector.broadcast %cst_208 : f32 to vector<1x128xf32>
    %648 = arith.mulf %647, %646 : vector<1x128xf32>
    %cst_209 = arith.constant 5.000000e-01 : f32
    %649 = vector.broadcast %cst_209 : f32 to vector<1x128xf32>
    %650 = arith.addf %648, %649 : vector<1x128xf32>
    %651 = vector.extract_strided_slice %638 {offsets = [0, 256], sizes = [1, 128], strides = [1, 1]} : vector<1x512xf32> to vector<1x128xf32>
    %652 = math.tanh %651 : vector<1x128xf32>
    %653 = vector.extract_strided_slice %638 {offsets = [0, 384], sizes = [1, 128], strides = [1, 1]} : vector<1x512xf32> to vector<1x128xf32>
    %654 = math.tanh %653 : vector<1x128xf32>
    %cst_210 = arith.constant 5.000000e-01 : f32
    %655 = vector.broadcast %cst_210 : f32 to vector<1x128xf32>
    %656 = arith.mulf %655, %654 : vector<1x128xf32>
    %cst_211 = arith.constant 5.000000e-01 : f32
    %657 = vector.broadcast %cst_211 : f32 to vector<1x128xf32>
    %658 = arith.addf %656, %657 : vector<1x128xf32>
    %659 = arith.mulf %650, %592 : vector<1x128xf32>
    %660 = arith.mulf %644, %652 : vector<1x128xf32>
    %661 = arith.addf %659, %660 : vector<1x128xf32>
    %662 = math.tanh %661 : vector<1x128xf32>
    %663 = arith.mulf %658, %662 : vector<1x128xf32>
    %664 = arith.truncf %663 : vector<1x128xf32> to vector<1x128xbf16>
    %cst_212 = arith.constant dense<0.000000e+00> : vector<1x512xf32>
    %665 = tpu.matmul %664, %8, %cst_212 {dimension_numbers = #tpu.dot_dimension_numbers<[1], [0], [0], [1], [0, 0, 1, 1], [], []>} : vector<1x128xbf16>, vector<128x512xbf16>, vector<1x512xf32> -> vector<1x512xf32>
    %cst_213 = arith.constant dense<0.000000e+00> : vector<1x128xf32>
    %666 = tpu.matmul %664, %10, %cst_213 {dimension_numbers = #tpu.dot_dimension_numbers<[1], [0], [0], [1], [0, 0, 1, 1], [], []>} : vector<1x128xbf16>, vector<128x128xbf16>, vector<1x128xf32> -> vector<1x128xf32>
    %667 = arith.addf %666, %11 : vector<1x128xf32>
    %668 = math.tanh %667 : vector<1x128xf32>
    %cst_214 = arith.constant 5.000000e-01 : f32
    %669 = vector.broadcast %cst_214 : f32 to vector<1x128xf32>
    %670 = arith.mulf %669, %668 : vector<1x128xf32>
    %cst_215 = arith.constant 5.000000e-01 : f32
    %671 = vector.broadcast %cst_215 : f32 to vector<1x128xf32>
    %672 = arith.addf %670, %671 : vector<1x128xf32>
    %c6 = arith.constant 6 : index
    %c0_216 = arith.constant 0 : index
    %673 = vector.load %arg14[%c6, %c0_216] : memref<8x128xf32, #tpu.memory_space<vmem>>, vector<1x128xf32>
    tpu.vector_store %arg14[%c6, %c0_216], %672 {strides = array<i32>} : memref<8x128xf32, #tpu.memory_space<vmem>>, vector<1x128xf32>,
    %674 = arith.truncf %672 : vector<1x128xf32> to vector<1x128xbf16>
    %cst_217 = arith.constant dense<0.000000e+00> : vector<1x512xf32>
    %675 = tpu.matmul %674, %4, %cst_217 {dimension_numbers = #tpu.dot_dimension_numbers<[1], [0], [0], [1], [0, 0, 1, 1], [], []>} : vector<1x128xbf16>, vector<128x512xbf16>, vector<1x512xf32> -> vector<1x512xf32>
    %676 = arith.addf %675, %635 : vector<1x512xf32>
    %677 = arith.addf %676, %6 : vector<1x512xf32>
    %678 = vector.extract_strided_slice %677 {offsets = [0, 0], sizes = [1, 128], strides = [1, 1]} : vector<1x512xf32> to vector<1x128xf32>
    %679 = math.tanh %678 : vector<1x128xf32>
    %cst_218 = arith.constant 5.000000e-01 : f32
    %680 = vector.broadcast %cst_218 : f32 to vector<1x128xf32>
    %681 = arith.mulf %680, %679 : vector<1x128xf32>
    %cst_219 = arith.constant 5.000000e-01 : f32
    %682 = vector.broadcast %cst_219 : f32 to vector<1x128xf32>
    %683 = arith.addf %681, %682 : vector<1x128xf32>
    %684 = vector.extract_strided_slice %677 {offsets = [0, 128], sizes = [1, 128], strides = [1, 1]} : vector<1x512xf32> to vector<1x128xf32>
    %685 = math.tanh %684 : vector<1x128xf32>
    %cst_220 = arith.constant 5.000000e-01 : f32
    %686 = vector.broadcast %cst_220 : f32 to vector<1x128xf32>
    %687 = arith.mulf %686, %685 : vector<1x128xf32>
    %cst_221 = arith.constant 5.000000e-01 : f32
    %688 = vector.broadcast %cst_221 : f32 to vector<1x128xf32>
    %689 = arith.addf %687, %688 : vector<1x128xf32>
    %690 = vector.extract_strided_slice %677 {offsets = [0, 256], sizes = [1, 128], strides = [1, 1]} : vector<1x512xf32> to vector<1x128xf32>
    %691 = math.tanh %690 : vector<1x128xf32>
    %692 = vector.extract_strided_slice %677 {offsets = [0, 384], sizes = [1, 128], strides = [1, 1]} : vector<1x512xf32> to vector<1x128xf32>
    %693 = math.tanh %692 : vector<1x128xf32>
    %cst_222 = arith.constant 5.000000e-01 : f32
    %694 = vector.broadcast %cst_222 : f32 to vector<1x128xf32>
    %695 = arith.mulf %694, %693 : vector<1x128xf32>
    %cst_223 = arith.constant 5.000000e-01 : f32
    %696 = vector.broadcast %cst_223 : f32 to vector<1x128xf32>
    %697 = arith.addf %695, %696 : vector<1x128xf32>
    %698 = arith.mulf %689, %631 : vector<1x128xf32>
    %699 = arith.mulf %683, %691 : vector<1x128xf32>
    %700 = arith.addf %698, %699 : vector<1x128xf32>
    %701 = math.tanh %700 : vector<1x128xf32>
    %702 = arith.mulf %697, %701 : vector<1x128xf32>
    %703 = arith.truncf %702 : vector<1x128xf32> to vector<1x128xbf16>
    %cst_224 = arith.constant dense<0.000000e+00> : vector<1x512xf32>
    %704 = tpu.matmul %703, %5, %cst_224 {dimension_numbers = #tpu.dot_dimension_numbers<[1], [0], [0], [1], [0, 0, 1, 1], [], []>} : vector<1x128xbf16>, vector<128x512xbf16>, vector<1x512xf32> -> vector<1x512xf32>
    %cst_225 = arith.constant dense<0.000000e+00> : vector<1x512xf32>
    %705 = tpu.matmul %703, %7, %cst_225 {dimension_numbers = #tpu.dot_dimension_numbers<[1], [0], [0], [1], [0, 0, 1, 1], [], []>} : vector<1x128xbf16>, vector<128x512xbf16>, vector<1x512xf32> -> vector<1x512xf32>
    %706 = arith.addf %705, %665 : vector<1x512xf32>
    %707 = arith.addf %706, %9 : vector<1x512xf32>
    %708 = vector.extract_strided_slice %707 {offsets = [0, 0], sizes = [1, 128], strides = [1, 1]} : vector<1x512xf32> to vector<1x128xf32>
    %709 = math.tanh %708 : vector<1x128xf32>
    %cst_226 = arith.constant 5.000000e-01 : f32
    %710 = vector.broadcast %cst_226 : f32 to vector<1x128xf32>
    %711 = arith.mulf %710, %709 : vector<1x128xf32>
    %cst_227 = arith.constant 5.000000e-01 : f32
    %712 = vector.broadcast %cst_227 : f32 to vector<1x128xf32>
    %713 = arith.addf %711, %712 : vector<1x128xf32>
    %714 = vector.extract_strided_slice %707 {offsets = [0, 128], sizes = [1, 128], strides = [1, 1]} : vector<1x512xf32> to vector<1x128xf32>
    %715 = math.tanh %714 : vector<1x128xf32>
    %cst_228 = arith.constant 5.000000e-01 : f32
    %716 = vector.broadcast %cst_228 : f32 to vector<1x128xf32>
    %717 = arith.mulf %716, %715 : vector<1x128xf32>
    %cst_229 = arith.constant 5.000000e-01 : f32
    %718 = vector.broadcast %cst_229 : f32 to vector<1x128xf32>
    %719 = arith.addf %717, %718 : vector<1x128xf32>
    %720 = vector.extract_strided_slice %707 {offsets = [0, 256], sizes = [1, 128], strides = [1, 1]} : vector<1x512xf32> to vector<1x128xf32>
    %721 = math.tanh %720 : vector<1x128xf32>
    %722 = vector.extract_strided_slice %707 {offsets = [0, 384], sizes = [1, 128], strides = [1, 1]} : vector<1x512xf32> to vector<1x128xf32>
    %723 = math.tanh %722 : vector<1x128xf32>
    %cst_230 = arith.constant 5.000000e-01 : f32
    %724 = vector.broadcast %cst_230 : f32 to vector<1x128xf32>
    %725 = arith.mulf %724, %723 : vector<1x128xf32>
    %cst_231 = arith.constant 5.000000e-01 : f32
    %726 = vector.broadcast %cst_231 : f32 to vector<1x128xf32>
    %727 = arith.addf %725, %726 : vector<1x128xf32>
    %728 = arith.mulf %719, %661 : vector<1x128xf32>
    %729 = arith.mulf %713, %721 : vector<1x128xf32>
    %730 = arith.addf %728, %729 : vector<1x128xf32>
    %731 = math.tanh %730 : vector<1x128xf32>
    %732 = arith.mulf %727, %731 : vector<1x128xf32>
    %733 = arith.truncf %732 : vector<1x128xf32> to vector<1x128xbf16>
    %cst_232 = arith.constant dense<0.000000e+00> : vector<1x512xf32>
    %734 = tpu.matmul %733, %8, %cst_232 {dimension_numbers = #tpu.dot_dimension_numbers<[1], [0], [0], [1], [0, 0, 1, 1], [], []>} : vector<1x128xbf16>, vector<128x512xbf16>, vector<1x512xf32> -> vector<1x512xf32>
    %cst_233 = arith.constant dense<0.000000e+00> : vector<1x128xf32>
    %735 = tpu.matmul %733, %10, %cst_233 {dimension_numbers = #tpu.dot_dimension_numbers<[1], [0], [0], [1], [0, 0, 1, 1], [], []>} : vector<1x128xbf16>, vector<128x128xbf16>, vector<1x128xf32> -> vector<1x128xf32>
    %736 = arith.addf %735, %11 : vector<1x128xf32>
    %737 = math.tanh %736 : vector<1x128xf32>
    %cst_234 = arith.constant 5.000000e-01 : f32
    %738 = vector.broadcast %cst_234 : f32 to vector<1x128xf32>
    %739 = arith.mulf %738, %737 : vector<1x128xf32>
    %cst_235 = arith.constant 5.000000e-01 : f32
    %740 = vector.broadcast %cst_235 : f32 to vector<1x128xf32>
    %741 = arith.addf %739, %740 : vector<1x128xf32>
    %c7 = arith.constant 7 : index
    %c0_236 = arith.constant 0 : index
    %742 = vector.load %arg14[%c7, %c0_236] : memref<8x128xf32, #tpu.memory_space<vmem>>, vector<1x128xf32>
    tpu.vector_store %arg14[%c7, %c0_236], %741 {strides = array<i32>} : memref<8x128xf32, #tpu.memory_space<vmem>>, vector<1x128xf32>,
    %c0_237 = arith.constant 0 : index
    %c0_238 = arith.constant 0 : index
    %743 = vector.load %arg14[%c0_237, %c0_238] : memref<8x128xf32, #tpu.memory_space<vmem>>, vector<8x128xf32>
    %c0_239 = arith.constant 0 : index
    %c0_240 = arith.constant 0 : index
    %744 = vector.load %arg13[%c0_239, %c0_240] : memref<88x128xf32, #tpu.memory_space<vmem>>, vector<8x128xf32>
    tpu.vector_store %arg13[%c0_239, %c0_240], %743 {strides = array<i32>} : memref<88x128xf32, #tpu.memory_space<vmem>>, vector<8x128xf32>,
    %c0_i32 = arith.constant 0 : i32
    %c10_i32 = arith.constant 10 : i32
    %745 = arith.addi %c0_i32, %c10_i32 : i32
    %c1_i32 = arith.constant 1 : i32
    %746:5 = scf.for %arg15 = %c0_i32 to %745 step %c1_i32 iter_args(%arg16 = %741, %arg17 = %700, %arg18 = %730, %arg19 = %704, %arg20 = %734) -> (vector<1x128xf32>, vector<1x128xf32>, vector<1x128xf32>, vector<1x512xf32>, vector<1x512xf32>)  : i32 {
      %747 = arith.truncf %arg16 : vector<1x128xf32> to vector<1x128xbf16>
      %cst_242 = arith.constant dense<0.000000e+00> : vector<1x512xf32>
      %748 = tpu.matmul %747, %4, %cst_242 {dimension_numbers = #tpu.dot_dimension_numbers<[1], [0], [0], [1], [0, 0, 1, 1], [], []>} : vector<1x128xbf16>, vector<128x512xbf16>, vector<1x512xf32> -> vector<1x512xf32>
      %749 = arith.addf %748, %arg19 : vector<1x512xf32>
      %750 = arith.addf %749, %6 : vector<1x512xf32>
      %751 = vector.extract_strided_slice %750 {offsets = [0, 0], sizes = [1, 128], strides = [1, 1]} : vector<1x512xf32> to vector<1x128xf32>
      %752 = math.tanh %751 : vector<1x128xf32>
      %cst_243 = arith.constant 5.000000e-01 : f32
      %753 = vector.broadcast %cst_243 : f32 to vector<1x128xf32>
      %754 = arith.mulf %753, %752 : vector<1x128xf32>
      %cst_244 = arith.constant 5.000000e-01 : f32
      %755 = vector.broadcast %cst_244 : f32 to vector<1x128xf32>
      %756 = arith.addf %754, %755 : vector<1x128xf32>
      %757 = vector.extract_strided_slice %750 {offsets = [0, 128], sizes = [1, 128], strides = [1, 1]} : vector<1x512xf32> to vector<1x128xf32>
      %758 = math.tanh %757 : vector<1x128xf32>
      %cst_245 = arith.constant 5.000000e-01 : f32
      %759 = vector.broadcast %cst_245 : f32 to vector<1x128xf32>
      %760 = arith.mulf %759, %758 : vector<1x128xf32>
      %cst_246 = arith.constant 5.000000e-01 : f32
      %761 = vector.broadcast %cst_246 : f32 to vector<1x128xf32>
      %762 = arith.addf %760, %761 : vector<1x128xf32>
      %763 = vector.extract_strided_slice %750 {offsets = [0, 256], sizes = [1, 128], strides = [1, 1]} : vector<1x512xf32> to vector<1x128xf32>
      %764 = math.tanh %763 : vector<1x128xf32>
      %765 = vector.extract_strided_slice %750 {offsets = [0, 384], sizes = [1, 128], strides = [1, 1]} : vector<1x512xf32> to vector<1x128xf32>
      %766 = math.tanh %765 : vector<1x128xf32>
      %cst_247 = arith.constant 5.000000e-01 : f32
      %767 = vector.broadcast %cst_247 : f32 to vector<1x128xf32>
      %768 = arith.mulf %767, %766 : vector<1x128xf32>
      %cst_248 = arith.constant 5.000000e-01 : f32
      %769 = vector.broadcast %cst_248 : f32 to vector<1x128xf32>
      %770 = arith.addf %768, %769 : vector<1x128xf32>
      %771 = arith.mulf %762, %arg17 : vector<1x128xf32>
      %772 = arith.mulf %756, %764 : vector<1x128xf32>
      %773 = arith.addf %771, %772 : vector<1x128xf32>
      %774 = math.tanh %773 : vector<1x128xf32>
      %775 = arith.mulf %770, %774 : vector<1x128xf32>
      %776 = arith.truncf %775 : vector<1x128xf32> to vector<1x128xbf16>
      %cst_249 = arith.constant dense<0.000000e+00> : vector<1x512xf32>
      %777 = tpu.matmul %776, %5, %cst_249 {dimension_numbers = #tpu.dot_dimension_numbers<[1], [0], [0], [1], [0, 0, 1, 1], [], []>} : vector<1x128xbf16>, vector<128x512xbf16>, vector<1x512xf32> -> vector<1x512xf32>
      %cst_250 = arith.constant dense<0.000000e+00> : vector<1x512xf32>
      %778 = tpu.matmul %776, %7, %cst_250 {dimension_numbers = #tpu.dot_dimension_numbers<[1], [0], [0], [1], [0, 0, 1, 1], [], []>} : vector<1x128xbf16>, vector<128x512xbf16>, vector<1x512xf32> -> vector<1x512xf32>
      %779 = arith.addf %778, %arg20 : vector<1x512xf32>
      %780 = arith.addf %779, %9 : vector<1x512xf32>
      %781 = vector.extract_strided_slice %780 {offsets = [0, 0], sizes = [1, 128], strides = [1, 1]} : vector<1x512xf32> to vector<1x128xf32>
      %782 = math.tanh %781 : vector<1x128xf32>
      %cst_251 = arith.constant 5.000000e-01 : f32
      %783 = vector.broadcast %cst_251 : f32 to vector<1x128xf32>
      %784 = arith.mulf %783, %782 : vector<1x128xf32>
      %cst_252 = arith.constant 5.000000e-01 : f32
      %785 = vector.broadcast %cst_252 : f32 to vector<1x128xf32>
      %786 = arith.addf %784, %785 : vector<1x128xf32>
      %787 = vector.extract_strided_slice %780 {offsets = [0, 128], sizes = [1, 128], strides = [1, 1]} : vector<1x512xf32> to vector<1x128xf32>
      %788 = math.tanh %787 : vector<1x128xf32>
      %cst_253 = arith.constant 5.000000e-01 : f32
      %789 = vector.broadcast %cst_253 : f32 to vector<1x128xf32>
      %790 = arith.mulf %789, %788 : vector<1x128xf32>
      %cst_254 = arith.constant 5.000000e-01 : f32
      %791 = vector.broadcast %cst_254 : f32 to vector<1x128xf32>
      %792 = arith.addf %790, %791 : vector<1x128xf32>
      %793 = vector.extract_strided_slice %780 {offsets = [0, 256], sizes = [1, 128], strides = [1, 1]} : vector<1x512xf32> to vector<1x128xf32>
      %794 = math.tanh %793 : vector<1x128xf32>
      %795 = vector.extract_strided_slice %780 {offsets = [0, 384], sizes = [1, 128], strides = [1, 1]} : vector<1x512xf32> to vector<1x128xf32>
      %796 = math.tanh %795 : vector<1x128xf32>
      %cst_255 = arith.constant 5.000000e-01 : f32
      %797 = vector.broadcast %cst_255 : f32 to vector<1x128xf32>
      %798 = arith.mulf %797, %796 : vector<1x128xf32>
      %cst_256 = arith.constant 5.000000e-01 : f32
      %799 = vector.broadcast %cst_256 : f32 to vector<1x128xf32>
      %800 = arith.addf %798, %799 : vector<1x128xf32>
      %801 = arith.mulf %792, %arg18 : vector<1x128xf32>
      %802 = arith.mulf %786, %794 : vector<1x128xf32>
      %803 = arith.addf %801, %802 : vector<1x128xf32>
      %804 = math.tanh %803 : vector<1x128xf32>
      %805 = arith.mulf %800, %804 : vector<1x128xf32>
      %806 = arith.truncf %805 : vector<1x128xf32> to vector<1x128xbf16>
      %cst_257 = arith.constant dense<0.000000e+00> : vector<1x512xf32>
      %807 = tpu.matmul %806, %8, %cst_257 {dimension_numbers = #tpu.dot_dimension_numbers<[1], [0], [0], [1], [0, 0, 1, 1], [], []>} : vector<1x128xbf16>, vector<128x512xbf16>, vector<1x512xf32> -> vector<1x512xf32>
      %cst_258 = arith.constant dense<0.000000e+00> : vector<1x128xf32>
      %808 = tpu.matmul %806, %10, %cst_258 {dimension_numbers = #tpu.dot_dimension_numbers<[1], [0], [0], [1], [0, 0, 1, 1], [], []>} : vector<1x128xbf16>, vector<128x128xbf16>, vector<1x128xf32> -> vector<1x128xf32>
      %809 = arith.addf %808, %11 : vector<1x128xf32>
      %810 = math.tanh %809 : vector<1x128xf32>
      %cst_259 = arith.constant 5.000000e-01 : f32
      %811 = vector.broadcast %cst_259 : f32 to vector<1x128xf32>
      %812 = arith.mulf %811, %810 : vector<1x128xf32>
      %cst_260 = arith.constant 5.000000e-01 : f32
      %813 = vector.broadcast %cst_260 : f32 to vector<1x128xf32>
      %814 = arith.addf %812, %813 : vector<1x128xf32>
      %c0_261 = arith.constant 0 : index
      %c0_262 = arith.constant 0 : index
      %815 = vector.load %arg14[%c0_261, %c0_262] : memref<8x128xf32, #tpu.memory_space<vmem>>, vector<1x128xf32>
      tpu.vector_store %arg14[%c0_261, %c0_262], %814 {strides = array<i32>} : memref<8x128xf32, #tpu.memory_space<vmem>>, vector<1x128xf32>,
      %816 = arith.truncf %814 : vector<1x128xf32> to vector<1x128xbf16>
      %cst_263 = arith.constant dense<0.000000e+00> : vector<1x512xf32>
      %817 = tpu.matmul %816, %4, %cst_263 {dimension_numbers = #tpu.dot_dimension_numbers<[1], [0], [0], [1], [0, 0, 1, 1], [], []>} : vector<1x128xbf16>, vector<128x512xbf16>, vector<1x512xf32> -> vector<1x512xf32>
      %818 = arith.addf %817, %777 : vector<1x512xf32>
      %819 = arith.addf %818, %6 : vector<1x512xf32>
      %820 = vector.extract_strided_slice %819 {offsets = [0, 0], sizes = [1, 128], strides = [1, 1]} : vector<1x512xf32> to vector<1x128xf32>
      %821 = math.tanh %820 : vector<1x128xf32>
      %cst_264 = arith.constant 5.000000e-01 : f32
      %822 = vector.broadcast %cst_264 : f32 to vector<1x128xf32>
      %823 = arith.mulf %822, %821 : vector<1x128xf32>
      %cst_265 = arith.constant 5.000000e-01 : f32
      %824 = vector.broadcast %cst_265 : f32 to vector<1x128xf32>
      %825 = arith.addf %823, %824 : vector<1x128xf32>
      %826 = vector.extract_strided_slice %819 {offsets = [0, 128], sizes = [1, 128], strides = [1, 1]} : vector<1x512xf32> to vector<1x128xf32>
      %827 = math.tanh %826 : vector<1x128xf32>
      %cst_266 = arith.constant 5.000000e-01 : f32
      %828 = vector.broadcast %cst_266 : f32 to vector<1x128xf32>
      %829 = arith.mulf %828, %827 : vector<1x128xf32>
      %cst_267 = arith.constant 5.000000e-01 : f32
      %830 = vector.broadcast %cst_267 : f32 to vector<1x128xf32>
      %831 = arith.addf %829, %830 : vector<1x128xf32>
      %832 = vector.extract_strided_slice %819 {offsets = [0, 256], sizes = [1, 128], strides = [1, 1]} : vector<1x512xf32> to vector<1x128xf32>
      %833 = math.tanh %832 : vector<1x128xf32>
      %834 = vector.extract_strided_slice %819 {offsets = [0, 384], sizes = [1, 128], strides = [1, 1]} : vector<1x512xf32> to vector<1x128xf32>
      %835 = math.tanh %834 : vector<1x128xf32>
      %cst_268 = arith.constant 5.000000e-01 : f32
      %836 = vector.broadcast %cst_268 : f32 to vector<1x128xf32>
      %837 = arith.mulf %836, %835 : vector<1x128xf32>
      %cst_269 = arith.constant 5.000000e-01 : f32
      %838 = vector.broadcast %cst_269 : f32 to vector<1x128xf32>
      %839 = arith.addf %837, %838 : vector<1x128xf32>
      %840 = arith.mulf %831, %773 : vector<1x128xf32>
      %841 = arith.mulf %825, %833 : vector<1x128xf32>
      %842 = arith.addf %840, %841 : vector<1x128xf32>
      %843 = math.tanh %842 : vector<1x128xf32>
      %844 = arith.mulf %839, %843 : vector<1x128xf32>
      %845 = arith.truncf %844 : vector<1x128xf32> to vector<1x128xbf16>
      %cst_270 = arith.constant dense<0.000000e+00> : vector<1x512xf32>
      %846 = tpu.matmul %845, %5, %cst_270 {dimension_numbers = #tpu.dot_dimension_numbers<[1], [0], [0], [1], [0, 0, 1, 1], [], []>} : vector<1x128xbf16>, vector<128x512xbf16>, vector<1x512xf32> -> vector<1x512xf32>
      %cst_271 = arith.constant dense<0.000000e+00> : vector<1x512xf32>
      %847 = tpu.matmul %845, %7, %cst_271 {dimension_numbers = #tpu.dot_dimension_numbers<[1], [0], [0], [1], [0, 0, 1, 1], [], []>} : vector<1x128xbf16>, vector<128x512xbf16>, vector<1x512xf32> -> vector<1x512xf32>
      %848 = arith.addf %847, %807 : vector<1x512xf32>
      %849 = arith.addf %848, %9 : vector<1x512xf32>
      %850 = vector.extract_strided_slice %849 {offsets = [0, 0], sizes = [1, 128], strides = [1, 1]} : vector<1x512xf32> to vector<1x128xf32>
      %851 = math.tanh %850 : vector<1x128xf32>
      %cst_272 = arith.constant 5.000000e-01 : f32
      %852 = vector.broadcast %cst_272 : f32 to vector<1x128xf32>
      %853 = arith.mulf %852, %851 : vector<1x128xf32>
      %cst_273 = arith.constant 5.000000e-01 : f32
      %854 = vector.broadcast %cst_273 : f32 to vector<1x128xf32>
      %855 = arith.addf %853, %854 : vector<1x128xf32>
      %856 = vector.extract_strided_slice %849 {offsets = [0, 128], sizes = [1, 128], strides = [1, 1]} : vector<1x512xf32> to vector<1x128xf32>
      %857 = math.tanh %856 : vector<1x128xf32>
      %cst_274 = arith.constant 5.000000e-01 : f32
      %858 = vector.broadcast %cst_274 : f32 to vector<1x128xf32>
      %859 = arith.mulf %858, %857 : vector<1x128xf32>
      %cst_275 = arith.constant 5.000000e-01 : f32
      %860 = vector.broadcast %cst_275 : f32 to vector<1x128xf32>
      %861 = arith.addf %859, %860 : vector<1x128xf32>
      %862 = vector.extract_strided_slice %849 {offsets = [0, 256], sizes = [1, 128], strides = [1, 1]} : vector<1x512xf32> to vector<1x128xf32>
      %863 = math.tanh %862 : vector<1x128xf32>
      %864 = vector.extract_strided_slice %849 {offsets = [0, 384], sizes = [1, 128], strides = [1, 1]} : vector<1x512xf32> to vector<1x128xf32>
      %865 = math.tanh %864 : vector<1x128xf32>
      %cst_276 = arith.constant 5.000000e-01 : f32
      %866 = vector.broadcast %cst_276 : f32 to vector<1x128xf32>
      %867 = arith.mulf %866, %865 : vector<1x128xf32>
      %cst_277 = arith.constant 5.000000e-01 : f32
      %868 = vector.broadcast %cst_277 : f32 to vector<1x128xf32>
      %869 = arith.addf %867, %868 : vector<1x128xf32>
      %870 = arith.mulf %861, %803 : vector<1x128xf32>
      %871 = arith.mulf %855, %863 : vector<1x128xf32>
      %872 = arith.addf %870, %871 : vector<1x128xf32>
      %873 = math.tanh %872 : vector<1x128xf32>
      %874 = arith.mulf %869, %873 : vector<1x128xf32>
      %875 = arith.truncf %874 : vector<1x128xf32> to vector<1x128xbf16>
      %cst_278 = arith.constant dense<0.000000e+00> : vector<1x512xf32>
      %876 = tpu.matmul %875, %8, %cst_278 {dimension_numbers = #tpu.dot_dimension_numbers<[1], [0], [0], [1], [0, 0, 1, 1], [], []>} : vector<1x128xbf16>, vector<128x512xbf16>, vector<1x512xf32> -> vector<1x512xf32>
      %cst_279 = arith.constant dense<0.000000e+00> : vector<1x128xf32>
      %877 = tpu.matmul %875, %10, %cst_279 {dimension_numbers = #tpu.dot_dimension_numbers<[1], [0], [0], [1], [0, 0, 1, 1], [], []>} : vector<1x128xbf16>, vector<128x128xbf16>, vector<1x128xf32> -> vector<1x128xf32>
      %878 = arith.addf %877, %11 : vector<1x128xf32>
      %879 = math.tanh %878 : vector<1x128xf32>
      %cst_280 = arith.constant 5.000000e-01 : f32
      %880 = vector.broadcast %cst_280 : f32 to vector<1x128xf32>
      %881 = arith.mulf %880, %879 : vector<1x128xf32>
      %cst_281 = arith.constant 5.000000e-01 : f32
      %882 = vector.broadcast %cst_281 : f32 to vector<1x128xf32>
      %883 = arith.addf %881, %882 : vector<1x128xf32>
      %c1_282 = arith.constant 1 : index
      %c0_283 = arith.constant 0 : index
      %884 = vector.load %arg14[%c1_282, %c0_283] : memref<8x128xf32, #tpu.memory_space<vmem>>, vector<1x128xf32>
      tpu.vector_store %arg14[%c1_282, %c0_283], %883 {strides = array<i32>} : memref<8x128xf32, #tpu.memory_space<vmem>>, vector<1x128xf32>,
      %885 = arith.truncf %883 : vector<1x128xf32> to vector<1x128xbf16>
      %cst_284 = arith.constant dense<0.000000e+00> : vector<1x512xf32>
      %886 = tpu.matmul %885, %4, %cst_284 {dimension_numbers = #tpu.dot_dimension_numbers<[1], [0], [0], [1], [0, 0, 1, 1], [], []>} : vector<1x128xbf16>, vector<128x512xbf16>, vector<1x512xf32> -> vector<1x512xf32>
      %887 = arith.addf %886, %846 : vector<1x512xf32>
      %888 = arith.addf %887, %6 : vector<1x512xf32>
      %889 = vector.extract_strided_slice %888 {offsets = [0, 0], sizes = [1, 128], strides = [1, 1]} : vector<1x512xf32> to vector<1x128xf32>
      %890 = math.tanh %889 : vector<1x128xf32>
      %cst_285 = arith.constant 5.000000e-01 : f32
      %891 = vector.broadcast %cst_285 : f32 to vector<1x128xf32>
      %892 = arith.mulf %891, %890 : vector<1x128xf32>
      %cst_286 = arith.constant 5.000000e-01 : f32
      %893 = vector.broadcast %cst_286 : f32 to vector<1x128xf32>
      %894 = arith.addf %892, %893 : vector<1x128xf32>
      %895 = vector.extract_strided_slice %888 {offsets = [0, 128], sizes = [1, 128], strides = [1, 1]} : vector<1x512xf32> to vector<1x128xf32>
      %896 = math.tanh %895 : vector<1x128xf32>
      %cst_287 = arith.constant 5.000000e-01 : f32
      %897 = vector.broadcast %cst_287 : f32 to vector<1x128xf32>
      %898 = arith.mulf %897, %896 : vector<1x128xf32>
      %cst_288 = arith.constant 5.000000e-01 : f32
      %899 = vector.broadcast %cst_288 : f32 to vector<1x128xf32>
      %900 = arith.addf %898, %899 : vector<1x128xf32>
      %901 = vector.extract_strided_slice %888 {offsets = [0, 256], sizes = [1, 128], strides = [1, 1]} : vector<1x512xf32> to vector<1x128xf32>
      %902 = math.tanh %901 : vector<1x128xf32>
      %903 = vector.extract_strided_slice %888 {offsets = [0, 384], sizes = [1, 128], strides = [1, 1]} : vector<1x512xf32> to vector<1x128xf32>
      %904 = math.tanh %903 : vector<1x128xf32>
      %cst_289 = arith.constant 5.000000e-01 : f32
      %905 = vector.broadcast %cst_289 : f32 to vector<1x128xf32>
      %906 = arith.mulf %905, %904 : vector<1x128xf32>
      %cst_290 = arith.constant 5.000000e-01 : f32
      %907 = vector.broadcast %cst_290 : f32 to vector<1x128xf32>
      %908 = arith.addf %906, %907 : vector<1x128xf32>
      %909 = arith.mulf %900, %842 : vector<1x128xf32>
      %910 = arith.mulf %894, %902 : vector<1x128xf32>
      %911 = arith.addf %909, %910 : vector<1x128xf32>
      %912 = math.tanh %911 : vector<1x128xf32>
      %913 = arith.mulf %908, %912 : vector<1x128xf32>
      %914 = arith.truncf %913 : vector<1x128xf32> to vector<1x128xbf16>
      %cst_291 = arith.constant dense<0.000000e+00> : vector<1x512xf32>
      %915 = tpu.matmul %914, %5, %cst_291 {dimension_numbers = #tpu.dot_dimension_numbers<[1], [0], [0], [1], [0, 0, 1, 1], [], []>} : vector<1x128xbf16>, vector<128x512xbf16>, vector<1x512xf32> -> vector<1x512xf32>
      %cst_292 = arith.constant dense<0.000000e+00> : vector<1x512xf32>
      %916 = tpu.matmul %914, %7, %cst_292 {dimension_numbers = #tpu.dot_dimension_numbers<[1], [0], [0], [1], [0, 0, 1, 1], [], []>} : vector<1x128xbf16>, vector<128x512xbf16>, vector<1x512xf32> -> vector<1x512xf32>
      %917 = arith.addf %916, %876 : vector<1x512xf32>
      %918 = arith.addf %917, %9 : vector<1x512xf32>
      %919 = vector.extract_strided_slice %918 {offsets = [0, 0], sizes = [1, 128], strides = [1, 1]} : vector<1x512xf32> to vector<1x128xf32>
      %920 = math.tanh %919 : vector<1x128xf32>
      %cst_293 = arith.constant 5.000000e-01 : f32
      %921 = vector.broadcast %cst_293 : f32 to vector<1x128xf32>
      %922 = arith.mulf %921, %920 : vector<1x128xf32>
      %cst_294 = arith.constant 5.000000e-01 : f32
      %923 = vector.broadcast %cst_294 : f32 to vector<1x128xf32>
      %924 = arith.addf %922, %923 : vector<1x128xf32>
      %925 = vector.extract_strided_slice %918 {offsets = [0, 128], sizes = [1, 128], strides = [1, 1]} : vector<1x512xf32> to vector<1x128xf32>
      %926 = math.tanh %925 : vector<1x128xf32>
      %cst_295 = arith.constant 5.000000e-01 : f32
      %927 = vector.broadcast %cst_295 : f32 to vector<1x128xf32>
      %928 = arith.mulf %927, %926 : vector<1x128xf32>
      %cst_296 = arith.constant 5.000000e-01 : f32
      %929 = vector.broadcast %cst_296 : f32 to vector<1x128xf32>
      %930 = arith.addf %928, %929 : vector<1x128xf32>
      %931 = vector.extract_strided_slice %918 {offsets = [0, 256], sizes = [1, 128], strides = [1, 1]} : vector<1x512xf32> to vector<1x128xf32>
      %932 = math.tanh %931 : vector<1x128xf32>
      %933 = vector.extract_strided_slice %918 {offsets = [0, 384], sizes = [1, 128], strides = [1, 1]} : vector<1x512xf32> to vector<1x128xf32>
      %934 = math.tanh %933 : vector<1x128xf32>
      %cst_297 = arith.constant 5.000000e-01 : f32
      %935 = vector.broadcast %cst_297 : f32 to vector<1x128xf32>
      %936 = arith.mulf %935, %934 : vector<1x128xf32>
      %cst_298 = arith.constant 5.000000e-01 : f32
      %937 = vector.broadcast %cst_298 : f32 to vector<1x128xf32>
      %938 = arith.addf %936, %937 : vector<1x128xf32>
      %939 = arith.mulf %930, %872 : vector<1x128xf32>
      %940 = arith.mulf %924, %932 : vector<1x128xf32>
      %941 = arith.addf %939, %940 : vector<1x128xf32>
      %942 = math.tanh %941 : vector<1x128xf32>
      %943 = arith.mulf %938, %942 : vector<1x128xf32>
      %944 = arith.truncf %943 : vector<1x128xf32> to vector<1x128xbf16>
      %cst_299 = arith.constant dense<0.000000e+00> : vector<1x512xf32>
      %945 = tpu.matmul %944, %8, %cst_299 {dimension_numbers = #tpu.dot_dimension_numbers<[1], [0], [0], [1], [0, 0, 1, 1], [], []>} : vector<1x128xbf16>, vector<128x512xbf16>, vector<1x512xf32> -> vector<1x512xf32>
      %cst_300 = arith.constant dense<0.000000e+00> : vector<1x128xf32>
      %946 = tpu.matmul %944, %10, %cst_300 {dimension_numbers = #tpu.dot_dimension_numbers<[1], [0], [0], [1], [0, 0, 1, 1], [], []>} : vector<1x128xbf16>, vector<128x128xbf16>, vector<1x128xf32> -> vector<1x128xf32>
      %947 = arith.addf %946, %11 : vector<1x128xf32>
      %948 = math.tanh %947 : vector<1x128xf32>
      %cst_301 = arith.constant 5.000000e-01 : f32
      %949 = vector.broadcast %cst_301 : f32 to vector<1x128xf32>
      %950 = arith.mulf %949, %948 : vector<1x128xf32>
      %cst_302 = arith.constant 5.000000e-01 : f32
      %951 = vector.broadcast %cst_302 : f32 to vector<1x128xf32>
      %952 = arith.addf %950, %951 : vector<1x128xf32>
      %c2_303 = arith.constant 2 : index
      %c0_304 = arith.constant 0 : index
      %953 = vector.load %arg14[%c2_303, %c0_304] : memref<8x128xf32, #tpu.memory_space<vmem>>, vector<1x128xf32>
      tpu.vector_store %arg14[%c2_303, %c0_304], %952 {strides = array<i32>} : memref<8x128xf32, #tpu.memory_space<vmem>>, vector<1x128xf32>,
      %954 = arith.truncf %952 : vector<1x128xf32> to vector<1x128xbf16>
      %cst_305 = arith.constant dense<0.000000e+00> : vector<1x512xf32>
      %955 = tpu.matmul %954, %4, %cst_305 {dimension_numbers = #tpu.dot_dimension_numbers<[1], [0], [0], [1], [0, 0, 1, 1], [], []>} : vector<1x128xbf16>, vector<128x512xbf16>, vector<1x512xf32> -> vector<1x512xf32>
      %956 = arith.addf %955, %915 : vector<1x512xf32>
      %957 = arith.addf %956, %6 : vector<1x512xf32>
      %958 = vector.extract_strided_slice %957 {offsets = [0, 0], sizes = [1, 128], strides = [1, 1]} : vector<1x512xf32> to vector<1x128xf32>
      %959 = math.tanh %958 : vector<1x128xf32>
      %cst_306 = arith.constant 5.000000e-01 : f32
      %960 = vector.broadcast %cst_306 : f32 to vector<1x128xf32>
      %961 = arith.mulf %960, %959 : vector<1x128xf32>
      %cst_307 = arith.constant 5.000000e-01 : f32
      %962 = vector.broadcast %cst_307 : f32 to vector<1x128xf32>
      %963 = arith.addf %961, %962 : vector<1x128xf32>
      %964 = vector.extract_strided_slice %957 {offsets = [0, 128], sizes = [1, 128], strides = [1, 1]} : vector<1x512xf32> to vector<1x128xf32>
      %965 = math.tanh %964 : vector<1x128xf32>
      %cst_308 = arith.constant 5.000000e-01 : f32
      %966 = vector.broadcast %cst_308 : f32 to vector<1x128xf32>
      %967 = arith.mulf %966, %965 : vector<1x128xf32>
      %cst_309 = arith.constant 5.000000e-01 : f32
      %968 = vector.broadcast %cst_309 : f32 to vector<1x128xf32>
      %969 = arith.addf %967, %968 : vector<1x128xf32>
      %970 = vector.extract_strided_slice %957 {offsets = [0, 256], sizes = [1, 128], strides = [1, 1]} : vector<1x512xf32> to vector<1x128xf32>
      %971 = math.tanh %970 : vector<1x128xf32>
      %972 = vector.extract_strided_slice %957 {offsets = [0, 384], sizes = [1, 128], strides = [1, 1]} : vector<1x512xf32> to vector<1x128xf32>
      %973 = math.tanh %972 : vector<1x128xf32>
      %cst_310 = arith.constant 5.000000e-01 : f32
      %974 = vector.broadcast %cst_310 : f32 to vector<1x128xf32>
      %975 = arith.mulf %974, %973 : vector<1x128xf32>
      %cst_311 = arith.constant 5.000000e-01 : f32
      %976 = vector.broadcast %cst_311 : f32 to vector<1x128xf32>
      %977 = arith.addf %975, %976 : vector<1x128xf32>
      %978 = arith.mulf %969, %911 : vector<1x128xf32>
      %979 = arith.mulf %963, %971 : vector<1x128xf32>
      %980 = arith.addf %978, %979 : vector<1x128xf32>
      %981 = math.tanh %980 : vector<1x128xf32>
      %982 = arith.mulf %977, %981 : vector<1x128xf32>
      %983 = arith.truncf %982 : vector<1x128xf32> to vector<1x128xbf16>
      %cst_312 = arith.constant dense<0.000000e+00> : vector<1x512xf32>
      %984 = tpu.matmul %983, %5, %cst_312 {dimension_numbers = #tpu.dot_dimension_numbers<[1], [0], [0], [1], [0, 0, 1, 1], [], []>} : vector<1x128xbf16>, vector<128x512xbf16>, vector<1x512xf32> -> vector<1x512xf32>
      %cst_313 = arith.constant dense<0.000000e+00> : vector<1x512xf32>
      %985 = tpu.matmul %983, %7, %cst_313 {dimension_numbers = #tpu.dot_dimension_numbers<[1], [0], [0], [1], [0, 0, 1, 1], [], []>} : vector<1x128xbf16>, vector<128x512xbf16>, vector<1x512xf32> -> vector<1x512xf32>
      %986 = arith.addf %985, %945 : vector<1x512xf32>
      %987 = arith.addf %986, %9 : vector<1x512xf32>
      %988 = vector.extract_strided_slice %987 {offsets = [0, 0], sizes = [1, 128], strides = [1, 1]} : vector<1x512xf32> to vector<1x128xf32>
      %989 = math.tanh %988 : vector<1x128xf32>
      %cst_314 = arith.constant 5.000000e-01 : f32
      %990 = vector.broadcast %cst_314 : f32 to vector<1x128xf32>
      %991 = arith.mulf %990, %989 : vector<1x128xf32>
      %cst_315 = arith.constant 5.000000e-01 : f32
      %992 = vector.broadcast %cst_315 : f32 to vector<1x128xf32>
      %993 = arith.addf %991, %992 : vector<1x128xf32>
      %994 = vector.extract_strided_slice %987 {offsets = [0, 128], sizes = [1, 128], strides = [1, 1]} : vector<1x512xf32> to vector<1x128xf32>
      %995 = math.tanh %994 : vector<1x128xf32>
      %cst_316 = arith.constant 5.000000e-01 : f32
      %996 = vector.broadcast %cst_316 : f32 to vector<1x128xf32>
      %997 = arith.mulf %996, %995 : vector<1x128xf32>
      %cst_317 = arith.constant 5.000000e-01 : f32
      %998 = vector.broadcast %cst_317 : f32 to vector<1x128xf32>
      %999 = arith.addf %997, %998 : vector<1x128xf32>
      %1000 = vector.extract_strided_slice %987 {offsets = [0, 256], sizes = [1, 128], strides = [1, 1]} : vector<1x512xf32> to vector<1x128xf32>
      %1001 = math.tanh %1000 : vector<1x128xf32>
      %1002 = vector.extract_strided_slice %987 {offsets = [0, 384], sizes = [1, 128], strides = [1, 1]} : vector<1x512xf32> to vector<1x128xf32>
      %1003 = math.tanh %1002 : vector<1x128xf32>
      %cst_318 = arith.constant 5.000000e-01 : f32
      %1004 = vector.broadcast %cst_318 : f32 to vector<1x128xf32>
      %1005 = arith.mulf %1004, %1003 : vector<1x128xf32>
      %cst_319 = arith.constant 5.000000e-01 : f32
      %1006 = vector.broadcast %cst_319 : f32 to vector<1x128xf32>
      %1007 = arith.addf %1005, %1006 : vector<1x128xf32>
      %1008 = arith.mulf %999, %941 : vector<1x128xf32>
      %1009 = arith.mulf %993, %1001 : vector<1x128xf32>
      %1010 = arith.addf %1008, %1009 : vector<1x128xf32>
      %1011 = math.tanh %1010 : vector<1x128xf32>
      %1012 = arith.mulf %1007, %1011 : vector<1x128xf32>
      %1013 = arith.truncf %1012 : vector<1x128xf32> to vector<1x128xbf16>
      %cst_320 = arith.constant dense<0.000000e+00> : vector<1x512xf32>
      %1014 = tpu.matmul %1013, %8, %cst_320 {dimension_numbers = #tpu.dot_dimension_numbers<[1], [0], [0], [1], [0, 0, 1, 1], [], []>} : vector<1x128xbf16>, vector<128x512xbf16>, vector<1x512xf32> -> vector<1x512xf32>
      %cst_321 = arith.constant dense<0.000000e+00> : vector<1x128xf32>
      %1015 = tpu.matmul %1013, %10, %cst_321 {dimension_numbers = #tpu.dot_dimension_numbers<[1], [0], [0], [1], [0, 0, 1, 1], [], []>} : vector<1x128xbf16>, vector<128x128xbf16>, vector<1x128xf32> -> vector<1x128xf32>
      %1016 = arith.addf %1015, %11 : vector<1x128xf32>
      %1017 = math.tanh %1016 : vector<1x128xf32>
      %cst_322 = arith.constant 5.000000e-01 : f32
      %1018 = vector.broadcast %cst_322 : f32 to vector<1x128xf32>
      %1019 = arith.mulf %1018, %1017 : vector<1x128xf32>
      %cst_323 = arith.constant 5.000000e-01 : f32
      %1020 = vector.broadcast %cst_323 : f32 to vector<1x128xf32>
      %1021 = arith.addf %1019, %1020 : vector<1x128xf32>
      %c3_324 = arith.constant 3 : index
      %c0_325 = arith.constant 0 : index
      %1022 = vector.load %arg14[%c3_324, %c0_325] : memref<8x128xf32, #tpu.memory_space<vmem>>, vector<1x128xf32>
      tpu.vector_store %arg14[%c3_324, %c0_325], %1021 {strides = array<i32>} : memref<8x128xf32, #tpu.memory_space<vmem>>, vector<1x128xf32>,
      %1023 = arith.truncf %1021 : vector<1x128xf32> to vector<1x128xbf16>
      %cst_326 = arith.constant dense<0.000000e+00> : vector<1x512xf32>
      %1024 = tpu.matmul %1023, %4, %cst_326 {dimension_numbers = #tpu.dot_dimension_numbers<[1], [0], [0], [1], [0, 0, 1, 1], [], []>} : vector<1x128xbf16>, vector<128x512xbf16>, vector<1x512xf32> -> vector<1x512xf32>
      %1025 = arith.addf %1024, %984 : vector<1x512xf32>
      %1026 = arith.addf %1025, %6 : vector<1x512xf32>
      %1027 = vector.extract_strided_slice %1026 {offsets = [0, 0], sizes = [1, 128], strides = [1, 1]} : vector<1x512xf32> to vector<1x128xf32>
      %1028 = math.tanh %1027 : vector<1x128xf32>
      %cst_327 = arith.constant 5.000000e-01 : f32
      %1029 = vector.broadcast %cst_327 : f32 to vector<1x128xf32>
      %1030 = arith.mulf %1029, %1028 : vector<1x128xf32>
      %cst_328 = arith.constant 5.000000e-01 : f32
      %1031 = vector.broadcast %cst_328 : f32 to vector<1x128xf32>
      %1032 = arith.addf %1030, %1031 : vector<1x128xf32>
      %1033 = vector.extract_strided_slice %1026 {offsets = [0, 128], sizes = [1, 128], strides = [1, 1]} : vector<1x512xf32> to vector<1x128xf32>
      %1034 = math.tanh %1033 : vector<1x128xf32>
      %cst_329 = arith.constant 5.000000e-01 : f32
      %1035 = vector.broadcast %cst_329 : f32 to vector<1x128xf32>
      %1036 = arith.mulf %1035, %1034 : vector<1x128xf32>
      %cst_330 = arith.constant 5.000000e-01 : f32
      %1037 = vector.broadcast %cst_330 : f32 to vector<1x128xf32>
      %1038 = arith.addf %1036, %1037 : vector<1x128xf32>
      %1039 = vector.extract_strided_slice %1026 {offsets = [0, 256], sizes = [1, 128], strides = [1, 1]} : vector<1x512xf32> to vector<1x128xf32>
      %1040 = math.tanh %1039 : vector<1x128xf32>
      %1041 = vector.extract_strided_slice %1026 {offsets = [0, 384], sizes = [1, 128], strides = [1, 1]} : vector<1x512xf32> to vector<1x128xf32>
      %1042 = math.tanh %1041 : vector<1x128xf32>
      %cst_331 = arith.constant 5.000000e-01 : f32
      %1043 = vector.broadcast %cst_331 : f32 to vector<1x128xf32>
      %1044 = arith.mulf %1043, %1042 : vector<1x128xf32>
      %cst_332 = arith.constant 5.000000e-01 : f32
      %1045 = vector.broadcast %cst_332 : f32 to vector<1x128xf32>
      %1046 = arith.addf %1044, %1045 : vector<1x128xf32>
      %1047 = arith.mulf %1038, %980 : vector<1x128xf32>
      %1048 = arith.mulf %1032, %1040 : vector<1x128xf32>
      %1049 = arith.addf %1047, %1048 : vector<1x128xf32>
      %1050 = math.tanh %1049 : vector<1x128xf32>
      %1051 = arith.mulf %1046, %1050 : vector<1x128xf32>
      %1052 = arith.truncf %1051 : vector<1x128xf32> to vector<1x128xbf16>
      %cst_333 = arith.constant dense<0.000000e+00> : vector<1x512xf32>
      %1053 = tpu.matmul %1052, %5, %cst_333 {dimension_numbers = #tpu.dot_dimension_numbers<[1], [0], [0], [1], [0, 0, 1, 1], [], []>} : vector<1x128xbf16>, vector<128x512xbf16>, vector<1x512xf32> -> vector<1x512xf32>
      %cst_334 = arith.constant dense<0.000000e+00> : vector<1x512xf32>
      %1054 = tpu.matmul %1052, %7, %cst_334 {dimension_numbers = #tpu.dot_dimension_numbers<[1], [0], [0], [1], [0, 0, 1, 1], [], []>} : vector<1x128xbf16>, vector<128x512xbf16>, vector<1x512xf32> -> vector<1x512xf32>
      %1055 = arith.addf %1054, %1014 : vector<1x512xf32>
      %1056 = arith.addf %1055, %9 : vector<1x512xf32>
      %1057 = vector.extract_strided_slice %1056 {offsets = [0, 0], sizes = [1, 128], strides = [1, 1]} : vector<1x512xf32> to vector<1x128xf32>
      %1058 = math.tanh %1057 : vector<1x128xf32>
      %cst_335 = arith.constant 5.000000e-01 : f32
      %1059 = vector.broadcast %cst_335 : f32 to vector<1x128xf32>
      %1060 = arith.mulf %1059, %1058 : vector<1x128xf32>
      %cst_336 = arith.constant 5.000000e-01 : f32
      %1061 = vector.broadcast %cst_336 : f32 to vector<1x128xf32>
      %1062 = arith.addf %1060, %1061 : vector<1x128xf32>
      %1063 = vector.extract_strided_slice %1056 {offsets = [0, 128], sizes = [1, 128], strides = [1, 1]} : vector<1x512xf32> to vector<1x128xf32>
      %1064 = math.tanh %1063 : vector<1x128xf32>
      %cst_337 = arith.constant 5.000000e-01 : f32
      %1065 = vector.broadcast %cst_337 : f32 to vector<1x128xf32>
      %1066 = arith.mulf %1065, %1064 : vector<1x128xf32>
      %cst_338 = arith.constant 5.000000e-01 : f32
      %1067 = vector.broadcast %cst_338 : f32 to vector<1x128xf32>
      %1068 = arith.addf %1066, %1067 : vector<1x128xf32>
      %1069 = vector.extract_strided_slice %1056 {offsets = [0, 256], sizes = [1, 128], strides = [1, 1]} : vector<1x512xf32> to vector<1x128xf32>
      %1070 = math.tanh %1069 : vector<1x128xf32>
      %1071 = vector.extract_strided_slice %1056 {offsets = [0, 384], sizes = [1, 128], strides = [1, 1]} : vector<1x512xf32> to vector<1x128xf32>
      %1072 = math.tanh %1071 : vector<1x128xf32>
      %cst_339 = arith.constant 5.000000e-01 : f32
      %1073 = vector.broadcast %cst_339 : f32 to vector<1x128xf32>
      %1074 = arith.mulf %1073, %1072 : vector<1x128xf32>
      %cst_340 = arith.constant 5.000000e-01 : f32
      %1075 = vector.broadcast %cst_340 : f32 to vector<1x128xf32>
      %1076 = arith.addf %1074, %1075 : vector<1x128xf32>
      %1077 = arith.mulf %1068, %1010 : vector<1x128xf32>
      %1078 = arith.mulf %1062, %1070 : vector<1x128xf32>
      %1079 = arith.addf %1077, %1078 : vector<1x128xf32>
      %1080 = math.tanh %1079 : vector<1x128xf32>
      %1081 = arith.mulf %1076, %1080 : vector<1x128xf32>
      %1082 = arith.truncf %1081 : vector<1x128xf32> to vector<1x128xbf16>
      %cst_341 = arith.constant dense<0.000000e+00> : vector<1x512xf32>
      %1083 = tpu.matmul %1082, %8, %cst_341 {dimension_numbers = #tpu.dot_dimension_numbers<[1], [0], [0], [1], [0, 0, 1, 1], [], []>} : vector<1x128xbf16>, vector<128x512xbf16>, vector<1x512xf32> -> vector<1x512xf32>
      %cst_342 = arith.constant dense<0.000000e+00> : vector<1x128xf32>
      %1084 = tpu.matmul %1082, %10, %cst_342 {dimension_numbers = #tpu.dot_dimension_numbers<[1], [0], [0], [1], [0, 0, 1, 1], [], []>} : vector<1x128xbf16>, vector<128x128xbf16>, vector<1x128xf32> -> vector<1x128xf32>
      %1085 = arith.addf %1084, %11 : vector<1x128xf32>
      %1086 = math.tanh %1085 : vector<1x128xf32>
      %cst_343 = arith.constant 5.000000e-01 : f32
      %1087 = vector.broadcast %cst_343 : f32 to vector<1x128xf32>
      %1088 = arith.mulf %1087, %1086 : vector<1x128xf32>
      %cst_344 = arith.constant 5.000000e-01 : f32
      %1089 = vector.broadcast %cst_344 : f32 to vector<1x128xf32>
      %1090 = arith.addf %1088, %1089 : vector<1x128xf32>
      %c4_345 = arith.constant 4 : index
      %c0_346 = arith.constant 0 : index
      %1091 = vector.load %arg14[%c4_345, %c0_346] : memref<8x128xf32, #tpu.memory_space<vmem>>, vector<1x128xf32>
      tpu.vector_store %arg14[%c4_345, %c0_346], %1090 {strides = array<i32>} : memref<8x128xf32, #tpu.memory_space<vmem>>, vector<1x128xf32>,
      %1092 = arith.truncf %1090 : vector<1x128xf32> to vector<1x128xbf16>
      %cst_347 = arith.constant dense<0.000000e+00> : vector<1x512xf32>
      %1093 = tpu.matmul %1092, %4, %cst_347 {dimension_numbers = #tpu.dot_dimension_numbers<[1], [0], [0], [1], [0, 0, 1, 1], [], []>} : vector<1x128xbf16>, vector<128x512xbf16>, vector<1x512xf32> -> vector<1x512xf32>
      %1094 = arith.addf %1093, %1053 : vector<1x512xf32>
      %1095 = arith.addf %1094, %6 : vector<1x512xf32>
      %1096 = vector.extract_strided_slice %1095 {offsets = [0, 0], sizes = [1, 128], strides = [1, 1]} : vector<1x512xf32> to vector<1x128xf32>
      %1097 = math.tanh %1096 : vector<1x128xf32>
      %cst_348 = arith.constant 5.000000e-01 : f32
      %1098 = vector.broadcast %cst_348 : f32 to vector<1x128xf32>
      %1099 = arith.mulf %1098, %1097 : vector<1x128xf32>
      %cst_349 = arith.constant 5.000000e-01 : f32
      %1100 = vector.broadcast %cst_349 : f32 to vector<1x128xf32>
      %1101 = arith.addf %1099, %1100 : vector<1x128xf32>
      %1102 = vector.extract_strided_slice %1095 {offsets = [0, 128], sizes = [1, 128], strides = [1, 1]} : vector<1x512xf32> to vector<1x128xf32>
      %1103 = math.tanh %1102 : vector<1x128xf32>
      %cst_350 = arith.constant 5.000000e-01 : f32
      %1104 = vector.broadcast %cst_350 : f32 to vector<1x128xf32>
      %1105 = arith.mulf %1104, %1103 : vector<1x128xf32>
      %cst_351 = arith.constant 5.000000e-01 : f32
      %1106 = vector.broadcast %cst_351 : f32 to vector<1x128xf32>
      %1107 = arith.addf %1105, %1106 : vector<1x128xf32>
      %1108 = vector.extract_strided_slice %1095 {offsets = [0, 256], sizes = [1, 128], strides = [1, 1]} : vector<1x512xf32> to vector<1x128xf32>
      %1109 = math.tanh %1108 : vector<1x128xf32>
      %1110 = vector.extract_strided_slice %1095 {offsets = [0, 384], sizes = [1, 128], strides = [1, 1]} : vector<1x512xf32> to vector<1x128xf32>
      %1111 = math.tanh %1110 : vector<1x128xf32>
      %cst_352 = arith.constant 5.000000e-01 : f32
      %1112 = vector.broadcast %cst_352 : f32 to vector<1x128xf32>
      %1113 = arith.mulf %1112, %1111 : vector<1x128xf32>
      %cst_353 = arith.constant 5.000000e-01 : f32
      %1114 = vector.broadcast %cst_353 : f32 to vector<1x128xf32>
      %1115 = arith.addf %1113, %1114 : vector<1x128xf32>
      %1116 = arith.mulf %1107, %1049 : vector<1x128xf32>
      %1117 = arith.mulf %1101, %1109 : vector<1x128xf32>
      %1118 = arith.addf %1116, %1117 : vector<1x128xf32>
      %1119 = math.tanh %1118 : vector<1x128xf32>
      %1120 = arith.mulf %1115, %1119 : vector<1x128xf32>
      %1121 = arith.truncf %1120 : vector<1x128xf32> to vector<1x128xbf16>
      %cst_354 = arith.constant dense<0.000000e+00> : vector<1x512xf32>
      %1122 = tpu.matmul %1121, %5, %cst_354 {dimension_numbers = #tpu.dot_dimension_numbers<[1], [0], [0], [1], [0, 0, 1, 1], [], []>} : vector<1x128xbf16>, vector<128x512xbf16>, vector<1x512xf32> -> vector<1x512xf32>
      %cst_355 = arith.constant dense<0.000000e+00> : vector<1x512xf32>
      %1123 = tpu.matmul %1121, %7, %cst_355 {dimension_numbers = #tpu.dot_dimension_numbers<[1], [0], [0], [1], [0, 0, 1, 1], [], []>} : vector<1x128xbf16>, vector<128x512xbf16>, vector<1x512xf32> -> vector<1x512xf32>
      %1124 = arith.addf %1123, %1083 : vector<1x512xf32>
      %1125 = arith.addf %1124, %9 : vector<1x512xf32>
      %1126 = vector.extract_strided_slice %1125 {offsets = [0, 0], sizes = [1, 128], strides = [1, 1]} : vector<1x512xf32> to vector<1x128xf32>
      %1127 = math.tanh %1126 : vector<1x128xf32>
      %cst_356 = arith.constant 5.000000e-01 : f32
      %1128 = vector.broadcast %cst_356 : f32 to vector<1x128xf32>
      %1129 = arith.mulf %1128, %1127 : vector<1x128xf32>
      %cst_357 = arith.constant 5.000000e-01 : f32
      %1130 = vector.broadcast %cst_357 : f32 to vector<1x128xf32>
      %1131 = arith.addf %1129, %1130 : vector<1x128xf32>
      %1132 = vector.extract_strided_slice %1125 {offsets = [0, 128], sizes = [1, 128], strides = [1, 1]} : vector<1x512xf32> to vector<1x128xf32>
      %1133 = math.tanh %1132 : vector<1x128xf32>
      %cst_358 = arith.constant 5.000000e-01 : f32
      %1134 = vector.broadcast %cst_358 : f32 to vector<1x128xf32>
      %1135 = arith.mulf %1134, %1133 : vector<1x128xf32>
      %cst_359 = arith.constant 5.000000e-01 : f32
      %1136 = vector.broadcast %cst_359 : f32 to vector<1x128xf32>
      %1137 = arith.addf %1135, %1136 : vector<1x128xf32>
      %1138 = vector.extract_strided_slice %1125 {offsets = [0, 256], sizes = [1, 128], strides = [1, 1]} : vector<1x512xf32> to vector<1x128xf32>
      %1139 = math.tanh %1138 : vector<1x128xf32>
      %1140 = vector.extract_strided_slice %1125 {offsets = [0, 384], sizes = [1, 128], strides = [1, 1]} : vector<1x512xf32> to vector<1x128xf32>
      %1141 = math.tanh %1140 : vector<1x128xf32>
      %cst_360 = arith.constant 5.000000e-01 : f32
      %1142 = vector.broadcast %cst_360 : f32 to vector<1x128xf32>
      %1143 = arith.mulf %1142, %1141 : vector<1x128xf32>
      %cst_361 = arith.constant 5.000000e-01 : f32
      %1144 = vector.broadcast %cst_361 : f32 to vector<1x128xf32>
      %1145 = arith.addf %1143, %1144 : vector<1x128xf32>
      %1146 = arith.mulf %1137, %1079 : vector<1x128xf32>
      %1147 = arith.mulf %1131, %1139 : vector<1x128xf32>
      %1148 = arith.addf %1146, %1147 : vector<1x128xf32>
      %1149 = math.tanh %1148 : vector<1x128xf32>
      %1150 = arith.mulf %1145, %1149 : vector<1x128xf32>
      %1151 = arith.truncf %1150 : vector<1x128xf32> to vector<1x128xbf16>
      %cst_362 = arith.constant dense<0.000000e+00> : vector<1x512xf32>
      %1152 = tpu.matmul %1151, %8, %cst_362 {dimension_numbers = #tpu.dot_dimension_numbers<[1], [0], [0], [1], [0, 0, 1, 1], [], []>} : vector<1x128xbf16>, vector<128x512xbf16>, vector<1x512xf32> -> vector<1x512xf32>
      %cst_363 = arith.constant dense<0.000000e+00> : vector<1x128xf32>
      %1153 = tpu.matmul %1151, %10, %cst_363 {dimension_numbers = #tpu.dot_dimension_numbers<[1], [0], [0], [1], [0, 0, 1, 1], [], []>} : vector<1x128xbf16>, vector<128x128xbf16>, vector<1x128xf32> -> vector<1x128xf32>
      %1154 = arith.addf %1153, %11 : vector<1x128xf32>
      %1155 = math.tanh %1154 : vector<1x128xf32>
      %cst_364 = arith.constant 5.000000e-01 : f32
      %1156 = vector.broadcast %cst_364 : f32 to vector<1x128xf32>
      %1157 = arith.mulf %1156, %1155 : vector<1x128xf32>
      %cst_365 = arith.constant 5.000000e-01 : f32
      %1158 = vector.broadcast %cst_365 : f32 to vector<1x128xf32>
      %1159 = arith.addf %1157, %1158 : vector<1x128xf32>
      %c5_366 = arith.constant 5 : index
      %c0_367 = arith.constant 0 : index
      %1160 = vector.load %arg14[%c5_366, %c0_367] : memref<8x128xf32, #tpu.memory_space<vmem>>, vector<1x128xf32>
      tpu.vector_store %arg14[%c5_366, %c0_367], %1159 {strides = array<i32>} : memref<8x128xf32, #tpu.memory_space<vmem>>, vector<1x128xf32>,
      %1161 = arith.truncf %1159 : vector<1x128xf32> to vector<1x128xbf16>
      %cst_368 = arith.constant dense<0.000000e+00> : vector<1x512xf32>
      %1162 = tpu.matmul %1161, %4, %cst_368 {dimension_numbers = #tpu.dot_dimension_numbers<[1], [0], [0], [1], [0, 0, 1, 1], [], []>} : vector<1x128xbf16>, vector<128x512xbf16>, vector<1x512xf32> -> vector<1x512xf32>
      %1163 = arith.addf %1162, %1122 : vector<1x512xf32>
      %1164 = arith.addf %1163, %6 : vector<1x512xf32>
      %1165 = vector.extract_strided_slice %1164 {offsets = [0, 0], sizes = [1, 128], strides = [1, 1]} : vector<1x512xf32> to vector<1x128xf32>
      %1166 = math.tanh %1165 : vector<1x128xf32>
      %cst_369 = arith.constant 5.000000e-01 : f32
      %1167 = vector.broadcast %cst_369 : f32 to vector<1x128xf32>
      %1168 = arith.mulf %1167, %1166 : vector<1x128xf32>
      %cst_370 = arith.constant 5.000000e-01 : f32
      %1169 = vector.broadcast %cst_370 : f32 to vector<1x128xf32>
      %1170 = arith.addf %1168, %1169 : vector<1x128xf32>
      %1171 = vector.extract_strided_slice %1164 {offsets = [0, 128], sizes = [1, 128], strides = [1, 1]} : vector<1x512xf32> to vector<1x128xf32>
      %1172 = math.tanh %1171 : vector<1x128xf32>
      %cst_371 = arith.constant 5.000000e-01 : f32
      %1173 = vector.broadcast %cst_371 : f32 to vector<1x128xf32>
      %1174 = arith.mulf %1173, %1172 : vector<1x128xf32>
      %cst_372 = arith.constant 5.000000e-01 : f32
      %1175 = vector.broadcast %cst_372 : f32 to vector<1x128xf32>
      %1176 = arith.addf %1174, %1175 : vector<1x128xf32>
      %1177 = vector.extract_strided_slice %1164 {offsets = [0, 256], sizes = [1, 128], strides = [1, 1]} : vector<1x512xf32> to vector<1x128xf32>
      %1178 = math.tanh %1177 : vector<1x128xf32>
      %1179 = vector.extract_strided_slice %1164 {offsets = [0, 384], sizes = [1, 128], strides = [1, 1]} : vector<1x512xf32> to vector<1x128xf32>
      %1180 = math.tanh %1179 : vector<1x128xf32>
      %cst_373 = arith.constant 5.000000e-01 : f32
      %1181 = vector.broadcast %cst_373 : f32 to vector<1x128xf32>
      %1182 = arith.mulf %1181, %1180 : vector<1x128xf32>
      %cst_374 = arith.constant 5.000000e-01 : f32
      %1183 = vector.broadcast %cst_374 : f32 to vector<1x128xf32>
      %1184 = arith.addf %1182, %1183 : vector<1x128xf32>
      %1185 = arith.mulf %1176, %1118 : vector<1x128xf32>
      %1186 = arith.mulf %1170, %1178 : vector<1x128xf32>
      %1187 = arith.addf %1185, %1186 : vector<1x128xf32>
      %1188 = math.tanh %1187 : vector<1x128xf32>
      %1189 = arith.mulf %1184, %1188 : vector<1x128xf32>
      %1190 = arith.truncf %1189 : vector<1x128xf32> to vector<1x128xbf16>
      %cst_375 = arith.constant dense<0.000000e+00> : vector<1x512xf32>
      %1191 = tpu.matmul %1190, %5, %cst_375 {dimension_numbers = #tpu.dot_dimension_numbers<[1], [0], [0], [1], [0, 0, 1, 1], [], []>} : vector<1x128xbf16>, vector<128x512xbf16>, vector<1x512xf32> -> vector<1x512xf32>
      %cst_376 = arith.constant dense<0.000000e+00> : vector<1x512xf32>
      %1192 = tpu.matmul %1190, %7, %cst_376 {dimension_numbers = #tpu.dot_dimension_numbers<[1], [0], [0], [1], [0, 0, 1, 1], [], []>} : vector<1x128xbf16>, vector<128x512xbf16>, vector<1x512xf32> -> vector<1x512xf32>
      %1193 = arith.addf %1192, %1152 : vector<1x512xf32>
      %1194 = arith.addf %1193, %9 : vector<1x512xf32>
      %1195 = vector.extract_strided_slice %1194 {offsets = [0, 0], sizes = [1, 128], strides = [1, 1]} : vector<1x512xf32> to vector<1x128xf32>
      %1196 = math.tanh %1195 : vector<1x128xf32>
      %cst_377 = arith.constant 5.000000e-01 : f32
      %1197 = vector.broadcast %cst_377 : f32 to vector<1x128xf32>
      %1198 = arith.mulf %1197, %1196 : vector<1x128xf32>
      %cst_378 = arith.constant 5.000000e-01 : f32
      %1199 = vector.broadcast %cst_378 : f32 to vector<1x128xf32>
      %1200 = arith.addf %1198, %1199 : vector<1x128xf32>
      %1201 = vector.extract_strided_slice %1194 {offsets = [0, 128], sizes = [1, 128], strides = [1, 1]} : vector<1x512xf32> to vector<1x128xf32>
      %1202 = math.tanh %1201 : vector<1x128xf32>
      %cst_379 = arith.constant 5.000000e-01 : f32
      %1203 = vector.broadcast %cst_379 : f32 to vector<1x128xf32>
      %1204 = arith.mulf %1203, %1202 : vector<1x128xf32>
      %cst_380 = arith.constant 5.000000e-01 : f32
      %1205 = vector.broadcast %cst_380 : f32 to vector<1x128xf32>
      %1206 = arith.addf %1204, %1205 : vector<1x128xf32>
      %1207 = vector.extract_strided_slice %1194 {offsets = [0, 256], sizes = [1, 128], strides = [1, 1]} : vector<1x512xf32> to vector<1x128xf32>
      %1208 = math.tanh %1207 : vector<1x128xf32>
      %1209 = vector.extract_strided_slice %1194 {offsets = [0, 384], sizes = [1, 128], strides = [1, 1]} : vector<1x512xf32> to vector<1x128xf32>
      %1210 = math.tanh %1209 : vector<1x128xf32>
      %cst_381 = arith.constant 5.000000e-01 : f32
      %1211 = vector.broadcast %cst_381 : f32 to vector<1x128xf32>
      %1212 = arith.mulf %1211, %1210 : vector<1x128xf32>
      %cst_382 = arith.constant 5.000000e-01 : f32
      %1213 = vector.broadcast %cst_382 : f32 to vector<1x128xf32>
      %1214 = arith.addf %1212, %1213 : vector<1x128xf32>
      %1215 = arith.mulf %1206, %1148 : vector<1x128xf32>
      %1216 = arith.mulf %1200, %1208 : vector<1x128xf32>
      %1217 = arith.addf %1215, %1216 : vector<1x128xf32>
      %1218 = math.tanh %1217 : vector<1x128xf32>
      %1219 = arith.mulf %1214, %1218 : vector<1x128xf32>
      %1220 = arith.truncf %1219 : vector<1x128xf32> to vector<1x128xbf16>
      %cst_383 = arith.constant dense<0.000000e+00> : vector<1x512xf32>
      %1221 = tpu.matmul %1220, %8, %cst_383 {dimension_numbers = #tpu.dot_dimension_numbers<[1], [0], [0], [1], [0, 0, 1, 1], [], []>} : vector<1x128xbf16>, vector<128x512xbf16>, vector<1x512xf32> -> vector<1x512xf32>
      %cst_384 = arith.constant dense<0.000000e+00> : vector<1x128xf32>
      %1222 = tpu.matmul %1220, %10, %cst_384 {dimension_numbers = #tpu.dot_dimension_numbers<[1], [0], [0], [1], [0, 0, 1, 1], [], []>} : vector<1x128xbf16>, vector<128x128xbf16>, vector<1x128xf32> -> vector<1x128xf32>
      %1223 = arith.addf %1222, %11 : vector<1x128xf32>
      %1224 = math.tanh %1223 : vector<1x128xf32>
      %cst_385 = arith.constant 5.000000e-01 : f32
      %1225 = vector.broadcast %cst_385 : f32 to vector<1x128xf32>
      %1226 = arith.mulf %1225, %1224 : vector<1x128xf32>
      %cst_386 = arith.constant 5.000000e-01 : f32
      %1227 = vector.broadcast %cst_386 : f32 to vector<1x128xf32>
      %1228 = arith.addf %1226, %1227 : vector<1x128xf32>
      %c6_387 = arith.constant 6 : index
      %c0_388 = arith.constant 0 : index
      %1229 = vector.load %arg14[%c6_387, %c0_388] : memref<8x128xf32, #tpu.memory_space<vmem>>, vector<1x128xf32>
      tpu.vector_store %arg14[%c6_387, %c0_388], %1228 {strides = array<i32>} : memref<8x128xf32, #tpu.memory_space<vmem>>, vector<1x128xf32>,
      %1230 = arith.truncf %1228 : vector<1x128xf32> to vector<1x128xbf16>
      %cst_389 = arith.constant dense<0.000000e+00> : vector<1x512xf32>
      %1231 = tpu.matmul %1230, %4, %cst_389 {dimension_numbers = #tpu.dot_dimension_numbers<[1], [0], [0], [1], [0, 0, 1, 1], [], []>} : vector<1x128xbf16>, vector<128x512xbf16>, vector<1x512xf32> -> vector<1x512xf32>
      %1232 = arith.addf %1231, %1191 : vector<1x512xf32>
      %1233 = arith.addf %1232, %6 : vector<1x512xf32>
      %1234 = vector.extract_strided_slice %1233 {offsets = [0, 0], sizes = [1, 128], strides = [1, 1]} : vector<1x512xf32> to vector<1x128xf32>
      %1235 = math.tanh %1234 : vector<1x128xf32>
      %cst_390 = arith.constant 5.000000e-01 : f32
      %1236 = vector.broadcast %cst_390 : f32 to vector<1x128xf32>
      %1237 = arith.mulf %1236, %1235 : vector<1x128xf32>
      %cst_391 = arith.constant 5.000000e-01 : f32
      %1238 = vector.broadcast %cst_391 : f32 to vector<1x128xf32>
      %1239 = arith.addf %1237, %1238 : vector<1x128xf32>
      %1240 = vector.extract_strided_slice %1233 {offsets = [0, 128], sizes = [1, 128], strides = [1, 1]} : vector<1x512xf32> to vector<1x128xf32>
      %1241 = math.tanh %1240 : vector<1x128xf32>
      %cst_392 = arith.constant 5.000000e-01 : f32
      %1242 = vector.broadcast %cst_392 : f32 to vector<1x128xf32>
      %1243 = arith.mulf %1242, %1241 : vector<1x128xf32>
      %cst_393 = arith.constant 5.000000e-01 : f32
      %1244 = vector.broadcast %cst_393 : f32 to vector<1x128xf32>
      %1245 = arith.addf %1243, %1244 : vector<1x128xf32>
      %1246 = vector.extract_strided_slice %1233 {offsets = [0, 256], sizes = [1, 128], strides = [1, 1]} : vector<1x512xf32> to vector<1x128xf32>
      %1247 = math.tanh %1246 : vector<1x128xf32>
      %1248 = vector.extract_strided_slice %1233 {offsets = [0, 384], sizes = [1, 128], strides = [1, 1]} : vector<1x512xf32> to vector<1x128xf32>
      %1249 = math.tanh %1248 : vector<1x128xf32>
      %cst_394 = arith.constant 5.000000e-01 : f32
      %1250 = vector.broadcast %cst_394 : f32 to vector<1x128xf32>
      %1251 = arith.mulf %1250, %1249 : vector<1x128xf32>
      %cst_395 = arith.constant 5.000000e-01 : f32
      %1252 = vector.broadcast %cst_395 : f32 to vector<1x128xf32>
      %1253 = arith.addf %1251, %1252 : vector<1x128xf32>
      %1254 = arith.mulf %1245, %1187 : vector<1x128xf32>
      %1255 = arith.mulf %1239, %1247 : vector<1x128xf32>
      %1256 = arith.addf %1254, %1255 : vector<1x128xf32>
      %1257 = math.tanh %1256 : vector<1x128xf32>
      %1258 = arith.mulf %1253, %1257 : vector<1x128xf32>
      %1259 = arith.truncf %1258 : vector<1x128xf32> to vector<1x128xbf16>
      %cst_396 = arith.constant dense<0.000000e+00> : vector<1x512xf32>
      %1260 = tpu.matmul %1259, %5, %cst_396 {dimension_numbers = #tpu.dot_dimension_numbers<[1], [0], [0], [1], [0, 0, 1, 1], [], []>} : vector<1x128xbf16>, vector<128x512xbf16>, vector<1x512xf32> -> vector<1x512xf32>
      %cst_397 = arith.constant dense<0.000000e+00> : vector<1x512xf32>
      %1261 = tpu.matmul %1259, %7, %cst_397 {dimension_numbers = #tpu.dot_dimension_numbers<[1], [0], [0], [1], [0, 0, 1, 1], [], []>} : vector<1x128xbf16>, vector<128x512xbf16>, vector<1x512xf32> -> vector<1x512xf32>
      %1262 = arith.addf %1261, %1221 : vector<1x512xf32>
      %1263 = arith.addf %1262, %9 : vector<1x512xf32>
      %1264 = vector.extract_strided_slice %1263 {offsets = [0, 0], sizes = [1, 128], strides = [1, 1]} : vector<1x512xf32> to vector<1x128xf32>
      %1265 = math.tanh %1264 : vector<1x128xf32>
      %cst_398 = arith.constant 5.000000e-01 : f32
      %1266 = vector.broadcast %cst_398 : f32 to vector<1x128xf32>
      %1267 = arith.mulf %1266, %1265 : vector<1x128xf32>
      %cst_399 = arith.constant 5.000000e-01 : f32
      %1268 = vector.broadcast %cst_399 : f32 to vector<1x128xf32>
      %1269 = arith.addf %1267, %1268 : vector<1x128xf32>
      %1270 = vector.extract_strided_slice %1263 {offsets = [0, 128], sizes = [1, 128], strides = [1, 1]} : vector<1x512xf32> to vector<1x128xf32>
      %1271 = math.tanh %1270 : vector<1x128xf32>
      %cst_400 = arith.constant 5.000000e-01 : f32
      %1272 = vector.broadcast %cst_400 : f32 to vector<1x128xf32>
      %1273 = arith.mulf %1272, %1271 : vector<1x128xf32>
      %cst_401 = arith.constant 5.000000e-01 : f32
      %1274 = vector.broadcast %cst_401 : f32 to vector<1x128xf32>
      %1275 = arith.addf %1273, %1274 : vector<1x128xf32>
      %1276 = vector.extract_strided_slice %1263 {offsets = [0, 256], sizes = [1, 128], strides = [1, 1]} : vector<1x512xf32> to vector<1x128xf32>
      %1277 = math.tanh %1276 : vector<1x128xf32>
      %1278 = vector.extract_strided_slice %1263 {offsets = [0, 384], sizes = [1, 128], strides = [1, 1]} : vector<1x512xf32> to vector<1x128xf32>
      %1279 = math.tanh %1278 : vector<1x128xf32>
      %cst_402 = arith.constant 5.000000e-01 : f32
      %1280 = vector.broadcast %cst_402 : f32 to vector<1x128xf32>
      %1281 = arith.mulf %1280, %1279 : vector<1x128xf32>
      %cst_403 = arith.constant 5.000000e-01 : f32
      %1282 = vector.broadcast %cst_403 : f32 to vector<1x128xf32>
      %1283 = arith.addf %1281, %1282 : vector<1x128xf32>
      %1284 = arith.mulf %1275, %1217 : vector<1x128xf32>
      %1285 = arith.mulf %1269, %1277 : vector<1x128xf32>
      %1286 = arith.addf %1284, %1285 : vector<1x128xf32>
      %1287 = math.tanh %1286 : vector<1x128xf32>
      %1288 = arith.mulf %1283, %1287 : vector<1x128xf32>
      %1289 = arith.truncf %1288 : vector<1x128xf32> to vector<1x128xbf16>
      %cst_404 = arith.constant dense<0.000000e+00> : vector<1x512xf32>
      %1290 = tpu.matmul %1289, %8, %cst_404 {dimension_numbers = #tpu.dot_dimension_numbers<[1], [0], [0], [1], [0, 0, 1, 1], [], []>} : vector<1x128xbf16>, vector<128x512xbf16>, vector<1x512xf32> -> vector<1x512xf32>
      %cst_405 = arith.constant dense<0.000000e+00> : vector<1x128xf32>
      %1291 = tpu.matmul %1289, %10, %cst_405 {dimension_numbers = #tpu.dot_dimension_numbers<[1], [0], [0], [1], [0, 0, 1, 1], [], []>} : vector<1x128xbf16>, vector<128x128xbf16>, vector<1x128xf32> -> vector<1x128xf32>
      %1292 = arith.addf %1291, %11 : vector<1x128xf32>
      %1293 = math.tanh %1292 : vector<1x128xf32>
      %cst_406 = arith.constant 5.000000e-01 : f32
      %1294 = vector.broadcast %cst_406 : f32 to vector<1x128xf32>
      %1295 = arith.mulf %1294, %1293 : vector<1x128xf32>
      %cst_407 = arith.constant 5.000000e-01 : f32
      %1296 = vector.broadcast %cst_407 : f32 to vector<1x128xf32>
      %1297 = arith.addf %1295, %1296 : vector<1x128xf32>
      %c7_408 = arith.constant 7 : index
      %c0_409 = arith.constant 0 : index
      %1298 = vector.load %arg14[%c7_408, %c0_409] : memref<8x128xf32, #tpu.memory_space<vmem>>, vector<1x128xf32>
      tpu.vector_store %arg14[%c7_408, %c0_409], %1297 {strides = array<i32>} : memref<8x128xf32, #tpu.memory_space<vmem>>, vector<1x128xf32>,
      %c1_i32_410 = arith.constant 1 : i32
      %1299 = arith.addi %arg15, %c1_i32_410 : i32
      %c8_i32 = arith.constant 8 : i32
      %1300 = arith.muli %c8_i32, %1299 : i32
      %1301 = tpu.assume_multiple %1300, 8 : i32
      %c0_411 = arith.constant 0 : index
      %c0_412 = arith.constant 0 : index
      %1302 = vector.load %arg14[%c0_411, %c0_412] : memref<8x128xf32, #tpu.memory_space<vmem>>, vector<8x128xf32>
      %1303 = arith.index_cast %1301 : i32 to index
      %c0_413 = arith.constant 0 : index
      %1304 = vector.load %arg13[%1303, %c0_413] : memref<88x128xf32, #tpu.memory_space<vmem>>, vector<8x128xf32>
      tpu.vector_store %arg13[%1303, %c0_413], %1302 {strides = array<i32>} : memref<88x128xf32, #tpu.memory_space<vmem>>, vector<8x128xf32>,
      scf.yield %1297, %1256, %1286, %1260, %1290 : vector<1x128xf32>, vector<1x128xf32>, vector<1x128xf32>, vector<1x512xf32>, vector<1x512xf32>
    }
    %c10_i32_241 = arith.constant 10 : i32
    return
  }
}

</mosaic_0001>

<llo_original>
// kernel: seq2seq_forward.1
$region0: #{seq2seq_forward.1}
  #allocation0 [shape = 'u32[]', space=smem, size = 0x4, offset = 0x4, fixed_abs, tag = 'smem constant byte address 0x4 - core index']
  #allocation1 [shape = 'u32[144,128]{1,0:T(1,128)}', space=vmem, size = 0x12000, scoped, tag = 'internal scratch']
  #allocation2 [shape = 'f32[8,128]{1,0:T(8,128)}', space=vmem, size = 0x1000, scoped, tag = 'scratch operand']
  %s0 = inlined_call_operand.hbm [shape: f32[4,1,128], index: 0, kind: input, shape index: {}]
  %s1 = inlined_call_operand.hbm [shape: bf16[256,512], index: 1, kind: input, shape index: {}]
  %s2 = inlined_call_operand.vmem [shape: f32[1,512], index: 2, kind: input, shape index: {}]
  %s3 = inlined_call_operand.hbm [shape: bf16[256,512], index: 3, kind: input, shape index: {}]
  %s4 = inlined_call_operand.vmem [shape: f32[1,512], index: 4, kind: input, shape index: {}]
  %s5 = inlined_call_operand.hbm [shape: bf16[128,512], index: 5, kind: input, shape index: {}]
  %s6 = inlined_call_operand.hbm [shape: bf16[128,512], index: 6, kind: input, shape index: {}]
  %s7 = inlined_call_operand.hbm [shape: f32[1,512], index: 7, kind: input, shape index: {}]
  %s8 = inlined_call_operand.hbm [shape: bf16[128,512], index: 8, kind: input, shape index: {}]
  %s9 = inlined_call_operand.hbm [shape: bf16[128,512], index: 9, kind: input, shape index: {}]
  %s10 = inlined_call_operand.hbm [shape: f32[1,512], index: 10, kind: input, shape index: {}]
  %s11 = inlined_call_operand.hbm [shape: bf16[128,128], index: 11, kind: input, shape index: {}]
  %s12 = inlined_call_operand.vmem [shape: f32[1,128], index: 12, kind: input, shape index: {}]
  %s13 = inlined_call_operand.hbm [shape: f32[88,128], index: 13, kind: output, shape index: {}]
  %s14 = sld [smem:[#allocation0]]
  $region109: #{seq2seq_forward.1} parent=0
    _
  %s16 = ssub.s32 1, %s14
  %s17 = scalar_select 0, %s16, %s14
  $region1: #{seq2seq_forward.1} parent=0
    #allocation3 [shape = 'u8[2048]{0}', space=vmem, size = 0x800, scoped, tag = 'input window, operand 0, single buffered']
    #allocation4 [shape = 's32[1]{0}', space=sflag, size = 0x4, scoped, tag = 'scoped memory for seq2seq_forward.1']
    #allocation5 [shape = 's32[1]{0}', space=sflag, size = 0x4, scoped, tag = 'scoped memory for seq2seq_forward.1']
    #allocation6 [shape = 'u8[262144]{0}', space=vmem, size = 0x40000, scoped, tag = 'input window, operand 1, single buffered']
    #allocation7 [shape = 's32[1]{0}', space=sflag, size = 0x4, scoped, tag = 'scoped memory for seq2seq_forward.1']
    #allocation8 [shape = 'u8[262144]{0}', space=vmem, size = 0x40000, scoped, tag = 'input window, operand 3, single buffered']
    #allocation9 [shape = 'u8[131072]{0}', space=vmem, size = 0x20000, scoped, tag = 'input window, operand 5, single buffered']
    #allocation10 [shape = 's32[1]{0}', space=sflag, size = 0x4, scoped, tag = 'scoped memory for seq2seq_forward.1']
    #allocation11 [shape = 'u8[131072]{0}', space=vmem, size = 0x20000, scoped, tag = 'input window, operand 6, single buffered']
    #allocation12 [shape = 'u8[2048]{0}', space=vmem, size = 0x800, scoped, tag = 'input window, operand 7, single buffered']
    #allocation13 [shape = 's32[1]{0}', space=sflag, size = 0x4, scoped, tag = 'scoped memory for seq2seq_forward.1']
    #allocation14 [shape = 'u8[131072]{0}', space=vmem, size = 0x20000, scoped, tag = 'input window, operand 8, single buffered']
    #allocation15 [shape = 'u8[131072]{0}', space=vmem, size = 0x20000, scoped, tag = 'input window, operand 9, single buffered']
    #allocation16 [shape = 's32[1]{0}', space=sflag, size = 0x4, scoped, tag = 'scoped memory for seq2seq_forward.1']
    #allocation17 [shape = 'u8[2048]{0}', space=vmem, size = 0x800, scoped, tag = 'input window, operand 10, single buffered']
    #allocation18 [shape = 'u8[32768]{0}', space=vmem, size = 0x8000, scoped, tag = 'input window, operand 11, single buffered']
    #allocation19 [shape = 's32[1]{0}', space=sflag, size = 0x4, scoped, tag = 'scoped memory for seq2seq_forward.1']
    #allocation20 [shape = 'u8[45056]{0}', space=vmem, size = 0xb000, scoped, tag = 'output window, operand 0, single buffered']
    %18 = vsyncpa [#allocation4], 0
    %19 = vsyncpa [#allocation7], 0
    %20 = vsyncpa [#allocation10], 0
    %21 = vsyncpa [#allocation13], 0
    %22 = vsyncpa [#allocation16], 0
    %23 = vsyncpa [#allocation19], 0
    %24 = vsyncpa [#allocation5], 0
    // Predicated region
    $region2: #{seq2seq_forward.1} parent=1 // pred_check
      _
    $region3: #{seq2seq_forward.1} parent=1 // pred_check_branch
      %26 = sbr.rel (0) target = $region5
    $region4: #{seq2seq_forward.1} parent=1 // pred_region
      %s28 = ssub.s32 64, 64
      %29 = vsyncadd [#allocation4], %s28
      %s30 = sshll.u32 [#allocation3], 4
      %s31 = int_to_ptr.vmem [resolvable:$true] %s30
      %36 = dma.hbm_to_vmem [thread:$0]  %s0, 64, %s31, [#allocation4], 16, 16, 1
    $region5: #{seq2seq_forward.1} parent=1 // pred_fallthru
      _
    // Predicated region
    $region6: #{seq2seq_forward.1} parent=1 // pred_check
      _
    $region7: #{seq2seq_forward.1} parent=1 // pred_check_branch
      %38 = sbr.rel (0) target = $region9
    $region8: #{seq2seq_forward.1} parent=1 // pred_region
      %s40 = ssub.s32 8192, 8192
      %41 = vsyncadd [#allocation7], %s40
      %s42 = sshll.u32 [#allocation6], 4
      %s43 = int_to_ptr.vmem [resolvable:$true] %s42
      %48 = dma.hbm_to_vmem [thread:$0]  %s1, 8192, %s43, [#allocation7], 256, 256, 16
    $region9: #{seq2seq_forward.1} parent=1 // pred_fallthru
      _
    // Predicated region
    $region10: #{seq2seq_forward.1} parent=1 // pred_check
      _
    $region11: #{seq2seq_forward.1} parent=1 // pred_check_branch
      %50 = sbr.rel (0) target = $region13
    $region12: #{seq2seq_forward.1} parent=1 // pred_region
      _
    $region13: #{seq2seq_forward.1} parent=1 // pred_fallthru
      _
    // Predicated region
    $region14: #{seq2seq_forward.1} parent=1 // pred_check
      _
    $region15: #{seq2seq_forward.1} parent=1 // pred_check_branch
      %52 = sbr.rel (0) target = $region17
    $region16: #{seq2seq_forward.1} parent=1 // pred_region
      %s54 = ssub.s32 8192, 8192
      %55 = vsyncadd [#allocation7], %s54
      %s56 = sshll.u32 [#allocation8], 4
      %s57 = int_to_ptr.vmem [resolvable:$true] %s56
      %62 = dma.hbm_to_vmem [thread:$0]  %s3, 8192, %s57, [#allocation7], 256, 256, 16
    $region17: #{seq2seq_forward.1} parent=1 // pred_fallthru
      _
    // Predicated region
    $region18: #{seq2seq_forward.1} parent=1 // pred_check
      _
    $region19: #{seq2seq_forward.1} parent=1 // pred_check_branch
      %64 = sbr.rel (0) target = $region21
    $region20: #{seq2seq_forward.1} parent=1 // pred_region
      _
    $region21: #{seq2seq_forward.1} parent=1 // pred_fallthru
      _
    // Predicated region
    $region22: #{seq2seq_forward.1} parent=1 // pred_check
      _
    $region23: #{seq2seq_forward.1} parent=1 // pred_check_branch
      %66 = sbr.rel (0) target = $region25
    $region24: #{seq2seq_forward.1} parent=1 // pred_region
      %s68 = ssub.s32 4096, 4096
      %69 = vsyncadd [#allocation10], %s68
      %s70 = sshll.u32 [#allocation9], 4
      %s71 = int_to_ptr.vmem [resolvable:$true] %s70
      %76 = dma.hbm_to_vmem [thread:$0]  %s5, 4096, %s71, [#allocation10], 256, 256, 16
    $region25: #{seq2seq_forward.1} parent=1 // pred_fallthru
      _
    // Predicated region
    $region26: #{seq2seq_forward.1} parent=1 // pred_check
      _
    $region27: #{seq2seq_forward.1} parent=1 // pred_check_branch
      %78 = sbr.rel (0) target = $region29
    $region28: #{seq2seq_forward.1} parent=1 // pred_region
      %s80 = ssub.s32 4096, 4096
      %81 = vsyncadd [#allocation10], %s80
      %s82 = sshll.u32 [#allocation11], 4
      %s83 = int_to_ptr.vmem [resolvable:$true] %s82
      %88 = dma.hbm_to_vmem [thread:$0]  %s6, 4096, %s83, [#allocation10], 256, 256, 16
    $region29: #{seq2seq_forward.1} parent=1 // pred_fallthru
      _
    // Predicated region
    $region30: #{seq2seq_forward.1} parent=1 // pred_check
      _
    $region31: #{seq2seq_forward.1} parent=1 // pred_check_branch
      %90 = sbr.rel (0) target = $region33
    $region32: #{seq2seq_forward.1} parent=1 // pred_region
      %s92 = ssub.s32 64, 64
      %93 = vsyncadd [#allocation13], %s92
      %s95 = sshll.u32 [#allocation12], 4
      %s96 = int_to_ptr.vmem [resolvable:$true] %s95
      %98 = dma.hbm_to_vmem [thread:$0]  %s7, 64, %s96, [#allocation13]
    $region33: #{seq2seq_forward.1} parent=1 // pred_fallthru
      _
    // Predicated region
    $region34: #{seq2seq_forward.1} parent=1 // pred_check
      _
    $region35: #{seq2seq_forward.1} parent=1 // pred_check_branch
      %100 = sbr.rel (0) target = $region37
    $region36: #{seq2seq_forward.1} parent=1 // pred_region
      %s102 = ssub.s32 4096, 4096
      %103 = vsyncadd [#allocation13], %s102
      %s104 = sshll.u32 [#allocation14], 4
      %s105 = int_to_ptr.vmem [resolvable:$true] %s104
      %110 = dma.hbm_to_vmem [thread:$0]  %s8, 4096, %s105, [#allocation13], 256, 256, 16
    $region37: #{seq2seq_forward.1} parent=1 // pred_fallthru
      _
    // Predicated region
    $region38: #{seq2seq_forward.1} parent=1 // pred_check
      _
    $region39: #{seq2seq_forward.1} parent=1 // pred_check_branch
      %112 = sbr.rel (0) target = $region41
    $region40: #{seq2seq_forward.1} parent=1 // pred_region
      %s114 = ssub.s32 4096, 4096
      %115 = vsyncadd [#allocation16], %s114
      %s116 = sshll.u32 [#allocation15], 4
      %s117 = int_to_ptr.vmem [resolvable:$true] %s116
      %122 = dma.hbm_to_vmem [thread:$0]  %s9, 4096, %s117, [#allocation16], 256, 256, 16
    $region41: #{seq2seq_forward.1} parent=1 // pred_fallthru
      _
    // Predicated region
    $region42: #{seq2seq_forward.1} parent=1 // pred_check
      _
    $region43: #{seq2seq_forward.1} parent=1 // pred_check_branch
      %124 = sbr.rel (0) target = $region45
    $region44: #{seq2seq_forward.1} parent=1 // pred_region
      %s126 = ssub.s32 64, 64
      %127 = vsyncadd [#allocation16], %s126
      %s129 = sshll.u32 [#allocation17], 4
      %s130 = int_to_ptr.vmem [resolvable:$true] %s129
      %132 = dma.hbm_to_vmem [thread:$0]  %s10, 64, %s130, [#allocation16]
    $region45: #{seq2seq_forward.1} parent=1 // pred_fallthru
      _
    // Predicated region
    $region46: #{seq2seq_forward.1} parent=1 // pred_check
      _
    $region47: #{seq2seq_forward.1} parent=1 // pred_check_branch
      %134 = sbr.rel (0) target = $region49
    $region48: #{seq2seq_forward.1} parent=1 // pred_region
      %s136 = ssub.s32 1024, 1024
      %137 = vsyncadd [#allocation19], %s136
      %s138 = sshll.u32 [#allocation18], 4
      %s139 = int_to_ptr.vmem [resolvable:$true] %s138
      %144 = dma.hbm_to_vmem [thread:$0]  %s11, 1024, %s139, [#allocation19], 64, 64, 4
    $region49: #{seq2seq_forward.1} parent=1 // pred_fallthru
      _
    // Predicated region
    $region50: #{seq2seq_forward.1} parent=1 // pred_check
      _
    $region51: #{seq2seq_forward.1} parent=1 // pred_check_branch
      %146 = sbr.rel (0) target = $region53
    $region52: #{seq2seq_forward.1} parent=1 // pred_region
      _
    $region53: #{seq2seq_forward.1} parent=1 // pred_fallthru
      _
    // Predicated region
    $region54: #{seq2seq_forward.1} parent=1 // pred_check
      _
    $region55: #{seq2seq_forward.1} parent=1 // pred_check_branch
      %148 = sbr.rel (0) target = $region57
    $region56: #{seq2seq_forward.1} parent=1 // pred_region
      %149 = dma.done [#allocation4], 64
    $region57: #{seq2seq_forward.1} parent=1 // pred_fallthru
      _
    // Predicated region
    $region58: #{seq2seq_forward.1} parent=1 // pred_check
      _
    $region59: #{seq2seq_forward.1} parent=1 // pred_check_branch
      %151 = sbr.rel (0) target = $region61
    $region60: #{seq2seq_forward.1} parent=1 // pred_region
      %152 = dma.done [#allocation7], 8192
    $region61: #{seq2seq_forward.1} parent=1 // pred_fallthru
      _
    // Predicated region
    $region62: #{seq2seq_forward.1} parent=1 // pred_check
      _
    $region63: #{seq2seq_forward.1} parent=1 // pred_check_branch
      %154 = sbr.rel (0) target = $region65
    $region64: #{seq2seq_forward.1} parent=1 // pred_region
      %155 = dma.done [#allocation7], 8192
    $region65: #{seq2seq_forward.1} parent=1 // pred_fallthru
      _
    // Predicated region
    $region66: #{seq2seq_forward.1} parent=1 // pred_check
      _
    $region67: #{seq2seq_forward.1} parent=1 // pred_check_branch
      %157 = sbr.rel (0) target = $region69
    $region68: #{seq2seq_forward.1} parent=1 // pred_region
      %158 = dma.done [#allocation10], 4096
    $region69: #{seq2seq_forward.1} parent=1 // pred_fallthru
      _
    // Predicated region
    $region70: #{seq2seq_forward.1} parent=1 // pred_check
      _
    $region71: #{seq2seq_forward.1} parent=1 // pred_check_branch
      %160 = sbr.rel (0) target = $region73
    $region72: #{seq2seq_forward.1} parent=1 // pred_region
      %161 = dma.done [#allocation10], 4096
    $region73: #{seq2seq_forward.1} parent=1 // pred_fallthru
      _
    // Predicated region
    $region74: #{seq2seq_forward.1} parent=1 // pred_check
      _
    $region75: #{seq2seq_forward.1} parent=1 // pred_check_branch
      %163 = sbr.rel (0) target = $region77
    $region76: #{seq2seq_forward.1} parent=1 // pred_region
      %164 = dma.done [#allocation13], 64
    $region77: #{seq2seq_forward.1} parent=1 // pred_fallthru
      _
    // Predicated region
    $region78: #{seq2seq_forward.1} parent=1 // pred_check
      _
    $region79: #{seq2seq_forward.1} parent=1 // pred_check_branch
      %166 = sbr.rel (0) target = $region81
    $region80: #{seq2seq_forward.1} parent=1 // pred_region
      %167 = dma.done [#allocation13], 4096
    $region81: #{seq2seq_forward.1} parent=1 // pred_fallthru
      _
    // Predicated region
    $region82: #{seq2seq_forward.1} parent=1 // pred_check
      _
    $region83: #{seq2seq_forward.1} parent=1 // pred_check_branch
      %169 = sbr.rel (0) target = $region85
    $region84: #{seq2seq_forward.1} parent=1 // pred_region
      %170 = dma.done [#allocation16], 4096
    $region85: #{seq2seq_forward.1} parent=1 // pred_fallthru
      _
    // Predicated region
    $region86: #{seq2seq_forward.1} parent=1 // pred_check
      _
    $region87: #{seq2seq_forward.1} parent=1 // pred_check_branch
      %172 = sbr.rel (0) target = $region89
    $region88: #{seq2seq_forward.1} parent=1 // pred_region
      %173 = dma.done [#allocation16], 64
    $region89: #{seq2seq_forward.1} parent=1 // pred_fallthru
      _
    // Predicated region
    $region90: #{seq2seq_forward.1} parent=1 // pred_check
      _
    $region91: #{seq2seq_forward.1} parent=1 // pred_check_branch
      %175 = sbr.rel (0) target = $region93
    $region92: #{seq2seq_forward.1} parent=1 // pred_region
      %176 = dma.done [#allocation19], 1024
    $region93: #{seq2seq_forward.1} parent=1 // pred_fallthru
      _
    %v178 = vld [vmem:[#allocation6] sm:$0xff]
    %v179 = vld [vmem:[#allocation6 + $0x8] sm:$0xff]
    %v180 = vld [vmem:[#allocation6 + $0x10] sm:$0xff]
    %v181 = vld [vmem:[#allocation6 + $0x18] sm:$0xff]
    %v182 = vld [vmem:[#allocation6 + $0x20] sm:$0xff]
    %v183 = vld [vmem:[#allocation6 + $0x28] sm:$0xff]
    %v184 = vld [vmem:[#allocation6 + $0x30] sm:$0xff]
    %v185 = vld [vmem:[#allocation6 + $0x38] sm:$0xff]
    %v186 = vld [vmem:[#allocation6 + $0x40] sm:$0xff]
    %v187 = vld [vmem:[#allocation6 + $0x48] sm:$0xff]
    %v188 = vld [vmem:[#allocation6 + $0x50] sm:$0xff]
    %v189 = vld [vmem:[#allocation6 + $0x58] sm:$0xff]
    %v190 = vld [vmem:[#allocation6 + $0x60] sm:$0xff]
    %v191 = vld [vmem:[#allocation6 + $0x68] sm:$0xff]
    %v192 = vld [vmem:[#allocation6 + $0x70] sm:$0xff]
    %v193 = vld [vmem:[#allocation6 + $0x78] sm:$0xff]
    %v194 = vld [vmem:[#allocation6 + $0x80] sm:$0xff]
    %v195 = vld [vmem:[#allocation6 + $0x88] sm:$0xff]
    %v196 = vld [vmem:[#allocation6 + $0x90] sm:$0xff]
    %v197 = vld [vmem:[#allocation6 + $0x98] sm:$0xff]
    %v198 = vld [vmem:[#allocation6 + $0xa0] sm:$0xff]
    %v199 = vld [vmem:[#allocation6 + $0xa8] sm:$0xff]
    %v200 = vld [vmem:[#allocation6 + $0xb0] sm:$0xff]
    %v201 = vld [vmem:[#allocation6 + $0xb8] sm:$0xff]
    %v202 = vld [vmem:[#allocation6 + $0xc0] sm:$0xff]
    %v203 = vld [vmem:[#allocation6 + $0xc8] sm:$0xff]
    %v204 = vld [vmem:[#allocation6 + $0xd0] sm:$0xff]
    %v205 = vld [vmem:[#allocation6 + $0xd8] sm:$0xff]
    %v206 = vld [vmem:[#allocation6 + $0xe0] sm:$0xff]
    %v207 = vld [vmem:[#allocation6 + $0xe8] sm:$0xff]
    %v208 = vld [vmem:[#allocation6 + $0xf0] sm:$0xff]
    %v209 = vld [vmem:[#allocation6 + $0xf8] sm:$0xff]
    %v210 = vld [vmem:[#allocation6 + $0x100] sm:$0xff]
    %v211 = vld [vmem:[#allocation6 + $0x108] sm:$0xff]
    %v212 = vld [vmem:[#allocation6 + $0x110] sm:$0xff]
    %v213 = vld [vmem:[#allocation6 + $0x118] sm:$0xff]
    %v214 = vld [vmem:[#allocation6 + $0x120] sm:$0xff]
    %v215 = vld [vmem:[#allocation6 + $0x128] sm:$0xff]
    %v216 = vld [vmem:[#allocation6 + $0x130] sm:$0xff]
    %v217 = vld [vmem:[#allocation6 + $0x138] sm:$0xff]
    %v218 = vld [vmem:[#allocation6 + $0x140] sm:$0xff]
    %v219 = vld [vmem:[#allocation6 + $0x148] sm:$0xff]
    %v220 = vld [vmem:[#allocation6 + $0x150] sm:$0xff]
    %v221 = vld [vmem:[#allocation6 + $0x158] sm:$0xff]
    %v222 = vld [vmem:[#allocation6 + $0x160] sm:$0xff]
    %v223 = vld [vmem:[#allocation6 + $0x168] sm:$0xff]
    %v224 = vld [vmem:[#allocation6 + $0x170] sm:$0xff]
    %v225 = vld [vmem:[#allocation6 + $0x178] sm:$0xff]
    %v226 = vld [vmem:[#allocation6 + $0x180] sm:$0xff]
    %v227 = vld [vmem:[#allocation6 + $0x188] sm:$0xff]
    %v228 = vld [vmem:[#allocation6 + $0x190] sm:$0xff]
    %v229 = vld [vmem:[#allocation6 + $0x198] sm:$0xff]
    %v230 = vld [vmem:[#allocation6 + $0x1a0] sm:$0xff]
    %v231 = vld [vmem:[#allocation6 + $0x1a8] sm:$0xff]
    %v232 = vld [vmem:[#allocation6 + $0x1b0] sm:$0xff]
    %v233 = vld [vmem:[#allocation6 + $0x1b8] sm:$0xff]
    %v234 = vld [vmem:[#allocation6 + $0x1c0] sm:$0xff]
    %v235 = vld [vmem:[#allocation6 + $0x1c8] sm:$0xff]
    %v236 = vld [vmem:[#allocation6 + $0x1d0] sm:$0xff]
    %v237 = vld [vmem:[#allocation6 + $0x1d8] sm:$0xff]
    %v238 = vld [vmem:[#allocation6 + $0x1e0] sm:$0xff]
    %v239 = vld [vmem:[#allocation6 + $0x1e8] sm:$0xff]
    %v240 = vld [vmem:[#allocation6 + $0x1f0] sm:$0xff]
    %v241 = vld [vmem:[#allocation6 + $0x1f8] sm:$0xff]
    %v242 = vld [vmem:[%s2] sm:$0xf]
    %v243 = vld [vmem:[#allocation8] sm:$0xff]
    %v244 = vld [vmem:[#allocation8 + $0x8] sm:$0xff]
    %v245 = vld [vmem:[#allocation8 + $0x10] sm:$0xff]
    %v246 = vld [vmem:[#allocation8 + $0x18] sm:$0xff]
    %v247 = vld [vmem:[#allocation8 + $0x20] sm:$0xff]
    %v248 = vld [vmem:[#allocation8 + $0x28] sm:$0xff]
    %v249 = vld [vmem:[#allocation8 + $0x30] sm:$0xff]
    %v250 = vld [vmem:[#allocation8 + $0x38] sm:$0xff]
    %v251 = vld [vmem:[#allocation8 + $0x40] sm:$0xff]
    %v252 = vld [vmem:[#allocation8 + $0x48] sm:$0xff]
    %v253 = vld [vmem:[#allocation8 + $0x50] sm:$0xff]
    %v254 = vld [vmem:[#allocation8 + $0x58] sm:$0xff]
    %v255 = vld [vmem:[#allocation8 + $0x60] sm:$0xff]
    %v256 = vld [vmem:[#allocation8 + $0x68] sm:$0xff]
    %v257 = vld [vmem:[#allocation8 + $0x70] sm:$0xff]
    %v258 = vld [vmem:[#allocation8 + $0x78] sm:$0xff]
    %v259 = vld [vmem:[#allocation8 + $0x80] sm:$0xff]
    %v260 = vld [vmem:[#allocation8 + $0x88] sm:$0xff]
    %v261 = vld [vmem:[#allocation8 + $0x90] sm:$0xff]
    %v262 = vld [vmem:[#allocation8 + $0x98] sm:$0xff]
    %v263 = vld [vmem:[#allocation8 + $0xa0] sm:$0xff]
    %v264 = vld [vmem:[#allocation8 + $0xa8] sm:$0xff]
    %v265 = vld [vmem:[#allocation8 + $0xb0] sm:$0xff]
    %v266 = vld [vmem:[#allocation8 + $0xb8] sm:$0xff]
    %v267 = vld [vmem:[#allocation8 + $0xc0] sm:$0xff]
    %v268 = vld [vmem:[#allocation8 + $0xc8] sm:$0xff]
    %v269 = vld [vmem:[#allocation8 + $0xd0] sm:$0xff]
    %v270 = vld [vmem:[#allocation8 + $0xd8] sm:$0xff]
    %v271 = vld [vmem:[#allocation8 + $0xe0] sm:$0xff]
    %v272 = vld [vmem:[#allocation8 + $0xe8] sm:$0xff]
    %v273 = vld [vmem:[#allocation8 + $0xf0] sm:$0xff]
    %v274 = vld [vmem:[#allocation8 + $0xf8] sm:$0xff]
    %v275 = vld [vmem:[#allocation8 + $0x100] sm:$0xff]
    %v276 = vld [vmem:[#allocation8 + $0x108] sm:$0xff]
    %v277 = vld [vmem:[#allocation8 + $0x110] sm:$0xff]
    %v278 = vld [vmem:[#allocation8 + $0x118] sm:$0xff]
    %v279 = vld [vmem:[#allocation8 + $0x120] sm:$0xff]
    %v280 = vld [vmem:[#allocation8 + $0x128] sm:$0xff]
    %v281 = vld [vmem:[#allocation8 + $0x130] sm:$0xff]
    %v282 = vld [vmem:[#allocation8 + $0x138] sm:$0xff]
    %v283 = vld [vmem:[#allocation8 + $0x140] sm:$0xff]
    %v284 = vld [vmem:[#allocation8 + $0x148] sm:$0xff]
    %v285 = vld [vmem:[#allocation8 + $0x150] sm:$0xff]
    %v286 = vld [vmem:[#allocation8 + $0x158] sm:$0xff]
    %v287 = vld [vmem:[#allocation8 + $0x160] sm:$0xff]
    %v288 = vld [vmem:[#allocation8 + $0x168] sm:$0xff]
    %v289 = vld [vmem:[#allocation8 + $0x170] sm:$0xff]
    %v290 = vld [vmem:[#allocation8 + $0x178] sm:$0xff]
    %v291 = vld [vmem:[#allocation8 + $0x180] sm:$0xff]
    %v292 = vld [vmem:[#allocation8 + $0x188] sm:$0xff]
    %v293 = vld [vmem:[#allocation8 + $0x190] sm:$0xff]
    %v294 = vld [vmem:[#allocation8 + $0x198] sm:$0xff]
    %v295 = vld [vmem:[#allocation8 + $0x1a0] sm:$0xff]
    %v296 = vld [vmem:[#allocation8 + $0x1a8] sm:$0xff]
    %v297 = vld [vmem:[#allocation8 + $0x1b0] sm:$0xff]
    %v298 = vld [vmem:[#allocation8 + $0x1b8] sm:$0xff]
    %v299 = vld [vmem:[#allocation8 + $0x1c0] sm:$0xff]
    %v300 = vld [vmem:[#allocation8 + $0x1c8] sm:$0xff]
    %v301 = vld [vmem:[#allocation8 + $0x1d0] sm:$0xff]
    %v302 = vld [vmem:[#allocation8 + $0x1d8] sm:$0xff]
    %v303 = vld [vmem:[#allocation8 + $0x1e0] sm:$0xff]
    %v304 = vld [vmem:[#allocation8 + $0x1e8] sm:$0xff]
    %v305 = vld [vmem:[#allocation8 + $0x1f0] sm:$0xff]
    %v306 = vld [vmem:[#allocation8 + $0x1f8] sm:$0xff]
    %v307 = vld [vmem:[%s4] sm:$0xf]
    %v308 = vld [vmem:[#allocation9] sm:$0xff]
    %v309 = vld [vmem:[#allocation9 + $0x8] sm:$0xff]
    %v310 = vld [vmem:[#allocation9 + $0x10] sm:$0xff]
    %v311 = vld [vmem:[#allocation9 + $0x18] sm:$0xff]
    %v312 = vld [vmem:[#allocation9 + $0x20] sm:$0xff]
    %v313 = vld [vmem:[#allocation9 + $0x28] sm:$0xff]
    %v314 = vld [vmem:[#allocation9 + $0x30] sm:$0xff]
    %v315 = vld [vmem:[#allocation9 + $0x38] sm:$0xff]
    %v316 = vld [vmem:[#allocation9 + $0x40] sm:$0xff]
    %v317 = vld [vmem:[#allocation9 + $0x48] sm:$0xff]
    %v318 = vld [vmem:[#allocation9 + $0x50] sm:$0xff]
    %v319 = vld [vmem:[#allocation9 + $0x58] sm:$0xff]
    %v320 = vld [vmem:[#allocation9 + $0x60] sm:$0xff]
    %v321 = vld [vmem:[#allocation9 + $0x68] sm:$0xff]
    %v322 = vld [vmem:[#allocation9 + $0x70] sm:$0xff]
    %v323 = vld [vmem:[#allocation9 + $0x78] sm:$0xff]
    %v324 = vld [vmem:[#allocation9 + $0x80] sm:$0xff]
    %v325 = vld [vmem:[#allocation9 + $0x88] sm:$0xff]
    %v326 = vld [vmem:[#allocation9 + $0x90] sm:$0xff]
    %v327 = vld [vmem:[#allocation9 + $0x98] sm:$0xff]
    %v328 = vld [vmem:[#allocation9 + $0xa0] sm:$0xff]
    %v329 = vld [vmem:[#allocation9 + $0xa8] sm:$0xff]
    %v330 = vld [vmem:[#allocation9 + $0xb0] sm:$0xff]
    %v331 = vld [vmem:[#allocation9 + $0xb8] sm:$0xff]
    %v332 = vld [vmem:[#allocation9 + $0xc0] sm:$0xff]
    %v333 = vld [vmem:[#allocation9 + $0xc8] sm:$0xff]
    %v334 = vld [vmem:[#allocation9 + $0xd0] sm:$0xff]
    %v335 = vld [vmem:[#allocation9 + $0xd8] sm:$0xff]
    %v336 = vld [vmem:[#allocation9 + $0xe0] sm:$0xff]
    %v337 = vld [vmem:[#allocation9 + $0xe8] sm:$0xff]
    %v338 = vld [vmem:[#allocation9 + $0xf0] sm:$0xff]
    %v339 = vld [vmem:[#allocation9 + $0xf8] sm:$0xff]
    %v340 = vld [vmem:[#allocation11] sm:$0xff]
    %v341 = vld [vmem:[#allocation11 + $0x8] sm:$0xff]
    %v342 = vld [vmem:[#allocation11 + $0x10] sm:$0xff]
    %v343 = vld [vmem:[#allocation11 + $0x18] sm:$0xff]
    %v344 = vld [vmem:[#allocation11 + $0x20] sm:$0xff]
    %v345 = vld [vmem:[#allocation11 + $0x28] sm:$0xff]
    %v346 = vld [vmem:[#allocation11 + $0x30] sm:$0xff]
    %v347 = vld [vmem:[#allocation11 + $0x38] sm:$0xff]
    %v348 = vld [vmem:[#allocation11 + $0x40] sm:$0xff]
    %v349 = vld [vmem:[#allocation11 + $0x48] sm:$0xff]
    %v350 = vld [vmem:[#allocation11 + $0x50] sm:$0xff]
    %v351 = vld [vmem:[#allocation11 + $0x58] sm:$0xff]
    %v352 = vld [vmem:[#allocation11 + $0x60] sm:$0xff]
    %v353 = vld [vmem:[#allocation11 + $0x68] sm:$0xff]
    %v354 = vld [vmem:[#allocation11 + $0x70] sm:$0xff]
    %v355 = vld [vmem:[#allocation11 + $0x78] sm:$0xff]
    %v356 = vld [vmem:[#allocation11 + $0x80] sm:$0xff]
    %v357 = vld [vmem:[#allocation11 + $0x88] sm:$0xff]
    %v358 = vld [vmem:[#allocation11 + $0x90] sm:$0xff]
    %v359 = vld [vmem:[#allocation11 + $0x98] sm:$0xff]
    %v360 = vld [vmem:[#allocation11 + $0xa0] sm:$0xff]
    %v361 = vld [vmem:[#allocation11 + $0xa8] sm:$0xff]
    %v362 = vld [vmem:[#allocation11 + $0xb0] sm:$0xff]
    %v363 = vld [vmem:[#allocation11 + $0xb8] sm:$0xff]
    %v364 = vld [vmem:[#allocation11 + $0xc0] sm:$0xff]
    %v365 = vld [vmem:[#allocation11 + $0xc8] sm:$0xff]
    %v366 = vld [vmem:[#allocation11 + $0xd0] sm:$0xff]
    %v367 = vld [vmem:[#allocation11 + $0xd8] sm:$0xff]
    %v368 = vld [vmem:[#allocation11 + $0xe0] sm:$0xff]
    %v369 = vld [vmem:[#allocation11 + $0xe8] sm:$0xff]
    %v370 = vld [vmem:[#allocation11 + $0xf0] sm:$0xff]
    %v371 = vld [vmem:[#allocation11 + $0xf8] sm:$0xff]
    %v372 = vld [vmem:[#allocation12] sm:$0xf]
    %v373 = vld [vmem:[#allocation14] sm:$0xff]
    %v374 = vld [vmem:[#allocation14 + $0x8] sm:$0xff]
    %v375 = vld [vmem:[#allocation14 + $0x10] sm:$0xff]
    %v376 = vld [vmem:[#allocation14 + $0x18] sm:$0xff]
    %v377 = vld [vmem:[#allocation14 + $0x20] sm:$0xff]
    %v378 = vld [vmem:[#allocation14 + $0x28] sm:$0xff]
    %v379 = vld [vmem:[#allocation14 + $0x30] sm:$0xff]
    %v380 = vld [vmem:[#allocation14 + $0x38] sm:$0xff]
    %v381 = vld [vmem:[#allocation14 + $0x40] sm:$0xff]
    %v382 = vld [vmem:[#allocation14 + $0x48] sm:$0xff]
    %v383 = vld [vmem:[#allocation14 + $0x50] sm:$0xff]
    %v384 = vld [vmem:[#allocation14 + $0x58] sm:$0xff]
    %v385 = vld [vmem:[#allocation14 + $0x60] sm:$0xff]
    %v386 = vld [vmem:[#allocation14 + $0x68] sm:$0xff]
    %v387 = vld [vmem:[#allocation14 + $0x70] sm:$0xff]
    %v388 = vld [vmem:[#allocation14 + $0x78] sm:$0xff]
    %v389 = vld [vmem:[#allocation14 + $0x80] sm:$0xff]
    %v390 = vld [vmem:[#allocation14 + $0x88] sm:$0xff]
    %v391 = vld [vmem:[#allocation14 + $0x90] sm:$0xff]
    %v392 = vld [vmem:[#allocation14 + $0x98] sm:$0xff]
    %v393 = vld [vmem:[#allocation14 + $0xa0] sm:$0xff]
    %v394 = vld [vmem:[#allocation14 + $0xa8] sm:$0xff]
    %v395 = vld [vmem:[#allocation14 + $0xb0] sm:$0xff]
    %v396 = vld [vmem:[#allocation14 + $0xb8] sm:$0xff]
    %v397 = vld [vmem:[#allocation14 + $0xc0] sm:$0xff]
    %v398 = vld [vmem:[#allocation14 + $0xc8] sm:$0xff]
    %v399 = vld [vmem:[#allocation14 + $0xd0] sm:$0xff]
    %v400 = vld [vmem:[#allocation14 + $0xd8] sm:$0xff]
    %v401 = vld [vmem:[#allocation14 + $0xe0] sm:$0xff]
    %v402 = vld [vmem:[#allocation14 + $0xe8] sm:$0xff]
    %v403 = vld [vmem:[#allocation14 + $0xf0] sm:$0xff]
    %v404 = vld [vmem:[#allocation14 + $0xf8] sm:$0xff]
    %v405 = vld [vmem:[#allocation15] sm:$0xff]
    %v406 = vld [vmem:[#allocation15 + $0x8] sm:$0xff]
    %v407 = vld [vmem:[#allocation15 + $0x10] sm:$0xff]
    %v408 = vld [vmem:[#allocation15 + $0x18] sm:$0xff]
    %v409 = vld [vmem:[#allocation15 + $0x20] sm:$0xff]
    %v410 = vld [vmem:[#allocation15 + $0x28] sm:$0xff]
    %v411 = vld [vmem:[#allocation15 + $0x30] sm:$0xff]
    %v412 = vld [vmem:[#allocation15 + $0x38] sm:$0xff]
    %v413 = vld [vmem:[#allocation15 + $0x40] sm:$0xff]
    %v414 = vld [vmem:[#allocation15 + $0x48] sm:$0xff]
    %v415 = vld [vmem:[#allocation15 + $0x50] sm:$0xff]
    %v416 = vld [vmem:[#allocation15 + $0x58] sm:$0xff]
    %v417 = vld [vmem:[#allocation15 + $0x60] sm:$0xff]
    %v418 = vld [vmem:[#allocation15 + $0x68] sm:$0xff]
    %v419 = vld [vmem:[#allocation15 + $0x70] sm:$0xff]
    %v420 = vld [vmem:[#allocation15 + $0x78] sm:$0xff]
    %v421 = vld [vmem:[#allocation15 + $0x80] sm:$0xff]
    %v422 = vld [vmem:[#allocation15 + $0x88] sm:$0xff]
    %v423 = vld [vmem:[#allocation15 + $0x90] sm:$0xff]
    %v424 = vld [vmem:[#allocation15 + $0x98] sm:$0xff]
    %v425 = vld [vmem:[#allocation15 + $0xa0] sm:$0xff]
    %v426 = vld [vmem:[#allocation15 + $0xa8] sm:$0xff]
    %v427 = vld [vmem:[#allocation15 + $0xb0] sm:$0xff]
    %v428 = vld [vmem:[#allocation15 + $0xb8] sm:$0xff]
    %v429 = vld [vmem:[#allocation15 + $0xc0] sm:$0xff]
    %v430 = vld [vmem:[#allocation15 + $0xc8] sm:$0xff]
    %v431 = vld [vmem:[#allocation15 + $0xd0] sm:$0xff]
    %v432 = vld [vmem:[#allocation15 + $0xd8] sm:$0xff]
    %v433 = vld [vmem:[#allocation15 + $0xe0] sm:$0xff]
    %v434 = vld [vmem:[#allocation15 + $0xe8] sm:$0xff]
    %v435 = vld [vmem:[#allocation15 + $0xf0] sm:$0xff]
    %v436 = vld [vmem:[#allocation15 + $0xf8] sm:$0xff]
    %v437 = vld [vmem:[#allocation17] sm:$0xf]
    %v438 = vld [vmem:[#allocation18] sm:$0xf]
    %v439 = vld [vmem:[#allocation18 + $0x4] sm:$0xf]
    %v440 = vld [vmem:[#allocation18 + $0x8] sm:$0xf]
    %v441 = vld [vmem:[#allocation18 + $0xc] sm:$0xf]
    %v442 = vld [vmem:[#allocation18 + $0x10] sm:$0xf]
    %v443 = vld [vmem:[#allocation18 + $0x14] sm:$0xf]
    %v444 = vld [vmem:[#allocation18 + $0x18] sm:$0xf]
    %v445 = vld [vmem:[#allocation18 + $0x1c] sm:$0xf]
    %v446 = vld [vmem:[#allocation18 + $0x20] sm:$0xf]
    %v447 = vld [vmem:[#allocation18 + $0x24] sm:$0xf]
    %v448 = vld [vmem:[#allocation18 + $0x28] sm:$0xf]
    %v449 = vld [vmem:[#allocation18 + $0x2c] sm:$0xf]
    %v450 = vld [vmem:[#allocation18 + $0x30] sm:$0xf]
    %v451 = vld [vmem:[#allocation18 + $0x34] sm:$0xf]
    %v452 = vld [vmem:[#allocation18 + $0x38] sm:$0xf]
    %v453 = vld [vmem:[#allocation18 + $0x3c] sm:$0xf]
    %v454 = vld [vmem:[%s12] sm:$0x1]
    %v455 = vld [vmem:[#allocation3] sm:$0x1]
    %v456 = vpack.c.bf16 %v455, %v455
    %v457 = vpack.c.bf16 0.0, 0.0
    %v522 = vunpack.c.l.b16 %v178
    %v523 = vunpack.c.h.b16 %v178
    %v524 = vunpack.c.l.b16 %v179
    %v525 = vunpack.c.h.b16 %v179
    %v526 = vunpack.c.l.b16 %v180
    %v527 = vunpack.c.h.b16 %v180
    %v528 = vunpack.c.l.b16 %v181
    %v529 = vunpack.c.h.b16 %v181
    %v530 = vunpack.c.l.b16 %v182
    %v531 = vunpack.c.h.b16 %v182
    %v532 = vunpack.c.l.b16 %v183
    %v533 = vunpack.c.h.b16 %v183
    %v534 = vunpack.c.l.b16 %v184
    %v535 = vunpack.c.h.b16 %v184
    %v536 = vunpack.c.l.b16 %v185
    %v537 = vunpack.c.h.b16 %v185
    %v538 = vunpack.c.l.b16 %v186
    %v539 = vunpack.c.h.b16 %v186
    %v540 = vunpack.c.l.b16 %v187
    %v541 = vunpack.c.h.b16 %v187
    %v542 = vunpack.c.l.b16 %v188
    %v543 = vunpack.c.h.b16 %v188
    %v544 = vunpack.c.l.b16 %v189
    %v545 = vunpack.c.h.b16 %v189
    %v546 = vunpack.c.l.b16 %v190
    %v547 = vunpack.c.h.b16 %v190
    %v548 = vunpack.c.l.b16 %v191
    %v549 = vunpack.c.h.b16 %v191
    %v550 = vunpack.c.l.b16 %v192
    %v551 = vunpack.c.h.b16 %v192
    %v552 = vunpack.c.l.b16 %v193
    %v553 = vunpack.c.h.b16 %v193
    %v554 = vunpack.c.l.b16 %v194
    %v555 = vunpack.c.h.b16 %v194
    %v556 = vunpack.c.l.b16 %v195
    %v557 = vunpack.c.h.b16 %v195
    %v558 = vunpack.c.l.b16 %v196
    %v559 = vunpack.c.h.b16 %v196
    %v560 = vunpack.c.l.b16 %v197
    %v561 = vunpack.c.h.b16 %v197
    %v562 = vunpack.c.l.b16 %v198
    %v563 = vunpack.c.h.b16 %v198
    %v564 = vunpack.c.l.b16 %v199
    %v565 = vunpack.c.h.b16 %v199
    %v566 = vunpack.c.l.b16 %v200
    %v567 = vunpack.c.h.b16 %v200
    %v568 = vunpack.c.l.b16 %v201
    %v569 = vunpack.c.h.b16 %v201
    %v570 = vunpack.c.l.b16 %v202
    %v571 = vunpack.c.h.b16 %v202
    %v572 = vunpack.c.l.b16 %v203
    %v573 = vunpack.c.h.b16 %v203
    %v574 = vunpack.c.l.b16 %v204
    %v575 = vunpack.c.h.b16 %v204
    %v576 = vunpack.c.l.b16 %v205
    %v577 = vunpack.c.h.b16 %v205
    %v578 = vunpack.c.l.b16 %v206
    %v579 = vunpack.c.h.b16 %v206
    %v580 = vunpack.c.l.b16 %v207
    %v581 = vunpack.c.h.b16 %v207
    %v582 = vunpack.c.l.b16 %v208
    %v583 = vunpack.c.h.b16 %v208
    %v584 = vunpack.c.l.b16 %v209
    %v585 = vunpack.c.h.b16 %v209
    %v586 = vunpack.c.l.b16 %v210
    %v587 = vunpack.c.h.b16 %v210
    %v588 = vunpack.c.l.b16 %v211
    %v589 = vunpack.c.h.b16 %v211
    %v590 = vunpack.c.l.b16 %v212
    %v591 = vunpack.c.h.b16 %v212
    %v592 = vunpack.c.l.b16 %v213
    %v593 = vunpack.c.h.b16 %v213
    %v594 = vunpack.c.l.b16 %v214
    %v595 = vunpack.c.h.b16 %v214
    %v596 = vunpack.c.l.b16 %v215
    %v597 = vunpack.c.h.b16 %v215
    %v598 = vunpack.c.l.b16 %v216
    %v599 = vunpack.c.h.b16 %v216
    %v600 = vunpack.c.l.b16 %v217
    %v601 = vunpack.c.h.b16 %v217
    %v602 = vunpack.c.l.b16 %v218
    %v603 = vunpack.c.h.b16 %v218
    %v604 = vunpack.c.l.b16 %v219
    %v605 = vunpack.c.h.b16 %v219
    %v606 = vunpack.c.l.b16 %v220
    %v607 = vunpack.c.h.b16 %v220
    %v608 = vunpack.c.l.b16 %v221
    %v609 = vunpack.c.h.b16 %v221
    %v610 = vunpack.c.l.b16 %v222
    %v611 = vunpack.c.h.b16 %v222
    %v612 = vunpack.c.l.b16 %v223
    %v613 = vunpack.c.h.b16 %v223
    %v614 = vunpack.c.l.b16 %v224
    %v615 = vunpack.c.h.b16 %v224
    %v616 = vunpack.c.l.b16 %v225
    %v617 = vunpack.c.h.b16 %v225
    %v618 = vunpack.c.l.b16 %v226
    %v619 = vunpack.c.h.b16 %v226
    %v620 = vunpack.c.l.b16 %v227
    %v621 = vunpack.c.h.b16 %v227
    %v622 = vunpack.c.l.b16 %v228
    %v623 = vunpack.c.h.b16 %v228
    %v624 = vunpack.c.l.b16 %v229
    %v625 = vunpack.c.h.b16 %v229
    %v626 = vunpack.c.l.b16 %v230
    %v627 = vunpack.c.h.b16 %v230
    %v628 = vunpack.c.l.b16 %v231
    %v629 = vunpack.c.h.b16 %v231
    %v630 = vunpack.c.l.b16 %v232
    %v631 = vunpack.c.h.b16 %v232
    %v632 = vunpack.c.l.b16 %v233
    %v633 = vunpack.c.h.b16 %v233
    %v634 = vunpack.c.l.b16 %v234
    %v635 = vunpack.c.h.b16 %v234
    %v636 = vunpack.c.l.b16 %v235
    %v637 = vunpack.c.h.b16 %v235
    %v638 = vunpack.c.l.b16 %v236
    %v639 = vunpack.c.h.b16 %v236
    %v640 = vunpack.c.l.b16 %v237
    %v641 = vunpack.c.h.b16 %v237
    %v642 = vunpack.c.l.b16 %v238
    %v643 = vunpack.c.h.b16 %v238
    %v644 = vunpack.c.l.b16 %v239
    %v645 = vunpack.c.h.b16 %v239
    %v646 = vunpack.c.l.b16 %v240
    %v647 = vunpack.c.h.b16 %v240
    %v648 = vunpack.c.l.b16 %v241
    %v649 = vunpack.c.h.b16 %v241
    %v650 = vpack.c.b16 %v526, %v522
    %v651 = vpack.c.b16 %v527, %v523
    %v652 = vpack.c.b16 %v528, %v524
    %v653 = vpack.c.b16 %v529, %v525
    %v654 = vpack.c.b16 %v534, %v530
    %v655 = vpack.c.b16 %v535, %v531
    %v656 = vpack.c.b16 %v536, %v532
    %v657 = vpack.c.b16 %v537, %v533
    %v658 = vpack.c.b16 %v542, %v538
    %v659 = vpack.c.b16 %v543, %v539
    %v660 = vpack.c.b16 %v544, %v540
    %v661 = vpack.c.b16 %v545, %v541
    %v662 = vpack.c.b16 %v550, %v546
    %v663 = vpack.c.b16 %v551, %v547
    %v664 = vpack.c.b16 %v552, %v548
    %v665 = vpack.c.b16 %v553, %v549
    %v666 = vpack.c.b16 %v558, %v554
    %v667 = vpack.c.b16 %v559, %v555
    %v668 = vpack.c.b16 %v560, %v556
    %v669 = vpack.c.b16 %v561, %v557
    %v670 = vpack.c.b16 %v566, %v562
    %v671 = vpack.c.b16 %v567, %v563
    %v672 = vpack.c.b16 %v568, %v564
    %v673 = vpack.c.b16 %v569, %v565
    %v674 = vpack.c.b16 %v574, %v570
    %v675 = vpack.c.b16 %v575, %v571
    %v676 = vpack.c.b16 %v576, %v572
    %v677 = vpack.c.b16 %v577, %v573
    %v678 = vpack.c.b16 %v582, %v578
    %v679 = vpack.c.b16 %v583, %v579
    %v680 = vpack.c.b16 %v584, %v580
    %v681 = vpack.c.b16 %v585, %v581
    %v682 = vpack.c.b16 %v590, %v586
    %v683 = vpack.c.b16 %v591, %v587
    %v684 = vpack.c.b16 %v592, %v588
    %v685 = vpack.c.b16 %v593, %v589
    %v686 = vpack.c.b16 %v598, %v594
    %v687 = vpack.c.b16 %v599, %v595
    %v688 = vpack.c.b16 %v600, %v596
    %v689 = vpack.c.b16 %v601, %v597
    %v690 = vpack.c.b16 %v606, %v602
    %v691 = vpack.c.b16 %v607, %v603
    %v692 = vpack.c.b16 %v608, %v604
    %v693 = vpack.c.b16 %v609, %v605
    %v694 = vpack.c.b16 %v614, %v610
    %v695 = vpack.c.b16 %v615, %v611
    %v696 = vpack.c.b16 %v616, %v612
    %v697 = vpack.c.b16 %v617, %v613
    %v698 = vpack.c.b16 %v622, %v618
    %v699 = vpack.c.b16 %v623, %v619
    %v700 = vpack.c.b16 %v624, %v620
    %v701 = vpack.c.b16 %v625, %v621
    %v702 = vpack.c.b16 %v630, %v626
    %v703 = vpack.c.b16 %v631, %v627
    %v704 = vpack.c.b16 %v632, %v628
    %v705 = vpack.c.b16 %v633, %v629
    %v706 = vpack.c.b16 %v638, %v634
    %v707 = vpack.c.b16 %v639, %v635
    %v708 = vpack.c.b16 %v640, %v636
    %v709 = vpack.c.b16 %v641, %v637
    %v710 = vpack.c.b16 %v646, %v642
    %v711 = vpack.c.b16 %v647, %v643
    %v712 = vpack.c.b16 %v648, %v644
    %v713 = vpack.c.b16 %v649, %v645
    %v779 = vlaneseq
    %v780 = vshrl.u32 %v779, 7
    %v781 = vsub.s32 0, %v780
    %v782 = vrot.slane %v242, %v781
    %v783 = vlaneseq
    %v784 = vshrl.u32 %v783, 7
    %v785 = vsub.s32 1, %v784
    %v786 = vrot.slane %v242, %v785
    %v787 = vlaneseq
    %v788 = vshrl.u32 %v787, 7
    %v789 = vsub.s32 2, %v788
    %v790 = vrot.slane %v242, %v789
    %v791 = vlaneseq
    %v792 = vshrl.u32 %v791, 7
    %v793 = vsub.s32 3, %v792
    %v794 = vrot.slane %v242, %v793
    %799 = vmatprep.subr.bf16.mxu0 %v651
    %800 = vmatpush1.bf16.msra.mxu0 %v650
    %801 = vmatprep.subr.bf16.mxu0 %v655
    %802 = vmatpush1.bf16.msra.mxu0 %v654
    %803 = vmatprep.subr.bf16.mxu0 %v659
    %804 = vmatpush1.bf16.msra.mxu0 %v658
    %805 = vmatprep.subr.bf16.mxu0 %v663
    %806 = vmatpush1.bf16.msra.mxu0 %v662
    %807 = vmatprep.subr.bf16.mxu0 %v667
    %808 = vmatpush1.bf16.msra.mxu0 %v666
    %809 = vmatprep.subr.bf16.mxu0 %v671
    %810 = vmatpush1.bf16.msra.mxu0 %v670
    %811 = vmatprep.subr.bf16.mxu0 %v675
    %812 = vmatpush1.bf16.msra.mxu0 %v674
    %813 = vmatprep.subr.bf16.mxu0 %v679
    %814 = vmatpush1.bf16.msra.mxu0 %v678
    %815 = vmatprep.subr.bf16.mxu0 %v683
    %816 = vmatpush1.bf16.msra.mxu0 %v682
    %817 = vmatprep.subr.bf16.mxu0 %v687
    %818 = vmatpush1.bf16.msra.mxu0 %v686
    %819 = vmatprep.subr.bf16.mxu0 %v691
    %820 = vmatpush1.bf16.msra.mxu0 %v690
    %821 = vmatprep.subr.bf16.mxu0 %v695
    %822 = vmatpush1.bf16.msra.mxu0 %v694
    %823 = vmatprep.subr.bf16.mxu0 %v699
    %824 = vmatpush1.bf16.msra.mxu0 %v698
    %825 = vmatprep.subr.bf16.mxu0 %v703
    %826 = vmatpush1.bf16.msra.mxu0 %v702
    %827 = vmatprep.subr.bf16.mxu0 %v707
    %828 = vmatpush1.bf16.msra.mxu0 %v706
    %829 = vmatprep.subr.bf16.mxu0 %v711
    %830 = vmatpush1.bf16.msra.mxu0 %v710
    %831 = vmatprep.mubr.bf16.mxu0 %v457
    %832 = vmatmul.mubr.bf16.gmra.mrb[0].mxu0 %v456
    %v833 = vpop.f32.mrb[0].mxu0
    %v834 = vadd.f32 %v782, %v833
    %v835 = vpop.f32.mrb[0].mxu0
    %v836 = vadd.f32 %v786, %v835
    %v837 = vpop.f32.mrb[0].mxu0
    %v838 = vpop.f32.mrb[0].mxu0
    %839 = vdwg.mxu0
    %840 = vmatprep.subr.bf16.mxu0 %v653
    %841 = vmatpush1.bf16.msra.mxu0 %v652
    %842 = vmatprep.subr.bf16.mxu0 %v657
    %843 = vmatpush1.bf16.msra.mxu0 %v656
    %844 = vmatprep.subr.bf16.mxu0 %v661
    %845 = vmatpush1.bf16.msra.mxu0 %v660
    %846 = vmatprep.subr.bf16.mxu0 %v665
    %847 = vmatpush1.bf16.msra.mxu0 %v664
    %848 = vmatprep.subr.bf16.mxu0 %v669
    %849 = vmatpush1.bf16.msra.mxu0 %v668
    %850 = vmatprep.subr.bf16.mxu0 %v673
    %851 = vmatpush1.bf16.msra.mxu0 %v672
    %852 = vmatprep.subr.bf16.mxu0 %v677
    %853 = vmatpush1.bf16.msra.mxu0 %v676
    %854 = vmatprep.subr.bf16.mxu0 %v681
    %855 = vmatpush1.bf16.msra.mxu0 %v680
    %856 = vmatprep.subr.bf16.mxu0 %v685
    %857 = vmatpush1.bf16.msra.mxu0 %v684
    %858 = vmatprep.subr.bf16.mxu0 %v689
    %859 = vmatpush1.bf16.msra.mxu0 %v688
    %860 = vmatprep.subr.bf16.mxu0 %v693
    %861 = vmatpush1.bf16.msra.mxu0 %v692
    %862 = vmatprep.subr.bf16.mxu0 %v697
    %863 = vmatpush1.bf16.msra.mxu0 %v696
    %864 = vmatprep.subr.bf16.mxu0 %v701
    %865 = vmatpush1.bf16.msra.mxu0 %v700
    %866 = vmatprep.subr.bf16.mxu0 %v705
    %867 = vmatpush1.bf16.msra.mxu0 %v704
    %868 = vmatprep.subr.bf16.mxu0 %v709
    %869 = vmatpush1.bf16.msra.mxu0 %v708
    %870 = vmatprep.subr.bf16.mxu0 %v713
    %871 = vmatpush1.bf16.msra.mxu0 %v712
    %872 = vmatprep.mubr.bf16.mxu0 %v457
    %873 = vmatmul.mubr.bf16.gmra.mrb[0].mxu0 %v456
    %v874 = vpop.f32.mrb[0].mxu0
    %v875 = vadd.f32 %v790, %v874
    %v876 = vpop.f32.mrb[0].mxu0
    %v877 = vadd.f32 %v794, %v876
    %v878 = vpop.f32.mrb[0].mxu0
    %v879 = vpop.f32.mrb[0].mxu0
    %880 = vdwg.mxu0
    %v881 = vtanh.pop %v834
    %v882 = vmul.f32 %v881, 0.5
    %v883 = vadd.f32 %v882, 0.5
    %v884 = vtanh.pop %v836
    %v885 = vmul.f32 %v884, 0.5
    %v886 = vadd.f32 %v885, 0.5
    %v887 = vtanh.pop %v875
    %v888 = vtanh.pop %v877
    %v889 = vmul.f32 %v888, 0.5
    %v890 = vadd.f32 %v889, 0.5
    %v891 = vmul.f32 %v886, 0.0
    %v892 = vmul.f32 %v883, %v887
    %v893 = vadd.f32 %v891, %v892
    %v894 = vtanh.pop %v893
    %v895 = vmul.f32 %v890, %v894
    %v896 = vpack.c.bf16 %v895, %v895
    %v961 = vunpack.c.l.b16 %v243
    %v962 = vunpack.c.h.b16 %v243
    %v963 = vunpack.c.l.b16 %v244
    %v964 = vunpack.c.h.b16 %v244
    %v965 = vunpack.c.l.b16 %v245
    %v966 = vunpack.c.h.b16 %v245
    %v967 = vunpack.c.l.b16 %v246
    %v968 = vunpack.c.h.b16 %v246
    %v969 = vunpack.c.l.b16 %v247
    %v970 = vunpack.c.h.b16 %v247
    %v971 = vunpack.c.l.b16 %v248
    %v972 = vunpack.c.h.b16 %v248
    %v973 = vunpack.c.l.b16 %v249
    %v974 = vunpack.c.h.b16 %v249
    %v975 = vunpack.c.l.b16 %v250
    %v976 = vunpack.c.h.b16 %v250
    %v977 = vunpack.c.l.b16 %v251
    %v978 = vunpack.c.h.b16 %v251
    %v979 = vunpack.c.l.b16 %v252
    %v980 = vunpack.c.h.b16 %v252
    %v981 = vunpack.c.l.b16 %v253
    %v982 = vunpack.c.h.b16 %v253
    %v983 = vunpack.c.l.b16 %v254
    %v984 = vunpack.c.h.b16 %v254
    %v985 = vunpack.c.l.b16 %v255
    %v986 = vunpack.c.h.b16 %v255
    %v987 = vunpack.c.l.b16 %v256
    %v988 = vunpack.c.h.b16 %v256
    %v989 = vunpack.c.l.b16 %v257
    %v990 = vunpack.c.h.b16 %v257
    %v991 = vunpack.c.l.b16 %v258
    %v992 = vunpack.c.h.b16 %v258
    %v993 = vunpack.c.l.b16 %v259
    %v994 = vunpack.c.h.b16 %v259
    %v995 = vunpack.c.l.b16 %v260
    %v996 = vunpack.c.h.b16 %v260
    %v997 = vunpack.c.l.b16 %v261
    %v998 = vunpack.c.h.b16 %v261
    %v999 = vunpack.c.l.b16 %v262
    %v1000 = vunpack.c.h.b16 %v262
    %v1001 = vunpack.c.l.b16 %v263
    %v1002 = vunpack.c.h.b16 %v263
    %v1003 = vunpack.c.l.b16 %v264
    %v1004 = vunpack.c.h.b16 %v264
    %v1005 = vunpack.c.l.b16 %v265
    %v1006 = vunpack.c.h.b16 %v265
    %v1007 = vunpack.c.l.b16 %v266
    %v1008 = vunpack.c.h.b16 %v266
    %v1009 = vunpack.c.l.b16 %v267
    %v1010 = vunpack.c.h.b16 %v267
    %v1011 = vunpack.c.l.b16 %v268
    %v1012 = vunpack.c.h.b16 %v268
    %v1013 = vunpack.c.l.b16 %v269
    %v1014 = vunpack.c.h.b16 %v269
    %v1015 = vunpack.c.l.b16 %v270
    %v1016 = vunpack.c.h.b16 %v270
    %v1017 = vunpack.c.l.b16 %v271
    %v1018 = vunpack.c.h.b16 %v271
    %v1019 = vunpack.c.l.b16 %v272
    %v1020 = vunpack.c.h.b16 %v272
    %v1021 = vunpack.c.l.b16 %v273
    %v1022 = vunpack.c.h.b16 %v273
    %v1023 = vunpack.c.l.b16 %v274
    %v1024 = vunpack.c.h.b16 %v274
    %v1025 = vunpack.c.l.b16 %v275
    %v1026 = vunpack.c.h.b16 %v275
    %v1027 = vunpack.c.l.b16 %v276
    %v1028 = vunpack.c.h.b16 %v276
    %v1029 = vunpack.c.l.b16 %v277
    %v1030 = vunpack.c.h.b16 %v277
    %v1031 = vunpack.c.l.b16 %v278
    %v1032 = vunpack.c.h.b16 %v278
    %v1033 = vunpack.c.l.b16 %v279
    %v1034 = vunpack.c.h.b16 %v279
    %v1035 = vunpack.c.l.b16 %v280
    %v1036 = vunpack.c.h.b16 %v280
    %v1037 = vunpack.c.l.b16 %v281
    %v1038 = vunpack.c.h.b16 %v281
    %v1039 = vunpack.c.l.b16 %v282
    %v1040 = vunpack.c.h.b16 %v282
    %v1041 = vunpack.c.l.b16 %v283
    %v1042 = vunpack.c.h.b16 %v283
    %v1043 = vunpack.c.l.b16 %v284
    %v1044 = vunpack.c.h.b16 %v284
    %v1045 = vunpack.c.l.b16 %v285
    %v1046 = vunpack.c.h.b16 %v285
    %v1047 = vunpack.c.l.b16 %v286
    %v1048 = vunpack.c.h.b16 %v286
    %v1049 = vunpack.c.l.b16 %v287
    %v1050 = vunpack.c.h.b16 %v287
    %v1051 = vunpack.c.l.b16 %v288
    %v1052 = vunpack.c.h.b16 %v288
    %v1053 = vunpack.c.l.b16 %v289
    %v1054 = vunpack.c.h.b16 %v289
    %v1055 = vunpack.c.l.b16 %v290
    %v1056 = vunpack.c.h.b16 %v290
    %v1057 = vunpack.c.l.b16 %v291
    %v1058 = vunpack.c.h.b16 %v291
    %v1059 = vunpack.c.l.b16 %v292
    %v1060 = vunpack.c.h.b16 %v292
    %v1061 = vunpack.c.l.b16 %v293
    %v1062 = vunpack.c.h.b16 %v293
    %v1063 = vunpack.c.l.b16 %v294
    %v1064 = vunpack.c.h.b16 %v294
    %v1065 = vunpack.c.l.b16 %v295
    %v1066 = vunpack.c.h.b16 %v295
    %v1067 = vunpack.c.l.b16 %v296
    %v1068 = vunpack.c.h.b16 %v296
    %v1069 = vunpack.c.l.b16 %v297
    %v1070 = vunpack.c.h.b16 %v297
    %v1071 = vunpack.c.l.b16 %v298
    %v1072 = vunpack.c.h.b16 %v298
    %v1073 = vunpack.c.l.b16 %v299
    %v1074 = vunpack.c.h.b16 %v299
    %v1075 = vunpack.c.l.b16 %v300
    %v1076 = vunpack.c.h.b16 %v300
    %v1077 = vunpack.c.l.b16 %v301
    %v1078 = vunpack.c.h.b16 %v301
    %v1079 = vunpack.c.l.b16 %v302
    %v1080 = vunpack.c.h.b16 %v302
    %v1081 = vunpack.c.l.b16 %v303
    %v1082 = vunpack.c.h.b16 %v303
    %v1083 = vunpack.c.l.b16 %v304
    %v1084 = vunpack.c.h.b16 %v304
    %v1085 = vunpack.c.l.b16 %v305
    %v1086 = vunpack.c.h.b16 %v305
    %v1087 = vunpack.c.l.b16 %v306
    %v1088 = vunpack.c.h.b16 %v306
    %v1089 = vpack.c.b16 %v965, %v961
    %v1090 = vpack.c.b16 %v966, %v962
    %v1091 = vpack.c.b16 %v967, %v963
    %v1092 = vpack.c.b16 %v968, %v964
    %v1093 = vpack.c.b16 %v973, %v969
    %v1094 = vpack.c.b16 %v974, %v970
    %v1095 = vpack.c.b16 %v975, %v971
    %v1096 = vpack.c.b16 %v976, %v972
    %v1097 = vpack.c.b16 %v981, %v977
    %v1098 = vpack.c.b16 %v982, %v978
    %v1099 = vpack.c.b16 %v983, %v979
    %v1100 = vpack.c.b16 %v984, %v980
    %v1101 = vpack.c.b16 %v989, %v985
    %v1102 = vpack.c.b16 %v990, %v986
    %v1103 = vpack.c.b16 %v991, %v987
    %v1104 = vpack.c.b16 %v992, %v988
    %v1105 = vpack.c.b16 %v997, %v993
    %v1106 = vpack.c.b16 %v998, %v994
    %v1107 = vpack.c.b16 %v999, %v995
    %v1108 = vpack.c.b16 %v1000, %v996
    %v1109 = vpack.c.b16 %v1005, %v1001
    %v1110 = vpack.c.b16 %v1006, %v1002
    %v1111 = vpack.c.b16 %v1007, %v1003
    %v1112 = vpack.c.b16 %v1008, %v1004
    %v1113 = vpack.c.b16 %v1013, %v1009
    %v1114 = vpack.c.b16 %v1014, %v1010
    %v1115 = vpack.c.b16 %v1015, %v1011
    %v1116 = vpack.c.b16 %v1016, %v1012
    %v1117 = vpack.c.b16 %v1021, %v1017
    %v1118 = vpack.c.b16 %v1022, %v1018
    %v1119 = vpack.c.b16 %v1023, %v1019
    %v1120 = vpack.c.b16 %v1024, %v1020
    %v1121 = vpack.c.b16 %v1029, %v1025
    %v1122 = vpack.c.b16 %v1030, %v1026
    %v1123 = vpack.c.b16 %v1031, %v1027
    %v1124 = vpack.c.b16 %v1032, %v1028
    %v1125 = vpack.c.b16 %v1037, %v1033
    %v1126 = vpack.c.b16 %v1038, %v1034
    %v1127 = vpack.c.b16 %v1039, %v1035
    %v1128 = vpack.c.b16 %v1040, %v1036
    %v1129 = vpack.c.b16 %v1045, %v1041
    %v1130 = vpack.c.b16 %v1046, %v1042
    %v1131 = vpack.c.b16 %v1047, %v1043
    %v1132 = vpack.c.b16 %v1048, %v1044
    %v1133 = vpack.c.b16 %v1053, %v1049
    %v1134 = vpack.c.b16 %v1054, %v1050
    %v1135 = vpack.c.b16 %v1055, %v1051
    %v1136 = vpack.c.b16 %v1056, %v1052
    %v1137 = vpack.c.b16 %v1061, %v1057
    %v1138 = vpack.c.b16 %v1062, %v1058
    %v1139 = vpack.c.b16 %v1063, %v1059
    %v1140 = vpack.c.b16 %v1064, %v1060
    %v1141 = vpack.c.b16 %v1069, %v1065
    %v1142 = vpack.c.b16 %v1070, %v1066
    %v1143 = vpack.c.b16 %v1071, %v1067
    %v1144 = vpack.c.b16 %v1072, %v1068
    %v1145 = vpack.c.b16 %v1077, %v1073
    %v1146 = vpack.c.b16 %v1078, %v1074
    %v1147 = vpack.c.b16 %v1079, %v1075
    %v1148 = vpack.c.b16 %v1080, %v1076
    %v1149 = vpack.c.b16 %v1085, %v1081
    %v1150 = vpack.c.b16 %v1086, %v1082
    %v1151 = vpack.c.b16 %v1087, %v1083
    %v1152 = vpack.c.b16 %v1088, %v1084
    %v1218 = vlaneseq
    %v1219 = vshrl.u32 %v1218, 7
    %v1220 = vsub.s32 0, %v1219
    %v1221 = vrot.slane %v307, %v1220
    %v1222 = vlaneseq
    %v1223 = vshrl.u32 %v1222, 7
    %v1224 = vsub.s32 1, %v1223
    %v1225 = vrot.slane %v307, %v1224
    %v1226 = vlaneseq
    %v1227 = vshrl.u32 %v1226, 7
    %v1228 = vsub.s32 2, %v1227
    %v1229 = vrot.slane %v307, %v1228
    %v1230 = vlaneseq
    %v1231 = vshrl.u32 %v1230, 7
    %v1232 = vsub.s32 3, %v1231
    %v1233 = vrot.slane %v307, %v1232
    %1238 = vmatprep.subr.bf16.mxu0 %v1090
    %1239 = vmatpush1.bf16.msra.mxu0 %v1089
    %1240 = vmatprep.subr.bf16.mxu0 %v1094
    %1241 = vmatpush1.bf16.msra.mxu0 %v1093
    %1242 = vmatprep.subr.bf16.mxu0 %v1098
    %1243 = vmatpush1.bf16.msra.mxu0 %v1097
    %1244 = vmatprep.subr.bf16.mxu0 %v1102
    %1245 = vmatpush1.bf16.msra.mxu0 %v1101
    %1246 = vmatprep.subr.bf16.mxu0 %v1106
    %1247 = vmatpush1.bf16.msra.mxu0 %v1105
    %1248 = vmatprep.subr.bf16.mxu0 %v1110
    %1249 = vmatpush1.bf16.msra.mxu0 %v1109
    %1250 = vmatprep.subr.bf16.mxu0 %v1114
    %1251 = vmatpush1.bf16.msra.mxu0 %v1113
    %1252 = vmatprep.subr.bf16.mxu0 %v1118
    %1253 = vmatpush1.bf16.msra.mxu0 %v1117
    %1254 = vmatprep.subr.bf16.mxu0 %v1122
    %1255 = vmatpush1.bf16.msra.mxu0 %v1121
    %1256 = vmatprep.subr.bf16.mxu0 %v1126
    %1257 = vmatpush1.bf16.msra.mxu0 %v1125
    %1258 = vmatprep.subr.bf16.mxu0 %v1130
    %1259 = vmatpush1.bf16.msra.mxu0 %v1129
    %1260 = vmatprep.subr.bf16.mxu0 %v1134
    %1261 = vmatpush1.bf16.msra.mxu0 %v1133
    %1262 = vmatprep.subr.bf16.mxu0 %v1138
    %1263 = vmatpush1.bf16.msra.mxu0 %v1137
    %1264 = vmatprep.subr.bf16.mxu0 %v1142
    %1265 = vmatpush1.bf16.msra.mxu0 %v1141
    %1266 = vmatprep.subr.bf16.mxu0 %v1146
    %1267 = vmatpush1.bf16.msra.mxu0 %v1145
    %1268 = vmatprep.subr.bf16.mxu0 %v1150
    %1269 = vmatpush1.bf16.msra.mxu0 %v1149
    %1270 = vmatprep.mubr.bf16.mxu0 %v457
    %1271 = vmatmul.mubr.bf16.gmra.mrb[0].mxu0 %v896
    %v1272 = vpop.f32.mrb[0].mxu0
    %v1273 = vadd.f32 %v1221, %v1272
    %v1274 = vpop.f32.mrb[0].mxu0
    %v1275 = vadd.f32 %v1225, %v1274
    %v1276 = vpop.f32.mrb[0].mxu0
    %v1277 = vpop.f32.mrb[0].mxu0
    %1278 = vdwg.mxu0
    %1279 = vmatprep.subr.bf16.mxu0 %v1092
    %1280 = vmatpush1.bf16.msra.mxu0 %v1091
    %1281 = vmatprep.subr.bf16.mxu0 %v1096
    %1282 = vmatpush1.bf16.msra.mxu0 %v1095
    %1283 = vmatprep.subr.bf16.mxu0 %v1100
    %1284 = vmatpush1.bf16.msra.mxu0 %v1099
    %1285 = vmatprep.subr.bf16.mxu0 %v1104
    %1286 = vmatpush1.bf16.msra.mxu0 %v1103
    %1287 = vmatprep.subr.bf16.mxu0 %v1108
    %1288 = vmatpush1.bf16.msra.mxu0 %v1107
    %1289 = vmatprep.subr.bf16.mxu0 %v1112
    %1290 = vmatpush1.bf16.msra.mxu0 %v1111
    %1291 = vmatprep.subr.bf16.mxu0 %v1116
    %1292 = vmatpush1.bf16.msra.mxu0 %v1115
    %1293 = vmatprep.subr.bf16.mxu0 %v1120
    %1294 = vmatpush1.bf16.msra.mxu0 %v1119
    %1295 = vmatprep.subr.bf16.mxu0 %v1124
    %1296 = vmatpush1.bf16.msra.mxu0 %v1123
    %1297 = vmatprep.subr.bf16.mxu0 %v1128
    %1298 = vmatpush1.bf16.msra.mxu0 %v1127
    %1299 = vmatprep.subr.bf16.mxu0 %v1132
    %1300 = vmatpush1.bf16.msra.mxu0 %v1131
    %1301 = vmatprep.subr.bf16.mxu0 %v1136
    %1302 = vmatpush1.bf16.msra.mxu0 %v1135
    %1303 = vmatprep.subr.bf16.mxu0 %v1140
    %1304 = vmatpush1.bf16.msra.mxu0 %v1139
    %1305 = vmatprep.subr.bf16.mxu0 %v1144
    %1306 = vmatpush1.bf16.msra.mxu0 %v1143
    %1307 = vmatprep.subr.bf16.mxu0 %v1148
    %1308 = vmatpush1.bf16.msra.mxu0 %v1147
    %1309 = vmatprep.subr.bf16.mxu0 %v1152
    %1310 = vmatpush1.bf16.msra.mxu0 %v1151
    %1311 = vmatprep.mubr.bf16.mxu0 %v457
    %1312 = vmatmul.mubr.bf16.gmra.mrb[0].mxu0 %v896
    %v1313 = vpop.f32.mrb[0].mxu0
    %v1314 = vadd.f32 %v1229, %v1313
    %v1315 = vpop.f32.mrb[0].mxu0
    %v1316 = vadd.f32 %v1233, %v1315
    %v1317 = vpop.f32.mrb[0].mxu0
    %v1318 = vpop.f32.mrb[0].mxu0
    %1319 = vdwg.mxu0
    %v1320 = vtanh.pop %v1273
    %v1321 = vmul.f32 %v1320, 0.5
    %v1322 = vadd.f32 %v1321, 0.5
    %v1323 = vtanh.pop %v1275
    %v1324 = vmul.f32 %v1323, 0.5
    %v1325 = vadd.f32 %v1324, 0.5
    %v1326 = vtanh.pop %v1314
    %v1327 = vtanh.pop %v1316
    %v1328 = vmul.f32 %v1327, 0.5
    %v1329 = vadd.f32 %v1328, 0.5
    %v1330 = vmul.f32 %v1325, 0.0
    %v1331 = vmul.f32 %v1322, %v1326
    %v1332 = vadd.f32 %v1330, %v1331
    %v1333 = vtanh.pop %v1332
    %v1334 = vmul.f32 %v1329, %v1333
    %s1335 = scalar_lea.vmem [#allocation3], 1
    %v1336 = vld [vmem:[%s1335] sm:$0x1]
    %v1337 = vpack.c.bf16 %v1336, %v1336
    %1338 = vmatprep.subr.bf16.mxu0 %v651
    %1339 = vmatpush1.bf16.msra.mxu0 %v650
    %1340 = vmatprep.subr.bf16.mxu0 %v655
    %1341 = vmatpush1.bf16.msra.mxu0 %v654
    %1342 = vmatprep.subr.bf16.mxu0 %v659
    %1343 = vmatpush1.bf16.msra.mxu0 %v658
    %1344 = vmatprep.subr.bf16.mxu0 %v663
    %1345 = vmatpush1.bf16.msra.mxu0 %v662
    %1346 = vmatprep.subr.bf16.mxu0 %v667
    %1347 = vmatpush1.bf16.msra.mxu0 %v666
    %1348 = vmatprep.subr.bf16.mxu0 %v671
    %1349 = vmatpush1.bf16.msra.mxu0 %v670
    %1350 = vmatprep.subr.bf16.mxu0 %v675
    %1351 = vmatpush1.bf16.msra.mxu0 %v674
    %1352 = vmatprep.subr.bf16.mxu0 %v679
    %1353 = vmatpush1.bf16.msra.mxu0 %v678
    %1354 = vmatprep.subr.bf16.mxu0 %v683
    %1355 = vmatpush1.bf16.msra.mxu0 %v682
    %1356 = vmatprep.subr.bf16.mxu0 %v687
    %1357 = vmatpush1.bf16.msra.mxu0 %v686
    %1358 = vmatprep.subr.bf16.mxu0 %v691
    %1359 = vmatpush1.bf16.msra.mxu0 %v690
    %1360 = vmatprep.subr.bf16.mxu0 %v695
    %1361 = vmatpush1.bf16.msra.mxu0 %v694
    %1362 = vmatprep.subr.bf16.mxu0 %v699
    %1363 = vmatpush1.bf16.msra.mxu0 %v698
    %1364 = vmatprep.subr.bf16.mxu0 %v703
    %1365 = vmatpush1.bf16.msra.mxu0 %v702
    %1366 = vmatprep.subr.bf16.mxu0 %v707
    %1367 = vmatpush1.bf16.msra.mxu0 %v706
    %1368 = vmatprep.subr.bf16.mxu0 %v711
    %1369 = vmatpush1.bf16.msra.mxu0 %v710
    %1370 = vmatprep.mubr.bf16.mxu0 %v896
    %1371 = vmatmul.mubr.bf16.gmra.mrb[0].mxu0 %v1337
    %v1372 = vpop.f32.mrb[0].mxu0
    %v1373 = vadd.f32 %v782, %v1372
    %v1374 = vpop.f32.mrb[0].mxu0
    %v1375 = vadd.f32 %v786, %v1374
    %v1376 = vpop.f32.mrb[0].mxu0
    %v1377 = vpop.f32.mrb[0].mxu0
    %1378 = vdwg.mxu0
    %1379 = vmatprep.subr.bf16.mxu0 %v653
    %1380 = vmatpush1.bf16.msra.mxu0 %v652
    %1381 = vmatprep.subr.bf16.mxu0 %v657
    %1382 = vmatpush1.bf16.msra.mxu0 %v656
    %1383 = vmatprep.subr.bf16.mxu0 %v661
    %1384 = vmatpush1.bf16.msra.mxu0 %v660
    %1385 = vmatprep.subr.bf16.mxu0 %v665
    %1386 = vmatpush1.bf16.msra.mxu0 %v664
    %1387 = vmatprep.subr.bf16.mxu0 %v669
    %1388 = vmatpush1.bf16.msra.mxu0 %v668
    %1389 = vmatprep.subr.bf16.mxu0 %v673
    %1390 = vmatpush1.bf16.msra.mxu0 %v672
    %1391 = vmatprep.subr.bf16.mxu0 %v677
    %1392 = vmatpush1.bf16.msra.mxu0 %v676
    %1393 = vmatprep.subr.bf16.mxu0 %v681
    %1394 = vmatpush1.bf16.msra.mxu0 %v680
    %1395 = vmatprep.subr.bf16.mxu0 %v685
    %1396 = vmatpush1.bf16.msra.mxu0 %v684
    %1397 = vmatprep.subr.bf16.mxu0 %v689
    %1398 = vmatpush1.bf16.msra.mxu0 %v688
    %1399 = vmatprep.subr.bf16.mxu0 %v693
    %1400 = vmatpush1.bf16.msra.mxu0 %v692
    %1401 = vmatprep.subr.bf16.mxu0 %v697
    %1402 = vmatpush1.bf16.msra.mxu0 %v696
    %1403 = vmatprep.subr.bf16.mxu0 %v701
    %1404 = vmatpush1.bf16.msra.mxu0 %v700
    %1405 = vmatprep.subr.bf16.mxu0 %v705
    %1406 = vmatpush1.bf16.msra.mxu0 %v704
    %1407 = vmatprep.subr.bf16.mxu0 %v709
    %1408 = vmatpush1.bf16.msra.mxu0 %v708
    %1409 = vmatprep.subr.bf16.mxu0 %v713
    %1410 = vmatpush1.bf16.msra.mxu0 %v712
    %1411 = vmatprep.mubr.bf16.mxu0 %v896
    %1412 = vmatmul.mubr.bf16.gmra.mrb[0].mxu0 %v1337
    %v1413 = vpop.f32.mrb[0].mxu0
    %v1414 = vadd.f32 %v790, %v1413
    %v1415 = vpop.f32.mrb[0].mxu0
    %v1416 = vadd.f32 %v794, %v1415
    %v1417 = vpop.f32.mrb[0].mxu0
    %v1418 = vpop.f32.mrb[0].mxu0
    %1419 = vdwg.mxu0
    %v1420 = vtanh.pop %v1373
    %v1421 = vmul.f32 %v1420, 0.5
    %v1422 = vadd.f32 %v1421, 0.5
    %v1423 = vtanh.pop %v1375
    %v1424 = vmul.f32 %v1423, 0.5
    %v1425 = vadd.f32 %v1424, 0.5
    %v1426 = vtanh.pop %v1414
    %v1427 = vtanh.pop %v1416
    %v1428 = vmul.f32 %v1427, 0.5
    %v1429 = vadd.f32 %v1428, 0.5
    %v1430 = vmul.f32 %v1425, %v893
    %v1431 = vmul.f32 %v1422, %v1426
    %v1432 = vadd.f32 %v1430, %v1431
    %v1433 = vtanh.pop %v1432
    %v1434 = vmul.f32 %v1429, %v1433
    %v1435 = vpack.c.bf16 %v1434, %v1434
    %v1436 = vpack.c.bf16 %v1334, %v1334
    %1437 = vmatprep.subr.bf16.mxu0 %v1090
    %1438 = vmatpush1.bf16.msra.mxu0 %v1089
    %1439 = vmatprep.subr.bf16.mxu0 %v1094
    %1440 = vmatpush1.bf16.msra.mxu0 %v1093
    %1441 = vmatprep.subr.bf16.mxu0 %v1098
    %1442 = vmatpush1.bf16.msra.mxu0 %v1097
    %1443 = vmatprep.subr.bf16.mxu0 %v1102
    %1444 = vmatpush1.bf16.msra.mxu0 %v1101
    %1445 = vmatprep.subr.bf16.mxu0 %v1106
    %1446 = vmatpush1.bf16.msra.mxu0 %v1105
    %1447 = vmatprep.subr.bf16.mxu0 %v1110
    %1448 = vmatpush1.bf16.msra.mxu0 %v1109
    %1449 = vmatprep.subr.bf16.mxu0 %v1114
    %1450 = vmatpush1.bf16.msra.mxu0 %v1113
    %1451 = vmatprep.subr.bf16.mxu0 %v1118
    %1452 = vmatpush1.bf16.msra.mxu0 %v1117
    %1453 = vmatprep.subr.bf16.mxu0 %v1122
    %1454 = vmatpush1.bf16.msra.mxu0 %v1121
    %1455 = vmatprep.subr.bf16.mxu0 %v1126
    %1456 = vmatpush1.bf16.msra.mxu0 %v1125
    %1457 = vmatprep.subr.bf16.mxu0 %v1130
    %1458 = vmatpush1.bf16.msra.mxu0 %v1129
    %1459 = vmatprep.subr.bf16.mxu0 %v1134
    %1460 = vmatpush1.bf16.msra.mxu0 %v1133
    %1461 = vmatprep.subr.bf16.mxu0 %v1138
    %1462 = vmatpush1.bf16.msra.mxu0 %v1137
    %1463 = vmatprep.subr.bf16.mxu0 %v1142
    %1464 = vmatpush1.bf16.msra.mxu0 %v1141
    %1465 = vmatprep.subr.bf16.mxu0 %v1146
    %1466 = vmatpush1.bf16.msra.mxu0 %v1145
    %1467 = vmatprep.subr.bf16.mxu0 %v1150
    %1468 = vmatpush1.bf16.msra.mxu0 %v1149
    %1469 = vmatprep.mubr.bf16.mxu0 %v1436
    %1470 = vmatmul.mubr.bf16.gmra.mrb[0].mxu0 %v1435
    %v1471 = vpop.f32.mrb[0].mxu0
    %v1472 = vadd.f32 %v1221, %v1471
    %v1473 = vpop.f32.mrb[0].mxu0
    %v1474 = vadd.f32 %v1225, %v1473
    %v1475 = vpop.f32.mrb[0].mxu0
    %v1476 = vpop.f32.mrb[0].mxu0
    %1477 = vdwg.mxu0
    %1478 = vmatprep.subr.bf16.mxu0 %v1092
    %1479 = vmatpush1.bf16.msra.mxu0 %v1091
    %1480 = vmatprep.subr.bf16.mxu0 %v1096
    %1481 = vmatpush1.bf16.msra.mxu0 %v1095
    %1482 = vmatprep.subr.bf16.mxu0 %v1100
    %1483 = vmatpush1.bf16.msra.mxu0 %v1099
    %1484 = vmatprep.subr.bf16.mxu0 %v1104
    %1485 = vmatpush1.bf16.msra.mxu0 %v1103
    %1486 = vmatprep.subr.bf16.mxu0 %v1108
    %1487 = vmatpush1.bf16.msra.mxu0 %v1107
    %1488 = vmatprep.subr.bf16.mxu0 %v1112
    %1489 = vmatpush1.bf16.msra.mxu0 %v1111
    %1490 = vmatprep.subr.bf16.mxu0 %v1116
    %1491 = vmatpush1.bf16.msra.mxu0 %v1115
    %1492 = vmatprep.subr.bf16.mxu0 %v1120
    %1493 = vmatpush1.bf16.msra.mxu0 %v1119
    %1494 = vmatprep.subr.bf16.mxu0 %v1124
    %1495 = vmatpush1.bf16.msra.mxu0 %v1123
    %1496 = vmatprep.subr.bf16.mxu0 %v1128
    %1497 = vmatpush1.bf16.msra.mxu0 %v1127
    %1498 = vmatprep.subr.bf16.mxu0 %v1132
    %1499 = vmatpush1.bf16.msra.mxu0 %v1131
    %1500 = vmatprep.subr.bf16.mxu0 %v1136
    %1501 = vmatpush1.bf16.msra.mxu0 %v1135
    %1502 = vmatprep.subr.bf16.mxu0 %v1140
    %1503 = vmatpush1.bf16.msra.mxu0 %v1139
    %1504 = vmatprep.subr.bf16.mxu0 %v1144
    %1505 = vmatpush1.bf16.msra.mxu0 %v1143
    %1506 = vmatprep.subr.bf16.mxu0 %v1148
    %1507 = vmatpush1.bf16.msra.mxu0 %v1147
    %1508 = vmatprep.subr.bf16.mxu0 %v1152
    %1509 = vmatpush1.bf16.msra.mxu0 %v1151
    %1510 = vmatprep.mubr.bf16.mxu0 %v1436
    %1511 = vmatmul.mubr.bf16.gmra.mrb[0].mxu0 %v1435
    %v1512 = vpop.f32.mrb[0].mxu0
    %v1513 = vadd.f32 %v1229, %v1512
    %v1514 = vpop.f32.mrb[0].mxu0
    %v1515 = vadd.f32 %v1233, %v1514
    %v1516 = vpop.f32.mrb[0].mxu0
    %v1517 = vpop.f32.mrb[0].mxu0
    %1518 = vdwg.mxu0
    %v1519 = vtanh.pop %v1472
    %v1520 = vmul.f32 %v1519, 0.5
    %v1521 = vadd.f32 %v1520, 0.5
    %v1522 = vtanh.pop %v1474
    %v1523 = vmul.f32 %v1522, 0.5
    %v1524 = vadd.f32 %v1523, 0.5
    %v1525 = vtanh.pop %v1513
    %v1526 = vtanh.pop %v1515
    %v1527 = vmul.f32 %v1526, 0.5
    %v1528 = vadd.f32 %v1527, 0.5
    %v1529 = vmul.f32 %v1524, %v1332
    %v1530 = vmul.f32 %v1521, %v1525
    %v1531 = vadd.f32 %v1529, %v1530
    %v1532 = vtanh.pop %v1531
    %v1533 = vmul.f32 %v1528, %v1532
    %s1534 = scalar_lea.vmem [#allocation3], 2
    %v1535 = vld [vmem:[%s1534] sm:$0x1]
    %v1536 = vpack.c.bf16 %v1535, %v1535
    %1537 = vmatprep.subr.bf16.mxu0 %v651
    %1538 = vmatpush1.bf16.msra.mxu0 %v650
    %1539 = vmatprep.subr.bf16.mxu0 %v655
    %1540 = vmatpush1.bf16.msra.mxu0 %v654
    %1541 = vmatprep.subr.bf16.mxu0 %v659
    %1542 = vmatpush1.bf16.msra.mxu0 %v658
    %1543 = vmatprep.subr.bf16.mxu0 %v663
    %1544 = vmatpush1.bf16.msra.mxu0 %v662
    %1545 = vmatprep.subr.bf16.mxu0 %v667
    %1546 = vmatpush1.bf16.msra.mxu0 %v666
    %1547 = vmatprep.subr.bf16.mxu0 %v671
    %1548 = vmatpush1.bf16.msra.mxu0 %v670
    %1549 = vmatprep.subr.bf16.mxu0 %v675
    %1550 = vmatpush1.bf16.msra.mxu0 %v674
    %1551 = vmatprep.subr.bf16.mxu0 %v679
    %1552 = vmatpush1.bf16.msra.mxu0 %v678
    %1553 = vmatprep.subr.bf16.mxu0 %v683
    %1554 = vmatpush1.bf16.msra.mxu0 %v682
    %1555 = vmatprep.subr.bf16.mxu0 %v687
    %1556 = vmatpush1.bf16.msra.mxu0 %v686
    %1557 = vmatprep.subr.bf16.mxu0 %v691
    %1558 = vmatpush1.bf16.msra.mxu0 %v690
    %1559 = vmatprep.subr.bf16.mxu0 %v695
    %1560 = vmatpush1.bf16.msra.mxu0 %v694
    %1561 = vmatprep.subr.bf16.mxu0 %v699
    %1562 = vmatpush1.bf16.msra.mxu0 %v698
    %1563 = vmatprep.subr.bf16.mxu0 %v703
    %1564 = vmatpush1.bf16.msra.mxu0 %v702
    %1565 = vmatprep.subr.bf16.mxu0 %v707
    %1566 = vmatpush1.bf16.msra.mxu0 %v706
    %1567 = vmatprep.subr.bf16.mxu0 %v711
    %1568 = vmatpush1.bf16.msra.mxu0 %v710
    %1569 = vmatprep.mubr.bf16.mxu0 %v1435
    %1570 = vmatmul.mubr.bf16.gmra.mrb[0].mxu0 %v1536
    %v1571 = vpop.f32.mrb[0].mxu0
    %v1572 = vadd.f32 %v782, %v1571
    %v1573 = vpop.f32.mrb[0].mxu0
    %v1574 = vadd.f32 %v786, %v1573
    %v1575 = vpop.f32.mrb[0].mxu0
    %v1576 = vpop.f32.mrb[0].mxu0
    %1577 = vdwg.mxu0
    %1578 = vmatprep.subr.bf16.mxu0 %v653
    %1579 = vmatpush1.bf16.msra.mxu0 %v652
    %1580 = vmatprep.subr.bf16.mxu0 %v657
    %1581 = vmatpush1.bf16.msra.mxu0 %v656
    %1582 = vmatprep.subr.bf16.mxu0 %v661
    %1583 = vmatpush1.bf16.msra.mxu0 %v660
    %1584 = vmatprep.subr.bf16.mxu0 %v665
    %1585 = vmatpush1.bf16.msra.mxu0 %v664
    %1586 = vmatprep.subr.bf16.mxu0 %v669
    %1587 = vmatpush1.bf16.msra.mxu0 %v668
    %1588 = vmatprep.subr.bf16.mxu0 %v673
    %1589 = vmatpush1.bf16.msra.mxu0 %v672
    %1590 = vmatprep.subr.bf16.mxu0 %v677
    %1591 = vmatpush1.bf16.msra.mxu0 %v676
    %1592 = vmatprep.subr.bf16.mxu0 %v681
    %1593 = vmatpush1.bf16.msra.mxu0 %v680
    %1594 = vmatprep.subr.bf16.mxu0 %v685
    %1595 = vmatpush1.bf16.msra.mxu0 %v684
    %1596 = vmatprep.subr.bf16.mxu0 %v689
    %1597 = vmatpush1.bf16.msra.mxu0 %v688
    %1598 = vmatprep.subr.bf16.mxu0 %v693
    %1599 = vmatpush1.bf16.msra.mxu0 %v692
    %1600 = vmatprep.subr.bf16.mxu0 %v697
    %1601 = vmatpush1.bf16.msra.mxu0 %v696
    %1602 = vmatprep.subr.bf16.mxu0 %v701
    %1603 = vmatpush1.bf16.msra.mxu0 %v700
    %1604 = vmatprep.subr.bf16.mxu0 %v705
    %1605 = vmatpush1.bf16.msra.mxu0 %v704
    %1606 = vmatprep.subr.bf16.mxu0 %v709
    %1607 = vmatpush1.bf16.msra.mxu0 %v708
    %1608 = vmatprep.subr.bf16.mxu0 %v713
    %1609 = vmatpush1.bf16.msra.mxu0 %v712
    %1610 = vmatprep.mubr.bf16.mxu0 %v1435
    %1611 = vmatmul.mubr.bf16.gmra.mrb[0].mxu0 %v1536
    %v1612 = vpop.f32.mrb[0].mxu0
    %v1613 = vadd.f32 %v790, %v1612
    %v1614 = vpop.f32.mrb[0].mxu0
    %v1615 = vadd.f32 %v794, %v1614
    %v1616 = vpop.f32.mrb[0].mxu0
    %v1617 = vpop.f32.mrb[0].mxu0
    %1618 = vdwg.mxu0
    %v1619 = vtanh.pop %v1572
    %v1620 = vmul.f32 %v1619, 0.5
    %v1621 = vadd.f32 %v1620, 0.5
    %v1622 = vtanh.pop %v1574
    %v1623 = vmul.f32 %v1622, 0.5
    %v1624 = vadd.f32 %v1623, 0.5
    %v1625 = vtanh.pop %v1613
    %v1626 = vtanh.pop %v1615
    %v1627 = vmul.f32 %v1626, 0.5
    %v1628 = vadd.f32 %v1627, 0.5
    %v1629 = vmul.f32 %v1624, %v1432
    %v1630 = vmul.f32 %v1621, %v1625
    %v1631 = vadd.f32 %v1629, %v1630
    %v1632 = vtanh.pop %v1631
    %v1633 = vmul.f32 %v1628, %v1632
    %v1634 = vpack.c.bf16 %v1633, %v1633
    %v1635 = vpack.c.bf16 %v1533, %v1533
    %1636 = vmatprep.subr.bf16.mxu0 %v1090
    %1637 = vmatpush1.bf16.msra.mxu0 %v1089
    %1638 = vmatprep.subr.bf16.mxu0 %v1094
    %1639 = vmatpush1.bf16.msra.mxu0 %v1093
    %1640 = vmatprep.subr.bf16.mxu0 %v1098
    %1641 = vmatpush1.bf16.msra.mxu0 %v1097
    %1642 = vmatprep.subr.bf16.mxu0 %v1102
    %1643 = vmatpush1.bf16.msra.mxu0 %v1101
    %1644 = vmatprep.subr.bf16.mxu0 %v1106
    %1645 = vmatpush1.bf16.msra.mxu0 %v1105
    %1646 = vmatprep.subr.bf16.mxu0 %v1110
    %1647 = vmatpush1.bf16.msra.mxu0 %v1109
    %1648 = vmatprep.subr.bf16.mxu0 %v1114
    %1649 = vmatpush1.bf16.msra.mxu0 %v1113
    %1650 = vmatprep.subr.bf16.mxu0 %v1118
    %1651 = vmatpush1.bf16.msra.mxu0 %v1117
    %1652 = vmatprep.subr.bf16.mxu0 %v1122
    %1653 = vmatpush1.bf16.msra.mxu0 %v1121
    %1654 = vmatprep.subr.bf16.mxu0 %v1126
    %1655 = vmatpush1.bf16.msra.mxu0 %v1125
    %1656 = vmatprep.subr.bf16.mxu0 %v1130
    %1657 = vmatpush1.bf16.msra.mxu0 %v1129
    %1658 = vmatprep.subr.bf16.mxu0 %v1134
    %1659 = vmatpush1.bf16.msra.mxu0 %v1133
    %1660 = vmatprep.subr.bf16.mxu0 %v1138
    %1661 = vmatpush1.bf16.msra.mxu0 %v1137
    %1662 = vmatprep.subr.bf16.mxu0 %v1142
    %1663 = vmatpush1.bf16.msra.mxu0 %v1141
    %1664 = vmatprep.subr.bf16.mxu0 %v1146
    %1665 = vmatpush1.bf16.msra.mxu0 %v1145
    %1666 = vmatprep.subr.bf16.mxu0 %v1150
    %1667 = vmatpush1.bf16.msra.mxu0 %v1149
    %1668 = vmatprep.mubr.bf16.mxu0 %v1635
    %1669 = vmatmul.mubr.bf16.gmra.mrb[0].mxu0 %v1634
    %v1670 = vpop.f32.mrb[0].mxu0
    %v1671 = vadd.f32 %v1221, %v1670
    %v1672 = vpop.f32.mrb[0].mxu0
    %v1673 = vadd.f32 %v1225, %v1672
    %v1674 = vpop.f32.mrb[0].mxu0
    %v1675 = vpop.f32.mrb[0].mxu0
    %1676 = vdwg.mxu0
    %1677 = vmatprep.subr.bf16.mxu0 %v1092
    %1678 = vmatpush1.bf16.msra.mxu0 %v1091
    %1679 = vmatprep.subr.bf16.mxu0 %v1096
    %1680 = vmatpush1.bf16.msra.mxu0 %v1095
    %1681 = vmatprep.subr.bf16.mxu0 %v1100
    %1682 = vmatpush1.bf16.msra.mxu0 %v1099
    %1683 = vmatprep.subr.bf16.mxu0 %v1104
    %1684 = vmatpush1.bf16.msra.mxu0 %v1103
    %1685 = vmatprep.subr.bf16.mxu0 %v1108
    %1686 = vmatpush1.bf16.msra.mxu0 %v1107
    %1687 = vmatprep.subr.bf16.mxu0 %v1112
    %1688 = vmatpush1.bf16.msra.mxu0 %v1111
    %1689 = vmatprep.subr.bf16.mxu0 %v1116
    %1690 = vmatpush1.bf16.msra.mxu0 %v1115
    %1691 = vmatprep.subr.bf16.mxu0 %v1120
    %1692 = vmatpush1.bf16.msra.mxu0 %v1119
    %1693 = vmatprep.subr.bf16.mxu0 %v1124
    %1694 = vmatpush1.bf16.msra.mxu0 %v1123
    %1695 = vmatprep.subr.bf16.mxu0 %v1128
    %1696 = vmatpush1.bf16.msra.mxu0 %v1127
    %1697 = vmatprep.subr.bf16.mxu0 %v1132
    %1698 = vmatpush1.bf16.msra.mxu0 %v1131
    %1699 = vmatprep.subr.bf16.mxu0 %v1136
    %1700 = vmatpush1.bf16.msra.mxu0 %v1135
    %1701 = vmatprep.subr.bf16.mxu0 %v1140
    %1702 = vmatpush1.bf16.msra.mxu0 %v1139
    %1703 = vmatprep.subr.bf16.mxu0 %v1144
    %1704 = vmatpush1.bf16.msra.mxu0 %v1143
    %1705 = vmatprep.subr.bf16.mxu0 %v1148
    %1706 = vmatpush1.bf16.msra.mxu0 %v1147
    %1707 = vmatprep.subr.bf16.mxu0 %v1152
    %1708 = vmatpush1.bf16.msra.mxu0 %v1151
    %1709 = vmatprep.mubr.bf16.mxu0 %v1635
    %1710 = vmatmul.mubr.bf16.gmra.mrb[0].mxu0 %v1634
    %v1711 = vpop.f32.mrb[0].mxu0
    %v1712 = vadd.f32 %v1229, %v1711
    %v1713 = vpop.f32.mrb[0].mxu0
    %v1714 = vadd.f32 %v1233, %v1713
    %v1715 = vpop.f32.mrb[0].mxu0
    %v1716 = vpop.f32.mrb[0].mxu0
    %1717 = vdwg.mxu0
    %v1718 = vtanh.pop %v1671
    %v1719 = vmul.f32 %v1718, 0.5
    %v1720 = vadd.f32 %v1719, 0.5
    %v1721 = vtanh.pop %v1673
    %v1722 = vmul.f32 %v1721, 0.5
    %v1723 = vadd.f32 %v1722, 0.5
    %v1724 = vtanh.pop %v1712
    %v1725 = vtanh.pop %v1714
    %v1726 = vmul.f32 %v1725, 0.5
    %v1727 = vadd.f32 %v1726, 0.5
    %v1728 = vmul.f32 %v1723, %v1531
    %v1729 = vmul.f32 %v1720, %v1724
    %v1730 = vadd.f32 %v1728, %v1729
    %v1731 = vtanh.pop %v1730
    %v1732 = vmul.f32 %v1727, %v1731
    %s1733 = scalar_lea.vmem [#allocation3], 3
    %v1734 = vld [vmem:[%s1733] sm:$0x1]
    %v1735 = vpack.c.bf16 %v1734, %v1734
    %1736 = vmatprep.subr.bf16.mxu0 %v651
    %1737 = vmatpush1.bf16.msra.mxu0 %v650
    %1738 = vmatprep.subr.bf16.mxu0 %v655
    %1739 = vmatpush1.bf16.msra.mxu0 %v654
    %1740 = vmatprep.subr.bf16.mxu0 %v659
    %1741 = vmatpush1.bf16.msra.mxu0 %v658
    %1742 = vmatprep.subr.bf16.mxu0 %v663
    %1743 = vmatpush1.bf16.msra.mxu0 %v662
    %1744 = vmatprep.subr.bf16.mxu0 %v667
    %1745 = vmatpush1.bf16.msra.mxu0 %v666
    %1746 = vmatprep.subr.bf16.mxu0 %v671
    %1747 = vmatpush1.bf16.msra.mxu0 %v670
    %1748 = vmatprep.subr.bf16.mxu0 %v675
    %1749 = vmatpush1.bf16.msra.mxu0 %v674
    %1750 = vmatprep.subr.bf16.mxu0 %v679
    %1751 = vmatpush1.bf16.msra.mxu0 %v678
    %1752 = vmatprep.subr.bf16.mxu0 %v683
    %1753 = vmatpush1.bf16.msra.mxu0 %v682
    %1754 = vmatprep.subr.bf16.mxu0 %v687
    %1755 = vmatpush1.bf16.msra.mxu0 %v686
    %1756 = vmatprep.subr.bf16.mxu0 %v691
    %1757 = vmatpush1.bf16.msra.mxu0 %v690
    %1758 = vmatprep.subr.bf16.mxu0 %v695
    %1759 = vmatpush1.bf16.msra.mxu0 %v694
    %1760 = vmatprep.subr.bf16.mxu0 %v699
    %1761 = vmatpush1.bf16.msra.mxu0 %v698
    %1762 = vmatprep.subr.bf16.mxu0 %v703
    %1763 = vmatpush1.bf16.msra.mxu0 %v702
    %1764 = vmatprep.subr.bf16.mxu0 %v707
    %1765 = vmatpush1.bf16.msra.mxu0 %v706
    %1766 = vmatprep.subr.bf16.mxu0 %v711
    %1767 = vmatpush1.bf16.msra.mxu0 %v710
    %1768 = vmatprep.mubr.bf16.mxu0 %v1634
    %1769 = vmatmul.mubr.bf16.gmra.mrb[0].mxu0 %v1735
    %v1770 = vpop.f32.mrb[0].mxu0
    %v1771 = vadd.f32 %v782, %v1770
    %v1772 = vpop.f32.mrb[0].mxu0
    %v1773 = vadd.f32 %v786, %v1772
    %v1774 = vpop.f32.mrb[0].mxu0
    %v1775 = vpop.f32.mrb[0].mxu0
    %1776 = vdwg.mxu0
    %1777 = vmatprep.subr.bf16.mxu0 %v653
    %1778 = vmatpush1.bf16.msra.mxu0 %v652
    %1779 = vmatprep.subr.bf16.mxu0 %v657
    %1780 = vmatpush1.bf16.msra.mxu0 %v656
    %1781 = vmatprep.subr.bf16.mxu0 %v661
    %1782 = vmatpush1.bf16.msra.mxu0 %v660
    %1783 = vmatprep.subr.bf16.mxu0 %v665
    %1784 = vmatpush1.bf16.msra.mxu0 %v664
    %1785 = vmatprep.subr.bf16.mxu0 %v669
    %1786 = vmatpush1.bf16.msra.mxu0 %v668
    %1787 = vmatprep.subr.bf16.mxu0 %v673
    %1788 = vmatpush1.bf16.msra.mxu0 %v672
    %1789 = vmatprep.subr.bf16.mxu0 %v677
    %1790 = vmatpush1.bf16.msra.mxu0 %v676
    %1791 = vmatprep.subr.bf16.mxu0 %v681
    %1792 = vmatpush1.bf16.msra.mxu0 %v680
    %1793 = vmatprep.subr.bf16.mxu0 %v685
    %1794 = vmatpush1.bf16.msra.mxu0 %v684
    %1795 = vmatprep.subr.bf16.mxu0 %v689
    %1796 = vmatpush1.bf16.msra.mxu0 %v688
    %1797 = vmatprep.subr.bf16.mxu0 %v693
    %1798 = vmatpush1.bf16.msra.mxu0 %v692
    %1799 = vmatprep.subr.bf16.mxu0 %v697
    %1800 = vmatpush1.bf16.msra.mxu0 %v696
    %1801 = vmatprep.subr.bf16.mxu0 %v701
    %1802 = vmatpush1.bf16.msra.mxu0 %v700
    %1803 = vmatprep.subr.bf16.mxu0 %v705
    %1804 = vmatpush1.bf16.msra.mxu0 %v704
    %1805 = vmatprep.subr.bf16.mxu0 %v709
    %1806 = vmatpush1.bf16.msra.mxu0 %v708
    %1807 = vmatprep.subr.bf16.mxu0 %v713
    %1808 = vmatpush1.bf16.msra.mxu0 %v712
    %1809 = vmatprep.mubr.bf16.mxu0 %v1634
    %1810 = vmatmul.mubr.bf16.gmra.mrb[0].mxu0 %v1735
    %v1811 = vpop.f32.mrb[0].mxu0
    %v1812 = vadd.f32 %v790, %v1811
    %v1813 = vpop.f32.mrb[0].mxu0
    %v1814 = vadd.f32 %v794, %v1813
    %v1815 = vpop.f32.mrb[0].mxu0
    %v1816 = vpop.f32.mrb[0].mxu0
    %1817 = vdwg.mxu0
    %v1818 = vtanh.pop %v1771
    %v1819 = vmul.f32 %v1818, 0.5
    %v1820 = vadd.f32 %v1819, 0.5
    %v1821 = vtanh.pop %v1773
    %v1822 = vmul.f32 %v1821, 0.5
    %v1823 = vadd.f32 %v1822, 0.5
    %v1824 = vtanh.pop %v1812
    %v1825 = vtanh.pop %v1814
    %v1826 = vmul.f32 %v1825, 0.5
    %v1827 = vadd.f32 %v1826, 0.5
    %v1828 = vmul.f32 %v1823, %v1631
    %v1829 = vmul.f32 %v1820, %v1824
    %v1830 = vadd.f32 %v1828, %v1829
    %v1831 = vtanh.pop %v1830
    %v1832 = vmul.f32 %v1827, %v1831
    %v1833 = vpack.c.bf16 %v1832, %v1832
    %v1834 = vpack.c.bf16 %v1732, %v1732
    %1835 = vmatprep.subr.bf16.mxu0 %v1090
    %1836 = vmatpush1.bf16.msra.mxu0 %v1089
    %1837 = vmatprep.subr.bf16.mxu0 %v1094
    %1838 = vmatpush1.bf16.msra.mxu0 %v1093
    %1839 = vmatprep.subr.bf16.mxu0 %v1098
    %1840 = vmatpush1.bf16.msra.mxu0 %v1097
    %1841 = vmatprep.subr.bf16.mxu0 %v1102
    %1842 = vmatpush1.bf16.msra.mxu0 %v1101
    %1843 = vmatprep.subr.bf16.mxu0 %v1106
    %1844 = vmatpush1.bf16.msra.mxu0 %v1105
    %1845 = vmatprep.subr.bf16.mxu0 %v1110
    %1846 = vmatpush1.bf16.msra.mxu0 %v1109
    %1847 = vmatprep.subr.bf16.mxu0 %v1114
    %1848 = vmatpush1.bf16.msra.mxu0 %v1113
    %1849 = vmatprep.subr.bf16.mxu0 %v1118
    %1850 = vmatpush1.bf16.msra.mxu0 %v1117
    %1851 = vmatprep.subr.bf16.mxu0 %v1122
    %1852 = vmatpush1.bf16.msra.mxu0 %v1121
    %1853 = vmatprep.subr.bf16.mxu0 %v1126
    %1854 = vmatpush1.bf16.msra.mxu0 %v1125
    %1855 = vmatprep.subr.bf16.mxu0 %v1130
    %1856 = vmatpush1.bf16.msra.mxu0 %v1129
    %1857 = vmatprep.subr.bf16.mxu0 %v1134
    %1858 = vmatpush1.bf16.msra.mxu0 %v1133
    %1859 = vmatprep.subr.bf16.mxu0 %v1138
    %1860 = vmatpush1.bf16.msra.mxu0 %v1137
    %1861 = vmatprep.subr.bf16.mxu0 %v1142
    %1862 = vmatpush1.bf16.msra.mxu0 %v1141
    %1863 = vmatprep.subr.bf16.mxu0 %v1146
    %1864 = vmatpush1.bf16.msra.mxu0 %v1145
    %1865 = vmatprep.subr.bf16.mxu0 %v1150
    %1866 = vmatpush1.bf16.msra.mxu0 %v1149
    %1867 = vmatprep.mubr.bf16.mxu0 %v1834
    %1868 = vmatmul.mubr.bf16.gmra.mrb[0].mxu0 %v1833
    %v1869 = vpop.f32.mrb[0].mxu0
    %v1870 = vadd.f32 %v1221, %v1869
    %v1871 = vpop.f32.mrb[0].mxu0
    %v1872 = vadd.f32 %v1225, %v1871
    %v1873 = vpop.f32.mrb[0].mxu0
    %v1874 = vpop.f32.mrb[0].mxu0
    %1875 = vdwg.mxu0
    %1876 = vmatprep.subr.bf16.mxu0 %v1092
    %1877 = vmatpush1.bf16.msra.mxu0 %v1091
    %1878 = vmatprep.subr.bf16.mxu0 %v1096
    %1879 = vmatpush1.bf16.msra.mxu0 %v1095
    %1880 = vmatprep.subr.bf16.mxu0 %v1100
    %1881 = vmatpush1.bf16.msra.mxu0 %v1099
    %1882 = vmatprep.subr.bf16.mxu0 %v1104
    %1883 = vmatpush1.bf16.msra.mxu0 %v1103
    %1884 = vmatprep.subr.bf16.mxu0 %v1108
    %1885 = vmatpush1.bf16.msra.mxu0 %v1107
    %1886 = vmatprep.subr.bf16.mxu0 %v1112
    %1887 = vmatpush1.bf16.msra.mxu0 %v1111
    %1888 = vmatprep.subr.bf16.mxu0 %v1116
    %1889 = vmatpush1.bf16.msra.mxu0 %v1115
    %1890 = vmatprep.subr.bf16.mxu0 %v1120
    %1891 = vmatpush1.bf16.msra.mxu0 %v1119
    %1892 = vmatprep.subr.bf16.mxu0 %v1124
    %1893 = vmatpush1.bf16.msra.mxu0 %v1123
    %1894 = vmatprep.subr.bf16.mxu0 %v1128
    %1895 = vmatpush1.bf16.msra.mxu0 %v1127
    %1896 = vmatprep.subr.bf16.mxu0 %v1132
    %1897 = vmatpush1.bf16.msra.mxu0 %v1131
    %1898 = vmatprep.subr.bf16.mxu0 %v1136
    %1899 = vmatpush1.bf16.msra.mxu0 %v1135
    %1900 = vmatprep.subr.bf16.mxu0 %v1140
    %1901 = vmatpush1.bf16.msra.mxu0 %v1139
    %1902 = vmatprep.subr.bf16.mxu0 %v1144
    %1903 = vmatpush1.bf16.msra.mxu0 %v1143
    %1904 = vmatprep.subr.bf16.mxu0 %v1148
    %1905 = vmatpush1.bf16.msra.mxu0 %v1147
    %1906 = vmatprep.subr.bf16.mxu0 %v1152
    %1907 = vmatpush1.bf16.msra.mxu0 %v1151
    %1908 = vmatprep.mubr.bf16.mxu0 %v1834
    %1909 = vmatmul.mubr.bf16.gmra.mrb[0].mxu0 %v1833
    %v1910 = vpop.f32.mrb[0].mxu0
    %v1911 = vadd.f32 %v1229, %v1910
    %v1912 = vpop.f32.mrb[0].mxu0
    %v1913 = vadd.f32 %v1233, %v1912
    %v1914 = vpop.f32.mrb[0].mxu0
    %v1915 = vpop.f32.mrb[0].mxu0
    %1916 = vdwg.mxu0
    %v1917 = vtanh.pop %v1870
    %v1918 = vmul.f32 %v1917, 0.5
    %v1919 = vadd.f32 %v1918, 0.5
    %v1920 = vtanh.pop %v1872
    %v1921 = vmul.f32 %v1920, 0.5
    %v1922 = vadd.f32 %v1921, 0.5
    %v1923 = vtanh.pop %v1911
    %v1924 = vtanh.pop %v1913
    %v1925 = vmul.f32 %v1924, 0.5
    %v1926 = vadd.f32 %v1925, 0.5
    %v1927 = vmul.f32 %v1922, %v1730
    %v1928 = vmul.f32 %v1919, %v1923
    %v1929 = vadd.f32 %v1927, %v1928
    %v1930 = vtanh.pop %v1929
    %v1931 = vmul.f32 %v1926, %v1930
    %v1964 = vunpack.c.l.b16 %v340
    %v1965 = vunpack.c.h.b16 %v340
    %v1966 = vunpack.c.l.b16 %v341
    %v1967 = vunpack.c.h.b16 %v341
    %v1968 = vunpack.c.l.b16 %v342
    %v1969 = vunpack.c.h.b16 %v342
    %v1970 = vunpack.c.l.b16 %v343
    %v1971 = vunpack.c.h.b16 %v343
    %v1972 = vunpack.c.l.b16 %v344
    %v1973 = vunpack.c.h.b16 %v344
    %v1974 = vunpack.c.l.b16 %v345
    %v1975 = vunpack.c.h.b16 %v345
    %v1976 = vunpack.c.l.b16 %v346
    %v1977 = vunpack.c.h.b16 %v346
    %v1978 = vunpack.c.l.b16 %v347
    %v1979 = vunpack.c.h.b16 %v347
    %v1980 = vunpack.c.l.b16 %v348
    %v1981 = vunpack.c.h.b16 %v348
    %v1982 = vunpack.c.l.b16 %v349
    %v1983 = vunpack.c.h.b16 %v349
    %v1984 = vunpack.c.l.b16 %v350
    %v1985 = vunpack.c.h.b16 %v350
    %v1986 = vunpack.c.l.b16 %v351
    %v1987 = vunpack.c.h.b16 %v351
    %v1988 = vunpack.c.l.b16 %v352
    %v1989 = vunpack.c.h.b16 %v352
    %v1990 = vunpack.c.l.b16 %v353
    %v1991 = vunpack.c.h.b16 %v353
    %v1992 = vunpack.c.l.b16 %v354
    %v1993 = vunpack.c.h.b16 %v354
    %v1994 = vunpack.c.l.b16 %v355
    %v1995 = vunpack.c.h.b16 %v355
    %v1996 = vunpack.c.l.b16 %v356
    %v1997 = vunpack.c.h.b16 %v356
    %v1998 = vunpack.c.l.b16 %v357
    %v1999 = vunpack.c.h.b16 %v357
    %v2000 = vunpack.c.l.b16 %v358
    %v2001 = vunpack.c.h.b16 %v358
    %v2002 = vunpack.c.l.b16 %v359
    %v2003 = vunpack.c.h.b16 %v359
    %v2004 = vunpack.c.l.b16 %v360
    %v2005 = vunpack.c.h.b16 %v360
    %v2006 = vunpack.c.l.b16 %v361
    %v2007 = vunpack.c.h.b16 %v361
    %v2008 = vunpack.c.l.b16 %v362
    %v2009 = vunpack.c.h.b16 %v362
    %v2010 = vunpack.c.l.b16 %v363
    %v2011 = vunpack.c.h.b16 %v363
    %v2012 = vunpack.c.l.b16 %v364
    %v2013 = vunpack.c.h.b16 %v364
    %v2014 = vunpack.c.l.b16 %v365
    %v2015 = vunpack.c.h.b16 %v365
    %v2016 = vunpack.c.l.b16 %v366
    %v2017 = vunpack.c.h.b16 %v366
    %v2018 = vunpack.c.l.b16 %v367
    %v2019 = vunpack.c.h.b16 %v367
    %v2020 = vunpack.c.l.b16 %v368
    %v2021 = vunpack.c.h.b16 %v368
    %v2022 = vunpack.c.l.b16 %v369
    %v2023 = vunpack.c.h.b16 %v369
    %v2024 = vunpack.c.l.b16 %v370
    %v2025 = vunpack.c.h.b16 %v370
    %v2026 = vunpack.c.l.b16 %v371
    %v2027 = vunpack.c.h.b16 %v371
    %v2028 = vpack.c.b16 %v1968, %v1964
    %v2029 = vpack.c.b16 %v1969, %v1965
    %v2030 = vpack.c.b16 %v1970, %v1966
    %v2031 = vpack.c.b16 %v1971, %v1967
    %v2032 = vpack.c.b16 %v1976, %v1972
    %v2033 = vpack.c.b16 %v1977, %v1973
    %v2034 = vpack.c.b16 %v1978, %v1974
    %v2035 = vpack.c.b16 %v1979, %v1975
    %v2036 = vpack.c.b16 %v1984, %v1980
    %v2037 = vpack.c.b16 %v1985, %v1981
    %v2038 = vpack.c.b16 %v1986, %v1982
    %v2039 = vpack.c.b16 %v1987, %v1983
    %v2040 = vpack.c.b16 %v1992, %v1988
    %v2041 = vpack.c.b16 %v1993, %v1989
    %v2042 = vpack.c.b16 %v1994, %v1990
    %v2043 = vpack.c.b16 %v1995, %v1991
    %v2044 = vpack.c.b16 %v2000, %v1996
    %v2045 = vpack.c.b16 %v2001, %v1997
    %v2046 = vpack.c.b16 %v2002, %v1998
    %v2047 = vpack.c.b16 %v2003, %v1999
    %v2048 = vpack.c.b16 %v2008, %v2004
    %v2049 = vpack.c.b16 %v2009, %v2005
    %v2050 = vpack.c.b16 %v2010, %v2006
    %v2051 = vpack.c.b16 %v2011, %v2007
    %v2052 = vpack.c.b16 %v2016, %v2012
    %v2053 = vpack.c.b16 %v2017, %v2013
    %v2054 = vpack.c.b16 %v2018, %v2014
    %v2055 = vpack.c.b16 %v2019, %v2015
    %v2056 = vpack.c.b16 %v2024, %v2020
    %v2057 = vpack.c.b16 %v2025, %v2021
    %v2058 = vpack.c.b16 %v2026, %v2022
    %v2059 = vpack.c.b16 %v2027, %v2023
    %2092 = vmatprep.subr.bf16.mxu0 %v2029
    %2093 = vmatpush1.bf16.msra.mxu0 %v2028
    %2094 = vmatprep.subr.bf16.mxu0 %v2033
    %2095 = vmatpush1.bf16.msra.mxu0 %v2032
    %2096 = vmatprep.subr.bf16.mxu0 %v2037
    %2097 = vmatpush1.bf16.msra.mxu0 %v2036
    %2098 = vmatprep.subr.bf16.mxu0 %v2041
    %2099 = vmatpush1.bf16.msra.mxu0 %v2040
    %2100 = vmatprep.subr.bf16.mxu0 %v2045
    %2101 = vmatpush1.bf16.msra.mxu0 %v2044
    %2102 = vmatprep.subr.bf16.mxu0 %v2049
    %2103 = vmatpush1.bf16.msra.mxu0 %v2048
    %2104 = vmatprep.subr.bf16.mxu0 %v2053
    %2105 = vmatpush1.bf16.msra.mxu0 %v2052
    %2106 = vmatprep.subr.bf16.mxu0 %v2057
    %2107 = vmatpush1.bf16.msra.mxu0 %v2056
    %2108 = vmatprep.subr.bf16.mxu0 0
    %2109 = vmatpush1.bf16.msra.mxu0 0
    %2110 = vmatprep.subr.bf16.mxu0 0
    %2111 = vmatpush1.bf16.msra.mxu0 0
    %2112 = vmatprep.subr.bf16.mxu0 0
    %2113 = vmatpush1.bf16.msra.mxu0 0
    %2114 = vmatprep.subr.bf16.mxu0 0
    %2115 = vmatpush1.bf16.msra.mxu0 0
    %2116 = vmatprep.subr.bf16.mxu0 0
    %2117 = vmatpush1.bf16.msra.mxu0 0
    %2118 = vmatprep.subr.bf16.mxu0 0
    %2119 = vmatpush1.bf16.msra.mxu0 0
    %2120 = vmatprep.subr.bf16.mxu0 0
    %2121 = vmatpush1.bf16.msra.mxu0 0
    %2122 = vmatprep.subr.bf16.mxu0 0
    %2123 = vmatpush1.bf16.msra.mxu0 0
    %2124 = vmatprep.mubr.bf16.mxu0 0
    %2125 = vmatmul.mubr.bf16.gmra.mrb[0].mxu0 %v1833
    %v2126 = vpop.f32.mrb[0].mxu0
    %v2127 = vadd.f32 0.0, %v2126
    %v2128 = vpop.f32.mrb[0].mxu0
    %v2129 = vadd.f32 0.0, %v2128
    %v2130 = vpop.f32.mrb[0].mxu0
    %v2131 = vpop.f32.mrb[0].mxu0
    %2132 = vdwg.mxu0
    %2133 = vmatprep.subr.bf16.mxu0 %v2031
    %2134 = vmatpush1.bf16.msra.mxu0 %v2030
    %2135 = vmatprep.subr.bf16.mxu0 %v2035
    %2136 = vmatpush1.bf16.msra.mxu0 %v2034
    %2137 = vmatprep.subr.bf16.mxu0 %v2039
    %2138 = vmatpush1.bf16.msra.mxu0 %v2038
    %2139 = vmatprep.subr.bf16.mxu0 %v2043
    %2140 = vmatpush1.bf16.msra.mxu0 %v2042
    %2141 = vmatprep.subr.bf16.mxu0 %v2047
    %2142 = vmatpush1.bf16.msra.mxu0 %v2046
    %2143 = vmatprep.subr.bf16.mxu0 %v2051
    %2144 = vmatpush1.bf16.msra.mxu0 %v2050
    %2145 = vmatprep.subr.bf16.mxu0 %v2055
    %2146 = vmatpush1.bf16.msra.mxu0 %v2054
    %2147 = vmatprep.subr.bf16.mxu0 %v2059
    %2148 = vmatpush1.bf16.msra.mxu0 %v2058
    %2149 = vmatprep.subr.bf16.mxu0 0
    %2150 = vmatpush1.bf16.msra.mxu0 0
    %2151 = vmatprep.subr.bf16.mxu0 0
    %2152 = vmatpush1.bf16.msra.mxu0 0
    %2153 = vmatprep.subr.bf16.mxu0 0
    %2154 = vmatpush1.bf16.msra.mxu0 0
    %2155 = vmatprep.subr.bf16.mxu0 0
    %2156 = vmatpush1.bf16.msra.mxu0 0
    %2157 = vmatprep.subr.bf16.mxu0 0
    %2158 = vmatpush1.bf16.msra.mxu0 0
    %2159 = vmatprep.subr.bf16.mxu0 0
    %2160 = vmatpush1.bf16.msra.mxu0 0
    %2161 = vmatprep.subr.bf16.mxu0 0
    %2162 = vmatpush1.bf16.msra.mxu0 0
    %2163 = vmatprep.subr.bf16.mxu0 0
    %2164 = vmatpush1.bf16.msra.mxu0 0
    %2165 = vmatprep.mubr.bf16.mxu0 0
    %2166 = vmatmul.mubr.bf16.gmra.mrb[0].mxu0 %v1833
    %v2167 = vpop.f32.mrb[0].mxu0
    %v2168 = vadd.f32 0.0, %v2167
    %v2169 = vpop.f32.mrb[0].mxu0
    %v2170 = vadd.f32 0.0, %v2169
    %v2171 = vpop.f32.mrb[0].mxu0
    %v2172 = vpop.f32.mrb[0].mxu0
    %2173 = vdwg.mxu0
    %v2174 = vpack.c.bf16 %v1931, %v1931
    %v2207 = vunpack.c.l.b16 %v405
    %v2208 = vunpack.c.h.b16 %v405
    %v2209 = vunpack.c.l.b16 %v406
    %v2210 = vunpack.c.h.b16 %v406
    %v2211 = vunpack.c.l.b16 %v407
    %v2212 = vunpack.c.h.b16 %v407
    %v2213 = vunpack.c.l.b16 %v408
    %v2214 = vunpack.c.h.b16 %v408
    %v2215 = vunpack.c.l.b16 %v409
    %v2216 = vunpack.c.h.b16 %v409
    %v2217 = vunpack.c.l.b16 %v410
    %v2218 = vunpack.c.h.b16 %v410
    %v2219 = vunpack.c.l.b16 %v411
    %v2220 = vunpack.c.h.b16 %v411
    %v2221 = vunpack.c.l.b16 %v412
    %v2222 = vunpack.c.h.b16 %v412
    %v2223 = vunpack.c.l.b16 %v413
    %v2224 = vunpack.c.h.b16 %v413
    %v2225 = vunpack.c.l.b16 %v414
    %v2226 = vunpack.c.h.b16 %v414
    %v2227 = vunpack.c.l.b16 %v415
    %v2228 = vunpack.c.h.b16 %v415
    %v2229 = vunpack.c.l.b16 %v416
    %v2230 = vunpack.c.h.b16 %v416
    %v2231 = vunpack.c.l.b16 %v417
    %v2232 = vunpack.c.h.b16 %v417
    %v2233 = vunpack.c.l.b16 %v418
    %v2234 = vunpack.c.h.b16 %v418
    %v2235 = vunpack.c.l.b16 %v419
    %v2236 = vunpack.c.h.b16 %v419
    %v2237 = vunpack.c.l.b16 %v420
    %v2238 = vunpack.c.h.b16 %v420
    %v2239 = vunpack.c.l.b16 %v421
    %v2240 = vunpack.c.h.b16 %v421
    %v2241 = vunpack.c.l.b16 %v422
    %v2242 = vunpack.c.h.b16 %v422
    %v2243 = vunpack.c.l.b16 %v423
    %v2244 = vunpack.c.h.b16 %v423
    %v2245 = vunpack.c.l.b16 %v424
    %v2246 = vunpack.c.h.b16 %v424
    %v2247 = vunpack.c.l.b16 %v425
    %v2248 = vunpack.c.h.b16 %v425
    %v2249 = vunpack.c.l.b16 %v426
    %v2250 = vunpack.c.h.b16 %v426
    %v2251 = vunpack.c.l.b16 %v427
    %v2252 = vunpack.c.h.b16 %v427
    %v2253 = vunpack.c.l.b16 %v428
    %v2254 = vunpack.c.h.b16 %v428
    %v2255 = vunpack.c.l.b16 %v429
    %v2256 = vunpack.c.h.b16 %v429
    %v2257 = vunpack.c.l.b16 %v430
    %v2258 = vunpack.c.h.b16 %v430
    %v2259 = vunpack.c.l.b16 %v431
    %v2260 = vunpack.c.h.b16 %v431
    %v2261 = vunpack.c.l.b16 %v432
    %v2262 = vunpack.c.h.b16 %v432
    %v2263 = vunpack.c.l.b16 %v433
    %v2264 = vunpack.c.h.b16 %v433
    %v2265 = vunpack.c.l.b16 %v434
    %v2266 = vunpack.c.h.b16 %v434
    %v2267 = vunpack.c.l.b16 %v435
    %v2268 = vunpack.c.h.b16 %v435
    %v2269 = vunpack.c.l.b16 %v436
    %v2270 = vunpack.c.h.b16 %v436
    %v2271 = vpack.c.b16 %v2211, %v2207
    %v2272 = vpack.c.b16 %v2212, %v2208
    %v2273 = vpack.c.b16 %v2213, %v2209
    %v2274 = vpack.c.b16 %v2214, %v2210
    %v2275 = vpack.c.b16 %v2219, %v2215
    %v2276 = vpack.c.b16 %v2220, %v2216
    %v2277 = vpack.c.b16 %v2221, %v2217
    %v2278 = vpack.c.b16 %v2222, %v2218
    %v2279 = vpack.c.b16 %v2227, %v2223
    %v2280 = vpack.c.b16 %v2228, %v2224
    %v2281 = vpack.c.b16 %v2229, %v2225
    %v2282 = vpack.c.b16 %v2230, %v2226
    %v2283 = vpack.c.b16 %v2235, %v2231
    %v2284 = vpack.c.b16 %v2236, %v2232
    %v2285 = vpack.c.b16 %v2237, %v2233
    %v2286 = vpack.c.b16 %v2238, %v2234
    %v2287 = vpack.c.b16 %v2243, %v2239
    %v2288 = vpack.c.b16 %v2244, %v2240
    %v2289 = vpack.c.b16 %v2245, %v2241
    %v2290 = vpack.c.b16 %v2246, %v2242
    %v2291 = vpack.c.b16 %v2251, %v2247
    %v2292 = vpack.c.b16 %v2252, %v2248
    %v2293 = vpack.c.b16 %v2253, %v2249
    %v2294 = vpack.c.b16 %v2254, %v2250
    %v2295 = vpack.c.b16 %v2259, %v2255
    %v2296 = vpack.c.b16 %v2260, %v2256
    %v2297 = vpack.c.b16 %v2261, %v2257
    %v2298 = vpack.c.b16 %v2262, %v2258
    %v2299 = vpack.c.b16 %v2267, %v2263
    %v2300 = vpack.c.b16 %v2268, %v2264
    %v2301 = vpack.c.b16 %v2269, %v2265
    %v2302 = vpack.c.b16 %v2270, %v2266
    %2335 = vmatprep.subr.bf16.mxu0 %v2272
    %2336 = vmatpush1.bf16.msra.mxu0 %v2271
    %2337 = vmatprep.subr.bf16.mxu0 %v2276
    %2338 = vmatpush1.bf16.msra.mxu0 %v2275
    %2339 = vmatprep.subr.bf16.mxu0 %v2280
    %2340 = vmatpush1.bf16.msra.mxu0 %v2279
    %2341 = vmatprep.subr.bf16.mxu0 %v2284
    %2342 = vmatpush1.bf16.msra.mxu0 %v2283
    %2343 = vmatprep.subr.bf16.mxu0 %v2288
    %2344 = vmatpush1.bf16.msra.mxu0 %v2287
    %2345 = vmatprep.subr.bf16.mxu0 %v2292
    %2346 = vmatpush1.bf16.msra.mxu0 %v2291
    %2347 = vmatprep.subr.bf16.mxu0 %v2296
    %2348 = vmatpush1.bf16.msra.mxu0 %v2295
    %2349 = vmatprep.subr.bf16.mxu0 %v2300
    %2350 = vmatpush1.bf16.msra.mxu0 %v2299
    %2351 = vmatprep.subr.bf16.mxu0 0
    %2352 = vmatpush1.bf16.msra.mxu0 0
    %2353 = vmatprep.subr.bf16.mxu0 0
    %2354 = vmatpush1.bf16.msra.mxu0 0
    %2355 = vmatprep.subr.bf16.mxu0 0
    %2356 = vmatpush1.bf16.msra.mxu0 0
    %2357 = vmatprep.subr.bf16.mxu0 0
    %2358 = vmatpush1.bf16.msra.mxu0 0
    %2359 = vmatprep.subr.bf16.mxu0 0
    %2360 = vmatpush1.bf16.msra.mxu0 0
    %2361 = vmatprep.subr.bf16.mxu0 0
    %2362 = vmatpush1.bf16.msra.mxu0 0
    %2363 = vmatprep.subr.bf16.mxu0 0
    %2364 = vmatpush1.bf16.msra.mxu0 0
    %2365 = vmatprep.subr.bf16.mxu0 0
    %2366 = vmatpush1.bf16.msra.mxu0 0
    %2367 = vmatprep.mubr.bf16.mxu0 0
    %2368 = vmatmul.mubr.bf16.gmra.mrb[0].mxu0 %v2174
    %v2369 = vpop.f32.mrb[0].mxu0
    %v2370 = vadd.f32 0.0, %v2369
    %v2371 = vpop.f32.mrb[0].mxu0
    %v2372 = vadd.f32 0.0, %v2371
    %v2373 = vpop.f32.mrb[0].mxu0
    %v2374 = vpop.f32.mrb[0].mxu0
    %2375 = vdwg.mxu0
    %2376 = vmatprep.subr.bf16.mxu0 %v2274
    %2377 = vmatpush1.bf16.msra.mxu0 %v2273
    %2378 = vmatprep.subr.bf16.mxu0 %v2278
    %2379 = vmatpush1.bf16.msra.mxu0 %v2277
    %2380 = vmatprep.subr.bf16.mxu0 %v2282
    %2381 = vmatpush1.bf16.msra.mxu0 %v2281
    %2382 = vmatprep.subr.bf16.mxu0 %v2286
    %2383 = vmatpush1.bf16.msra.mxu0 %v2285
    %2384 = vmatprep.subr.bf16.mxu0 %v2290
    %2385 = vmatpush1.bf16.msra.mxu0 %v2289
    %2386 = vmatprep.subr.bf16.mxu0 %v2294
    %2387 = vmatpush1.bf16.msra.mxu0 %v2293
    %2388 = vmatprep.subr.bf16.mxu0 %v2298
    %2389 = vmatpush1.bf16.msra.mxu0 %v2297
    %2390 = vmatprep.subr.bf16.mxu0 %v2302
    %2391 = vmatpush1.bf16.msra.mxu0 %v2301
    %2392 = vmatprep.subr.bf16.mxu0 0
    %2393 = vmatpush1.bf16.msra.mxu0 0
    %2394 = vmatprep.subr.bf16.mxu0 0
    %2395 = vmatpush1.bf16.msra.mxu0 0
    %2396 = vmatprep.subr.bf16.mxu0 0
    %2397 = vmatpush1.bf16.msra.mxu0 0
    %2398 = vmatprep.subr.bf16.mxu0 0
    %2399 = vmatpush1.bf16.msra.mxu0 0
    %2400 = vmatprep.subr.bf16.mxu0 0
    %2401 = vmatpush1.bf16.msra.mxu0 0
    %2402 = vmatprep.subr.bf16.mxu0 0
    %2403 = vmatpush1.bf16.msra.mxu0 0
    %2404 = vmatprep.subr.bf16.mxu0 0
    %2405 = vmatpush1.bf16.msra.mxu0 0
    %2406 = vmatprep.subr.bf16.mxu0 0
    %2407 = vmatpush1.bf16.msra.mxu0 0
    %2408 = vmatprep.mubr.bf16.mxu0 0
    %2409 = vmatmul.mubr.bf16.gmra.mrb[0].mxu0 %v2174
    %v2410 = vpop.f32.mrb[0].mxu0
    %v2411 = vadd.f32 0.0, %v2410
    %v2412 = vpop.f32.mrb[0].mxu0
    %v2413 = vadd.f32 0.0, %v2412
    %v2414 = vpop.f32.mrb[0].mxu0
    %v2415 = vpop.f32.mrb[0].mxu0
    %2416 = vdwg.mxu0
    %2417 = vst [vmem:[#allocation2] sm:$0x1] 0.0
    %v2450 = vunpack.c.l.b16 %v308
    %v2451 = vunpack.c.h.b16 %v308
    %v2452 = vunpack.c.l.b16 %v309
    %v2453 = vunpack.c.h.b16 %v309
    %v2454 = vunpack.c.l.b16 %v310
    %v2455 = vunpack.c.h.b16 %v310
    %v2456 = vunpack.c.l.b16 %v311
    %v2457 = vunpack.c.h.b16 %v311
    %v2458 = vunpack.c.l.b16 %v312
    %v2459 = vunpack.c.h.b16 %v312
    %v2460 = vunpack.c.l.b16 %v313
    %v2461 = vunpack.c.h.b16 %v313
    %v2462 = vunpack.c.l.b16 %v314
    %v2463 = vunpack.c.h.b16 %v314
    %v2464 = vunpack.c.l.b16 %v315
    %v2465 = vunpack.c.h.b16 %v315
    %v2466 = vunpack.c.l.b16 %v316
    %v2467 = vunpack.c.h.b16 %v316
    %v2468 = vunpack.c.l.b16 %v317
    %v2469 = vunpack.c.h.b16 %v317
    %v2470 = vunpack.c.l.b16 %v318
    %v2471 = vunpack.c.h.b16 %v318
    %v2472 = vunpack.c.l.b16 %v319
    %v2473 = vunpack.c.h.b16 %v319
    %v2474 = vunpack.c.l.b16 %v320
    %v2475 = vunpack.c.h.b16 %v320
    %v2476 = vunpack.c.l.b16 %v321
    %v2477 = vunpack.c.h.b16 %v321
    %v2478 = vunpack.c.l.b16 %v322
    %v2479 = vunpack.c.h.b16 %v322
    %v2480 = vunpack.c.l.b16 %v323
    %v2481 = vunpack.c.h.b16 %v323
    %v2482 = vunpack.c.l.b16 %v324
    %v2483 = vunpack.c.h.b16 %v324
    %v2484 = vunpack.c.l.b16 %v325
    %v2485 = vunpack.c.h.b16 %v325
    %v2486 = vunpack.c.l.b16 %v326
    %v2487 = vunpack.c.h.b16 %v326
    %v2488 = vunpack.c.l.b16 %v327
    %v2489 = vunpack.c.h.b16 %v327
    %v2490 = vunpack.c.l.b16 %v328
    %v2491 = vunpack.c.h.b16 %v328
    %v2492 = vunpack.c.l.b16 %v329
    %v2493 = vunpack.c.h.b16 %v329
    %v2494 = vunpack.c.l.b16 %v330
    %v2495 = vunpack.c.h.b16 %v330
    %v2496 = vunpack.c.l.b16 %v331
    %v2497 = vunpack.c.h.b16 %v331
    %v2498 = vunpack.c.l.b16 %v332
    %v2499 = vunpack.c.h.b16 %v332
    %v2500 = vunpack.c.l.b16 %v333
    %v2501 = vunpack.c.h.b16 %v333
    %v2502 = vunpack.c.l.b16 %v334
    %v2503 = vunpack.c.h.b16 %v334
    %v2504 = vunpack.c.l.b16 %v335
    %v2505 = vunpack.c.h.b16 %v335
    %v2506 = vunpack.c.l.b16 %v336
    %v2507 = vunpack.c.h.b16 %v336
    %v2508 = vunpack.c.l.b16 %v337
    %v2509 = vunpack.c.h.b16 %v337
    %v2510 = vunpack.c.l.b16 %v338
    %v2511 = vunpack.c.h.b16 %v338
    %v2512 = vunpack.c.l.b16 %v339
    %v2513 = vunpack.c.h.b16 %v339
    %v2514 = vpack.c.b16 %v2454, %v2450
    %v2515 = vpack.c.b16 %v2455, %v2451
    %v2516 = vpack.c.b16 %v2456, %v2452
    %v2517 = vpack.c.b16 %v2457, %v2453
    %v2518 = vpack.c.b16 %v2462, %v2458
    %v2519 = vpack.c.b16 %v2463, %v2459
    %v2520 = vpack.c.b16 %v2464, %v2460
    %v2521 = vpack.c.b16 %v2465, %v2461
    %v2522 = vpack.c.b16 %v2470, %v2466
    %v2523 = vpack.c.b16 %v2471, %v2467
    %v2524 = vpack.c.b16 %v2472, %v2468
    %v2525 = vpack.c.b16 %v2473, %v2469
    %v2526 = vpack.c.b16 %v2478, %v2474
    %v2527 = vpack.c.b16 %v2479, %v2475
    %v2528 = vpack.c.b16 %v2480, %v2476
    %v2529 = vpack.c.b16 %v2481, %v2477
    %v2530 = vpack.c.b16 %v2486, %v2482
    %v2531 = vpack.c.b16 %v2487, %v2483
    %v2532 = vpack.c.b16 %v2488, %v2484
    %v2533 = vpack.c.b16 %v2489, %v2485
    %v2534 = vpack.c.b16 %v2494, %v2490
    %v2535 = vpack.c.b16 %v2495, %v2491
    %v2536 = vpack.c.b16 %v2496, %v2492
    %v2537 = vpack.c.b16 %v2497, %v2493
    %v2538 = vpack.c.b16 %v2502, %v2498
    %v2539 = vpack.c.b16 %v2503, %v2499
    %v2540 = vpack.c.b16 %v2504, %v2500
    %v2541 = vpack.c.b16 %v2505, %v2501
    %v2542 = vpack.c.b16 %v2510, %v2506
    %v2543 = vpack.c.b16 %v2511, %v2507
    %v2544 = vpack.c.b16 %v2512, %v2508
    %v2545 = vpack.c.b16 %v2513, %v2509
    %2578 = vmatprep.subr.bf16.mxu0 %v2515
    %2579 = vmatpush1.bf16.msra.mxu0 %v2514
    %2580 = vmatprep.subr.bf16.mxu0 %v2519
    %2581 = vmatpush1.bf16.msra.mxu0 %v2518
    %2582 = vmatprep.subr.bf16.mxu0 %v2523
    %2583 = vmatpush1.bf16.msra.mxu0 %v2522
    %2584 = vmatprep.subr.bf16.mxu0 %v2527
    %2585 = vmatpush1.bf16.msra.mxu0 %v2526
    %2586 = vmatprep.subr.bf16.mxu0 %v2531
    %2587 = vmatpush1.bf16.msra.mxu0 %v2530
    %2588 = vmatprep.subr.bf16.mxu0 %v2535
    %2589 = vmatpush1.bf16.msra.mxu0 %v2534
    %2590 = vmatprep.subr.bf16.mxu0 %v2539
    %2591 = vmatpush1.bf16.msra.mxu0 %v2538
    %2592 = vmatprep.subr.bf16.mxu0 %v2543
    %2593 = vmatpush1.bf16.msra.mxu0 %v2542
    %2594 = vmatprep.subr.bf16.mxu0 0
    %2595 = vmatpush1.bf16.msra.mxu0 0
    %2596 = vmatprep.subr.bf16.mxu0 0
    %2597 = vmatpush1.bf16.msra.mxu0 0
    %2598 = vmatprep.subr.bf16.mxu0 0
    %2599 = vmatpush1.bf16.msra.mxu0 0
    %2600 = vmatprep.subr.bf16.mxu0 0
    %2601 = vmatpush1.bf16.msra.mxu0 0
    %2602 = vmatprep.subr.bf16.mxu0 0
    %2603 = vmatpush1.bf16.msra.mxu0 0
    %2604 = vmatprep.subr.bf16.mxu0 0
    %2605 = vmatpush1.bf16.msra.mxu0 0
    %2606 = vmatprep.subr.bf16.mxu0 0
    %2607 = vmatpush1.bf16.msra.mxu0 0
    %2608 = vmatprep.subr.bf16.mxu0 0
    %2609 = vmatpush1.bf16.msra.mxu0 0
    %2610 = vmatprep.mubr.bf16.mxu0 0
    %2611 = vmatmul.mubr.bf16.gmra.mrb[0].mxu0 0
    %v2612 = vpop.f32.mrb[0].mxu0
    %v2613 = vadd.f32 %v2127, %v2612
    %v2614 = vpop.f32.mrb[0].mxu0
    %v2615 = vadd.f32 %v2129, %v2614
    %v2616 = vpop.f32.mrb[0].mxu0
    %v2617 = vpop.f32.mrb[0].mxu0
    %2618 = vdwg.mxu0
    %2619 = vmatprep.subr.bf16.mxu0 %v2517
    %2620 = vmatpush1.bf16.msra.mxu0 %v2516
    %2621 = vmatprep.subr.bf16.mxu0 %v2521
    %2622 = vmatpush1.bf16.msra.mxu0 %v2520
    %2623 = vmatprep.subr.bf16.mxu0 %v2525
    %2624 = vmatpush1.bf16.msra.mxu0 %v2524
    %2625 = vmatprep.subr.bf16.mxu0 %v2529
    %2626 = vmatpush1.bf16.msra.mxu0 %v2528
    %2627 = vmatprep.subr.bf16.mxu0 %v2533
    %2628 = vmatpush1.bf16.msra.mxu0 %v2532
    %2629 = vmatprep.subr.bf16.mxu0 %v2537
    %2630 = vmatpush1.bf16.msra.mxu0 %v2536
    %2631 = vmatprep.subr.bf16.mxu0 %v2541
    %2632 = vmatpush1.bf16.msra.mxu0 %v2540
    %2633 = vmatprep.subr.bf16.mxu0 %v2545
    %2634 = vmatpush1.bf16.msra.mxu0 %v2544
    %2635 = vmatprep.subr.bf16.mxu0 0
    %2636 = vmatpush1.bf16.msra.mxu0 0
    %2637 = vmatprep.subr.bf16.mxu0 0
    %2638 = vmatpush1.bf16.msra.mxu0 0
    %2639 = vmatprep.subr.bf16.mxu0 0
    %2640 = vmatpush1.bf16.msra.mxu0 0
    %2641 = vmatprep.subr.bf16.mxu0 0
    %2642 = vmatpush1.bf16.msra.mxu0 0
    %2643 = vmatprep.subr.bf16.mxu0 0
    %2644 = vmatpush1.bf16.msra.mxu0 0
    %2645 = vmatprep.subr.bf16.mxu0 0
    %2646 = vmatpush1.bf16.msra.mxu0 0
    %2647 = vmatprep.subr.bf16.mxu0 0
    %2648 = vmatpush1.bf16.msra.mxu0 0
    %2649 = vmatprep.subr.bf16.mxu0 0
    %2650 = vmatpush1.bf16.msra.mxu0 0
    %2651 = vmatprep.mubr.bf16.mxu0 0
    %2652 = vmatmul.mubr.bf16.gmra.mrb[0].mxu0 0
    %v2653 = vpop.f32.mrb[0].mxu0
    %v2654 = vadd.f32 %v2168, %v2653
    %v2655 = vpop.f32.mrb[0].mxu0
    %v2656 = vadd.f32 %v2170, %v2655
    %v2657 = vpop.f32.mrb[0].mxu0
    %v2658 = vpop.f32.mrb[0].mxu0
    %2659 = vdwg.mxu0
    %v2661 = vlaneseq
    %v2662 = vshrl.u32 %v2661, 7
    %v2663 = vsub.s32 0, %v2662
    %v2664 = vrot.slane %v372, %v2663
    %v2665 = vlaneseq
    %v2666 = vshrl.u32 %v2665, 7
    %v2667 = vsub.s32 1, %v2666
    %v2668 = vrot.slane %v372, %v2667
    %v2669 = vlaneseq
    %v2670 = vshrl.u32 %v2669, 7
    %v2671 = vsub.s32 2, %v2670
    %v2672 = vrot.slane %v372, %v2671
    %v2673 = vlaneseq
    %v2674 = vshrl.u32 %v2673, 7
    %v2675 = vsub.s32 3, %v2674
    %v2676 = vrot.slane %v372, %v2675
    %v2681 = vadd.f32 %v2613, %v2664
    %v2682 = vadd.f32 %v2615, %v2668
    %v2683 = vadd.f32 %v2654, %v2672
    %v2684 = vadd.f32 %v2656, %v2676
    %v2685 = vtanh.pop %v2681
    %v2686 = vmul.f32 %v2685, 0.5
    %v2687 = vadd.f32 %v2686, 0.5
    %v2688 = vtanh.pop %v2682
    %v2689 = vmul.f32 %v2688, 0.5
    %v2690 = vadd.f32 %v2689, 0.5
    %v2691 = vtanh.pop %v2683
    %v2692 = vtanh.pop %v2684
    %v2693 = vmul.f32 %v2692, 0.5
    %v2694 = vadd.f32 %v2693, 0.5
    %v2695 = vmul.f32 %v2690, %v1830
    %v2696 = vmul.f32 %v2687, %v2691
    %v2697 = vadd.f32 %v2695, %v2696
    %v2698 = vtanh.pop %v2697
    %v2699 = vmul.f32 %v2694, %v2698
    %v2700 = vpack.c.bf16 %v2699, %v2699
    %2701 = vmatprep.subr.bf16.mxu0 %v2029
    %2702 = vmatpush1.bf16.msra.mxu0 %v2028
    %2703 = vmatprep.subr.bf16.mxu0 %v2033
    %2704 = vmatpush1.bf16.msra.mxu0 %v2032
    %2705 = vmatprep.subr.bf16.mxu0 %v2037
    %2706 = vmatpush1.bf16.msra.mxu0 %v2036
    %2707 = vmatprep.subr.bf16.mxu0 %v2041
    %2708 = vmatpush1.bf16.msra.mxu0 %v2040
    %2709 = vmatprep.subr.bf16.mxu0 %v2045
    %2710 = vmatpush1.bf16.msra.mxu0 %v2044
    %2711 = vmatprep.subr.bf16.mxu0 %v2049
    %2712 = vmatpush1.bf16.msra.mxu0 %v2048
    %2713 = vmatprep.subr.bf16.mxu0 %v2053
    %2714 = vmatpush1.bf16.msra.mxu0 %v2052
    %2715 = vmatprep.subr.bf16.mxu0 %v2057
    %2716 = vmatpush1.bf16.msra.mxu0 %v2056
    %2717 = vmatprep.subr.bf16.mxu0 0
    %2718 = vmatpush1.bf16.msra.mxu0 0
    %2719 = vmatprep.subr.bf16.mxu0 0
    %2720 = vmatpush1.bf16.msra.mxu0 0
    %2721 = vmatprep.subr.bf16.mxu0 0
    %2722 = vmatpush1.bf16.msra.mxu0 0
    %2723 = vmatprep.subr.bf16.mxu0 0
    %2724 = vmatpush1.bf16.msra.mxu0 0
    %2725 = vmatprep.subr.bf16.mxu0 0
    %2726 = vmatpush1.bf16.msra.mxu0 0
    %2727 = vmatprep.subr.bf16.mxu0 0
    %2728 = vmatpush1.bf16.msra.mxu0 0
    %2729 = vmatprep.subr.bf16.mxu0 0
    %2730 = vmatpush1.bf16.msra.mxu0 0
    %2731 = vmatprep.subr.bf16.mxu0 0
    %2732 = vmatpush1.bf16.msra.mxu0 0
    %2733 = vmatprep.mubr.bf16.mxu0 0
    %2734 = vmatmul.mubr.bf16.gmra.mrb[0].mxu0 %v2700
    %v2735 = vpop.f32.mrb[0].mxu0
    %v2736 = vadd.f32 0.0, %v2735
    %v2737 = vpop.f32.mrb[0].mxu0
    %v2738 = vadd.f32 0.0, %v2737
    %v2739 = vpop.f32.mrb[0].mxu0
    %v2740 = vpop.f32.mrb[0].mxu0
    %2741 = vdwg.mxu0
    %2742 = vmatprep.subr.bf16.mxu0 %v2031
    %2743 = vmatpush1.bf16.msra.mxu0 %v2030
    %2744 = vmatprep.subr.bf16.mxu0 %v2035
    %2745 = vmatpush1.bf16.msra.mxu0 %v2034
    %2746 = vmatprep.subr.bf16.mxu0 %v2039
    %2747 = vmatpush1.bf16.msra.mxu0 %v2038
    %2748 = vmatprep.subr.bf16.mxu0 %v2043
    %2749 = vmatpush1.bf16.msra.mxu0 %v2042
    %2750 = vmatprep.subr.bf16.mxu0 %v2047
    %2751 = vmatpush1.bf16.msra.mxu0 %v2046
    %2752 = vmatprep.subr.bf16.mxu0 %v2051
    %2753 = vmatpush1.bf16.msra.mxu0 %v2050
    %2754 = vmatprep.subr.bf16.mxu0 %v2055
    %2755 = vmatpush1.bf16.msra.mxu0 %v2054
    %2756 = vmatprep.subr.bf16.mxu0 %v2059
    %2757 = vmatpush1.bf16.msra.mxu0 %v2058
    %2758 = vmatprep.subr.bf16.mxu0 0
    %2759 = vmatpush1.bf16.msra.mxu0 0
    %2760 = vmatprep.subr.bf16.mxu0 0
    %2761 = vmatpush1.bf16.msra.mxu0 0
    %2762 = vmatprep.subr.bf16.mxu0 0
    %2763 = vmatpush1.bf16.msra.mxu0 0
    %2764 = vmatprep.subr.bf16.mxu0 0
    %2765 = vmatpush1.bf16.msra.mxu0 0
    %2766 = vmatprep.subr.bf16.mxu0 0
    %2767 = vmatpush1.bf16.msra.mxu0 0
    %2768 = vmatprep.subr.bf16.mxu0 0
    %2769 = vmatpush1.bf16.msra.mxu0 0
    %2770 = vmatprep.subr.bf16.mxu0 0
    %2771 = vmatpush1.bf16.msra.mxu0 0
    %2772 = vmatprep.subr.bf16.mxu0 0
    %2773 = vmatpush1.bf16.msra.mxu0 0
    %2774 = vmatprep.mubr.bf16.mxu0 0
    %2775 = vmatmul.mubr.bf16.gmra.mrb[0].mxu0 %v2700
    %v2776 = vpop.f32.mrb[0].mxu0
    %v2777 = vadd.f32 0.0, %v2776
    %v2778 = vpop.f32.mrb[0].mxu0
    %v2779 = vadd.f32 0.0, %v2778
    %v2780 = vpop.f32.mrb[0].mxu0
    %v2781 = vpop.f32.mrb[0].mxu0
    %2782 = vdwg.mxu0
    %v2815 = vunpack.c.l.b16 %v373
    %v2816 = vunpack.c.h.b16 %v373
    %v2817 = vunpack.c.l.b16 %v374
    %v2818 = vunpack.c.h.b16 %v374
    %v2819 = vunpack.c.l.b16 %v375
    %v2820 = vunpack.c.h.b16 %v375
    %v2821 = vunpack.c.l.b16 %v376
    %v2822 = vunpack.c.h.b16 %v376
    %v2823 = vunpack.c.l.b16 %v377
    %v2824 = vunpack.c.h.b16 %v377
    %v2825 = vunpack.c.l.b16 %v378
    %v2826 = vunpack.c.h.b16 %v378
    %v2827 = vunpack.c.l.b16 %v379
    %v2828 = vunpack.c.h.b16 %v379
    %v2829 = vunpack.c.l.b16 %v380
    %v2830 = vunpack.c.h.b16 %v380
    %v2831 = vunpack.c.l.b16 %v381
    %v2832 = vunpack.c.h.b16 %v381
    %v2833 = vunpack.c.l.b16 %v382
    %v2834 = vunpack.c.h.b16 %v382
    %v2835 = vunpack.c.l.b16 %v383
    %v2836 = vunpack.c.h.b16 %v383
    %v2837 = vunpack.c.l.b16 %v384
    %v2838 = vunpack.c.h.b16 %v384
    %v2839 = vunpack.c.l.b16 %v385
    %v2840 = vunpack.c.h.b16 %v385
    %v2841 = vunpack.c.l.b16 %v386
    %v2842 = vunpack.c.h.b16 %v386
    %v2843 = vunpack.c.l.b16 %v387
    %v2844 = vunpack.c.h.b16 %v387
    %v2845 = vunpack.c.l.b16 %v388
    %v2846 = vunpack.c.h.b16 %v388
    %v2847 = vunpack.c.l.b16 %v389
    %v2848 = vunpack.c.h.b16 %v389
    %v2849 = vunpack.c.l.b16 %v390
    %v2850 = vunpack.c.h.b16 %v390
    %v2851 = vunpack.c.l.b16 %v391
    %v2852 = vunpack.c.h.b16 %v391
    %v2853 = vunpack.c.l.b16 %v392
    %v2854 = vunpack.c.h.b16 %v392
    %v2855 = vunpack.c.l.b16 %v393
    %v2856 = vunpack.c.h.b16 %v393
    %v2857 = vunpack.c.l.b16 %v394
    %v2858 = vunpack.c.h.b16 %v394
    %v2859 = vunpack.c.l.b16 %v395
    %v2860 = vunpack.c.h.b16 %v395
    %v2861 = vunpack.c.l.b16 %v396
    %v2862 = vunpack.c.h.b16 %v396
    %v2863 = vunpack.c.l.b16 %v397
    %v2864 = vunpack.c.h.b16 %v397
    %v2865 = vunpack.c.l.b16 %v398
    %v2866 = vunpack.c.h.b16 %v398
    %v2867 = vunpack.c.l.b16 %v399
    %v2868 = vunpack.c.h.b16 %v399
    %v2869 = vunpack.c.l.b16 %v400
    %v2870 = vunpack.c.h.b16 %v400
    %v2871 = vunpack.c.l.b16 %v401
    %v2872 = vunpack.c.h.b16 %v401
    %v2873 = vunpack.c.l.b16 %v402
    %v2874 = vunpack.c.h.b16 %v402
    %v2875 = vunpack.c.l.b16 %v403
    %v2876 = vunpack.c.h.b16 %v403
    %v2877 = vunpack.c.l.b16 %v404
    %v2878 = vunpack.c.h.b16 %v404
    %v2879 = vpack.c.b16 %v2819, %v2815
    %v2880 = vpack.c.b16 %v2820, %v2816
    %v2881 = vpack.c.b16 %v2821, %v2817
    %v2882 = vpack.c.b16 %v2822, %v2818
    %v2883 = vpack.c.b16 %v2827, %v2823
    %v2884 = vpack.c.b16 %v2828, %v2824
    %v2885 = vpack.c.b16 %v2829, %v2825
    %v2886 = vpack.c.b16 %v2830, %v2826
    %v2887 = vpack.c.b16 %v2835, %v2831
    %v2888 = vpack.c.b16 %v2836, %v2832
    %v2889 = vpack.c.b16 %v2837, %v2833
    %v2890 = vpack.c.b16 %v2838, %v2834
    %v2891 = vpack.c.b16 %v2843, %v2839
    %v2892 = vpack.c.b16 %v2844, %v2840
    %v2893 = vpack.c.b16 %v2845, %v2841
    %v2894 = vpack.c.b16 %v2846, %v2842
    %v2895 = vpack.c.b16 %v2851, %v2847
    %v2896 = vpack.c.b16 %v2852, %v2848
    %v2897 = vpack.c.b16 %v2853, %v2849
    %v2898 = vpack.c.b16 %v2854, %v2850
    %v2899 = vpack.c.b16 %v2859, %v2855
    %v2900 = vpack.c.b16 %v2860, %v2856
    %v2901 = vpack.c.b16 %v2861, %v2857
    %v2902 = vpack.c.b16 %v2862, %v2858
    %v2903 = vpack.c.b16 %v2867, %v2863
    %v2904 = vpack.c.b16 %v2868, %v2864
    %v2905 = vpack.c.b16 %v2869, %v2865
    %v2906 = vpack.c.b16 %v2870, %v2866
    %v2907 = vpack.c.b16 %v2875, %v2871
    %v2908 = vpack.c.b16 %v2876, %v2872
    %v2909 = vpack.c.b16 %v2877, %v2873
    %v2910 = vpack.c.b16 %v2878, %v2874
    %2943 = vmatprep.subr.bf16.mxu0 %v2880
    %2944 = vmatpush1.bf16.msra.mxu0 %v2879
    %2945 = vmatprep.subr.bf16.mxu0 %v2884
    %2946 = vmatpush1.bf16.msra.mxu0 %v2883
    %2947 = vmatprep.subr.bf16.mxu0 %v2888
    %2948 = vmatpush1.bf16.msra.mxu0 %v2887
    %2949 = vmatprep.subr.bf16.mxu0 %v2892
    %2950 = vmatpush1.bf16.msra.mxu0 %v2891
    %2951 = vmatprep.subr.bf16.mxu0 %v2896
    %2952 = vmatpush1.bf16.msra.mxu0 %v2895
    %2953 = vmatprep.subr.bf16.mxu0 %v2900
    %2954 = vmatpush1.bf16.msra.mxu0 %v2899
    %2955 = vmatprep.subr.bf16.mxu0 %v2904
    %2956 = vmatpush1.bf16.msra.mxu0 %v2903
    %2957 = vmatprep.subr.bf16.mxu0 %v2908
    %2958 = vmatpush1.bf16.msra.mxu0 %v2907
    %2959 = vmatprep.subr.bf16.mxu0 0
    %2960 = vmatpush1.bf16.msra.mxu0 0
    %2961 = vmatprep.subr.bf16.mxu0 0
    %2962 = vmatpush1.bf16.msra.mxu0 0
    %2963 = vmatprep.subr.bf16.mxu0 0
    %2964 = vmatpush1.bf16.msra.mxu0 0
    %2965 = vmatprep.subr.bf16.mxu0 0
    %2966 = vmatpush1.bf16.msra.mxu0 0
    %2967 = vmatprep.subr.bf16.mxu0 0
    %2968 = vmatpush1.bf16.msra.mxu0 0
    %2969 = vmatprep.subr.bf16.mxu0 0
    %2970 = vmatpush1.bf16.msra.mxu0 0
    %2971 = vmatprep.subr.bf16.mxu0 0
    %2972 = vmatpush1.bf16.msra.mxu0 0
    %2973 = vmatprep.subr.bf16.mxu0 0
    %2974 = vmatpush1.bf16.msra.mxu0 0
    %2975 = vmatprep.mubr.bf16.mxu0 0
    %2976 = vmatmul.mubr.bf16.gmra.mrb[0].mxu0 %v2700
    %v2977 = vpop.f32.mrb[0].mxu0
    %v2978 = vadd.f32 %v2370, %v2977
    %v2979 = vpop.f32.mrb[0].mxu0
    %v2980 = vadd.f32 %v2372, %v2979
    %v2981 = vpop.f32.mrb[0].mxu0
    %v2982 = vpop.f32.mrb[0].mxu0
    %2983 = vdwg.mxu0
    %2984 = vmatprep.subr.bf16.mxu0 %v2882
    %2985 = vmatpush1.bf16.msra.mxu0 %v2881
    %2986 = vmatprep.subr.bf16.mxu0 %v2886
    %2987 = vmatpush1.bf16.msra.mxu0 %v2885
    %2988 = vmatprep.subr.bf16.mxu0 %v2890
    %2989 = vmatpush1.bf16.msra.mxu0 %v2889
    %2990 = vmatprep.subr.bf16.mxu0 %v2894
    %2991 = vmatpush1.bf16.msra.mxu0 %v2893
    %2992 = vmatprep.subr.bf16.mxu0 %v2898
    %2993 = vmatpush1.bf16.msra.mxu0 %v2897
    %2994 = vmatprep.subr.bf16.mxu0 %v2902
    %2995 = vmatpush1.bf16.msra.mxu0 %v2901
    %2996 = vmatprep.subr.bf16.mxu0 %v2906
    %2997 = vmatpush1.bf16.msra.mxu0 %v2905
    %2998 = vmatprep.subr.bf16.mxu0 %v2910
    %2999 = vmatpush1.bf16.msra.mxu0 %v2909
    %3000 = vmatprep.subr.bf16.mxu0 0
    %3001 = vmatpush1.bf16.msra.mxu0 0
    %3002 = vmatprep.subr.bf16.mxu0 0
    %3003 = vmatpush1.bf16.msra.mxu0 0
    %3004 = vmatprep.subr.bf16.mxu0 0
    %3005 = vmatpush1.bf16.msra.mxu0 0
    %3006 = vmatprep.subr.bf16.mxu0 0
    %3007 = vmatpush1.bf16.msra.mxu0 0
    %3008 = vmatprep.subr.bf16.mxu0 0
    %3009 = vmatpush1.bf16.msra.mxu0 0
    %3010 = vmatprep.subr.bf16.mxu0 0
    %3011 = vmatpush1.bf16.msra.mxu0 0
    %3012 = vmatprep.subr.bf16.mxu0 0
    %3013 = vmatpush1.bf16.msra.mxu0 0
    %3014 = vmatprep.subr.bf16.mxu0 0
    %3015 = vmatpush1.bf16.msra.mxu0 0
    %3016 = vmatprep.mubr.bf16.mxu0 0
    %3017 = vmatmul.mubr.bf16.gmra.mrb[0].mxu0 %v2700
    %v3018 = vpop.f32.mrb[0].mxu0
    %v3019 = vadd.f32 %v2411, %v3018
    %v3020 = vpop.f32.mrb[0].mxu0
    %v3021 = vadd.f32 %v2413, %v3020
    %v3022 = vpop.f32.mrb[0].mxu0
    %v3023 = vpop.f32.mrb[0].mxu0
    %3024 = vdwg.mxu0
    %v3026 = vlaneseq
    %v3027 = vshrl.u32 %v3026, 7
    %v3028 = vsub.s32 0, %v3027
    %v3029 = vrot.slane %v437, %v3028
    %v3030 = vlaneseq
    %v3031 = vshrl.u32 %v3030, 7
    %v3032 = vsub.s32 1, %v3031
    %v3033 = vrot.slane %v437, %v3032
    %v3034 = vlaneseq
    %v3035 = vshrl.u32 %v3034, 7
    %v3036 = vsub.s32 2, %v3035
    %v3037 = vrot.slane %v437, %v3036
    %v3038 = vlaneseq
    %v3039 = vshrl.u32 %v3038, 7
    %v3040 = vsub.s32 3, %v3039
    %v3041 = vrot.slane %v437, %v3040
    %v3046 = vadd.f32 %v2978, %v3029
    %v3047 = vadd.f32 %v2980, %v3033
    %v3048 = vadd.f32 %v3019, %v3037
    %v3049 = vadd.f32 %v3021, %v3041
    %v3050 = vtanh.pop %v3046
    %v3051 = vmul.f32 %v3050, 0.5
    %v3052 = vadd.f32 %v3051, 0.5
    %v3053 = vtanh.pop %v3047
    %v3054 = vmul.f32 %v3053, 0.5
    %v3055 = vadd.f32 %v3054, 0.5
    %v3056 = vtanh.pop %v3048
    %v3057 = vtanh.pop %v3049
    %v3058 = vmul.f32 %v3057, 0.5
    %v3059 = vadd.f32 %v3058, 0.5
    %v3060 = vmul.f32 %v3055, %v1929
    %v3061 = vmul.f32 %v3052, %v3056
    %v3062 = vadd.f32 %v3060, %v3061
    %v3063 = vtanh.pop %v3062
    %v3064 = vmul.f32 %v3059, %v3063
    %v3065 = vpack.c.bf16 %v3064, %v3064
    %3066 = vmatprep.subr.bf16.mxu0 %v2272
    %3067 = vmatpush1.bf16.msra.mxu0 %v2271
    %3068 = vmatprep.subr.bf16.mxu0 %v2276
    %3069 = vmatpush1.bf16.msra.mxu0 %v2275
    %3070 = vmatprep.subr.bf16.mxu0 %v2280
    %3071 = vmatpush1.bf16.msra.mxu0 %v2279
    %3072 = vmatprep.subr.bf16.mxu0 %v2284
    %3073 = vmatpush1.bf16.msra.mxu0 %v2283
    %3074 = vmatprep.subr.bf16.mxu0 %v2288
    %3075 = vmatpush1.bf16.msra.mxu0 %v2287
    %3076 = vmatprep.subr.bf16.mxu0 %v2292
    %3077 = vmatpush1.bf16.msra.mxu0 %v2291
    %3078 = vmatprep.subr.bf16.mxu0 %v2296
    %3079 = vmatpush1.bf16.msra.mxu0 %v2295
    %3080 = vmatprep.subr.bf16.mxu0 %v2300
    %3081 = vmatpush1.bf16.msra.mxu0 %v2299
    %3082 = vmatprep.subr.bf16.mxu0 0
    %3083 = vmatpush1.bf16.msra.mxu0 0
    %3084 = vmatprep.subr.bf16.mxu0 0
    %3085 = vmatpush1.bf16.msra.mxu0 0
    %3086 = vmatprep.subr.bf16.mxu0 0
    %3087 = vmatpush1.bf16.msra.mxu0 0
    %3088 = vmatprep.subr.bf16.mxu0 0
    %3089 = vmatpush1.bf16.msra.mxu0 0
    %3090 = vmatprep.subr.bf16.mxu0 0
    %3091 = vmatpush1.bf16.msra.mxu0 0
    %3092 = vmatprep.subr.bf16.mxu0 0
    %3093 = vmatpush1.bf16.msra.mxu0 0
    %3094 = vmatprep.subr.bf16.mxu0 0
    %3095 = vmatpush1.bf16.msra.mxu0 0
    %3096 = vmatprep.subr.bf16.mxu0 0
    %3097 = vmatpush1.bf16.msra.mxu0 0
    %3098 = vmatprep.mubr.bf16.mxu0 0
    %3099 = vmatmul.mubr.bf16.gmra.mrb[0].mxu0 %v3065
    %v3100 = vpop.f32.mrb[0].mxu0
    %v3101 = vadd.f32 0.0, %v3100
    %v3102 = vpop.f32.mrb[0].mxu0
    %v3103 = vadd.f32 0.0, %v3102
    %v3104 = vpop.f32.mrb[0].mxu0
    %v3105 = vpop.f32.mrb[0].mxu0
    %3106 = vdwg.mxu0
    %3107 = vmatprep.subr.bf16.mxu0 %v2274
    %3108 = vmatpush1.bf16.msra.mxu0 %v2273
    %3109 = vmatprep.subr.bf16.mxu0 %v2278
    %3110 = vmatpush1.bf16.msra.mxu0 %v2277
    %3111 = vmatprep.subr.bf16.mxu0 %v2282
    %3112 = vmatpush1.bf16.msra.mxu0 %v2281
    %3113 = vmatprep.subr.bf16.mxu0 %v2286
    %3114 = vmatpush1.bf16.msra.mxu0 %v2285
    %3115 = vmatprep.subr.bf16.mxu0 %v2290
    %3116 = vmatpush1.bf16.msra.mxu0 %v2289
    %3117 = vmatprep.subr.bf16.mxu0 %v2294
    %3118 = vmatpush1.bf16.msra.mxu0 %v2293
    %3119 = vmatprep.subr.bf16.mxu0 %v2298
    %3120 = vmatpush1.bf16.msra.mxu0 %v2297
    %3121 = vmatprep.subr.bf16.mxu0 %v2302
    %3122 = vmatpush1.bf16.msra.mxu0 %v2301
    %3123 = vmatprep.subr.bf16.mxu0 0
    %3124 = vmatpush1.bf16.msra.mxu0 0
    %3125 = vmatprep.subr.bf16.mxu0 0
    %3126 = vmatpush1.bf16.msra.mxu0 0
    %3127 = vmatprep.subr.bf16.mxu0 0
    %3128 = vmatpush1.bf16.msra.mxu0 0
    %3129 = vmatprep.subr.bf16.mxu0 0
    %3130 = vmatpush1.bf16.msra.mxu0 0
    %3131 = vmatprep.subr.bf16.mxu0 0
    %3132 = vmatpush1.bf16.msra.mxu0 0
    %3133 = vmatprep.subr.bf16.mxu0 0
    %3134 = vmatpush1.bf16.msra.mxu0 0
    %3135 = vmatprep.subr.bf16.mxu0 0
    %3136 = vmatpush1.bf16.msra.mxu0 0
    %3137 = vmatprep.subr.bf16.mxu0 0
    %3138 = vmatpush1.bf16.msra.mxu0 0
    %3139 = vmatprep.mubr.bf16.mxu0 0
    %3140 = vmatmul.mubr.bf16.gmra.mrb[0].mxu0 %v3065
    %v3141 = vpop.f32.mrb[0].mxu0
    %v3142 = vadd.f32 0.0, %v3141
    %v3143 = vpop.f32.mrb[0].mxu0
    %v3144 = vadd.f32 0.0, %v3143
    %v3145 = vpop.f32.mrb[0].mxu0
    %v3146 = vpop.f32.mrb[0].mxu0
    %3147 = vdwg.mxu0
    %v3164 = vunpack.c.l.b16 %v438
    %v3165 = vunpack.c.l.b16 %v439
    %v3166 = vunpack.c.l.b16 %v440
    %v3167 = vunpack.c.l.b16 %v441
    %v3168 = vunpack.c.l.b16 %v442
    %v3169 = vunpack.c.l.b16 %v443
    %v3170 = vunpack.c.l.b16 %v444
    %v3171 = vunpack.c.l.b16 %v445
    %v3172 = vunpack.c.l.b16 %v446
    %v3173 = vunpack.c.l.b16 %v447
    %v3174 = vunpack.c.l.b16 %v448
    %v3175 = vunpack.c.l.b16 %v449
    %v3176 = vunpack.c.l.b16 %v450
    %v3177 = vunpack.c.l.b16 %v451
    %v3178 = vunpack.c.l.b16 %v452
    %v3179 = vunpack.c.l.b16 %v453
    %v3180 = vpack.c.b16 %v3165, %v3164
    %v3181 = vpack.c.b16 %v3167, %v3166
    %v3182 = vpack.c.b16 %v3169, %v3168
    %v3183 = vpack.c.b16 %v3171, %v3170
    %v3184 = vpack.c.b16 %v3173, %v3172
    %v3185 = vpack.c.b16 %v3175, %v3174
    %v3186 = vpack.c.b16 %v3177, %v3176
    %v3187 = vpack.c.b16 %v3179, %v3178
    %3196 = vmatprep.subr.bf16.mxu0 0
    %3197 = vmatpush1.bf16.msra.mxu0 %v3180
    %3198 = vmatprep.subr.bf16.mxu0 0
    %3199 = vmatpush1.bf16.msra.mxu0 %v3181
    %3200 = vmatprep.subr.bf16.mxu0 0
    %3201 = vmatpush1.bf16.msra.mxu0 %v3182
    %3202 = vmatprep.subr.bf16.mxu0 0
    %3203 = vmatpush1.bf16.msra.mxu0 %v3183
    %3204 = vmatprep.subr.bf16.mxu0 0
    %3205 = vmatpush1.bf16.msra.mxu0 %v3184
    %3206 = vmatprep.subr.bf16.mxu0 0
    %3207 = vmatpush1.bf16.msra.mxu0 %v3185
    %3208 = vmatprep.subr.bf16.mxu0 0
    %3209 = vmatpush1.bf16.msra.mxu0 %v3186
    %3210 = vmatprep.subr.bf16.mxu0 0
    %3211 = vmatpush1.bf16.msra.mxu0 %v3187
    %3212 = vmatprep.subr.bf16.mxu0 0
    %3213 = vmatpush1.bf16.msra.mxu0 0
    %3214 = vmatprep.subr.bf16.mxu0 0
    %3215 = vmatpush1.bf16.msra.mxu0 0
    %3216 = vmatprep.subr.bf16.mxu0 0
    %3217 = vmatpush1.bf16.msra.mxu0 0
    %3218 = vmatprep.subr.bf16.mxu0 0
    %3219 = vmatpush1.bf16.msra.mxu0 0
    %3220 = vmatprep.subr.bf16.mxu0 0
    %3221 = vmatpush1.bf16.msra.mxu0 0
    %3222 = vmatprep.subr.bf16.mxu0 0
    %3223 = vmatpush1.bf16.msra.mxu0 0
    %3224 = vmatprep.subr.bf16.mxu0 0
    %3225 = vmatpush1.bf16.msra.mxu0 0
    %3226 = vmatprep.subr.bf16.mxu0 0
    %3227 = vmatpush1.bf16.msra.mxu0 0
    %3228 = vmatprep.mubr.bf16.mxu0 0
    %3229 = vmatmul.mubr.bf16.gmra.mrb[0].mxu0 %v3065
    %v3230 = vpop.f32.mrb[0].mxu0
    %v3231 = vadd.f32 %v454, %v3230
    %v3232 = vpop.f32.mrb[0].mxu0
    %v3233 = vpop.f32.mrb[0].mxu0
    %v3234 = vpop.f32.mrb[0].mxu0
    %3235 = vdwg.mxu0
    %v3236 = vtanh.pop %v3231
    %v3237 = vmul.f32 %v3236, 0.5
    %v3238 = vadd.f32 %v3237, 0.5
    %3239 = vst [vmem:[#allocation2 + $0x1] sm:$0x1] %v3238
    %v3240 = vpack.c.bf16 %v3238, %v3238
    %3241 = vmatprep.subr.bf16.mxu0 %v2515
    %3242 = vmatpush1.bf16.msra.mxu0 %v2514
    %3243 = vmatprep.subr.bf16.mxu0 %v2519
    %3244 = vmatpush1.bf16.msra.mxu0 %v2518
    %3245 = vmatprep.subr.bf16.mxu0 %v2523
    %3246 = vmatpush1.bf16.msra.mxu0 %v2522
    %3247 = vmatprep.subr.bf16.mxu0 %v2527
    %3248 = vmatpush1.bf16.msra.mxu0 %v2526
    %3249 = vmatprep.subr.bf16.mxu0 %v2531
    %3250 = vmatpush1.bf16.msra.mxu0 %v2530
    %3251 = vmatprep.subr.bf16.mxu0 %v2535
    %3252 = vmatpush1.bf16.msra.mxu0 %v2534
    %3253 = vmatprep.subr.bf16.mxu0 %v2539
    %3254 = vmatpush1.bf16.msra.mxu0 %v2538
    %3255 = vmatprep.subr.bf16.mxu0 %v2543
    %3256 = vmatpush1.bf16.msra.mxu0 %v2542
    %3257 = vmatprep.subr.bf16.mxu0 0
    %3258 = vmatpush1.bf16.msra.mxu0 0
    %3259 = vmatprep.subr.bf16.mxu0 0
    %3260 = vmatpush1.bf16.msra.mxu0 0
    %3261 = vmatprep.subr.bf16.mxu0 0
    %3262 = vmatpush1.bf16.msra.mxu0 0
    %3263 = vmatprep.subr.bf16.mxu0 0
    %3264 = vmatpush1.bf16.msra.mxu0 0
    %3265 = vmatprep.subr.bf16.mxu0 0
    %3266 = vmatpush1.bf16.msra.mxu0 0
    %3267 = vmatprep.subr.bf16.mxu0 0
    %3268 = vmatpush1.bf16.msra.mxu0 0
    %3269 = vmatprep.subr.bf16.mxu0 0
    %3270 = vmatpush1.bf16.msra.mxu0 0
    %3271 = vmatprep.subr.bf16.mxu0 0
    %3272 = vmatpush1.bf16.msra.mxu0 0
    %3273 = vmatprep.mubr.bf16.mxu0 0
    %3274 = vmatmul.mubr.bf16.gmra.mrb[0].mxu0 %v3240
    %v3275 = vpop.f32.mrb[0].mxu0
    %v3276 = vadd.f32 %v2736, %v3275
    %v3277 = vpop.f32.mrb[0].mxu0
    %v3278 = vadd.f32 %v2738, %v3277
    %v3279 = vpop.f32.mrb[0].mxu0
    %v3280 = vpop.f32.mrb[0].mxu0
    %3281 = vdwg.mxu0
    %3282 = vmatprep.subr.bf16.mxu0 %v2517
    %3283 = vmatpush1.bf16.msra.mxu0 %v2516
    %3284 = vmatprep.subr.bf16.mxu0 %v2521
    %3285 = vmatpush1.bf16.msra.mxu0 %v2520
    %3286 = vmatprep.subr.bf16.mxu0 %v2525
    %3287 = vmatpush1.bf16.msra.mxu0 %v2524
    %3288 = vmatprep.subr.bf16.mxu0 %v2529
    %3289 = vmatpush1.bf16.msra.mxu0 %v2528
    %3290 = vmatprep.subr.bf16.mxu0 %v2533
    %3291 = vmatpush1.bf16.msra.mxu0 %v2532
    %3292 = vmatprep.subr.bf16.mxu0 %v2537
    %3293 = vmatpush1.bf16.msra.mxu0 %v2536
    %3294 = vmatprep.subr.bf16.mxu0 %v2541
    %3295 = vmatpush1.bf16.msra.mxu0 %v2540
    %3296 = vmatprep.subr.bf16.mxu0 %v2545
    %3297 = vmatpush1.bf16.msra.mxu0 %v2544
    %3298 = vmatprep.subr.bf16.mxu0 0
    %3299 = vmatpush1.bf16.msra.mxu0 0
    %3300 = vmatprep.subr.bf16.mxu0 0
    %3301 = vmatpush1.bf16.msra.mxu0 0
    %3302 = vmatprep.subr.bf16.mxu0 0
    %3303 = vmatpush1.bf16.msra.mxu0 0
    %3304 = vmatprep.subr.bf16.mxu0 0
    %3305 = vmatpush1.bf16.msra.mxu0 0
    %3306 = vmatprep.subr.bf16.mxu0 0
    %3307 = vmatpush1.bf16.msra.mxu0 0
    %3308 = vmatprep.subr.bf16.mxu0 0
    %3309 = vmatpush1.bf16.msra.mxu0 0
    %3310 = vmatprep.subr.bf16.mxu0 0
    %3311 = vmatpush1.bf16.msra.mxu0 0
    %3312 = vmatprep.subr.bf16.mxu0 0
    %3313 = vmatpush1.bf16.msra.mxu0 0
    %3314 = vmatprep.mubr.bf16.mxu0 0
    %3315 = vmatmul.mubr.bf16.gmra.mrb[0].mxu0 %v3240
    %v3316 = vpop.f32.mrb[0].mxu0
    %v3317 = vadd.f32 %v2777, %v3316
    %v3318 = vpop.f32.mrb[0].mxu0
    %v3319 = vadd.f32 %v2779, %v3318
    %v3320 = vpop.f32.mrb[0].mxu0
    %v3321 = vpop.f32.mrb[0].mxu0
    %3322 = vdwg.mxu0
    %v3323 = vadd.f32 %v3276, %v2664
    %v3324 = vadd.f32 %v3278, %v2668
    %v3325 = vadd.f32 %v3317, %v2672
    %v3326 = vadd.f32 %v3319, %v2676
    %v3327 = vtanh.pop %v3323
    %v3328 = vmul.f32 %v3327, 0.5
    %v3329 = vadd.f32 %v3328, 0.5
    %v3330 = vtanh.pop %v3324
    %v3331 = vmul.f32 %v3330, 0.5
    %v3332 = vadd.f32 %v3331, 0.5
    %v3333 = vtanh.pop %v3325
    %v3334 = vtanh.pop %v3326
    %v3335 = vmul.f32 %v3334, 0.5
    %v3336 = vadd.f32 %v3335, 0.5
    %v3337 = vmul.f32 %v3332, %v2697
    %v3338 = vmul.f32 %v3329, %v3333
    %v3339 = vadd.f32 %v3337, %v3338
    %v3340 = vtanh.pop %v3339
    %v3341 = vmul.f32 %v3336, %v3340
    %v3342 = vpack.c.bf16 %v3341, %v3341
    %3343 = vmatprep.subr.bf16.mxu0 %v2029
    %3344 = vmatpush1.bf16.msra.mxu0 %v2028
    %3345 = vmatprep.subr.bf16.mxu0 %v2033
    %3346 = vmatpush1.bf16.msra.mxu0 %v2032
    %3347 = vmatprep.subr.bf16.mxu0 %v2037
    %3348 = vmatpush1.bf16.msra.mxu0 %v2036
    %3349 = vmatprep.subr.bf16.mxu0 %v2041
    %3350 = vmatpush1.bf16.msra.mxu0 %v2040
    %3351 = vmatprep.subr.bf16.mxu0 %v2045
    %3352 = vmatpush1.bf16.msra.mxu0 %v2044
    %3353 = vmatprep.subr.bf16.mxu0 %v2049
    %3354 = vmatpush1.bf16.msra.mxu0 %v2048
    %3355 = vmatprep.subr.bf16.mxu0 %v2053
    %3356 = vmatpush1.bf16.msra.mxu0 %v2052
    %3357 = vmatprep.subr.bf16.mxu0 %v2057
    %3358 = vmatpush1.bf16.msra.mxu0 %v2056
    %3359 = vmatprep.subr.bf16.mxu0 0
    %3360 = vmatpush1.bf16.msra.mxu0 0
    %3361 = vmatprep.subr.bf16.mxu0 0
    %3362 = vmatpush1.bf16.msra.mxu0 0
    %3363 = vmatprep.subr.bf16.mxu0 0
    %3364 = vmatpush1.bf16.msra.mxu0 0
    %3365 = vmatprep.subr.bf16.mxu0 0
    %3366 = vmatpush1.bf16.msra.mxu0 0
    %3367 = vmatprep.subr.bf16.mxu0 0
    %3368 = vmatpush1.bf16.msra.mxu0 0
    %3369 = vmatprep.subr.bf16.mxu0 0
    %3370 = vmatpush1.bf16.msra.mxu0 0
    %3371 = vmatprep.subr.bf16.mxu0 0
    %3372 = vmatpush1.bf16.msra.mxu0 0
    %3373 = vmatprep.subr.bf16.mxu0 0
    %3374 = vmatpush1.bf16.msra.mxu0 0
    %3375 = vmatprep.mubr.bf16.mxu0 0
    %3376 = vmatmul.mubr.bf16.gmra.mrb[0].mxu0 %v3342
    %v3377 = vpop.f32.mrb[0].mxu0
    %v3378 = vadd.f32 0.0, %v3377
    %v3379 = vpop.f32.mrb[0].mxu0
    %v3380 = vadd.f32 0.0, %v3379
    %v3381 = vpop.f32.mrb[0].mxu0
    %v3382 = vpop.f32.mrb[0].mxu0
    %3383 = vdwg.mxu0
    %3384 = vmatprep.subr.bf16.mxu0 %v2031
    %3385 = vmatpush1.bf16.msra.mxu0 %v2030
    %3386 = vmatprep.subr.bf16.mxu0 %v2035
    %3387 = vmatpush1.bf16.msra.mxu0 %v2034
    %3388 = vmatprep.subr.bf16.mxu0 %v2039
    %3389 = vmatpush1.bf16.msra.mxu0 %v2038
    %3390 = vmatprep.subr.bf16.mxu0 %v2043
    %3391 = vmatpush1.bf16.msra.mxu0 %v2042
    %3392 = vmatprep.subr.bf16.mxu0 %v2047
    %3393 = vmatpush1.bf16.msra.mxu0 %v2046
    %3394 = vmatprep.subr.bf16.mxu0 %v2051
    %3395 = vmatpush1.bf16.msra.mxu0 %v2050
    %3396 = vmatprep.subr.bf16.mxu0 %v2055
    %3397 = vmatpush1.bf16.msra.mxu0 %v2054
    %3398 = vmatprep.subr.bf16.mxu0 %v2059
    %3399 = vmatpush1.bf16.msra.mxu0 %v2058
    %3400 = vmatprep.subr.bf16.mxu0 0
    %3401 = vmatpush1.bf16.msra.mxu0 0
    %3402 = vmatprep.subr.bf16.mxu0 0
    %3403 = vmatpush1.bf16.msra.mxu0 0
    %3404 = vmatprep.subr.bf16.mxu0 0
    %3405 = vmatpush1.bf16.msra.mxu0 0
    %3406 = vmatprep.subr.bf16.mxu0 0
    %3407 = vmatpush1.bf16.msra.mxu0 0
    %3408 = vmatprep.subr.bf16.mxu0 0
    %3409 = vmatpush1.bf16.msra.mxu0 0
    %3410 = vmatprep.subr.bf16.mxu0 0
    %3411 = vmatpush1.bf16.msra.mxu0 0
    %3412 = vmatprep.subr.bf16.mxu0 0
    %3413 = vmatpush1.bf16.msra.mxu0 0
    %3414 = vmatprep.subr.bf16.mxu0 0
    %3415 = vmatpush1.bf16.msra.mxu0 0
    %3416 = vmatprep.mubr.bf16.mxu0 0
    %3417 = vmatmul.mubr.bf16.gmra.mrb[0].mxu0 %v3342
    %v3418 = vpop.f32.mrb[0].mxu0
    %v3419 = vadd.f32 0.0, %v3418
    %v3420 = vpop.f32.mrb[0].mxu0
    %v3421 = vadd.f32 0.0, %v3420
    %v3422 = vpop.f32.mrb[0].mxu0
    %v3423 = vpop.f32.mrb[0].mxu0
    %3424 = vdwg.mxu0
    %3425 = vmatprep.subr.bf16.mxu0 %v2880
    %3426 = vmatpush1.bf16.msra.mxu0 %v2879
    %3427 = vmatprep.subr.bf16.mxu0 %v2884
    %3428 = vmatpush1.bf16.msra.mxu0 %v2883
    %3429 = vmatprep.subr.bf16.mxu0 %v2888
    %3430 = vmatpush1.bf16.msra.mxu0 %v2887
    %3431 = vmatprep.subr.bf16.mxu0 %v2892
    %3432 = vmatpush1.bf16.msra.mxu0 %v2891
    %3433 = vmatprep.subr.bf16.mxu0 %v2896
    %3434 = vmatpush1.bf16.msra.mxu0 %v2895
    %3435 = vmatprep.subr.bf16.mxu0 %v2900
    %3436 = vmatpush1.bf16.msra.mxu0 %v2899
    %3437 = vmatprep.subr.bf16.mxu0 %v2904
    %3438 = vmatpush1.bf16.msra.mxu0 %v2903
    %3439 = vmatprep.subr.bf16.mxu0 %v2908
    %3440 = vmatpush1.bf16.msra.mxu0 %v2907
    %3441 = vmatprep.subr.bf16.mxu0 0
    %3442 = vmatpush1.bf16.msra.mxu0 0
    %3443 = vmatprep.subr.bf16.mxu0 0
    %3444 = vmatpush1.bf16.msra.mxu0 0
    %3445 = vmatprep.subr.bf16.mxu0 0
    %3446 = vmatpush1.bf16.msra.mxu0 0
    %3447 = vmatprep.subr.bf16.mxu0 0
    %3448 = vmatpush1.bf16.msra.mxu0 0
    %3449 = vmatprep.subr.bf16.mxu0 0
    %3450 = vmatpush1.bf16.msra.mxu0 0
    %3451 = vmatprep.subr.bf16.mxu0 0
    %3452 = vmatpush1.bf16.msra.mxu0 0
    %3453 = vmatprep.subr.bf16.mxu0 0
    %3454 = vmatpush1.bf16.msra.mxu0 0
    %3455 = vmatprep.subr.bf16.mxu0 0
    %3456 = vmatpush1.bf16.msra.mxu0 0
    %3457 = vmatprep.mubr.bf16.mxu0 0
    %3458 = vmatmul.mubr.bf16.gmra.mrb[0].mxu0 %v3342
    %v3459 = vpop.f32.mrb[0].mxu0
    %v3460 = vadd.f32 %v3101, %v3459
    %v3461 = vpop.f32.mrb[0].mxu0
    %v3462 = vadd.f32 %v3103, %v3461
    %v3463 = vpop.f32.mrb[0].mxu0
    %v3464 = vpop.f32.mrb[0].mxu0
    %3465 = vdwg.mxu0
    %3466 = vmatprep.subr.bf16.mxu0 %v2882
    %3467 = vmatpush1.bf16.msra.mxu0 %v2881
    %3468 = vmatprep.subr.bf16.mxu0 %v2886
    %3469 = vmatpush1.bf16.msra.mxu0 %v2885
    %3470 = vmatprep.subr.bf16.mxu0 %v2890
    %3471 = vmatpush1.bf16.msra.mxu0 %v2889
    %3472 = vmatprep.subr.bf16.mxu0 %v2894
    %3473 = vmatpush1.bf16.msra.mxu0 %v2893
    %3474 = vmatprep.subr.bf16.mxu0 %v2898
    %3475 = vmatpush1.bf16.msra.mxu0 %v2897
    %3476 = vmatprep.subr.bf16.mxu0 %v2902
    %3477 = vmatpush1.bf16.msra.mxu0 %v2901
    %3478 = vmatprep.subr.bf16.mxu0 %v2906
    %3479 = vmatpush1.bf16.msra.mxu0 %v2905
    %3480 = vmatprep.subr.bf16.mxu0 %v2910
    %3481 = vmatpush1.bf16.msra.mxu0 %v2909
    %3482 = vmatprep.subr.bf16.mxu0 0
    %3483 = vmatpush1.bf16.msra.mxu0 0
    %3484 = vmatprep.subr.bf16.mxu0 0
    %3485 = vmatpush1.bf16.msra.mxu0 0
    %3486 = vmatprep.subr.bf16.mxu0 0
    %3487 = vmatpush1.bf16.msra.mxu0 0
    %3488 = vmatprep.subr.bf16.mxu0 0
    %3489 = vmatpush1.bf16.msra.mxu0 0
    %3490 = vmatprep.subr.bf16.mxu0 0
    %3491 = vmatpush1.bf16.msra.mxu0 0
    %3492 = vmatprep.subr.bf16.mxu0 0
    %3493 = vmatpush1.bf16.msra.mxu0 0
    %3494 = vmatprep.subr.bf16.mxu0 0
    %3495 = vmatpush1.bf16.msra.mxu0 0
    %3496 = vmatprep.subr.bf16.mxu0 0
    %3497 = vmatpush1.bf16.msra.mxu0 0
    %3498 = vmatprep.mubr.bf16.mxu0 0
    %3499 = vmatmul.mubr.bf16.gmra.mrb[0].mxu0 %v3342
    %v3500 = vpop.f32.mrb[0].mxu0
    %v3501 = vadd.f32 %v3142, %v3500
    %v3502 = vpop.f32.mrb[0].mxu0
    %v3503 = vadd.f32 %v3144, %v3502
    %v3504 = vpop.f32.mrb[0].mxu0
    %v3505 = vpop.f32.mrb[0].mxu0
    %3506 = vdwg.mxu0
    %v3507 = vadd.f32 %v3460, %v3029
    %v3508 = vadd.f32 %v3462, %v3033
    %v3509 = vadd.f32 %v3501, %v3037
    %v3510 = vadd.f32 %v3503, %v3041
    %v3511 = vtanh.pop %v3507
    %v3512 = vmul.f32 %v3511, 0.5
    %v3513 = vadd.f32 %v3512, 0.5
    %v3514 = vtanh.pop %v3508
    %v3515 = vmul.f32 %v3514, 0.5
    %v3516 = vadd.f32 %v3515, 0.5
    %v3517 = vtanh.pop %v3509
    %v3518 = vtanh.pop %v3510
    %v3519 = vmul.f32 %v3518, 0.5
    %v3520 = vadd.f32 %v3519, 0.5
    %v3521 = vmul.f32 %v3516, %v3062
    %v3522 = vmul.f32 %v3513, %v3517
    %v3523 = vadd.f32 %v3521, %v3522
    %v3524 = vtanh.pop %v3523
    %v3525 = vmul.f32 %v3520, %v3524
    %v3526 = vpack.c.bf16 %v3525, %v3525
    %3527 = vmatprep.subr.bf16.mxu0 %v2272
    %3528 = vmatpush1.bf16.msra.mxu0 %v2271
    %3529 = vmatprep.subr.bf16.mxu0 %v2276
    %3530 = vmatpush1.bf16.msra.mxu0 %v2275
    %3531 = vmatprep.subr.bf16.mxu0 %v2280
    %3532 = vmatpush1.bf16.msra.mxu0 %v2279
    %3533 = vmatprep.subr.bf16.mxu0 %v2284
    %3534 = vmatpush1.bf16.msra.mxu0 %v2283
    %3535 = vmatprep.subr.bf16.mxu0 %v2288
    %3536 = vmatpush1.bf16.msra.mxu0 %v2287
    %3537 = vmatprep.subr.bf16.mxu0 %v2292
    %3538 = vmatpush1.bf16.msra.mxu0 %v2291
    %3539 = vmatprep.subr.bf16.mxu0 %v2296
    %3540 = vmatpush1.bf16.msra.mxu0 %v2295
    %3541 = vmatprep.subr.bf16.mxu0 %v2300
    %3542 = vmatpush1.bf16.msra.mxu0 %v2299
    %3543 = vmatprep.subr.bf16.mxu0 0
    %3544 = vmatpush1.bf16.msra.mxu0 0
    %3545 = vmatprep.subr.bf16.mxu0 0
    %3546 = vmatpush1.bf16.msra.mxu0 0
    %3547 = vmatprep.subr.bf16.mxu0 0
    %3548 = vmatpush1.bf16.msra.mxu0 0
    %3549 = vmatprep.subr.bf16.mxu0 0
    %3550 = vmatpush1.bf16.msra.mxu0 0
    %3551 = vmatprep.subr.bf16.mxu0 0
    %3552 = vmatpush1.bf16.msra.mxu0 0
    %3553 = vmatprep.subr.bf16.mxu0 0
    %3554 = vmatpush1.bf16.msra.mxu0 0
    %3555 = vmatprep.subr.bf16.mxu0 0
    %3556 = vmatpush1.bf16.msra.mxu0 0
    %3557 = vmatprep.subr.bf16.mxu0 0
    %3558 = vmatpush1.bf16.msra.mxu0 0
    %3559 = vmatprep.mubr.bf16.mxu0 0
    %3560 = vmatmul.mubr.bf16.gmra.mrb[0].mxu0 %v3526
    %v3561 = vpop.f32.mrb[0].mxu0
    %v3562 = vadd.f32 0.0, %v3561
    %v3563 = vpop.f32.mrb[0].mxu0
    %v3564 = vadd.f32 0.0, %v3563
    %v3565 = vpop.f32.mrb[0].mxu0
    %v3566 = vpop.f32.mrb[0].mxu0
    %3567 = vdwg.mxu0
    %3568 = vmatprep.subr.bf16.mxu0 %v2274
    %3569 = vmatpush1.bf16.msra.mxu0 %v2273
    %3570 = vmatprep.subr.bf16.mxu0 %v2278
    %3571 = vmatpush1.bf16.msra.mxu0 %v2277
    %3572 = vmatprep.subr.bf16.mxu0 %v2282
    %3573 = vmatpush1.bf16.msra.mxu0 %v2281
    %3574 = vmatprep.subr.bf16.mxu0 %v2286
    %3575 = vmatpush1.bf16.msra.mxu0 %v2285
    %3576 = vmatprep.subr.bf16.mxu0 %v2290
    %3577 = vmatpush1.bf16.msra.mxu0 %v2289
    %3578 = vmatprep.subr.bf16.mxu0 %v2294
    %3579 = vmatpush1.bf16.msra.mxu0 %v2293
    %3580 = vmatprep.subr.bf16.mxu0 %v2298
    %3581 = vmatpush1.bf16.msra.mxu0 %v2297
    %3582 = vmatprep.subr.bf16.mxu0 %v2302
    %3583 = vmatpush1.bf16.msra.mxu0 %v2301
    %3584 = vmatprep.subr.bf16.mxu0 0
    %3585 = vmatpush1.bf16.msra.mxu0 0
    %3586 = vmatprep.subr.bf16.mxu0 0
    %3587 = vmatpush1.bf16.msra.mxu0 0
    %3588 = vmatprep.subr.bf16.mxu0 0
    %3589 = vmatpush1.bf16.msra.mxu0 0
    %3590 = vmatprep.subr.bf16.mxu0 0
    %3591 = vmatpush1.bf16.msra.mxu0 0
    %3592 = vmatprep.subr.bf16.mxu0 0
    %3593 = vmatpush1.bf16.msra.mxu0 0
    %3594 = vmatprep.subr.bf16.mxu0 0
    %3595 = vmatpush1.bf16.msra.mxu0 0
    %3596 = vmatprep.subr.bf16.mxu0 0
    %3597 = vmatpush1.bf16.msra.mxu0 0
    %3598 = vmatprep.subr.bf16.mxu0 0
    %3599 = vmatpush1.bf16.msra.mxu0 0
    %3600 = vmatprep.mubr.bf16.mxu0 0
    %3601 = vmatmul.mubr.bf16.gmra.mrb[0].mxu0 %v3526
    %v3602 = vpop.f32.mrb[0].mxu0
    %v3603 = vadd.f32 0.0, %v3602
    %v3604 = vpop.f32.mrb[0].mxu0
    %v3605 = vadd.f32 0.0, %v3604
    %v3606 = vpop.f32.mrb[0].mxu0
    %v3607 = vpop.f32.mrb[0].mxu0
    %3608 = vdwg.mxu0
    %3609 = vmatprep.subr.bf16.mxu0 0
    %3610 = vmatpush1.bf16.msra.mxu0 %v3180
    %3611 = vmatprep.subr.bf16.mxu0 0
    %3612 = vmatpush1.bf16.msra.mxu0 %v3181
    %3613 = vmatprep.subr.bf16.mxu0 0
    %3614 = vmatpush1.bf16.msra.mxu0 %v3182
    %3615 = vmatprep.subr.bf16.mxu0 0
    %3616 = vmatpush1.bf16.msra.mxu0 %v3183
    %3617 = vmatprep.subr.bf16.mxu0 0
    %3618 = vmatpush1.bf16.msra.mxu0 %v3184
    %3619 = vmatprep.subr.bf16.mxu0 0
    %3620 = vmatpush1.bf16.msra.mxu0 %v3185
    %3621 = vmatprep.subr.bf16.mxu0 0
    %3622 = vmatpush1.bf16.msra.mxu0 %v3186
    %3623 = vmatprep.subr.bf16.mxu0 0
    %3624 = vmatpush1.bf16.msra.mxu0 %v3187
    %3625 = vmatprep.subr.bf16.mxu0 0
    %3626 = vmatpush1.bf16.msra.mxu0 0
    %3627 = vmatprep.subr.bf16.mxu0 0
    %3628 = vmatpush1.bf16.msra.mxu0 0
    %3629 = vmatprep.subr.bf16.mxu0 0
    %3630 = vmatpush1.bf16.msra.mxu0 0
    %3631 = vmatprep.subr.bf16.mxu0 0
    %3632 = vmatpush1.bf16.msra.mxu0 0
    %3633 = vmatprep.subr.bf16.mxu0 0
    %3634 = vmatpush1.bf16.msra.mxu0 0
    %3635 = vmatprep.subr.bf16.mxu0 0
    %3636 = vmatpush1.bf16.msra.mxu0 0
    %3637 = vmatprep.subr.bf16.mxu0 0
    %3638 = vmatpush1.bf16.msra.mxu0 0
    %3639 = vmatprep.subr.bf16.mxu0 0
    %3640 = vmatpush1.bf16.msra.mxu0 0
    %3641 = vmatprep.mubr.bf16.mxu0 0
    %3642 = vmatmul.mubr.bf16.gmra.mrb[0].mxu0 %v3526
    %v3643 = vpop.f32.mrb[0].mxu0
    %v3644 = vadd.f32 %v454, %v3643
    %v3645 = vpop.f32.mrb[0].mxu0
    %v3646 = vpop.f32.mrb[0].mxu0
    %v3647 = vpop.f32.mrb[0].mxu0
    %3648 = vdwg.mxu0
    %v3649 = vtanh.pop %v3644
    %v3650 = vmul.f32 %v3649, 0.5
    %v3651 = vadd.f32 %v3650, 0.5
    %3652 = vst [vmem:[#allocation2 + $0x2] sm:$0x1] %v3651
    %v3653 = vpack.c.bf16 %v3651, %v3651
    %3654 = vmatprep.subr.bf16.mxu0 %v2515
    %3655 = vmatpush1.bf16.msra.mxu0 %v2514
    %3656 = vmatprep.subr.bf16.mxu0 %v2519
    %3657 = vmatpush1.bf16.msra.mxu0 %v2518
    %3658 = vmatprep.subr.bf16.mxu0 %v2523
    %3659 = vmatpush1.bf16.msra.mxu0 %v2522
    %3660 = vmatprep.subr.bf16.mxu0 %v2527
    %3661 = vmatpush1.bf16.msra.mxu0 %v2526
    %3662 = vmatprep.subr.bf16.mxu0 %v2531
    %3663 = vmatpush1.bf16.msra.mxu0 %v2530
    %3664 = vmatprep.subr.bf16.mxu0 %v2535
    %3665 = vmatpush1.bf16.msra.mxu0 %v2534
    %3666 = vmatprep.subr.bf16.mxu0 %v2539
    %3667 = vmatpush1.bf16.msra.mxu0 %v2538
    %3668 = vmatprep.subr.bf16.mxu0 %v2543
    %3669 = vmatpush1.bf16.msra.mxu0 %v2542
    %3670 = vmatprep.subr.bf16.mxu0 0
    %3671 = vmatpush1.bf16.msra.mxu0 0
    %3672 = vmatprep.subr.bf16.mxu0 0
    %3673 = vmatpush1.bf16.msra.mxu0 0
    %3674 = vmatprep.subr.bf16.mxu0 0
    %3675 = vmatpush1.bf16.msra.mxu0 0
    %3676 = vmatprep.subr.bf16.mxu0 0
    %3677 = vmatpush1.bf16.msra.mxu0 0
    %3678 = vmatprep.subr.bf16.mxu0 0
    %3679 = vmatpush1.bf16.msra.mxu0 0
    %3680 = vmatprep.subr.bf16.mxu0 0
    %3681 = vmatpush1.bf16.msra.mxu0 0
    %3682 = vmatprep.subr.bf16.mxu0 0
    %3683 = vmatpush1.bf16.msra.mxu0 0
    %3684 = vmatprep.subr.bf16.mxu0 0
    %3685 = vmatpush1.bf16.msra.mxu0 0
    %3686 = vmatprep.mubr.bf16.mxu0 0
    %3687 = vmatmul.mubr.bf16.gmra.mrb[0].mxu0 %v3653
    %v3688 = vpop.f32.mrb[0].mxu0
    %v3689 = vadd.f32 %v3378, %v3688
    %v3690 = vpop.f32.mrb[0].mxu0
    %v3691 = vadd.f32 %v3380, %v3690
    %v3692 = vpop.f32.mrb[0].mxu0
    %v3693 = vpop.f32.mrb[0].mxu0
    %3694 = vdwg.mxu0
    %3695 = vmatprep.subr.bf16.mxu0 %v2517
    %3696 = vmatpush1.bf16.msra.mxu0 %v2516
    %3697 = vmatprep.subr.bf16.mxu0 %v2521
    %3698 = vmatpush1.bf16.msra.mxu0 %v2520
    %3699 = vmatprep.subr.bf16.mxu0 %v2525
    %3700 = vmatpush1.bf16.msra.mxu0 %v2524
    %3701 = vmatprep.subr.bf16.mxu0 %v2529
    %3702 = vmatpush1.bf16.msra.mxu0 %v2528
    %3703 = vmatprep.subr.bf16.mxu0 %v2533
    %3704 = vmatpush1.bf16.msra.mxu0 %v2532
    %3705 = vmatprep.subr.bf16.mxu0 %v2537
    %3706 = vmatpush1.bf16.msra.mxu0 %v2536
    %3707 = vmatprep.subr.bf16.mxu0 %v2541
    %3708 = vmatpush1.bf16.msra.mxu0 %v2540
    %3709 = vmatprep.subr.bf16.mxu0 %v2545
    %3710 = vmatpush1.bf16.msra.mxu0 %v2544
    %3711 = vmatprep.subr.bf16.mxu0 0
    %3712 = vmatpush1.bf16.msra.mxu0 0
    %3713 = vmatprep.subr.bf16.mxu0 0
    %3714 = vmatpush1.bf16.msra.mxu0 0
    %3715 = vmatprep.subr.bf16.mxu0 0
    %3716 = vmatpush1.bf16.msra.mxu0 0
    %3717 = vmatprep.subr.bf16.mxu0 0
    %3718 = vmatpush1.bf16.msra.mxu0 0
    %3719 = vmatprep.subr.bf16.mxu0 0
    %3720 = vmatpush1.bf16.msra.mxu0 0
    %3721 = vmatprep.subr.bf16.mxu0 0
    %3722 = vmatpush1.bf16.msra.mxu0 0
    %3723 = vmatprep.subr.bf16.mxu0 0
    %3724 = vmatpush1.bf16.msra.mxu0 0
    %3725 = vmatprep.subr.bf16.mxu0 0
    %3726 = vmatpush1.bf16.msra.mxu0 0
    %3727 = vmatprep.mubr.bf16.mxu0 0
    %3728 = vmatmul.mubr.bf16.gmra.mrb[0].mxu0 %v3653
    %v3729 = vpop.f32.mrb[0].mxu0
    %v3730 = vadd.f32 %v3419, %v3729
    %v3731 = vpop.f32.mrb[0].mxu0
    %v3732 = vadd.f32 %v3421, %v3731
    %v3733 = vpop.f32.mrb[0].mxu0
    %v3734 = vpop.f32.mrb[0].mxu0
    %3735 = vdwg.mxu0
    %v3736 = vadd.f32 %v3689, %v2664
    %v3737 = vadd.f32 %v3691, %v2668
    %v3738 = vadd.f32 %v3730, %v2672
    %v3739 = vadd.f32 %v3732, %v2676
    %v3740 = vtanh.pop %v3736
    %v3741 = vmul.f32 %v3740, 0.5
    %v3742 = vadd.f32 %v3741, 0.5
    %v3743 = vtanh.pop %v3737
    %v3744 = vmul.f32 %v3743, 0.5
    %v3745 = vadd.f32 %v3744, 0.5
    %v3746 = vtanh.pop %v3738
    %v3747 = vtanh.pop %v3739
    %v3748 = vmul.f32 %v3747, 0.5
    %v3749 = vadd.f32 %v3748, 0.5
    %v3750 = vmul.f32 %v3745, %v3339
    %v3751 = vmul.f32 %v3742, %v3746
    %v3752 = vadd.f32 %v3750, %v3751
    %v3753 = vtanh.pop %v3752
    %v3754 = vmul.f32 %v3749, %v3753
    %v3755 = vpack.c.bf16 %v3754, %v3754
    %3756 = vmatprep.subr.bf16.mxu0 %v2029
    %3757 = vmatpush1.bf16.msra.mxu0 %v2028
    %3758 = vmatprep.subr.bf16.mxu0 %v2033
    %3759 = vmatpush1.bf16.msra.mxu0 %v2032
    %3760 = vmatprep.subr.bf16.mxu0 %v2037
    %3761 = vmatpush1.bf16.msra.mxu0 %v2036
    %3762 = vmatprep.subr.bf16.mxu0 %v2041
    %3763 = vmatpush1.bf16.msra.mxu0 %v2040
    %3764 = vmatprep.subr.bf16.mxu0 %v2045
    %3765 = vmatpush1.bf16.msra.mxu0 %v2044
    %3766 = vmatprep.subr.bf16.mxu0 %v2049
    %3767 = vmatpush1.bf16.msra.mxu0 %v2048
    %3768 = vmatprep.subr.bf16.mxu0 %v2053
    %3769 = vmatpush1.bf16.msra.mxu0 %v2052
    %3770 = vmatprep.subr.bf16.mxu0 %v2057
    %3771 = vmatpush1.bf16.msra.mxu0 %v2056
    %3772 = vmatprep.subr.bf16.mxu0 0
    %3773 = vmatpush1.bf16.msra.mxu0 0
    %3774 = vmatprep.subr.bf16.mxu0 0
    %3775 = vmatpush1.bf16.msra.mxu0 0
    %3776 = vmatprep.subr.bf16.mxu0 0
    %3777 = vmatpush1.bf16.msra.mxu0 0
    %3778 = vmatprep.subr.bf16.mxu0 0
    %3779 = vmatpush1.bf16.msra.mxu0 0
    %3780 = vmatprep.subr.bf16.mxu0 0
    %3781 = vmatpush1.bf16.msra.mxu0 0
    %3782 = vmatprep.subr.bf16.mxu0 0
    %3783 = vmatpush1.bf16.msra.mxu0 0
    %3784 = vmatprep.subr.bf16.mxu0 0
    %3785 = vmatpush1.bf16.msra.mxu0 0
    %3786 = vmatprep.subr.bf16.mxu0 0
    %3787 = vmatpush1.bf16.msra.mxu0 0
    %3788 = vmatprep.mubr.bf16.mxu0 0
    %3789 = vmatmul.mubr.bf16.gmra.mrb[0].mxu0 %v3755
    %v3790 = vpop.f32.mrb[0].mxu0
    %v3791 = vadd.f32 0.0, %v3790
    %v3792 = vpop.f32.mrb[0].mxu0
    %v3793 = vadd.f32 0.0, %v3792
    %v3794 = vpop.f32.mrb[0].mxu0
    %v3795 = vpop.f32.mrb[0].mxu0
    %3796 = vdwg.mxu0
    %3797 = vmatprep.subr.bf16.mxu0 %v2031
    %3798 = vmatpush1.bf16.msra.mxu0 %v2030
    %3799 = vmatprep.subr.bf16.mxu0 %v2035
    %3800 = vmatpush1.bf16.msra.mxu0 %v2034
    %3801 = vmatprep.subr.bf16.mxu0 %v2039
    %3802 = vmatpush1.bf16.msra.mxu0 %v2038
    %3803 = vmatprep.subr.bf16.mxu0 %v2043
    %3804 = vmatpush1.bf16.msra.mxu0 %v2042
    %3805 = vmatprep.subr.bf16.mxu0 %v2047
    %3806 = vmatpush1.bf16.msra.mxu0 %v2046
    %3807 = vmatprep.subr.bf16.mxu0 %v2051
    %3808 = vmatpush1.bf16.msra.mxu0 %v2050
    %3809 = vmatprep.subr.bf16.mxu0 %v2055
    %3810 = vmatpush1.bf16.msra.mxu0 %v2054
    %3811 = vmatprep.subr.bf16.mxu0 %v2059
    %3812 = vmatpush1.bf16.msra.mxu0 %v2058
    %3813 = vmatprep.subr.bf16.mxu0 0
    %3814 = vmatpush1.bf16.msra.mxu0 0
    %3815 = vmatprep.subr.bf16.mxu0 0
    %3816 = vmatpush1.bf16.msra.mxu0 0
    %3817 = vmatprep.subr.bf16.mxu0 0
    %3818 = vmatpush1.bf16.msra.mxu0 0
    %3819 = vmatprep.subr.bf16.mxu0 0
    %3820 = vmatpush1.bf16.msra.mxu0 0
    %3821 = vmatprep.subr.bf16.mxu0 0
    %3822 = vmatpush1.bf16.msra.mxu0 0
    %3823 = vmatprep.subr.bf16.mxu0 0
    %3824 = vmatpush1.bf16.msra.mxu0 0
    %3825 = vmatprep.subr.bf16.mxu0 0
    %3826 = vmatpush1.bf16.msra.mxu0 0
    %3827 = vmatprep.subr.bf16.mxu0 0
    %3828 = vmatpush1.bf16.msra.mxu0 0
    %3829 = vmatprep.mubr.bf16.mxu0 0
    %3830 = vmatmul.mubr.bf16.gmra.mrb[0].mxu0 %v3755
    %v3831 = vpop.f32.mrb[0].mxu0
    %v3832 = vadd.f32 0.0, %v3831
    %v3833 = vpop.f32.mrb[0].mxu0
    %v3834 = vadd.f32 0.0, %v3833
    %v3835 = vpop.f32.mrb[0].mxu0
    %v3836 = vpop.f32.mrb[0].mxu0
    %3837 = vdwg.mxu0
    %3838 = vmatprep.subr.bf16.mxu0 %v2880
    %3839 = vmatpush1.bf16.msra.mxu0 %v2879
    %3840 = vmatprep.subr.bf16.mxu0 %v2884
    %3841 = vmatpush1.bf16.msra.mxu0 %v2883
    %3842 = vmatprep.subr.bf16.mxu0 %v2888
    %3843 = vmatpush1.bf16.msra.mxu0 %v2887
    %3844 = vmatprep.subr.bf16.mxu0 %v2892
    %3845 = vmatpush1.bf16.msra.mxu0 %v2891
    %3846 = vmatprep.subr.bf16.mxu0 %v2896
    %3847 = vmatpush1.bf16.msra.mxu0 %v2895
    %3848 = vmatprep.subr.bf16.mxu0 %v2900
    %3849 = vmatpush1.bf16.msra.mxu0 %v2899
    %3850 = vmatprep.subr.bf16.mxu0 %v2904
    %3851 = vmatpush1.bf16.msra.mxu0 %v2903
    %3852 = vmatprep.subr.bf16.mxu0 %v2908
    %3853 = vmatpush1.bf16.msra.mxu0 %v2907
    %3854 = vmatprep.subr.bf16.mxu0 0
    %3855 = vmatpush1.bf16.msra.mxu0 0
    %3856 = vmatprep.subr.bf16.mxu0 0
    %3857 = vmatpush1.bf16.msra.mxu0 0
    %3858 = vmatprep.subr.bf16.mxu0 0
    %3859 = vmatpush1.bf16.msra.mxu0 0
    %3860 = vmatprep.subr.bf16.mxu0 0
    %3861 = vmatpush1.bf16.msra.mxu0 0
    %3862 = vmatprep.subr.bf16.mxu0 0
    %3863 = vmatpush1.bf16.msra.mxu0 0
    %3864 = vmatprep.subr.bf16.mxu0 0
    %3865 = vmatpush1.bf16.msra.mxu0 0
    %3866 = vmatprep.subr.bf16.mxu0 0
    %3867 = vmatpush1.bf16.msra.mxu0 0
    %3868 = vmatprep.subr.bf16.mxu0 0
    %3869 = vmatpush1.bf16.msra.mxu0 0
    %3870 = vmatprep.mubr.bf16.mxu0 0
    %3871 = vmatmul.mubr.bf16.gmra.mrb[0].mxu0 %v3755
    %v3872 = vpop.f32.mrb[0].mxu0
    %v3873 = vadd.f32 %v3562, %v3872
    %v3874 = vpop.f32.mrb[0].mxu0
    %v3875 = vadd.f32 %v3564, %v3874
    %v3876 = vpop.f32.mrb[0].mxu0
    %v3877 = vpop.f32.mrb[0].mxu0
    %3878 = vdwg.mxu0
    %3879 = vmatprep.subr.bf16.mxu0 %v2882
    %3880 = vmatpush1.bf16.msra.mxu0 %v2881
    %3881 = vmatprep.subr.bf16.mxu0 %v2886
    %3882 = vmatpush1.bf16.msra.mxu0 %v2885
    %3883 = vmatprep.subr.bf16.mxu0 %v2890
    %3884 = vmatpush1.bf16.msra.mxu0 %v2889
    %3885 = vmatprep.subr.bf16.mxu0 %v2894
    %3886 = vmatpush1.bf16.msra.mxu0 %v2893
    %3887 = vmatprep.subr.bf16.mxu0 %v2898
    %3888 = vmatpush1.bf16.msra.mxu0 %v2897
    %3889 = vmatprep.subr.bf16.mxu0 %v2902
    %3890 = vmatpush1.bf16.msra.mxu0 %v2901
    %3891 = vmatprep.subr.bf16.mxu0 %v2906
    %3892 = vmatpush1.bf16.msra.mxu0 %v2905
    %3893 = vmatprep.subr.bf16.mxu0 %v2910
    %3894 = vmatpush1.bf16.msra.mxu0 %v2909
    %3895 = vmatprep.subr.bf16.mxu0 0
    %3896 = vmatpush1.bf16.msra.mxu0 0
    %3897 = vmatprep.subr.bf16.mxu0 0
    %3898 = vmatpush1.bf16.msra.mxu0 0
    %3899 = vmatprep.subr.bf16.mxu0 0
    %3900 = vmatpush1.bf16.msra.mxu0 0
    %3901 = vmatprep.subr.bf16.mxu0 0
    %3902 = vmatpush1.bf16.msra.mxu0 0
    %3903 = vmatprep.subr.bf16.mxu0 0
    %3904 = vmatpush1.bf16.msra.mxu0 0
    %3905 = vmatprep.subr.bf16.mxu0 0
    %3906 = vmatpush1.bf16.msra.mxu0 0
    %3907 = vmatprep.subr.bf16.mxu0 0
    %3908 = vmatpush1.bf16.msra.mxu0 0
    %3909 = vmatprep.subr.bf16.mxu0 0
    %3910 = vmatpush1.bf16.msra.mxu0 0
    %3911 = vmatprep.mubr.bf16.mxu0 0
    %3912 = vmatmul.mubr.bf16.gmra.mrb[0].mxu0 %v3755
    %v3913 = vpop.f32.mrb[0].mxu0
    %v3914 = vadd.f32 %v3603, %v3913
    %v3915 = vpop.f32.mrb[0].mxu0
    %v3916 = vadd.f32 %v3605, %v3915
    %v3917 = vpop.f32.mrb[0].mxu0
    %v3918 = vpop.f32.mrb[0].mxu0
    %3919 = vdwg.mxu0
    %v3920 = vadd.f32 %v3873, %v3029
    %v3921 = vadd.f32 %v3875, %v3033
    %v3922 = vadd.f32 %v3914, %v3037
    %v3923 = vadd.f32 %v3916, %v3041
    %v3924 = vtanh.pop %v3920
    %v3925 = vmul.f32 %v3924, 0.5
    %v3926 = vadd.f32 %v3925, 0.5
    %v3927 = vtanh.pop %v3921
    %v3928 = vmul.f32 %v3927, 0.5
    %v3929 = vadd.f32 %v3928, 0.5
    %v3930 = vtanh.pop %v3922
    %v3931 = vtanh.pop %v3923
    %v3932 = vmul.f32 %v3931, 0.5
    %v3933 = vadd.f32 %v3932, 0.5
    %v3934 = vmul.f32 %v3929, %v3523
    %v3935 = vmul.f32 %v3926, %v3930
    %v3936 = vadd.f32 %v3934, %v3935
    %v3937 = vtanh.pop %v3936
    %v3938 = vmul.f32 %v3933, %v3937
    %v3939 = vpack.c.bf16 %v3938, %v3938
    %3940 = vmatprep.subr.bf16.mxu0 %v2272
    %3941 = vmatpush1.bf16.msra.mxu0 %v2271
    %3942 = vmatprep.subr.bf16.mxu0 %v2276
    %3943 = vmatpush1.bf16.msra.mxu0 %v2275
    %3944 = vmatprep.subr.bf16.mxu0 %v2280
    %3945 = vmatpush1.bf16.msra.mxu0 %v2279
    %3946 = vmatprep.subr.bf16.mxu0 %v2284
    %3947 = vmatpush1.bf16.msra.mxu0 %v2283
    %3948 = vmatprep.subr.bf16.mxu0 %v2288
    %3949 = vmatpush1.bf16.msra.mxu0 %v2287
    %3950 = vmatprep.subr.bf16.mxu0 %v2292
    %3951 = vmatpush1.bf16.msra.mxu0 %v2291
    %3952 = vmatprep.subr.bf16.mxu0 %v2296
    %3953 = vmatpush1.bf16.msra.mxu0 %v2295
    %3954 = vmatprep.subr.bf16.mxu0 %v2300
    %3955 = vmatpush1.bf16.msra.mxu0 %v2299
    %3956 = vmatprep.subr.bf16.mxu0 0
    %3957 = vmatpush1.bf16.msra.mxu0 0
    %3958 = vmatprep.subr.bf16.mxu0 0
    %3959 = vmatpush1.bf16.msra.mxu0 0
    %3960 = vmatprep.subr.bf16.mxu0 0
    %3961 = vmatpush1.bf16.msra.mxu0 0
    %3962 = vmatprep.subr.bf16.mxu0 0
    %3963 = vmatpush1.bf16.msra.mxu0 0
    %3964 = vmatprep.subr.bf16.mxu0 0
    %3965 = vmatpush1.bf16.msra.mxu0 0
    %3966 = vmatprep.subr.bf16.mxu0 0
    %3967 = vmatpush1.bf16.msra.mxu0 0
    %3968 = vmatprep.subr.bf16.mxu0 0
    %3969 = vmatpush1.bf16.msra.mxu0 0
    %3970 = vmatprep.subr.bf16.mxu0 0
    %3971 = vmatpush1.bf16.msra.mxu0 0
    %3972 = vmatprep.mubr.bf16.mxu0 0
    %3973 = vmatmul.mubr.bf16.gmra.mrb[0].mxu0 %v3939
    %v3974 = vpop.f32.mrb[0].mxu0
    %v3975 = vadd.f32 0.0, %v3974
    %v3976 = vpop.f32.mrb[0].mxu0
    %v3977 = vadd.f32 0.0, %v3976
    %v3978 = vpop.f32.mrb[0].mxu0
    %v3979 = vpop.f32.mrb[0].mxu0
    %3980 = vdwg.mxu0
    %3981 = vmatprep.subr.bf16.mxu0 %v2274
    %3982 = vmatpush1.bf16.msra.mxu0 %v2273
    %3983 = vmatprep.subr.bf16.mxu0 %v2278
    %3984 = vmatpush1.bf16.msra.mxu0 %v2277
    %3985 = vmatprep.subr.bf16.mxu0 %v2282
    %3986 = vmatpush1.bf16.msra.mxu0 %v2281
    %3987 = vmatprep.subr.bf16.mxu0 %v2286
    %3988 = vmatpush1.bf16.msra.mxu0 %v2285
    %3989 = vmatprep.subr.bf16.mxu0 %v2290
    %3990 = vmatpush1.bf16.msra.mxu0 %v2289
    %3991 = vmatprep.subr.bf16.mxu0 %v2294
    %3992 = vmatpush1.bf16.msra.mxu0 %v2293
    %3993 = vmatprep.subr.bf16.mxu0 %v2298
    %3994 = vmatpush1.bf16.msra.mxu0 %v2297
    %3995 = vmatprep.subr.bf16.mxu0 %v2302
    %3996 = vmatpush1.bf16.msra.mxu0 %v2301
    %3997 = vmatprep.subr.bf16.mxu0 0
    %3998 = vmatpush1.bf16.msra.mxu0 0
    %3999 = vmatprep.subr.bf16.mxu0 0
    %4000 = vmatpush1.bf16.msra.mxu0 0
    %4001 = vmatprep.subr.bf16.mxu0 0
    %4002 = vmatpush1.bf16.msra.mxu0 0
    %4003 = vmatprep.subr.bf16.mxu0 0
    %4004 = vmatpush1.bf16.msra.mxu0 0
    %4005 = vmatprep.subr.bf16.mxu0 0
    %4006 = vmatpush1.bf16.msra.mxu0 0
    %4007 = vmatprep.subr.bf16.mxu0 0
    %4008 = vmatpush1.bf16.msra.mxu0 0
    %4009 = vmatprep.subr.bf16.mxu0 0
    %4010 = vmatpush1.bf16.msra.mxu0 0
    %4011 = vmatprep.subr.bf16.mxu0 0
    %4012 = vmatpush1.bf16.msra.mxu0 0
    %4013 = vmatprep.mubr.bf16.mxu0 0
    %4014 = vmatmul.mubr.bf16.gmra.mrb[0].mxu0 %v3939
    %v4015 = vpop.f32.mrb[0].mxu0
    %v4016 = vadd.f32 0.0, %v4015
    %v4017 = vpop.f32.mrb[0].mxu0
    %v4018 = vadd.f32 0.0, %v4017
    %v4019 = vpop.f32.mrb[0].mxu0
    %v4020 = vpop.f32.mrb[0].mxu0
    %4021 = vdwg.mxu0
    %4022 = vmatprep.subr.bf16.mxu0 0
    %4023 = vmatpush1.bf16.msra.mxu0 %v3180
    %4024 = vmatprep.subr.bf16.mxu0 0
    %4025 = vmatpush1.bf16.msra.mxu0 %v3181
    %4026 = vmatprep.subr.bf16.mxu0 0
    %4027 = vmatpush1.bf16.msra.mxu0 %v3182
    %4028 = vmatprep.subr.bf16.mxu0 0
    %4029 = vmatpush1.bf16.msra.mxu0 %v3183
    %4030 = vmatprep.subr.bf16.mxu0 0
    %4031 = vmatpush1.bf16.msra.mxu0 %v3184
    %4032 = vmatprep.subr.bf16.mxu0 0
    %4033 = vmatpush1.bf16.msra.mxu0 %v3185
    %4034 = vmatprep.subr.bf16.mxu0 0
    %4035 = vmatpush1.bf16.msra.mxu0 %v3186
    %4036 = vmatprep.subr.bf16.mxu0 0
    %4037 = vmatpush1.bf16.msra.mxu0 %v3187
    %4038 = vmatprep.subr.bf16.mxu0 0
    %4039 = vmatpush1.bf16.msra.mxu0 0
    %4040 = vmatprep.subr.bf16.mxu0 0
    %4041 = vmatpush1.bf16.msra.mxu0 0
    %4042 = vmatprep.subr.bf16.mxu0 0
    %4043 = vmatpush1.bf16.msra.mxu0 0
    %4044 = vmatprep.subr.bf16.mxu0 0
    %4045 = vmatpush1.bf16.msra.mxu0 0
    %4046 = vmatprep.subr.bf16.mxu0 0
    %4047 = vmatpush1.bf16.msra.mxu0 0
    %4048 = vmatprep.subr.bf16.mxu0 0
    %4049 = vmatpush1.bf16.msra.mxu0 0
    %4050 = vmatprep.subr.bf16.mxu0 0
    %4051 = vmatpush1.bf16.msra.mxu0 0
    %4052 = vmatprep.subr.bf16.mxu0 0
    %4053 = vmatpush1.bf16.msra.mxu0 0
    %4054 = vmatprep.mubr.bf16.mxu0 0
    %4055 = vmatmul.mubr.bf16.gmra.mrb[0].mxu0 %v3939
    %v4056 = vpop.f32.mrb[0].mxu0
    %v4057 = vadd.f32 %v454, %v4056
    %v4058 = vpop.f32.mrb[0].mxu0
    %v4059 = vpop.f32.mrb[0].mxu0
    %v4060 = vpop.f32.mrb[0].mxu0
    %4061 = vdwg.mxu0
    %v4062 = vtanh.pop %v4057
    %v4063 = vmul.f32 %v4062, 0.5
    %v4064 = vadd.f32 %v4063, 0.5
    %4065 = vst [vmem:[#allocation2 + $0x3] sm:$0x1] %v4064
    %v4066 = vpack.c.bf16 %v4064, %v4064
    %4067 = vmatprep.subr.bf16.mxu0 %v2515
    %4068 = vmatpush1.bf16.msra.mxu0 %v2514
    %4069 = vmatprep.subr.bf16.mxu0 %v2519
    %4070 = vmatpush1.bf16.msra.mxu0 %v2518
    %4071 = vmatprep.subr.bf16.mxu0 %v2523
    %4072 = vmatpush1.bf16.msra.mxu0 %v2522
    %4073 = vmatprep.subr.bf16.mxu0 %v2527
    %4074 = vmatpush1.bf16.msra.mxu0 %v2526
    %4075 = vmatprep.subr.bf16.mxu0 %v2531
    %4076 = vmatpush1.bf16.msra.mxu0 %v2530
    %4077 = vmatprep.subr.bf16.mxu0 %v2535
    %4078 = vmatpush1.bf16.msra.mxu0 %v2534
    %4079 = vmatprep.subr.bf16.mxu0 %v2539
    %4080 = vmatpush1.bf16.msra.mxu0 %v2538
    %4081 = vmatprep.subr.bf16.mxu0 %v2543
    %4082 = vmatpush1.bf16.msra.mxu0 %v2542
    %4083 = vmatprep.subr.bf16.mxu0 0
    %4084 = vmatpush1.bf16.msra.mxu0 0
    %4085 = vmatprep.subr.bf16.mxu0 0
    %4086 = vmatpush1.bf16.msra.mxu0 0
    %4087 = vmatprep.subr.bf16.mxu0 0
    %4088 = vmatpush1.bf16.msra.mxu0 0
    %4089 = vmatprep.subr.bf16.mxu0 0
    %4090 = vmatpush1.bf16.msra.mxu0 0
    %4091 = vmatprep.subr.bf16.mxu0 0
    %4092 = vmatpush1.bf16.msra.mxu0 0
    %4093 = vmatprep.subr.bf16.mxu0 0
    %4094 = vmatpush1.bf16.msra.mxu0 0
    %4095 = vmatprep.subr.bf16.mxu0 0
    %4096 = vmatpush1.bf16.msra.mxu0 0
    %4097 = vmatprep.subr.bf16.mxu0 0
    %4098 = vmatpush1.bf16.msra.mxu0 0
    %4099 = vmatprep.mubr.bf16.mxu0 0
    %4100 = vmatmul.mubr.bf16.gmra.mrb[0].mxu0 %v4066
    %v4101 = vpop.f32.mrb[0].mxu0
    %v4102 = vadd.f32 %v3791, %v4101
    %v4103 = vpop.f32.mrb[0].mxu0
    %v4104 = vadd.f32 %v3793, %v4103
    %v4105 = vpop.f32.mrb[0].mxu0
    %v4106 = vpop.f32.mrb[0].mxu0
    %4107 = vdwg.mxu0
    %4108 = vmatprep.subr.bf16.mxu0 %v2517
    %4109 = vmatpush1.bf16.msra.mxu0 %v2516
    %4110 = vmatprep.subr.bf16.mxu0 %v2521
    %4111 = vmatpush1.bf16.msra.mxu0 %v2520
    %4112 = vmatprep.subr.bf16.mxu0 %v2525
    %4113 = vmatpush1.bf16.msra.mxu0 %v2524
    %4114 = vmatprep.subr.bf16.mxu0 %v2529
    %4115 = vmatpush1.bf16.msra.mxu0 %v2528
    %4116 = vmatprep.subr.bf16.mxu0 %v2533
    %4117 = vmatpush1.bf16.msra.mxu0 %v2532
    %4118 = vmatprep.subr.bf16.mxu0 %v2537
    %4119 = vmatpush1.bf16.msra.mxu0 %v2536
    %4120 = vmatprep.subr.bf16.mxu0 %v2541
    %4121 = vmatpush1.bf16.msra.mxu0 %v2540
    %4122 = vmatprep.subr.bf16.mxu0 %v2545
    %4123 = vmatpush1.bf16.msra.mxu0 %v2544
    %4124 = vmatprep.subr.bf16.mxu0 0
    %4125 = vmatpush1.bf16.msra.mxu0 0
    %4126 = vmatprep.subr.bf16.mxu0 0
    %4127 = vmatpush1.bf16.msra.mxu0 0
    %4128 = vmatprep.subr.bf16.mxu0 0
    %4129 = vmatpush1.bf16.msra.mxu0 0
    %4130 = vmatprep.subr.bf16.mxu0 0
    %4131 = vmatpush1.bf16.msra.mxu0 0
    %4132 = vmatprep.subr.bf16.mxu0 0
    %4133 = vmatpush1.bf16.msra.mxu0 0
    %4134 = vmatprep.subr.bf16.mxu0 0
    %4135 = vmatpush1.bf16.msra.mxu0 0
    %4136 = vmatprep.subr.bf16.mxu0 0
    %4137 = vmatpush1.bf16.msra.mxu0 0
    %4138 = vmatprep.subr.bf16.mxu0 0
    %4139 = vmatpush1.bf16.msra.mxu0 0
    %4140 = vmatprep.mubr.bf16.mxu0 0
    %4141 = vmatmul.mubr.bf16.gmra.mrb[0].mxu0 %v4066
    %v4142 = vpop.f32.mrb[0].mxu0
    %v4143 = vadd.f32 %v3832, %v4142
    %v4144 = vpop.f32.mrb[0].mxu0
    %v4145 = vadd.f32 %v3834, %v4144
    %v4146 = vpop.f32.mrb[0].mxu0
    %v4147 = vpop.f32.mrb[0].mxu0
    %4148 = vdwg.mxu0
    %v4149 = vadd.f32 %v4102, %v2664
    %v4150 = vadd.f32 %v4104, %v2668
    %v4151 = vadd.f32 %v4143, %v2672
    %v4152 = vadd.f32 %v4145, %v2676
    %v4153 = vtanh.pop %v4149
    %v4154 = vmul.f32 %v4153, 0.5
    %v4155 = vadd.f32 %v4154, 0.5
    %v4156 = vtanh.pop %v4150
    %v4157 = vmul.f32 %v4156, 0.5
    %v4158 = vadd.f32 %v4157, 0.5
    %v4159 = vtanh.pop %v4151
    %v4160 = vtanh.pop %v4152
    %v4161 = vmul.f32 %v4160, 0.5
    %v4162 = vadd.f32 %v4161, 0.5
    %v4163 = vmul.f32 %v4158, %v3752
    %v4164 = vmul.f32 %v4155, %v4159
    %v4165 = vadd.f32 %v4163, %v4164
    %v4166 = vtanh.pop %v4165
    %v4167 = vmul.f32 %v4162, %v4166
    %v4168 = vpack.c.bf16 %v4167, %v4167
    %4169 = vmatprep.subr.bf16.mxu0 %v2029
    %4170 = vmatpush1.bf16.msra.mxu0 %v2028
    %4171 = vmatprep.subr.bf16.mxu0 %v2033
    %4172 = vmatpush1.bf16.msra.mxu0 %v2032
    %4173 = vmatprep.subr.bf16.mxu0 %v2037
    %4174 = vmatpush1.bf16.msra.mxu0 %v2036
    %4175 = vmatprep.subr.bf16.mxu0 %v2041
    %4176 = vmatpush1.bf16.msra.mxu0 %v2040
    %4177 = vmatprep.subr.bf16.mxu0 %v2045
    %4178 = vmatpush1.bf16.msra.mxu0 %v2044
    %4179 = vmatprep.subr.bf16.mxu0 %v2049
    %4180 = vmatpush1.bf16.msra.mxu0 %v2048
    %4181 = vmatprep.subr.bf16.mxu0 %v2053
    %4182 = vmatpush1.bf16.msra.mxu0 %v2052
    %4183 = vmatprep.subr.bf16.mxu0 %v2057
    %4184 = vmatpush1.bf16.msra.mxu0 %v2056
    %4185 = vmatprep.subr.bf16.mxu0 0
    %4186 = vmatpush1.bf16.msra.mxu0 0
    %4187 = vmatprep.subr.bf16.mxu0 0
    %4188 = vmatpush1.bf16.msra.mxu0 0
    %4189 = vmatprep.subr.bf16.mxu0 0
    %4190 = vmatpush1.bf16.msra.mxu0 0
    %4191 = vmatprep.subr.bf16.mxu0 0
    %4192 = vmatpush1.bf16.msra.mxu0 0
    %4193 = vmatprep.subr.bf16.mxu0 0
    %4194 = vmatpush1.bf16.msra.mxu0 0
    %4195 = vmatprep.subr.bf16.mxu0 0
    %4196 = vmatpush1.bf16.msra.mxu0 0
    %4197 = vmatprep.subr.bf16.mxu0 0
    %4198 = vmatpush1.bf16.msra.mxu0 0
    %4199 = vmatprep.subr.bf16.mxu0 0
    %4200 = vmatpush1.bf16.msra.mxu0 0
    %4201 = vmatprep.mubr.bf16.mxu0 0
    %4202 = vmatmul.mubr.bf16.gmra.mrb[0].mxu0 %v4168
    %v4203 = vpop.f32.mrb[0].mxu0
    %v4204 = vadd.f32 0.0, %v4203
    %v4205 = vpop.f32.mrb[0].mxu0
    %v4206 = vadd.f32 0.0, %v4205
    %v4207 = vpop.f32.mrb[0].mxu0
    %v4208 = vpop.f32.mrb[0].mxu0
    %4209 = vdwg.mxu0
    %4210 = vmatprep.subr.bf16.mxu0 %v2031
    %4211 = vmatpush1.bf16.msra.mxu0 %v2030
    %4212 = vmatprep.subr.bf16.mxu0 %v2035
    %4213 = vmatpush1.bf16.msra.mxu0 %v2034
    %4214 = vmatprep.subr.bf16.mxu0 %v2039
    %4215 = vmatpush1.bf16.msra.mxu0 %v2038
    %4216 = vmatprep.subr.bf16.mxu0 %v2043
    %4217 = vmatpush1.bf16.msra.mxu0 %v2042
    %4218 = vmatprep.subr.bf16.mxu0 %v2047
    %4219 = vmatpush1.bf16.msra.mxu0 %v2046
    %4220 = vmatprep.subr.bf16.mxu0 %v2051
    %4221 = vmatpush1.bf16.msra.mxu0 %v2050
    %4222 = vmatprep.subr.bf16.mxu0 %v2055
    %4223 = vmatpush1.bf16.msra.mxu0 %v2054
    %4224 = vmatprep.subr.bf16.mxu0 %v2059
    %4225 = vmatpush1.bf16.msra.mxu0 %v2058
    %4226 = vmatprep.subr.bf16.mxu0 0
    %4227 = vmatpush1.bf16.msra.mxu0 0
    %4228 = vmatprep.subr.bf16.mxu0 0
    %4229 = vmatpush1.bf16.msra.mxu0 0
    %4230 = vmatprep.subr.bf16.mxu0 0
    %4231 = vmatpush1.bf16.msra.mxu0 0
    %4232 = vmatprep.subr.bf16.mxu0 0
    %4233 = vmatpush1.bf16.msra.mxu0 0
    %4234 = vmatprep.subr.bf16.mxu0 0
    %4235 = vmatpush1.bf16.msra.mxu0 0
    %4236 = vmatprep.subr.bf16.mxu0 0
    %4237 = vmatpush1.bf16.msra.mxu0 0
    %4238 = vmatprep.subr.bf16.mxu0 0
    %4239 = vmatpush1.bf16.msra.mxu0 0
    %4240 = vmatprep.subr.bf16.mxu0 0
    %4241 = vmatpush1.bf16.msra.mxu0 0
    %4242 = vmatprep.mubr.bf16.mxu0 0
    %4243 = vmatmul.mubr.bf16.gmra.mrb[0].mxu0 %v4168
    %v4244 = vpop.f32.mrb[0].mxu0
    %v4245 = vadd.f32 0.0, %v4244
    %v4246 = vpop.f32.mrb[0].mxu0
    %v4247 = vadd.f32 0.0, %v4246
    %v4248 = vpop.f32.mrb[0].mxu0
    %v4249 = vpop.f32.mrb[0].mxu0
    %4250 = vdwg.mxu0
    %4251 = vmatprep.subr.bf16.mxu0 %v2880
    %4252 = vmatpush1.bf16.msra.mxu0 %v2879
    %4253 = vmatprep.subr.bf16.mxu0 %v2884
    %4254 = vmatpush1.bf16.msra.mxu0 %v2883
    %4255 = vmatprep.subr.bf16.mxu0 %v2888
    %4256 = vmatpush1.bf16.msra.mxu0 %v2887
    %4257 = vmatprep.subr.bf16.mxu0 %v2892
    %4258 = vmatpush1.bf16.msra.mxu0 %v2891
    %4259 = vmatprep.subr.bf16.mxu0 %v2896
    %4260 = vmatpush1.bf16.msra.mxu0 %v2895
    %4261 = vmatprep.subr.bf16.mxu0 %v2900
    %4262 = vmatpush1.bf16.msra.mxu0 %v2899
    %4263 = vmatprep.subr.bf16.mxu0 %v2904
    %4264 = vmatpush1.bf16.msra.mxu0 %v2903
    %4265 = vmatprep.subr.bf16.mxu0 %v2908
    %4266 = vmatpush1.bf16.msra.mxu0 %v2907
    %4267 = vmatprep.subr.bf16.mxu0 0
    %4268 = vmatpush1.bf16.msra.mxu0 0
    %4269 = vmatprep.subr.bf16.mxu0 0
    %4270 = vmatpush1.bf16.msra.mxu0 0
    %4271 = vmatprep.subr.bf16.mxu0 0
    %4272 = vmatpush1.bf16.msra.mxu0 0
    %4273 = vmatprep.subr.bf16.mxu0 0
    %4274 = vmatpush1.bf16.msra.mxu0 0
    %4275 = vmatprep.subr.bf16.mxu0 0
    %4276 = vmatpush1.bf16.msra.mxu0 0
    %4277 = vmatprep.subr.bf16.mxu0 0
    %4278 = vmatpush1.bf16.msra.mxu0 0
    %4279 = vmatprep.subr.bf16.mxu0 0
    %4280 = vmatpush1.bf16.msra.mxu0 0
    %4281 = vmatprep.subr.bf16.mxu0 0
    %4282 = vmatpush1.bf16.msra.mxu0 0
    %4283 = vmatprep.mubr.bf16.mxu0 0
    %4284 = vmatmul.mubr.bf16.gmra.mrb[0].mxu0 %v4168
    %v4285 = vpop.f32.mrb[0].mxu0
    %v4286 = vadd.f32 %v3975, %v4285
    %v4287 = vpop.f32.mrb[0].mxu0
    %v4288 = vadd.f32 %v3977, %v4287
    %v4289 = vpop.f32.mrb[0].mxu0
    %v4290 = vpop.f32.mrb[0].mxu0
    %4291 = vdwg.mxu0
    %4292 = vmatprep.subr.bf16.mxu0 %v2882
    %4293 = vmatpush1.bf16.msra.mxu0 %v2881
    %4294 = vmatprep.subr.bf16.mxu0 %v2886
    %4295 = vmatpush1.bf16.msra.mxu0 %v2885
    %4296 = vmatprep.subr.bf16.mxu0 %v2890
    %4297 = vmatpush1.bf16.msra.mxu0 %v2889
    %4298 = vmatprep.subr.bf16.mxu0 %v2894
    %4299 = vmatpush1.bf16.msra.mxu0 %v2893
    %4300 = vmatprep.subr.bf16.mxu0 %v2898
    %4301 = vmatpush1.bf16.msra.mxu0 %v2897
    %4302 = vmatprep.subr.bf16.mxu0 %v2902
    %4303 = vmatpush1.bf16.msra.mxu0 %v2901
    %4304 = vmatprep.subr.bf16.mxu0 %v2906
    %4305 = vmatpush1.bf16.msra.mxu0 %v2905
    %4306 = vmatprep.subr.bf16.mxu0 %v2910
    %4307 = vmatpush1.bf16.msra.mxu0 %v2909
    %4308 = vmatprep.subr.bf16.mxu0 0
    %4309 = vmatpush1.bf16.msra.mxu0 0
    %4310 = vmatprep.subr.bf16.mxu0 0
    %4311 = vmatpush1.bf16.msra.mxu0 0
    %4312 = vmatprep.subr.bf16.mxu0 0
    %4313 = vmatpush1.bf16.msra.mxu0 0
    %4314 = vmatprep.subr.bf16.mxu0 0
    %4315 = vmatpush1.bf16.msra.mxu0 0
    %4316 = vmatprep.subr.bf16.mxu0 0
    %4317 = vmatpush1.bf16.msra.mxu0 0
    %4318 = vmatprep.subr.bf16.mxu0 0
    %4319 = vmatpush1.bf16.msra.mxu0 0
    %4320 = vmatprep.subr.bf16.mxu0 0
    %4321 = vmatpush1.bf16.msra.mxu0 0
    %4322 = vmatprep.subr.bf16.mxu0 0
    %4323 = vmatpush1.bf16.msra.mxu0 0
    %4324 = vmatprep.mubr.bf16.mxu0 0
    %4325 = vmatmul.mubr.bf16.gmra.mrb[0].mxu0 %v4168
    %v4326 = vpop.f32.mrb[0].mxu0
    %v4327 = vadd.f32 %v4016, %v4326
    %v4328 = vpop.f32.mrb[0].mxu0
    %v4329 = vadd.f32 %v4018, %v4328
    %v4330 = vpop.f32.mrb[0].mxu0
    %v4331 = vpop.f32.mrb[0].mxu0
    %4332 = vdwg.mxu0
    %v4333 = vadd.f32 %v4286, %v3029
    %v4334 = vadd.f32 %v4288, %v3033
    %v4335 = vadd.f32 %v4327, %v3037
    %v4336 = vadd.f32 %v4329, %v3041
    %v4337 = vtanh.pop %v4333
    %v4338 = vmul.f32 %v4337, 0.5
    %v4339 = vadd.f32 %v4338, 0.5
    %v4340 = vtanh.pop %v4334
    %v4341 = vmul.f32 %v4340, 0.5
    %v4342 = vadd.f32 %v4341, 0.5
    %v4343 = vtanh.pop %v4335
    %v4344 = vtanh.pop %v4336
    %v4345 = vmul.f32 %v4344, 0.5
    %v4346 = vadd.f32 %v4345, 0.5
    %v4347 = vmul.f32 %v4342, %v3936
    %v4348 = vmul.f32 %v4339, %v4343
    %v4349 = vadd.f32 %v4347, %v4348
    %v4350 = vtanh.pop %v4349
    %v4351 = vmul.f32 %v4346, %v4350
    %v4352 = vpack.c.bf16 %v4351, %v4351
    %4353 = vmatprep.subr.bf16.mxu0 %v2272
    %4354 = vmatpush1.bf16.msra.mxu0 %v2271
    %4355 = vmatprep.subr.bf16.mxu0 %v2276
    %4356 = vmatpush1.bf16.msra.mxu0 %v2275
    %4357 = vmatprep.subr.bf16.mxu0 %v2280
    %4358 = vmatpush1.bf16.msra.mxu0 %v2279
    %4359 = vmatprep.subr.bf16.mxu0 %v2284
    %4360 = vmatpush1.bf16.msra.mxu0 %v2283
    %4361 = vmatprep.subr.bf16.mxu0 %v2288
    %4362 = vmatpush1.bf16.msra.mxu0 %v2287
    %4363 = vmatprep.subr.bf16.mxu0 %v2292
    %4364 = vmatpush1.bf16.msra.mxu0 %v2291
    %4365 = vmatprep.subr.bf16.mxu0 %v2296
    %4366 = vmatpush1.bf16.msra.mxu0 %v2295
    %4367 = vmatprep.subr.bf16.mxu0 %v2300
    %4368 = vmatpush1.bf16.msra.mxu0 %v2299
    %4369 = vmatprep.subr.bf16.mxu0 0
    %4370 = vmatpush1.bf16.msra.mxu0 0
    %4371 = vmatprep.subr.bf16.mxu0 0
    %4372 = vmatpush1.bf16.msra.mxu0 0
    %4373 = vmatprep.subr.bf16.mxu0 0
    %4374 = vmatpush1.bf16.msra.mxu0 0
    %4375 = vmatprep.subr.bf16.mxu0 0
    %4376 = vmatpush1.bf16.msra.mxu0 0
    %4377 = vmatprep.subr.bf16.mxu0 0
    %4378 = vmatpush1.bf16.msra.mxu0 0
    %4379 = vmatprep.subr.bf16.mxu0 0
    %4380 = vmatpush1.bf16.msra.mxu0 0
    %4381 = vmatprep.subr.bf16.mxu0 0
    %4382 = vmatpush1.bf16.msra.mxu0 0
    %4383 = vmatprep.subr.bf16.mxu0 0
    %4384 = vmatpush1.bf16.msra.mxu0 0
    %4385 = vmatprep.mubr.bf16.mxu0 0
    %4386 = vmatmul.mubr.bf16.gmra.mrb[0].mxu0 %v4352
    %v4387 = vpop.f32.mrb[0].mxu0
    %v4388 = vadd.f32 0.0, %v4387
    %v4389 = vpop.f32.mrb[0].mxu0
    %v4390 = vadd.f32 0.0, %v4389
    %v4391 = vpop.f32.mrb[0].mxu0
    %v4392 = vpop.f32.mrb[0].mxu0
    %4393 = vdwg.mxu0
    %4394 = vmatprep.subr.bf16.mxu0 %v2274
    %4395 = vmatpush1.bf16.msra.mxu0 %v2273
    %4396 = vmatprep.subr.bf16.mxu0 %v2278
    %4397 = vmatpush1.bf16.msra.mxu0 %v2277
    %4398 = vmatprep.subr.bf16.mxu0 %v2282
    %4399 = vmatpush1.bf16.msra.mxu0 %v2281
    %4400 = vmatprep.subr.bf16.mxu0 %v2286
    %4401 = vmatpush1.bf16.msra.mxu0 %v2285
    %4402 = vmatprep.subr.bf16.mxu0 %v2290
    %4403 = vmatpush1.bf16.msra.mxu0 %v2289
    %4404 = vmatprep.subr.bf16.mxu0 %v2294
    %4405 = vmatpush1.bf16.msra.mxu0 %v2293
    %4406 = vmatprep.subr.bf16.mxu0 %v2298
    %4407 = vmatpush1.bf16.msra.mxu0 %v2297
    %4408 = vmatprep.subr.bf16.mxu0 %v2302
    %4409 = vmatpush1.bf16.msra.mxu0 %v2301
    %4410 = vmatprep.subr.bf16.mxu0 0
    %4411 = vmatpush1.bf16.msra.mxu0 0
    %4412 = vmatprep.subr.bf16.mxu0 0
    %4413 = vmatpush1.bf16.msra.mxu0 0
    %4414 = vmatprep.subr.bf16.mxu0 0
    %4415 = vmatpush1.bf16.msra.mxu0 0
    %4416 = vmatprep.subr.bf16.mxu0 0
    %4417 = vmatpush1.bf16.msra.mxu0 0
    %4418 = vmatprep.subr.bf16.mxu0 0
    %4419 = vmatpush1.bf16.msra.mxu0 0
    %4420 = vmatprep.subr.bf16.mxu0 0
    %4421 = vmatpush1.bf16.msra.mxu0 0
    %4422 = vmatprep.subr.bf16.mxu0 0
    %4423 = vmatpush1.bf16.msra.mxu0 0
    %4424 = vmatprep.subr.bf16.mxu0 0
    %4425 = vmatpush1.bf16.msra.mxu0 0
    %4426 = vmatprep.mubr.bf16.mxu0 0
    %4427 = vmatmul.mubr.bf16.gmra.mrb[0].mxu0 %v4352
    %v4428 = vpop.f32.mrb[0].mxu0
    %v4429 = vadd.f32 0.0, %v4428
    %v4430 = vpop.f32.mrb[0].mxu0
    %v4431 = vadd.f32 0.0, %v4430
    %v4432 = vpop.f32.mrb[0].mxu0
    %v4433 = vpop.f32.mrb[0].mxu0
    %4434 = vdwg.mxu0
    %4435 = vmatprep.subr.bf16.mxu0 0
    %4436 = vmatpush1.bf16.msra.mxu0 %v3180
    %4437 = vmatprep.subr.bf16.mxu0 0
    %4438 = vmatpush1.bf16.msra.mxu0 %v3181
    %4439 = vmatprep.subr.bf16.mxu0 0
    %4440 = vmatpush1.bf16.msra.mxu0 %v3182
    %4441 = vmatprep.subr.bf16.mxu0 0
    %4442 = vmatpush1.bf16.msra.mxu0 %v3183
    %4443 = vmatprep.subr.bf16.mxu0 0
    %4444 = vmatpush1.bf16.msra.mxu0 %v3184
    %4445 = vmatprep.subr.bf16.mxu0 0
    %4446 = vmatpush1.bf16.msra.mxu0 %v3185
    %4447 = vmatprep.subr.bf16.mxu0 0
    %4448 = vmatpush1.bf16.msra.mxu0 %v3186
    %4449 = vmatprep.subr.bf16.mxu0 0
    %4450 = vmatpush1.bf16.msra.mxu0 %v3187
    %4451 = vmatprep.subr.bf16.mxu0 0
    %4452 = vmatpush1.bf16.msra.mxu0 0
    %4453 = vmatprep.subr.bf16.mxu0 0
    %4454 = vmatpush1.bf16.msra.mxu0 0
    %4455 = vmatprep.subr.bf16.mxu0 0
    %4456 = vmatpush1.bf16.msra.mxu0 0
    %4457 = vmatprep.subr.bf16.mxu0 0
    %4458 = vmatpush1.bf16.msra.mxu0 0
    %4459 = vmatprep.subr.bf16.mxu0 0
    %4460 = vmatpush1.bf16.msra.mxu0 0
    %4461 = vmatprep.subr.bf16.mxu0 0
    %4462 = vmatpush1.bf16.msra.mxu0 0
    %4463 = vmatprep.subr.bf16.mxu0 0
    %4464 = vmatpush1.bf16.msra.mxu0 0
    %4465 = vmatprep.subr.bf16.mxu0 0
    %4466 = vmatpush1.bf16.msra.mxu0 0
    %4467 = vmatprep.mubr.bf16.mxu0 0
    %4468 = vmatmul.mubr.bf16.gmra.mrb[0].mxu0 %v4352
    %v4469 = vpop.f32.mrb[0].mxu0
    %v4470 = vadd.f32 %v454, %v4469
    %v4471 = vpop.f32.mrb[0].mxu0
    %v4472 = vpop.f32.mrb[0].mxu0
    %v4473 = vpop.f32.mrb[0].mxu0
    %4474 = vdwg.mxu0
    %v4475 = vtanh.pop %v4470
    %v4476 = vmul.f32 %v4475, 0.5
    %v4477 = vadd.f32 %v4476, 0.5
    %4478 = vst [vmem:[#allocation2 + $0x4] sm:$0x1] %v4477
    %v4479 = vpack.c.bf16 %v4477, %v4477
    %4480 = vmatprep.subr.bf16.mxu0 %v2515
    %4481 = vmatpush1.bf16.msra.mxu0 %v2514
    %4482 = vmatprep.subr.bf16.mxu0 %v2519
    %4483 = vmatpush1.bf16.msra.mxu0 %v2518
    %4484 = vmatprep.subr.bf16.mxu0 %v2523
    %4485 = vmatpush1.bf16.msra.mxu0 %v2522
    %4486 = vmatprep.subr.bf16.mxu0 %v2527
    %4487 = vmatpush1.bf16.msra.mxu0 %v2526
    %4488 = vmatprep.subr.bf16.mxu0 %v2531
    %4489 = vmatpush1.bf16.msra.mxu0 %v2530
    %4490 = vmatprep.subr.bf16.mxu0 %v2535
    %4491 = vmatpush1.bf16.msra.mxu0 %v2534
    %4492 = vmatprep.subr.bf16.mxu0 %v2539
    %4493 = vmatpush1.bf16.msra.mxu0 %v2538
    %4494 = vmatprep.subr.bf16.mxu0 %v2543
    %4495 = vmatpush1.bf16.msra.mxu0 %v2542
    %4496 = vmatprep.subr.bf16.mxu0 0
    %4497 = vmatpush1.bf16.msra.mxu0 0
    %4498 = vmatprep.subr.bf16.mxu0 0
    %4499 = vmatpush1.bf16.msra.mxu0 0
    %4500 = vmatprep.subr.bf16.mxu0 0
    %4501 = vmatpush1.bf16.msra.mxu0 0
    %4502 = vmatprep.subr.bf16.mxu0 0
    %4503 = vmatpush1.bf16.msra.mxu0 0
    %4504 = vmatprep.subr.bf16.mxu0 0
    %4505 = vmatpush1.bf16.msra.mxu0 0
    %4506 = vmatprep.subr.bf16.mxu0 0
    %4507 = vmatpush1.bf16.msra.mxu0 0
    %4508 = vmatprep.subr.bf16.mxu0 0
    %4509 = vmatpush1.bf16.msra.mxu0 0
    %4510 = vmatprep.subr.bf16.mxu0 0
    %4511 = vmatpush1.bf16.msra.mxu0 0
    %4512 = vmatprep.mubr.bf16.mxu0 0
    %4513 = vmatmul.mubr.bf16.gmra.mrb[0].mxu0 %v4479
    %v4514 = vpop.f32.mrb[0].mxu0
    %v4515 = vadd.f32 %v4204, %v4514
    %v4516 = vpop.f32.mrb[0].mxu0
    %v4517 = vadd.f32 %v4206, %v4516
    %v4518 = vpop.f32.mrb[0].mxu0
    %v4519 = vpop.f32.mrb[0].mxu0
    %4520 = vdwg.mxu0
    %4521 = vmatprep.subr.bf16.mxu0 %v2517
    %4522 = vmatpush1.bf16.msra.mxu0 %v2516
    %4523 = vmatprep.subr.bf16.mxu0 %v2521
    %4524 = vmatpush1.bf16.msra.mxu0 %v2520
    %4525 = vmatprep.subr.bf16.mxu0 %v2525
    %4526 = vmatpush1.bf16.msra.mxu0 %v2524
    %4527 = vmatprep.subr.bf16.mxu0 %v2529
    %4528 = vmatpush1.bf16.msra.mxu0 %v2528
    %4529 = vmatprep.subr.bf16.mxu0 %v2533
    %4530 = vmatpush1.bf16.msra.mxu0 %v2532
    %4531 = vmatprep.subr.bf16.mxu0 %v2537
    %4532 = vmatpush1.bf16.msra.mxu0 %v2536
    %4533 = vmatprep.subr.bf16.mxu0 %v2541
    %4534 = vmatpush1.bf16.msra.mxu0 %v2540
    %4535 = vmatprep.subr.bf16.mxu0 %v2545
    %4536 = vmatpush1.bf16.msra.mxu0 %v2544
    %4537 = vmatprep.subr.bf16.mxu0 0
    %4538 = vmatpush1.bf16.msra.mxu0 0
    %4539 = vmatprep.subr.bf16.mxu0 0
    %4540 = vmatpush1.bf16.msra.mxu0 0
    %4541 = vmatprep.subr.bf16.mxu0 0
    %4542 = vmatpush1.bf16.msra.mxu0 0
    %4543 = vmatprep.subr.bf16.mxu0 0
    %4544 = vmatpush1.bf16.msra.mxu0 0
    %4545 = vmatprep.subr.bf16.mxu0 0
    %4546 = vmatpush1.bf16.msra.mxu0 0
    %4547 = vmatprep.subr.bf16.mxu0 0
    %4548 = vmatpush1.bf16.msra.mxu0 0
    %4549 = vmatprep.subr.bf16.mxu0 0
    %4550 = vmatpush1.bf16.msra.mxu0 0
    %4551 = vmatprep.subr.bf16.mxu0 0
    %4552 = vmatpush1.bf16.msra.mxu0 0
    %4553 = vmatprep.mubr.bf16.mxu0 0
    %4554 = vmatmul.mubr.bf16.gmra.mrb[0].mxu0 %v4479
    %v4555 = vpop.f32.mrb[0].mxu0
    %v4556 = vadd.f32 %v4245, %v4555
    %v4557 = vpop.f32.mrb[0].mxu0
    %v4558 = vadd.f32 %v4247, %v4557
    %v4559 = vpop.f32.mrb[0].mxu0
    %v4560 = vpop.f32.mrb[0].mxu0
    %4561 = vdwg.mxu0
    %v4562 = vadd.f32 %v4515, %v2664
    %v4563 = vadd.f32 %v4517, %v2668
    %v4564 = vadd.f32 %v4556, %v2672
    %v4565 = vadd.f32 %v4558, %v2676
    %v4566 = vtanh.pop %v4562
    %v4567 = vmul.f32 %v4566, 0.5
    %v4568 = vadd.f32 %v4567, 0.5
    %v4569 = vtanh.pop %v4563
    %v4570 = vmul.f32 %v4569, 0.5
    %v4571 = vadd.f32 %v4570, 0.5
    %v4572 = vtanh.pop %v4564
    %v4573 = vtanh.pop %v4565
    %v4574 = vmul.f32 %v4573, 0.5
    %v4575 = vadd.f32 %v4574, 0.5
    %v4576 = vmul.f32 %v4571, %v4165
    %v4577 = vmul.f32 %v4568, %v4572
    %v4578 = vadd.f32 %v4576, %v4577
    %v4579 = vtanh.pop %v4578
    %v4580 = vmul.f32 %v4575, %v4579
    %v4581 = vpack.c.bf16 %v4580, %v4580
    %4582 = vmatprep.subr.bf16.mxu0 %v2029
    %4583 = vmatpush1.bf16.msra.mxu0 %v2028
    %4584 = vmatprep.subr.bf16.mxu0 %v2033
    %4585 = vmatpush1.bf16.msra.mxu0 %v2032
    %4586 = vmatprep.subr.bf16.mxu0 %v2037
    %4587 = vmatpush1.bf16.msra.mxu0 %v2036
    %4588 = vmatprep.subr.bf16.mxu0 %v2041
    %4589 = vmatpush1.bf16.msra.mxu0 %v2040
    %4590 = vmatprep.subr.bf16.mxu0 %v2045
    %4591 = vmatpush1.bf16.msra.mxu0 %v2044
    %4592 = vmatprep.subr.bf16.mxu0 %v2049
    %4593 = vmatpush1.bf16.msra.mxu0 %v2048
    %4594 = vmatprep.subr.bf16.mxu0 %v2053
    %4595 = vmatpush1.bf16.msra.mxu0 %v2052
    %4596 = vmatprep.subr.bf16.mxu0 %v2057
    %4597 = vmatpush1.bf16.msra.mxu0 %v2056
    %4598 = vmatprep.subr.bf16.mxu0 0
    %4599 = vmatpush1.bf16.msra.mxu0 0
    %4600 = vmatprep.subr.bf16.mxu0 0
    %4601 = vmatpush1.bf16.msra.mxu0 0
    %4602 = vmatprep.subr.bf16.mxu0 0
    %4603 = vmatpush1.bf16.msra.mxu0 0
    %4604 = vmatprep.subr.bf16.mxu0 0
    %4605 = vmatpush1.bf16.msra.mxu0 0
    %4606 = vmatprep.subr.bf16.mxu0 0
    %4607 = vmatpush1.bf16.msra.mxu0 0
    %4608 = vmatprep.subr.bf16.mxu0 0
    %4609 = vmatpush1.bf16.msra.mxu0 0
    %4610 = vmatprep.subr.bf16.mxu0 0
    %4611 = vmatpush1.bf16.msra.mxu0 0
    %4612 = vmatprep.subr.bf16.mxu0 0
    %4613 = vmatpush1.bf16.msra.mxu0 0
    %4614 = vmatprep.mubr.bf16.mxu0 0
    %4615 = vmatmul.mubr.bf16.gmra.mrb[0].mxu0 %v4581
    %v4616 = vpop.f32.mrb[0].mxu0
    %v4617 = vadd.f32 0.0, %v4616
    %v4618 = vpop.f32.mrb[0].mxu0
    %v4619 = vadd.f32 0.0, %v4618
    %v4620 = vpop.f32.mrb[0].mxu0
    %v4621 = vpop.f32.mrb[0].mxu0
    %4622 = vdwg.mxu0
    %4623 = vmatprep.subr.bf16.mxu0 %v2031
    %4624 = vmatpush1.bf16.msra.mxu0 %v2030
    %4625 = vmatprep.subr.bf16.mxu0 %v2035
    %4626 = vmatpush1.bf16.msra.mxu0 %v2034
    %4627 = vmatprep.subr.bf16.mxu0 %v2039
    %4628 = vmatpush1.bf16.msra.mxu0 %v2038
    %4629 = vmatprep.subr.bf16.mxu0 %v2043
    %4630 = vmatpush1.bf16.msra.mxu0 %v2042
    %4631 = vmatprep.subr.bf16.mxu0 %v2047
    %4632 = vmatpush1.bf16.msra.mxu0 %v2046
    %4633 = vmatprep.subr.bf16.mxu0 %v2051
    %4634 = vmatpush1.bf16.msra.mxu0 %v2050
    %4635 = vmatprep.subr.bf16.mxu0 %v2055
    %4636 = vmatpush1.bf16.msra.mxu0 %v2054
    %4637 = vmatprep.subr.bf16.mxu0 %v2059
    %4638 = vmatpush1.bf16.msra.mxu0 %v2058
    %4639 = vmatprep.subr.bf16.mxu0 0
    %4640 = vmatpush1.bf16.msra.mxu0 0
    %4641 = vmatprep.subr.bf16.mxu0 0
    %4642 = vmatpush1.bf16.msra.mxu0 0
    %4643 = vmatprep.subr.bf16.mxu0 0
    %4644 = vmatpush1.bf16.msra.mxu0 0
    %4645 = vmatprep.subr.bf16.mxu0 0
    %4646 = vmatpush1.bf16.msra.mxu0 0
    %4647 = vmatprep.subr.bf16.mxu0 0
    %4648 = vmatpush1.bf16.msra.mxu0 0
    %4649 = vmatprep.subr.bf16.mxu0 0
    %4650 = vmatpush1.bf16.msra.mxu0 0
    %4651 = vmatprep.subr.bf16.mxu0 0
    %4652 = vmatpush1.bf16.msra.mxu0 0
    %4653 = vmatprep.subr.bf16.mxu0 0
    %4654 = vmatpush1.bf16.msra.mxu0 0
    %4655 = vmatprep.mubr.bf16.mxu0 0
    %4656 = vmatmul.mubr.bf16.gmra.mrb[0].mxu0 %v4581
    %v4657 = vpop.f32.mrb[0].mxu0
    %v4658 = vadd.f32 0.0, %v4657
    %v4659 = vpop.f32.mrb[0].mxu0
    %v4660 = vadd.f32 0.0, %v4659
    %v4661 = vpop.f32.mrb[0].mxu0
    %v4662 = vpop.f32.mrb[0].mxu0
    %4663 = vdwg.mxu0
    %4664 = vmatprep.subr.bf16.mxu0 %v2880
    %4665 = vmatpush1.bf16.msra.mxu0 %v2879
    %4666 = vmatprep.subr.bf16.mxu0 %v2884
    %4667 = vmatpush1.bf16.msra.mxu0 %v2883
    %4668 = vmatprep.subr.bf16.mxu0 %v2888
    %4669 = vmatpush1.bf16.msra.mxu0 %v2887
    %4670 = vmatprep.subr.bf16.mxu0 %v2892
    %4671 = vmatpush1.bf16.msra.mxu0 %v2891
    %4672 = vmatprep.subr.bf16.mxu0 %v2896
    %4673 = vmatpush1.bf16.msra.mxu0 %v2895
    %4674 = vmatprep.subr.bf16.mxu0 %v2900
    %4675 = vmatpush1.bf16.msra.mxu0 %v2899
    %4676 = vmatprep.subr.bf16.mxu0 %v2904
    %4677 = vmatpush1.bf16.msra.mxu0 %v2903
    %4678 = vmatprep.subr.bf16.mxu0 %v2908
    %4679 = vmatpush1.bf16.msra.mxu0 %v2907
    %4680 = vmatprep.subr.bf16.mxu0 0
    %4681 = vmatpush1.bf16.msra.mxu0 0
    %4682 = vmatprep.subr.bf16.mxu0 0
    %4683 = vmatpush1.bf16.msra.mxu0 0
    %4684 = vmatprep.subr.bf16.mxu0 0
    %4685 = vmatpush1.bf16.msra.mxu0 0
    %4686 = vmatprep.subr.bf16.mxu0 0
    %4687 = vmatpush1.bf16.msra.mxu0 0
    %4688 = vmatprep.subr.bf16.mxu0 0
    %4689 = vmatpush1.bf16.msra.mxu0 0
    %4690 = vmatprep.subr.bf16.mxu0 0
    %4691 = vmatpush1.bf16.msra.mxu0 0
    %4692 = vmatprep.subr.bf16.mxu0 0
    %4693 = vmatpush1.bf16.msra.mxu0 0
    %4694 = vmatprep.subr.bf16.mxu0 0
    %4695 = vmatpush1.bf16.msra.mxu0 0
    %4696 = vmatprep.mubr.bf16.mxu0 0
    %4697 = vmatmul.mubr.bf16.gmra.mrb[0].mxu0 %v4581
    %v4698 = vpop.f32.mrb[0].mxu0
    %v4699 = vadd.f32 %v4388, %v4698
    %v4700 = vpop.f32.mrb[0].mxu0
    %v4701 = vadd.f32 %v4390, %v4700
    %v4702 = vpop.f32.mrb[0].mxu0
    %v4703 = vpop.f32.mrb[0].mxu0
    %4704 = vdwg.mxu0
    %4705 = vmatprep.subr.bf16.mxu0 %v2882
    %4706 = vmatpush1.bf16.msra.mxu0 %v2881
    %4707 = vmatprep.subr.bf16.mxu0 %v2886
    %4708 = vmatpush1.bf16.msra.mxu0 %v2885
    %4709 = vmatprep.subr.bf16.mxu0 %v2890
    %4710 = vmatpush1.bf16.msra.mxu0 %v2889
    %4711 = vmatprep.subr.bf16.mxu0 %v2894
    %4712 = vmatpush1.bf16.msra.mxu0 %v2893
    %4713 = vmatprep.subr.bf16.mxu0 %v2898
    %4714 = vmatpush1.bf16.msra.mxu0 %v2897
    %4715 = vmatprep.subr.bf16.mxu0 %v2902
    %4716 = vmatpush1.bf16.msra.mxu0 %v2901
    %4717 = vmatprep.subr.bf16.mxu0 %v2906
    %4718 = vmatpush1.bf16.msra.mxu0 %v2905
    %4719 = vmatprep.subr.bf16.mxu0 %v2910
    %4720 = vmatpush1.bf16.msra.mxu0 %v2909
    %4721 = vmatprep.subr.bf16.mxu0 0
    %4722 = vmatpush1.bf16.msra.mxu0 0
    %4723 = vmatprep.subr.bf16.mxu0 0
    %4724 = vmatpush1.bf16.msra.mxu0 0
    %4725 = vmatprep.subr.bf16.mxu0 0
    %4726 = vmatpush1.bf16.msra.mxu0 0
    %4727 = vmatprep.subr.bf16.mxu0 0
    %4728 = vmatpush1.bf16.msra.mxu0 0
    %4729 = vmatprep.subr.bf16.mxu0 0
    %4730 = vmatpush1.bf16.msra.mxu0 0
    %4731 = vmatprep.subr.bf16.mxu0 0
    %4732 = vmatpush1.bf16.msra.mxu0 0
    %4733 = vmatprep.subr.bf16.mxu0 0
    %4734 = vmatpush1.bf16.msra.mxu0 0
    %4735 = vmatprep.subr.bf16.mxu0 0
    %4736 = vmatpush1.bf16.msra.mxu0 0
    %4737 = vmatprep.mubr.bf16.mxu0 0
    %4738 = vmatmul.mubr.bf16.gmra.mrb[0].mxu0 %v4581
    %v4739 = vpop.f32.mrb[0].mxu0
    %v4740 = vadd.f32 %v4429, %v4739
    %v4741 = vpop.f32.mrb[0].mxu0
    %v4742 = vadd.f32 %v4431, %v4741
    %v4743 = vpop.f32.mrb[0].mxu0
    %v4744 = vpop.f32.mrb[0].mxu0
    %4745 = vdwg.mxu0
    %v4746 = vadd.f32 %v4699, %v3029
    %v4747 = vadd.f32 %v4701, %v3033
    %v4748 = vadd.f32 %v4740, %v3037
    %v4749 = vadd.f32 %v4742, %v3041
    %v4750 = vtanh.pop %v4746
    %v4751 = vmul.f32 %v4750, 0.5
    %v4752 = vadd.f32 %v4751, 0.5
    %v4753 = vtanh.pop %v4747
    %v4754 = vmul.f32 %v4753, 0.5
    %v4755 = vadd.f32 %v4754, 0.5
    %v4756 = vtanh.pop %v4748
    %v4757 = vtanh.pop %v4749
    %v4758 = vmul.f32 %v4757, 0.5
    %v4759 = vadd.f32 %v4758, 0.5
    %v4760 = vmul.f32 %v4755, %v4349
    %v4761 = vmul.f32 %v4752, %v4756
    %v4762 = vadd.f32 %v4760, %v4761
    %v4763 = vtanh.pop %v4762
    %v4764 = vmul.f32 %v4759, %v4763
    %v4765 = vpack.c.bf16 %v4764, %v4764
    %4766 = vmatprep.subr.bf16.mxu0 %v2272
    %4767 = vmatpush1.bf16.msra.mxu0 %v2271
    %4768 = vmatprep.subr.bf16.mxu0 %v2276
    %4769 = vmatpush1.bf16.msra.mxu0 %v2275
    %4770 = vmatprep.subr.bf16.mxu0 %v2280
    %4771 = vmatpush1.bf16.msra.mxu0 %v2279
    %4772 = vmatprep.subr.bf16.mxu0 %v2284
    %4773 = vmatpush1.bf16.msra.mxu0 %v2283
    %4774 = vmatprep.subr.bf16.mxu0 %v2288
    %4775 = vmatpush1.bf16.msra.mxu0 %v2287
    %4776 = vmatprep.subr.bf16.mxu0 %v2292
    %4777 = vmatpush1.bf16.msra.mxu0 %v2291
    %4778 = vmatprep.subr.bf16.mxu0 %v2296
    %4779 = vmatpush1.bf16.msra.mxu0 %v2295
    %4780 = vmatprep.subr.bf16.mxu0 %v2300
    %4781 = vmatpush1.bf16.msra.mxu0 %v2299
    %4782 = vmatprep.subr.bf16.mxu0 0
    %4783 = vmatpush1.bf16.msra.mxu0 0
    %4784 = vmatprep.subr.bf16.mxu0 0
    %4785 = vmatpush1.bf16.msra.mxu0 0
    %4786 = vmatprep.subr.bf16.mxu0 0
    %4787 = vmatpush1.bf16.msra.mxu0 0
    %4788 = vmatprep.subr.bf16.mxu0 0
    %4789 = vmatpush1.bf16.msra.mxu0 0
    %4790 = vmatprep.subr.bf16.mxu0 0
    %4791 = vmatpush1.bf16.msra.mxu0 0
    %4792 = vmatprep.subr.bf16.mxu0 0
    %4793 = vmatpush1.bf16.msra.mxu0 0
    %4794 = vmatprep.subr.bf16.mxu0 0
    %4795 = vmatpush1.bf16.msra.mxu0 0
    %4796 = vmatprep.subr.bf16.mxu0 0
    %4797 = vmatpush1.bf16.msra.mxu0 0
    %4798 = vmatprep.mubr.bf16.mxu0 0
    %4799 = vmatmul.mubr.bf16.gmra.mrb[0].mxu0 %v4765
    %v4800 = vpop.f32.mrb[0].mxu0
    %v4801 = vadd.f32 0.0, %v4800
    %v4802 = vpop.f32.mrb[0].mxu0
    %v4803 = vadd.f32 0.0, %v4802
    %v4804 = vpop.f32.mrb[0].mxu0
    %v4805 = vpop.f32.mrb[0].mxu0
    %4806 = vdwg.mxu0
    %4807 = vmatprep.subr.bf16.mxu0 %v2274
    %4808 = vmatpush1.bf16.msra.mxu0 %v2273
    %4809 = vmatprep.subr.bf16.mxu0 %v2278
    %4810 = vmatpush1.bf16.msra.mxu0 %v2277
    %4811 = vmatprep.subr.bf16.mxu0 %v2282
    %4812 = vmatpush1.bf16.msra.mxu0 %v2281
    %4813 = vmatprep.subr.bf16.mxu0 %v2286
    %4814 = vmatpush1.bf16.msra.mxu0 %v2285
    %4815 = vmatprep.subr.bf16.mxu0 %v2290
    %4816 = vmatpush1.bf16.msra.mxu0 %v2289
    %4817 = vmatprep.subr.bf16.mxu0 %v2294
    %4818 = vmatpush1.bf16.msra.mxu0 %v2293
    %4819 = vmatprep.subr.bf16.mxu0 %v2298
    %4820 = vmatpush1.bf16.msra.mxu0 %v2297
    %4821 = vmatprep.subr.bf16.mxu0 %v2302
    %4822 = vmatpush1.bf16.msra.mxu0 %v2301
    %4823 = vmatprep.subr.bf16.mxu0 0
    %4824 = vmatpush1.bf16.msra.mxu0 0
    %4825 = vmatprep.subr.bf16.mxu0 0
    %4826 = vmatpush1.bf16.msra.mxu0 0
    %4827 = vmatprep.subr.bf16.mxu0 0
    %4828 = vmatpush1.bf16.msra.mxu0 0
    %4829 = vmatprep.subr.bf16.mxu0 0
    %4830 = vmatpush1.bf16.msra.mxu0 0
    %4831 = vmatprep.subr.bf16.mxu0 0
    %4832 = vmatpush1.bf16.msra.mxu0 0
    %4833 = vmatprep.subr.bf16.mxu0 0
    %4834 = vmatpush1.bf16.msra.mxu0 0
    %4835 = vmatprep.subr.bf16.mxu0 0
    %4836 = vmatpush1.bf16.msra.mxu0 0
    %4837 = vmatprep.subr.bf16.mxu0 0
    %4838 = vmatpush1.bf16.msra.mxu0 0
    %4839 = vmatprep.mubr.bf16.mxu0 0
    %4840 = vmatmul.mubr.bf16.gmra.mrb[0].mxu0 %v4765
    %v4841 = vpop.f32.mrb[0].mxu0
    %v4842 = vadd.f32 0.0, %v4841
    %v4843 = vpop.f32.mrb[0].mxu0
    %v4844 = vadd.f32 0.0, %v4843
    %v4845 = vpop.f32.mrb[0].mxu0
    %v4846 = vpop.f32.mrb[0].mxu0
    %4847 = vdwg.mxu0
    %4848 = vmatprep.subr.bf16.mxu0 0
    %4849 = vmatpush1.bf16.msra.mxu0 %v3180
    %4850 = vmatprep.subr.bf16.mxu0 0
    %4851 = vmatpush1.bf16.msra.mxu0 %v3181
    %4852 = vmatprep.subr.bf16.mxu0 0
    %4853 = vmatpush1.bf16.msra.mxu0 %v3182
    %4854 = vmatprep.subr.bf16.mxu0 0
    %4855 = vmatpush1.bf16.msra.mxu0 %v3183
    %4856 = vmatprep.subr.bf16.mxu0 0
    %4857 = vmatpush1.bf16.msra.mxu0 %v3184
    %4858 = vmatprep.subr.bf16.mxu0 0
    %4859 = vmatpush1.bf16.msra.mxu0 %v3185
    %4860 = vmatprep.subr.bf16.mxu0 0
    %4861 = vmatpush1.bf16.msra.mxu0 %v3186
    %4862 = vmatprep.subr.bf16.mxu0 0
    %4863 = vmatpush1.bf16.msra.mxu0 %v3187
    %4864 = vmatprep.subr.bf16.mxu0 0
    %4865 = vmatpush1.bf16.msra.mxu0 0
    %4866 = vmatprep.subr.bf16.mxu0 0
    %4867 = vmatpush1.bf16.msra.mxu0 0
    %4868 = vmatprep.subr.bf16.mxu0 0
    %4869 = vmatpush1.bf16.msra.mxu0 0
    %4870 = vmatprep.subr.bf16.mxu0 0
    %4871 = vmatpush1.bf16.msra.mxu0 0
    %4872 = vmatprep.subr.bf16.mxu0 0
    %4873 = vmatpush1.bf16.msra.mxu0 0
    %4874 = vmatprep.subr.bf16.mxu0 0
    %4875 = vmatpush1.bf16.msra.mxu0 0
    %4876 = vmatprep.subr.bf16.mxu0 0
    %4877 = vmatpush1.bf16.msra.mxu0 0
    %4878 = vmatprep.subr.bf16.mxu0 0
    %4879 = vmatpush1.bf16.msra.mxu0 0
    %4880 = vmatprep.mubr.bf16.mxu0 0
    %4881 = vmatmul.mubr.bf16.gmra.mrb[0].mxu0 %v4765
    %v4882 = vpop.f32.mrb[0].mxu0
    %v4883 = vadd.f32 %v454, %v4882
    %v4884 = vpop.f32.mrb[0].mxu0
    %v4885 = vpop.f32.mrb[0].mxu0
    %v4886 = vpop.f32.mrb[0].mxu0
    %4887 = vdwg.mxu0
    %v4888 = vtanh.pop %v4883
    %v4889 = vmul.f32 %v4888, 0.5
    %v4890 = vadd.f32 %v4889, 0.5
    %4891 = vst [vmem:[#allocation2 + $0x5] sm:$0x1] %v4890
    %v4892 = vpack.c.bf16 %v4890, %v4890
    %4893 = vmatprep.subr.bf16.mxu0 %v2515
    %4894 = vmatpush1.bf16.msra.mxu0 %v2514
    %4895 = vmatprep.subr.bf16.mxu0 %v2519
    %4896 = vmatpush1.bf16.msra.mxu0 %v2518
    %4897 = vmatprep.subr.bf16.mxu0 %v2523
    %4898 = vmatpush1.bf16.msra.mxu0 %v2522
    %4899 = vmatprep.subr.bf16.mxu0 %v2527
    %4900 = vmatpush1.bf16.msra.mxu0 %v2526
    %4901 = vmatprep.subr.bf16.mxu0 %v2531
    %4902 = vmatpush1.bf16.msra.mxu0 %v2530
    %4903 = vmatprep.subr.bf16.mxu0 %v2535
    %4904 = vmatpush1.bf16.msra.mxu0 %v2534
    %4905 = vmatprep.subr.bf16.mxu0 %v2539
    %4906 = vmatpush1.bf16.msra.mxu0 %v2538
    %4907 = vmatprep.subr.bf16.mxu0 %v2543
    %4908 = vmatpush1.bf16.msra.mxu0 %v2542
    %4909 = vmatprep.subr.bf16.mxu0 0
    %4910 = vmatpush1.bf16.msra.mxu0 0
    %4911 = vmatprep.subr.bf16.mxu0 0
    %4912 = vmatpush1.bf16.msra.mxu0 0
    %4913 = vmatprep.subr.bf16.mxu0 0
    %4914 = vmatpush1.bf16.msra.mxu0 0
    %4915 = vmatprep.subr.bf16.mxu0 0
    %4916 = vmatpush1.bf16.msra.mxu0 0
    %4917 = vmatprep.subr.bf16.mxu0 0
    %4918 = vmatpush1.bf16.msra.mxu0 0
    %4919 = vmatprep.subr.bf16.mxu0 0
    %4920 = vmatpush1.bf16.msra.mxu0 0
    %4921 = vmatprep.subr.bf16.mxu0 0
    %4922 = vmatpush1.bf16.msra.mxu0 0
    %4923 = vmatprep.subr.bf16.mxu0 0
    %4924 = vmatpush1.bf16.msra.mxu0 0
    %4925 = vmatprep.mubr.bf16.mxu0 0
    %4926 = vmatmul.mubr.bf16.gmra.mrb[0].mxu0 %v4892
    %v4927 = vpop.f32.mrb[0].mxu0
    %v4928 = vadd.f32 %v4617, %v4927
    %v4929 = vpop.f32.mrb[0].mxu0
    %v4930 = vadd.f32 %v4619, %v4929
    %v4931 = vpop.f32.mrb[0].mxu0
    %v4932 = vpop.f32.mrb[0].mxu0
    %4933 = vdwg.mxu0
    %4934 = vmatprep.subr.bf16.mxu0 %v2517
    %4935 = vmatpush1.bf16.msra.mxu0 %v2516
    %4936 = vmatprep.subr.bf16.mxu0 %v2521
    %4937 = vmatpush1.bf16.msra.mxu0 %v2520
    %4938 = vmatprep.subr.bf16.mxu0 %v2525
    %4939 = vmatpush1.bf16.msra.mxu0 %v2524
    %4940 = vmatprep.subr.bf16.mxu0 %v2529
    %4941 = vmatpush1.bf16.msra.mxu0 %v2528
    %4942 = vmatprep.subr.bf16.mxu0 %v2533
    %4943 = vmatpush1.bf16.msra.mxu0 %v2532
    %4944 = vmatprep.subr.bf16.mxu0 %v2537
    %4945 = vmatpush1.bf16.msra.mxu0 %v2536
    %4946 = vmatprep.subr.bf16.mxu0 %v2541
    %4947 = vmatpush1.bf16.msra.mxu0 %v2540
    %4948 = vmatprep.subr.bf16.mxu0 %v2545
    %4949 = vmatpush1.bf16.msra.mxu0 %v2544
    %4950 = vmatprep.subr.bf16.mxu0 0
    %4951 = vmatpush1.bf16.msra.mxu0 0
    %4952 = vmatprep.subr.bf16.mxu0 0
    %4953 = vmatpush1.bf16.msra.mxu0 0
    %4954 = vmatprep.subr.bf16.mxu0 0
    %4955 = vmatpush1.bf16.msra.mxu0 0
    %4956 = vmatprep.subr.bf16.mxu0 0
    %4957 = vmatpush1.bf16.msra.mxu0 0
    %4958 = vmatprep.subr.bf16.mxu0 0
    %4959 = vmatpush1.bf16.msra.mxu0 0
    %4960 = vmatprep.subr.bf16.mxu0 0
    %4961 = vmatpush1.bf16.msra.mxu0 0
    %4962 = vmatprep.subr.bf16.mxu0 0
    %4963 = vmatpush1.bf16.msra.mxu0 0
    %4964 = vmatprep.subr.bf16.mxu0 0
    %4965 = vmatpush1.bf16.msra.mxu0 0
    %4966 = vmatprep.mubr.bf16.mxu0 0
    %4967 = vmatmul.mubr.bf16.gmra.mrb[0].mxu0 %v4892
    %v4968 = vpop.f32.mrb[0].mxu0
    %v4969 = vadd.f32 %v4658, %v4968
    %v4970 = vpop.f32.mrb[0].mxu0
    %v4971 = vadd.f32 %v4660, %v4970
    %v4972 = vpop.f32.mrb[0].mxu0
    %v4973 = vpop.f32.mrb[0].mxu0
    %4974 = vdwg.mxu0
    %v4975 = vadd.f32 %v4928, %v2664
    %v4976 = vadd.f32 %v4930, %v2668
    %v4977 = vadd.f32 %v4969, %v2672
    %v4978 = vadd.f32 %v4971, %v2676
    %v4979 = vtanh.pop %v4975
    %v4980 = vmul.f32 %v4979, 0.5
    %v4981 = vadd.f32 %v4980, 0.5
    %v4982 = vtanh.pop %v4976
    %v4983 = vmul.f32 %v4982, 0.5
    %v4984 = vadd.f32 %v4983, 0.5
    %v4985 = vtanh.pop %v4977
    %v4986 = vtanh.pop %v4978
    %v4987 = vmul.f32 %v4986, 0.5
    %v4988 = vadd.f32 %v4987, 0.5
    %v4989 = vmul.f32 %v4984, %v4578
    %v4990 = vmul.f32 %v4981, %v4985
    %v4991 = vadd.f32 %v4989, %v4990
    %v4992 = vtanh.pop %v4991
    %v4993 = vmul.f32 %v4988, %v4992
    %v4994 = vpack.c.bf16 %v4993, %v4993
    %4995 = vmatprep.subr.bf16.mxu0 %v2029
    %4996 = vmatpush1.bf16.msra.mxu0 %v2028
    %4997 = vmatprep.subr.bf16.mxu0 %v2033
    %4998 = vmatpush1.bf16.msra.mxu0 %v2032
    %4999 = vmatprep.subr.bf16.mxu0 %v2037
    %5000 = vmatpush1.bf16.msra.mxu0 %v2036
    %5001 = vmatprep.subr.bf16.mxu0 %v2041
    %5002 = vmatpush1.bf16.msra.mxu0 %v2040
    %5003 = vmatprep.subr.bf16.mxu0 %v2045
    %5004 = vmatpush1.bf16.msra.mxu0 %v2044
    %5005 = vmatprep.subr.bf16.mxu0 %v2049
    %5006 = vmatpush1.bf16.msra.mxu0 %v2048
    %5007 = vmatprep.subr.bf16.mxu0 %v2053
    %5008 = vmatpush1.bf16.msra.mxu0 %v2052
    %5009 = vmatprep.subr.bf16.mxu0 %v2057
    %5010 = vmatpush1.bf16.msra.mxu0 %v2056
    %5011 = vmatprep.subr.bf16.mxu0 0
    %5012 = vmatpush1.bf16.msra.mxu0 0
    %5013 = vmatprep.subr.bf16.mxu0 0
    %5014 = vmatpush1.bf16.msra.mxu0 0
    %5015 = vmatprep.subr.bf16.mxu0 0
    %5016 = vmatpush1.bf16.msra.mxu0 0
    %5017 = vmatprep.subr.bf16.mxu0 0
    %5018 = vmatpush1.bf16.msra.mxu0 0
    %5019 = vmatprep.subr.bf16.mxu0 0
    %5020 = vmatpush1.bf16.msra.mxu0 0
    %5021 = vmatprep.subr.bf16.mxu0 0
    %5022 = vmatpush1.bf16.msra.mxu0 0
    %5023 = vmatprep.subr.bf16.mxu0 0
    %5024 = vmatpush1.bf16.msra.mxu0 0
    %5025 = vmatprep.subr.bf16.mxu0 0
    %5026 = vmatpush1.bf16.msra.mxu0 0
    %5027 = vmatprep.mubr.bf16.mxu0 0
    %5028 = vmatmul.mubr.bf16.gmra.mrb[0].mxu0 %v4994
    %v5029 = vpop.f32.mrb[0].mxu0
    %v5030 = vadd.f32 0.0, %v5029
    %v5031 = vpop.f32.mrb[0].mxu0
    %v5032 = vadd.f32 0.0, %v5031
    %v5033 = vpop.f32.mrb[0].mxu0
    %v5034 = vpop.f32.mrb[0].mxu0
    %5035 = vdwg.mxu0
    %5036 = vmatprep.subr.bf16.mxu0 %v2031
    %5037 = vmatpush1.bf16.msra.mxu0 %v2030
    %5038 = vmatprep.subr.bf16.mxu0 %v2035
    %5039 = vmatpush1.bf16.msra.mxu0 %v2034
    %5040 = vmatprep.subr.bf16.mxu0 %v2039
    %5041 = vmatpush1.bf16.msra.mxu0 %v2038
    %5042 = vmatprep.subr.bf16.mxu0 %v2043
    %5043 = vmatpush1.bf16.msra.mxu0 %v2042
    %5044 = vmatprep.subr.bf16.mxu0 %v2047
    %5045 = vmatpush1.bf16.msra.mxu0 %v2046
    %5046 = vmatprep.subr.bf16.mxu0 %v2051
    %5047 = vmatpush1.bf16.msra.mxu0 %v2050
    %5048 = vmatprep.subr.bf16.mxu0 %v2055
    %5049 = vmatpush1.bf16.msra.mxu0 %v2054
    %5050 = vmatprep.subr.bf16.mxu0 %v2059
    %5051 = vmatpush1.bf16.msra.mxu0 %v2058
    %5052 = vmatprep.subr.bf16.mxu0 0
    %5053 = vmatpush1.bf16.msra.mxu0 0
    %5054 = vmatprep.subr.bf16.mxu0 0
    %5055 = vmatpush1.bf16.msra.mxu0 0
    %5056 = vmatprep.subr.bf16.mxu0 0
    %5057 = vmatpush1.bf16.msra.mxu0 0
    %5058 = vmatprep.subr.bf16.mxu0 0
    %5059 = vmatpush1.bf16.msra.mxu0 0
    %5060 = vmatprep.subr.bf16.mxu0 0
    %5061 = vmatpush1.bf16.msra.mxu0 0
    %5062 = vmatprep.subr.bf16.mxu0 0
    %5063 = vmatpush1.bf16.msra.mxu0 0
    %5064 = vmatprep.subr.bf16.mxu0 0
    %5065 = vmatpush1.bf16.msra.mxu0 0
    %5066 = vmatprep.subr.bf16.mxu0 0
    %5067 = vmatpush1.bf16.msra.mxu0 0
    %5068 = vmatprep.mubr.bf16.mxu0 0
    %5069 = vmatmul.mubr.bf16.gmra.mrb[0].mxu0 %v4994
    %v5070 = vpop.f32.mrb[0].mxu0
    %v5071 = vadd.f32 0.0, %v5070
    %v5072 = vpop.f32.mrb[0].mxu0
    %v5073 = vadd.f32 0.0, %v5072
    %v5074 = vpop.f32.mrb[0].mxu0
    %v5075 = vpop.f32.mrb[0].mxu0
    %5076 = vdwg.mxu0
    %5077 = vmatprep.subr.bf16.mxu0 %v2880
    %5078 = vmatpush1.bf16.msra.mxu0 %v2879
    %5079 = vmatprep.subr.bf16.mxu0 %v2884
    %5080 = vmatpush1.bf16.msra.mxu0 %v2883
    %5081 = vmatprep.subr.bf16.mxu0 %v2888
    %5082 = vmatpush1.bf16.msra.mxu0 %v2887
    %5083 = vmatprep.subr.bf16.mxu0 %v2892
    %5084 = vmatpush1.bf16.msra.mxu0 %v2891
    %5085 = vmatprep.subr.bf16.mxu0 %v2896
    %5086 = vmatpush1.bf16.msra.mxu0 %v2895
    %5087 = vmatprep.subr.bf16.mxu0 %v2900
    %5088 = vmatpush1.bf16.msra.mxu0 %v2899
    %5089 = vmatprep.subr.bf16.mxu0 %v2904
    %5090 = vmatpush1.bf16.msra.mxu0 %v2903
    %5091 = vmatprep.subr.bf16.mxu0 %v2908
    %5092 = vmatpush1.bf16.msra.mxu0 %v2907
    %5093 = vmatprep.subr.bf16.mxu0 0
    %5094 = vmatpush1.bf16.msra.mxu0 0
    %5095 = vmatprep.subr.bf16.mxu0 0
    %5096 = vmatpush1.bf16.msra.mxu0 0
    %5097 = vmatprep.subr.bf16.mxu0 0
    %5098 = vmatpush1.bf16.msra.mxu0 0
    %5099 = vmatprep.subr.bf16.mxu0 0
    %5100 = vmatpush1.bf16.msra.mxu0 0
    %5101 = vmatprep.subr.bf16.mxu0 0
    %5102 = vmatpush1.bf16.msra.mxu0 0
    %5103 = vmatprep.subr.bf16.mxu0 0
    %5104 = vmatpush1.bf16.msra.mxu0 0
    %5105 = vmatprep.subr.bf16.mxu0 0
    %5106 = vmatpush1.bf16.msra.mxu0 0
    %5107 = vmatprep.subr.bf16.mxu0 0
    %5108 = vmatpush1.bf16.msra.mxu0 0
    %5109 = vmatprep.mubr.bf16.mxu0 0
    %5110 = vmatmul.mubr.bf16.gmra.mrb[0].mxu0 %v4994
    %v5111 = vpop.f32.mrb[0].mxu0
    %v5112 = vadd.f32 %v4801, %v5111
    %v5113 = vpop.f32.mrb[0].mxu0
    %v5114 = vadd.f32 %v4803, %v5113
    %v5115 = vpop.f32.mrb[0].mxu0
    %v5116 = vpop.f32.mrb[0].mxu0
    %5117 = vdwg.mxu0
    %5118 = vmatprep.subr.bf16.mxu0 %v2882
    %5119 = vmatpush1.bf16.msra.mxu0 %v2881
    %5120 = vmatprep.subr.bf16.mxu0 %v2886
    %5121 = vmatpush1.bf16.msra.mxu0 %v2885
    %5122 = vmatprep.subr.bf16.mxu0 %v2890
    %5123 = vmatpush1.bf16.msra.mxu0 %v2889
    %5124 = vmatprep.subr.bf16.mxu0 %v2894
    %5125 = vmatpush1.bf16.msra.mxu0 %v2893
    %5126 = vmatprep.subr.bf16.mxu0 %v2898
    %5127 = vmatpush1.bf16.msra.mxu0 %v2897
    %5128 = vmatprep.subr.bf16.mxu0 %v2902
    %5129 = vmatpush1.bf16.msra.mxu0 %v2901
    %5130 = vmatprep.subr.bf16.mxu0 %v2906
    %5131 = vmatpush1.bf16.msra.mxu0 %v2905
    %5132 = vmatprep.subr.bf16.mxu0 %v2910
    %5133 = vmatpush1.bf16.msra.mxu0 %v2909
    %5134 = vmatprep.subr.bf16.mxu0 0
    %5135 = vmatpush1.bf16.msra.mxu0 0
    %5136 = vmatprep.subr.bf16.mxu0 0
    %5137 = vmatpush1.bf16.msra.mxu0 0
    %5138 = vmatprep.subr.bf16.mxu0 0
    %5139 = vmatpush1.bf16.msra.mxu0 0
    %5140 = vmatprep.subr.bf16.mxu0 0
    %5141 = vmatpush1.bf16.msra.mxu0 0
    %5142 = vmatprep.subr.bf16.mxu0 0
    %5143 = vmatpush1.bf16.msra.mxu0 0
    %5144 = vmatprep.subr.bf16.mxu0 0
    %5145 = vmatpush1.bf16.msra.mxu0 0
    %5146 = vmatprep.subr.bf16.mxu0 0
    %5147 = vmatpush1.bf16.msra.mxu0 0
    %5148 = vmatprep.subr.bf16.mxu0 0
    %5149 = vmatpush1.bf16.msra.mxu0 0
    %5150 = vmatprep.mubr.bf16.mxu0 0
    %5151 = vmatmul.mubr.bf16.gmra.mrb[0].mxu0 %v4994
    %v5152 = vpop.f32.mrb[0].mxu0
    %v5153 = vadd.f32 %v4842, %v5152
    %v5154 = vpop.f32.mrb[0].mxu0
    %v5155 = vadd.f32 %v4844, %v5154
    %v5156 = vpop.f32.mrb[0].mxu0
    %v5157 = vpop.f32.mrb[0].mxu0
    %5158 = vdwg.mxu0
    %v5159 = vadd.f32 %v5112, %v3029
    %v5160 = vadd.f32 %v5114, %v3033
    %v5161 = vadd.f32 %v5153, %v3037
    %v5162 = vadd.f32 %v5155, %v3041
    %v5163 = vtanh.pop %v5159
    %v5164 = vmul.f32 %v5163, 0.5
    %v5165 = vadd.f32 %v5164, 0.5
    %v5166 = vtanh.pop %v5160
    %v5167 = vmul.f32 %v5166, 0.5
    %v5168 = vadd.f32 %v5167, 0.5
    %v5169 = vtanh.pop %v5161
    %v5170 = vtanh.pop %v5162
    %v5171 = vmul.f32 %v5170, 0.5
    %v5172 = vadd.f32 %v5171, 0.5
    %v5173 = vmul.f32 %v5168, %v4762
    %v5174 = vmul.f32 %v5165, %v5169
    %v5175 = vadd.f32 %v5173, %v5174
    %v5176 = vtanh.pop %v5175
    %v5177 = vmul.f32 %v5172, %v5176
    %v5178 = vpack.c.bf16 %v5177, %v5177
    %5179 = vmatprep.subr.bf16.mxu0 %v2272
    %5180 = vmatpush1.bf16.msra.mxu0 %v2271
    %5181 = vmatprep.subr.bf16.mxu0 %v2276
    %5182 = vmatpush1.bf16.msra.mxu0 %v2275
    %5183 = vmatprep.subr.bf16.mxu0 %v2280
    %5184 = vmatpush1.bf16.msra.mxu0 %v2279
    %5185 = vmatprep.subr.bf16.mxu0 %v2284
    %5186 = vmatpush1.bf16.msra.mxu0 %v2283
    %5187 = vmatprep.subr.bf16.mxu0 %v2288
    %5188 = vmatpush1.bf16.msra.mxu0 %v2287
    %5189 = vmatprep.subr.bf16.mxu0 %v2292
    %5190 = vmatpush1.bf16.msra.mxu0 %v2291
    %5191 = vmatprep.subr.bf16.mxu0 %v2296
    %5192 = vmatpush1.bf16.msra.mxu0 %v2295
    %5193 = vmatprep.subr.bf16.mxu0 %v2300
    %5194 = vmatpush1.bf16.msra.mxu0 %v2299
    %5195 = vmatprep.subr.bf16.mxu0 0
    %5196 = vmatpush1.bf16.msra.mxu0 0
    %5197 = vmatprep.subr.bf16.mxu0 0
    %5198 = vmatpush1.bf16.msra.mxu0 0
    %5199 = vmatprep.subr.bf16.mxu0 0
    %5200 = vmatpush1.bf16.msra.mxu0 0
    %5201 = vmatprep.subr.bf16.mxu0 0
    %5202 = vmatpush1.bf16.msra.mxu0 0
    %5203 = vmatprep.subr.bf16.mxu0 0
    %5204 = vmatpush1.bf16.msra.mxu0 0
    %5205 = vmatprep.subr.bf16.mxu0 0
    %5206 = vmatpush1.bf16.msra.mxu0 0
    %5207 = vmatprep.subr.bf16.mxu0 0
    %5208 = vmatpush1.bf16.msra.mxu0 0
    %5209 = vmatprep.subr.bf16.mxu0 0
    %5210 = vmatpush1.bf16.msra.mxu0 0
    %5211 = vmatprep.mubr.bf16.mxu0 0
    %5212 = vmatmul.mubr.bf16.gmra.mrb[0].mxu0 %v5178
    %v5213 = vpop.f32.mrb[0].mxu0
    %v5214 = vadd.f32 0.0, %v5213
    %v5215 = vpop.f32.mrb[0].mxu0
    %v5216 = vadd.f32 0.0, %v5215
    %v5217 = vpop.f32.mrb[0].mxu0
    %v5218 = vpop.f32.mrb[0].mxu0
    %5219 = vdwg.mxu0
    %5220 = vmatprep.subr.bf16.mxu0 %v2274
    %5221 = vmatpush1.bf16.msra.mxu0 %v2273
    %5222 = vmatprep.subr.bf16.mxu0 %v2278
    %5223 = vmatpush1.bf16.msra.mxu0 %v2277
    %5224 = vmatprep.subr.bf16.mxu0 %v2282
    %5225 = vmatpush1.bf16.msra.mxu0 %v2281
    %5226 = vmatprep.subr.bf16.mxu0 %v2286
    %5227 = vmatpush1.bf16.msra.mxu0 %v2285
    %5228 = vmatprep.subr.bf16.mxu0 %v2290
    %5229 = vmatpush1.bf16.msra.mxu0 %v2289
    %5230 = vmatprep.subr.bf16.mxu0 %v2294
    %5231 = vmatpush1.bf16.msra.mxu0 %v2293
    %5232 = vmatprep.subr.bf16.mxu0 %v2298
    %5233 = vmatpush1.bf16.msra.mxu0 %v2297
    %5234 = vmatprep.subr.bf16.mxu0 %v2302
    %5235 = vmatpush1.bf16.msra.mxu0 %v2301
    %5236 = vmatprep.subr.bf16.mxu0 0
    %5237 = vmatpush1.bf16.msra.mxu0 0
    %5238 = vmatprep.subr.bf16.mxu0 0
    %5239 = vmatpush1.bf16.msra.mxu0 0
    %5240 = vmatprep.subr.bf16.mxu0 0
    %5241 = vmatpush1.bf16.msra.mxu0 0
    %5242 = vmatprep.subr.bf16.mxu0 0
    %5243 = vmatpush1.bf16.msra.mxu0 0
    %5244 = vmatprep.subr.bf16.mxu0 0
    %5245 = vmatpush1.bf16.msra.mxu0 0
    %5246 = vmatprep.subr.bf16.mxu0 0
    %5247 = vmatpush1.bf16.msra.mxu0 0
    %5248 = vmatprep.subr.bf16.mxu0 0
    %5249 = vmatpush1.bf16.msra.mxu0 0
    %5250 = vmatprep.subr.bf16.mxu0 0
    %5251 = vmatpush1.bf16.msra.mxu0 0
    %5252 = vmatprep.mubr.bf16.mxu0 0
    %5253 = vmatmul.mubr.bf16.gmra.mrb[0].mxu0 %v5178
    %v5254 = vpop.f32.mrb[0].mxu0
    %v5255 = vadd.f32 0.0, %v5254
    %v5256 = vpop.f32.mrb[0].mxu0
    %v5257 = vadd.f32 0.0, %v5256
    %v5258 = vpop.f32.mrb[0].mxu0
    %v5259 = vpop.f32.mrb[0].mxu0
    %5260 = vdwg.mxu0
    %5261 = vmatprep.subr.bf16.mxu0 0
    %5262 = vmatpush1.bf16.msra.mxu0 %v3180
    %5263 = vmatprep.subr.bf16.mxu0 0
    %5264 = vmatpush1.bf16.msra.mxu0 %v3181
    %5265 = vmatprep.subr.bf16.mxu0 0
    %5266 = vmatpush1.bf16.msra.mxu0 %v3182
    %5267 = vmatprep.subr.bf16.mxu0 0
    %5268 = vmatpush1.bf16.msra.mxu0 %v3183
    %5269 = vmatprep.subr.bf16.mxu0 0
    %5270 = vmatpush1.bf16.msra.mxu0 %v3184
    %5271 = vmatprep.subr.bf16.mxu0 0
    %5272 = vmatpush1.bf16.msra.mxu0 %v3185
    %5273 = vmatprep.subr.bf16.mxu0 0
    %5274 = vmatpush1.bf16.msra.mxu0 %v3186
    %5275 = vmatprep.subr.bf16.mxu0 0
    %5276 = vmatpush1.bf16.msra.mxu0 %v3187
    %5277 = vmatprep.subr.bf16.mxu0 0
    %5278 = vmatpush1.bf16.msra.mxu0 0
    %5279 = vmatprep.subr.bf16.mxu0 0
    %5280 = vmatpush1.bf16.msra.mxu0 0
    %5281 = vmatprep.subr.bf16.mxu0 0
    %5282 = vmatpush1.bf16.msra.mxu0 0
    %5283 = vmatprep.subr.bf16.mxu0 0
    %5284 = vmatpush1.bf16.msra.mxu0 0
    %5285 = vmatprep.subr.bf16.mxu0 0
    %5286 = vmatpush1.bf16.msra.mxu0 0
    %5287 = vmatprep.subr.bf16.mxu0 0
    %5288 = vmatpush1.bf16.msra.mxu0 0
    %5289 = vmatprep.subr.bf16.mxu0 0
    %5290 = vmatpush1.bf16.msra.mxu0 0
    %5291 = vmatprep.subr.bf16.mxu0 0
    %5292 = vmatpush1.bf16.msra.mxu0 0
    %5293 = vmatprep.mubr.bf16.mxu0 0
    %5294 = vmatmul.mubr.bf16.gmra.mrb[0].mxu0 %v5178
    %v5295 = vpop.f32.mrb[0].mxu0
    %v5296 = vadd.f32 %v454, %v5295
    %v5297 = vpop.f32.mrb[0].mxu0
    %v5298 = vpop.f32.mrb[0].mxu0
    %v5299 = vpop.f32.mrb[0].mxu0
    %5300 = vdwg.mxu0
    %v5301 = vtanh.pop %v5296
    %v5302 = vmul.f32 %v5301, 0.5
    %v5303 = vadd.f32 %v5302, 0.5
    %5304 = vst [vmem:[#allocation2 + $0x6] sm:$0x1] %v5303
    %v5305 = vpack.c.bf16 %v5303, %v5303
    %5306 = vmatprep.subr.bf16.mxu0 %v2515
    %5307 = vmatpush1.bf16.msra.mxu0 %v2514
    %5308 = vmatprep.subr.bf16.mxu0 %v2519
    %5309 = vmatpush1.bf16.msra.mxu0 %v2518
    %5310 = vmatprep.subr.bf16.mxu0 %v2523
    %5311 = vmatpush1.bf16.msra.mxu0 %v2522
    %5312 = vmatprep.subr.bf16.mxu0 %v2527
    %5313 = vmatpush1.bf16.msra.mxu0 %v2526
    %5314 = vmatprep.subr.bf16.mxu0 %v2531
    %5315 = vmatpush1.bf16.msra.mxu0 %v2530
    %5316 = vmatprep.subr.bf16.mxu0 %v2535
    %5317 = vmatpush1.bf16.msra.mxu0 %v2534
    %5318 = vmatprep.subr.bf16.mxu0 %v2539
    %5319 = vmatpush1.bf16.msra.mxu0 %v2538
    %5320 = vmatprep.subr.bf16.mxu0 %v2543
    %5321 = vmatpush1.bf16.msra.mxu0 %v2542
    %5322 = vmatprep.subr.bf16.mxu0 0
    %5323 = vmatpush1.bf16.msra.mxu0 0
    %5324 = vmatprep.subr.bf16.mxu0 0
    %5325 = vmatpush1.bf16.msra.mxu0 0
    %5326 = vmatprep.subr.bf16.mxu0 0
    %5327 = vmatpush1.bf16.msra.mxu0 0
    %5328 = vmatprep.subr.bf16.mxu0 0
    %5329 = vmatpush1.bf16.msra.mxu0 0
    %5330 = vmatprep.subr.bf16.mxu0 0
    %5331 = vmatpush1.bf16.msra.mxu0 0
    %5332 = vmatprep.subr.bf16.mxu0 0
    %5333 = vmatpush1.bf16.msra.mxu0 0
    %5334 = vmatprep.subr.bf16.mxu0 0
    %5335 = vmatpush1.bf16.msra.mxu0 0
    %5336 = vmatprep.subr.bf16.mxu0 0
    %5337 = vmatpush1.bf16.msra.mxu0 0
    %5338 = vmatprep.mubr.bf16.mxu0 0
    %5339 = vmatmul.mubr.bf16.gmra.mrb[0].mxu0 %v5305
    %v5340 = vpop.f32.mrb[0].mxu0
    %v5341 = vadd.f32 %v5030, %v5340
    %v5342 = vpop.f32.mrb[0].mxu0
    %v5343 = vadd.f32 %v5032, %v5342
    %v5344 = vpop.f32.mrb[0].mxu0
    %v5345 = vpop.f32.mrb[0].mxu0
    %5346 = vdwg.mxu0
    %5347 = vmatprep.subr.bf16.mxu0 %v2517
    %5348 = vmatpush1.bf16.msra.mxu0 %v2516
    %5349 = vmatprep.subr.bf16.mxu0 %v2521
    %5350 = vmatpush1.bf16.msra.mxu0 %v2520
    %5351 = vmatprep.subr.bf16.mxu0 %v2525
    %5352 = vmatpush1.bf16.msra.mxu0 %v2524
    %5353 = vmatprep.subr.bf16.mxu0 %v2529
    %5354 = vmatpush1.bf16.msra.mxu0 %v2528
    %5355 = vmatprep.subr.bf16.mxu0 %v2533
    %5356 = vmatpush1.bf16.msra.mxu0 %v2532
    %5357 = vmatprep.subr.bf16.mxu0 %v2537
    %5358 = vmatpush1.bf16.msra.mxu0 %v2536
    %5359 = vmatprep.subr.bf16.mxu0 %v2541
    %5360 = vmatpush1.bf16.msra.mxu0 %v2540
    %5361 = vmatprep.subr.bf16.mxu0 %v2545
    %5362 = vmatpush1.bf16.msra.mxu0 %v2544
    %5363 = vmatprep.subr.bf16.mxu0 0
    %5364 = vmatpush1.bf16.msra.mxu0 0
    %5365 = vmatprep.subr.bf16.mxu0 0
    %5366 = vmatpush1.bf16.msra.mxu0 0
    %5367 = vmatprep.subr.bf16.mxu0 0
    %5368 = vmatpush1.bf16.msra.mxu0 0
    %5369 = vmatprep.subr.bf16.mxu0 0
    %5370 = vmatpush1.bf16.msra.mxu0 0
    %5371 = vmatprep.subr.bf16.mxu0 0
    %5372 = vmatpush1.bf16.msra.mxu0 0
    %5373 = vmatprep.subr.bf16.mxu0 0
    %5374 = vmatpush1.bf16.msra.mxu0 0
    %5375 = vmatprep.subr.bf16.mxu0 0
    %5376 = vmatpush1.bf16.msra.mxu0 0
    %5377 = vmatprep.subr.bf16.mxu0 0
    %5378 = vmatpush1.bf16.msra.mxu0 0
    %5379 = vmatprep.mubr.bf16.mxu0 0
    %5380 = vmatmul.mubr.bf16.gmra.mrb[0].mxu0 %v5305
    %v5381 = vpop.f32.mrb[0].mxu0
    %v5382 = vadd.f32 %v5071, %v5381
    %v5383 = vpop.f32.mrb[0].mxu0
    %v5384 = vadd.f32 %v5073, %v5383
    %v5385 = vpop.f32.mrb[0].mxu0
    %v5386 = vpop.f32.mrb[0].mxu0
    %5387 = vdwg.mxu0
    %v5388 = vadd.f32 %v5341, %v2664
    %v5389 = vadd.f32 %v5343, %v2668
    %v5390 = vadd.f32 %v5382, %v2672
    %v5391 = vadd.f32 %v5384, %v2676
    %v5392 = vtanh.pop %v5388
    %v5393 = vmul.f32 %v5392, 0.5
    %v5394 = vadd.f32 %v5393, 0.5
    %v5395 = vtanh.pop %v5389
    %v5396 = vmul.f32 %v5395, 0.5
    %v5397 = vadd.f32 %v5396, 0.5
    %v5398 = vtanh.pop %v5390
    %v5399 = vtanh.pop %v5391
    %v5400 = vmul.f32 %v5399, 0.5
    %v5401 = vadd.f32 %v5400, 0.5
    %v5402 = vmul.f32 %v5397, %v4991
    %v5403 = vmul.f32 %v5394, %v5398
    %v5404 = vadd.f32 %v5402, %v5403
    %v5405 = vtanh.pop %v5404
    %v5406 = vmul.f32 %v5401, %v5405
    %v5407 = vpack.c.bf16 %v5406, %v5406
    %5408 = vmatprep.subr.bf16.mxu0 %v2029
    %5409 = vmatpush1.bf16.msra.mxu0 %v2028
    %5410 = vmatprep.subr.bf16.mxu0 %v2033
    %5411 = vmatpush1.bf16.msra.mxu0 %v2032
    %5412 = vmatprep.subr.bf16.mxu0 %v2037
    %5413 = vmatpush1.bf16.msra.mxu0 %v2036
    %5414 = vmatprep.subr.bf16.mxu0 %v2041
    %5415 = vmatpush1.bf16.msra.mxu0 %v2040
    %5416 = vmatprep.subr.bf16.mxu0 %v2045
    %5417 = vmatpush1.bf16.msra.mxu0 %v2044
    %5418 = vmatprep.subr.bf16.mxu0 %v2049
    %5419 = vmatpush1.bf16.msra.mxu0 %v2048
    %5420 = vmatprep.subr.bf16.mxu0 %v2053
    %5421 = vmatpush1.bf16.msra.mxu0 %v2052
    %5422 = vmatprep.subr.bf16.mxu0 %v2057
    %5423 = vmatpush1.bf16.msra.mxu0 %v2056
    %5424 = vmatprep.subr.bf16.mxu0 0
    %5425 = vmatpush1.bf16.msra.mxu0 0
    %5426 = vmatprep.subr.bf16.mxu0 0
    %5427 = vmatpush1.bf16.msra.mxu0 0
    %5428 = vmatprep.subr.bf16.mxu0 0
    %5429 = vmatpush1.bf16.msra.mxu0 0
    %5430 = vmatprep.subr.bf16.mxu0 0
    %5431 = vmatpush1.bf16.msra.mxu0 0
    %5432 = vmatprep.subr.bf16.mxu0 0
    %5433 = vmatpush1.bf16.msra.mxu0 0
    %5434 = vmatprep.subr.bf16.mxu0 0
    %5435 = vmatpush1.bf16.msra.mxu0 0
    %5436 = vmatprep.subr.bf16.mxu0 0
    %5437 = vmatpush1.bf16.msra.mxu0 0
    %5438 = vmatprep.subr.bf16.mxu0 0
    %5439 = vmatpush1.bf16.msra.mxu0 0
    %5440 = vmatprep.mubr.bf16.mxu0 0
    %5441 = vmatmul.mubr.bf16.gmra.mrb[0].mxu0 %v5407
    %v5442 = vpop.f32.mrb[0].mxu0
    %v5443 = vadd.f32 0.0, %v5442
    %v5444 = vpop.f32.mrb[0].mxu0
    %v5445 = vadd.f32 0.0, %v5444
    %v5446 = vpop.f32.mrb[0].mxu0
    %v5447 = vpop.f32.mrb[0].mxu0
    %5448 = vdwg.mxu0
    %5449 = vmatprep.subr.bf16.mxu0 %v2031
    %5450 = vmatpush1.bf16.msra.mxu0 %v2030
    %5451 = vmatprep.subr.bf16.mxu0 %v2035
    %5452 = vmatpush1.bf16.msra.mxu0 %v2034
    %5453 = vmatprep.subr.bf16.mxu0 %v2039
    %5454 = vmatpush1.bf16.msra.mxu0 %v2038
    %5455 = vmatprep.subr.bf16.mxu0 %v2043
    %5456 = vmatpush1.bf16.msra.mxu0 %v2042
    %5457 = vmatprep.subr.bf16.mxu0 %v2047
    %5458 = vmatpush1.bf16.msra.mxu0 %v2046
    %5459 = vmatprep.subr.bf16.mxu0 %v2051
    %5460 = vmatpush1.bf16.msra.mxu0 %v2050
    %5461 = vmatprep.subr.bf16.mxu0 %v2055
    %5462 = vmatpush1.bf16.msra.mxu0 %v2054
    %5463 = vmatprep.subr.bf16.mxu0 %v2059
    %5464 = vmatpush1.bf16.msra.mxu0 %v2058
    %5465 = vmatprep.subr.bf16.mxu0 0
    %5466 = vmatpush1.bf16.msra.mxu0 0
    %5467 = vmatprep.subr.bf16.mxu0 0
    %5468 = vmatpush1.bf16.msra.mxu0 0
    %5469 = vmatprep.subr.bf16.mxu0 0
    %5470 = vmatpush1.bf16.msra.mxu0 0
    %5471 = vmatprep.subr.bf16.mxu0 0
    %5472 = vmatpush1.bf16.msra.mxu0 0
    %5473 = vmatprep.subr.bf16.mxu0 0
    %5474 = vmatpush1.bf16.msra.mxu0 0
    %5475 = vmatprep.subr.bf16.mxu0 0
    %5476 = vmatpush1.bf16.msra.mxu0 0
    %5477 = vmatprep.subr.bf16.mxu0 0
    %5478 = vmatpush1.bf16.msra.mxu0 0
    %5479 = vmatprep.subr.bf16.mxu0 0
    %5480 = vmatpush1.bf16.msra.mxu0 0
    %5481 = vmatprep.mubr.bf16.mxu0 0
    %5482 = vmatmul.mubr.bf16.gmra.mrb[0].mxu0 %v5407
    %v5483 = vpop.f32.mrb[0].mxu0
    %v5484 = vadd.f32 0.0, %v5483
    %v5485 = vpop.f32.mrb[0].mxu0
    %v5486 = vadd.f32 0.0, %v5485
    %v5487 = vpop.f32.mrb[0].mxu0
    %v5488 = vpop.f32.mrb[0].mxu0
    %5489 = vdwg.mxu0
    %5490 = vmatprep.subr.bf16.mxu0 %v2880
    %5491 = vmatpush1.bf16.msra.mxu0 %v2879
    %5492 = vmatprep.subr.bf16.mxu0 %v2884
    %5493 = vmatpush1.bf16.msra.mxu0 %v2883
    %5494 = vmatprep.subr.bf16.mxu0 %v2888
    %5495 = vmatpush1.bf16.msra.mxu0 %v2887
    %5496 = vmatprep.subr.bf16.mxu0 %v2892
    %5497 = vmatpush1.bf16.msra.mxu0 %v2891
    %5498 = vmatprep.subr.bf16.mxu0 %v2896
    %5499 = vmatpush1.bf16.msra.mxu0 %v2895
    %5500 = vmatprep.subr.bf16.mxu0 %v2900
    %5501 = vmatpush1.bf16.msra.mxu0 %v2899
    %5502 = vmatprep.subr.bf16.mxu0 %v2904
    %5503 = vmatpush1.bf16.msra.mxu0 %v2903
    %5504 = vmatprep.subr.bf16.mxu0 %v2908
    %5505 = vmatpush1.bf16.msra.mxu0 %v2907
    %5506 = vmatprep.subr.bf16.mxu0 0
    %5507 = vmatpush1.bf16.msra.mxu0 0
    %5508 = vmatprep.subr.bf16.mxu0 0
    %5509 = vmatpush1.bf16.msra.mxu0 0
    %5510 = vmatprep.subr.bf16.mxu0 0
    %5511 = vmatpush1.bf16.msra.mxu0 0
    %5512 = vmatprep.subr.bf16.mxu0 0
    %5513 = vmatpush1.bf16.msra.mxu0 0
    %5514 = vmatprep.subr.bf16.mxu0 0
    %5515 = vmatpush1.bf16.msra.mxu0 0
    %5516 = vmatprep.subr.bf16.mxu0 0
    %5517 = vmatpush1.bf16.msra.mxu0 0
    %5518 = vmatprep.subr.bf16.mxu0 0
    %5519 = vmatpush1.bf16.msra.mxu0 0
    %5520 = vmatprep.subr.bf16.mxu0 0
    %5521 = vmatpush1.bf16.msra.mxu0 0
    %5522 = vmatprep.mubr.bf16.mxu0 0
    %5523 = vmatmul.mubr.bf16.gmra.mrb[0].mxu0 %v5407
    %v5524 = vpop.f32.mrb[0].mxu0
    %v5525 = vadd.f32 %v5214, %v5524
    %v5526 = vpop.f32.mrb[0].mxu0
    %v5527 = vadd.f32 %v5216, %v5526
    %v5528 = vpop.f32.mrb[0].mxu0
    %v5529 = vpop.f32.mrb[0].mxu0
    %5530 = vdwg.mxu0
    %5531 = vmatprep.subr.bf16.mxu0 %v2882
    %5532 = vmatpush1.bf16.msra.mxu0 %v2881
    %5533 = vmatprep.subr.bf16.mxu0 %v2886
    %5534 = vmatpush1.bf16.msra.mxu0 %v2885
    %5535 = vmatprep.subr.bf16.mxu0 %v2890
    %5536 = vmatpush1.bf16.msra.mxu0 %v2889
    %5537 = vmatprep.subr.bf16.mxu0 %v2894
    %5538 = vmatpush1.bf16.msra.mxu0 %v2893
    %5539 = vmatprep.subr.bf16.mxu0 %v2898
    %5540 = vmatpush1.bf16.msra.mxu0 %v2897
    %5541 = vmatprep.subr.bf16.mxu0 %v2902
    %5542 = vmatpush1.bf16.msra.mxu0 %v2901
    %5543 = vmatprep.subr.bf16.mxu0 %v2906
    %5544 = vmatpush1.bf16.msra.mxu0 %v2905
    %5545 = vmatprep.subr.bf16.mxu0 %v2910
    %5546 = vmatpush1.bf16.msra.mxu0 %v2909
    %5547 = vmatprep.subr.bf16.mxu0 0
    %5548 = vmatpush1.bf16.msra.mxu0 0
    %5549 = vmatprep.subr.bf16.mxu0 0
    %5550 = vmatpush1.bf16.msra.mxu0 0
    %5551 = vmatprep.subr.bf16.mxu0 0
    %5552 = vmatpush1.bf16.msra.mxu0 0
    %5553 = vmatprep.subr.bf16.mxu0 0
    %5554 = vmatpush1.bf16.msra.mxu0 0
    %5555 = vmatprep.subr.bf16.mxu0 0
    %5556 = vmatpush1.bf16.msra.mxu0 0
    %5557 = vmatprep.subr.bf16.mxu0 0
    %5558 = vmatpush1.bf16.msra.mxu0 0
    %5559 = vmatprep.subr.bf16.mxu0 0
    %5560 = vmatpush1.bf16.msra.mxu0 0
    %5561 = vmatprep.subr.bf16.mxu0 0
    %5562 = vmatpush1.bf16.msra.mxu0 0
    %5563 = vmatprep.mubr.bf16.mxu0 0
    %5564 = vmatmul.mubr.bf16.gmra.mrb[0].mxu0 %v5407
    %v5565 = vpop.f32.mrb[0].mxu0
    %v5566 = vadd.f32 %v5255, %v5565
    %v5567 = vpop.f32.mrb[0].mxu0
    %v5568 = vadd.f32 %v5257, %v5567
    %v5569 = vpop.f32.mrb[0].mxu0
    %v5570 = vpop.f32.mrb[0].mxu0
    %5571 = vdwg.mxu0
    %v5572 = vadd.f32 %v5525, %v3029
    %v5573 = vadd.f32 %v5527, %v3033
    %v5574 = vadd.f32 %v5566, %v3037
    %v5575 = vadd.f32 %v5568, %v3041
    %v5576 = vtanh.pop %v5572
    %v5577 = vmul.f32 %v5576, 0.5
    %v5578 = vadd.f32 %v5577, 0.5
    %v5579 = vtanh.pop %v5573
    %v5580 = vmul.f32 %v5579, 0.5
    %v5581 = vadd.f32 %v5580, 0.5
    %v5582 = vtanh.pop %v5574
    %v5583 = vtanh.pop %v5575
    %v5584 = vmul.f32 %v5583, 0.5
    %v5585 = vadd.f32 %v5584, 0.5
    %v5586 = vmul.f32 %v5581, %v5175
    %v5587 = vmul.f32 %v5578, %v5582
    %v5588 = vadd.f32 %v5586, %v5587
    %v5589 = vtanh.pop %v5588
    %v5590 = vmul.f32 %v5585, %v5589
    %v5591 = vpack.c.bf16 %v5590, %v5590
    %5592 = vmatprep.subr.bf16.mxu0 %v2272
    %5593 = vmatpush1.bf16.msra.mxu0 %v2271
    %5594 = vmatprep.subr.bf16.mxu0 %v2276
    %5595 = vmatpush1.bf16.msra.mxu0 %v2275
    %5596 = vmatprep.subr.bf16.mxu0 %v2280
    %5597 = vmatpush1.bf16.msra.mxu0 %v2279
    %5598 = vmatprep.subr.bf16.mxu0 %v2284
    %5599 = vmatpush1.bf16.msra.mxu0 %v2283
    %5600 = vmatprep.subr.bf16.mxu0 %v2288
    %5601 = vmatpush1.bf16.msra.mxu0 %v2287
    %5602 = vmatprep.subr.bf16.mxu0 %v2292
    %5603 = vmatpush1.bf16.msra.mxu0 %v2291
    %5604 = vmatprep.subr.bf16.mxu0 %v2296
    %5605 = vmatpush1.bf16.msra.mxu0 %v2295
    %5606 = vmatprep.subr.bf16.mxu0 %v2300
    %5607 = vmatpush1.bf16.msra.mxu0 %v2299
    %5608 = vmatprep.subr.bf16.mxu0 0
    %5609 = vmatpush1.bf16.msra.mxu0 0
    %5610 = vmatprep.subr.bf16.mxu0 0
    %5611 = vmatpush1.bf16.msra.mxu0 0
    %5612 = vmatprep.subr.bf16.mxu0 0
    %5613 = vmatpush1.bf16.msra.mxu0 0
    %5614 = vmatprep.subr.bf16.mxu0 0
    %5615 = vmatpush1.bf16.msra.mxu0 0
    %5616 = vmatprep.subr.bf16.mxu0 0
    %5617 = vmatpush1.bf16.msra.mxu0 0
    %5618 = vmatprep.subr.bf16.mxu0 0
    %5619 = vmatpush1.bf16.msra.mxu0 0
    %5620 = vmatprep.subr.bf16.mxu0 0
    %5621 = vmatpush1.bf16.msra.mxu0 0
    %5622 = vmatprep.subr.bf16.mxu0 0
    %5623 = vmatpush1.bf16.msra.mxu0 0
    %5624 = vmatprep.mubr.bf16.mxu0 0
    %5625 = vmatmul.mubr.bf16.gmra.mrb[0].mxu0 %v5591
    %v5626 = vpop.f32.mrb[0].mxu0
    %v5627 = vadd.f32 0.0, %v5626
    %v5628 = vpop.f32.mrb[0].mxu0
    %v5629 = vadd.f32 0.0, %v5628
    %v5630 = vpop.f32.mrb[0].mxu0
    %v5631 = vpop.f32.mrb[0].mxu0
    %5632 = vdwg.mxu0
    %5633 = vmatprep.subr.bf16.mxu0 %v2274
    %5634 = vmatpush1.bf16.msra.mxu0 %v2273
    %5635 = vmatprep.subr.bf16.mxu0 %v2278
    %5636 = vmatpush1.bf16.msra.mxu0 %v2277
    %5637 = vmatprep.subr.bf16.mxu0 %v2282
    %5638 = vmatpush1.bf16.msra.mxu0 %v2281
    %5639 = vmatprep.subr.bf16.mxu0 %v2286
    %5640 = vmatpush1.bf16.msra.mxu0 %v2285
    %5641 = vmatprep.subr.bf16.mxu0 %v2290
    %5642 = vmatpush1.bf16.msra.mxu0 %v2289
    %5643 = vmatprep.subr.bf16.mxu0 %v2294
    %5644 = vmatpush1.bf16.msra.mxu0 %v2293
    %5645 = vmatprep.subr.bf16.mxu0 %v2298
    %5646 = vmatpush1.bf16.msra.mxu0 %v2297
    %5647 = vmatprep.subr.bf16.mxu0 %v2302
    %5648 = vmatpush1.bf16.msra.mxu0 %v2301
    %5649 = vmatprep.subr.bf16.mxu0 0
    %5650 = vmatpush1.bf16.msra.mxu0 0
    %5651 = vmatprep.subr.bf16.mxu0 0
    %5652 = vmatpush1.bf16.msra.mxu0 0
    %5653 = vmatprep.subr.bf16.mxu0 0
    %5654 = vmatpush1.bf16.msra.mxu0 0
    %5655 = vmatprep.subr.bf16.mxu0 0
    %5656 = vmatpush1.bf16.msra.mxu0 0
    %5657 = vmatprep.subr.bf16.mxu0 0
    %5658 = vmatpush1.bf16.msra.mxu0 0
    %5659 = vmatprep.subr.bf16.mxu0 0
    %5660 = vmatpush1.bf16.msra.mxu0 0
    %5661 = vmatprep.subr.bf16.mxu0 0
    %5662 = vmatpush1.bf16.msra.mxu0 0
    %5663 = vmatprep.subr.bf16.mxu0 0
    %5664 = vmatpush1.bf16.msra.mxu0 0
    %5665 = vmatprep.mubr.bf16.mxu0 0
    %5666 = vmatmul.mubr.bf16.gmra.mrb[0].mxu0 %v5591
    %v5667 = vpop.f32.mrb[0].mxu0
    %v5668 = vadd.f32 0.0, %v5667
    %v5669 = vpop.f32.mrb[0].mxu0
    %v5670 = vadd.f32 0.0, %v5669
    %v5671 = vpop.f32.mrb[0].mxu0
    %v5672 = vpop.f32.mrb[0].mxu0
    %5673 = vdwg.mxu0
    %5674 = vmatprep.subr.bf16.mxu0 0
    %5675 = vmatpush1.bf16.msra.mxu0 %v3180
    %5676 = vmatprep.subr.bf16.mxu0 0
    %5677 = vmatpush1.bf16.msra.mxu0 %v3181
    %5678 = vmatprep.subr.bf16.mxu0 0
    %5679 = vmatpush1.bf16.msra.mxu0 %v3182
    %5680 = vmatprep.subr.bf16.mxu0 0
    %5681 = vmatpush1.bf16.msra.mxu0 %v3183
    %5682 = vmatprep.subr.bf16.mxu0 0
    %5683 = vmatpush1.bf16.msra.mxu0 %v3184
    %5684 = vmatprep.subr.bf16.mxu0 0
    %5685 = vmatpush1.bf16.msra.mxu0 %v3185
    %5686 = vmatprep.subr.bf16.mxu0 0
    %5687 = vmatpush1.bf16.msra.mxu0 %v3186
    %5688 = vmatprep.subr.bf16.mxu0 0
    %5689 = vmatpush1.bf16.msra.mxu0 %v3187
    %5690 = vmatprep.subr.bf16.mxu0 0
    %5691 = vmatpush1.bf16.msra.mxu0 0
    %5692 = vmatprep.subr.bf16.mxu0 0
    %5693 = vmatpush1.bf16.msra.mxu0 0
    %5694 = vmatprep.subr.bf16.mxu0 0
    %5695 = vmatpush1.bf16.msra.mxu0 0
    %5696 = vmatprep.subr.bf16.mxu0 0
    %5697 = vmatpush1.bf16.msra.mxu0 0
    %5698 = vmatprep.subr.bf16.mxu0 0
    %5699 = vmatpush1.bf16.msra.mxu0 0
    %5700 = vmatprep.subr.bf16.mxu0 0
    %5701 = vmatpush1.bf16.msra.mxu0 0
    %5702 = vmatprep.subr.bf16.mxu0 0
    %5703 = vmatpush1.bf16.msra.mxu0 0
    %5704 = vmatprep.subr.bf16.mxu0 0
    %5705 = vmatpush1.bf16.msra.mxu0 0
    %5706 = vmatprep.mubr.bf16.mxu0 0
    %5707 = vmatmul.mubr.bf16.gmra.mrb[0].mxu0 %v5591
    %v5708 = vpop.f32.mrb[0].mxu0
    %v5709 = vadd.f32 %v454, %v5708
    %v5710 = vpop.f32.mrb[0].mxu0
    %v5711 = vpop.f32.mrb[0].mxu0
    %v5712 = vpop.f32.mrb[0].mxu0
    %5713 = vdwg.mxu0
    %v5714 = vtanh.pop %v5709
    %v5715 = vmul.f32 %v5714, 0.5
    %v5716 = vadd.f32 %v5715, 0.5
    %5717 = vst [vmem:[#allocation2 + $0x7] sm:$0x1] %v5716
    %v5718 = vld [vmem:[#allocation2] sm:$0xff]
    %5719 = vst [vmem:[#allocation20] sm:$0xff] %v5718
    loop: start=0, step=1, limit=10
    $region94: #{seq2seq_forward.1} parent=1 // loop_pre_header
      _
    $region95: #{seq2seq_forward.1} parent=1 // loop_header
      %s5721 = sphi 0, %s5725
      %p5722 = scmp.ge.s32.totalorder %s5721, 10
      %v5726 = vphi %v5716, %v9039
      %v5727 = vphi %v5404, %v8727
      %v5728 = vphi %v5588, %v8911
      %v5729 = vphi %v5443, %v8766
      %v5730 = vphi %v5445, %v8768
      %v5731 = vphi %v5484, %v8807
      %v5732 = vphi %v5486, %v8809
      %v5733 = vphi %v5627, %v8950
      %v5734 = vphi %v5629, %v8952
      %v5735 = vphi %v5668, %v8991
      %v5736 = vphi %v5670, %v8993
    $region96: #{seq2seq_forward.1} parent=1 // loop_header_branch
      %5724 = sbr.rel (%p5722) target = $region100
    $region97: #{seq2seq_forward.1} parent=1 // loop_body
      %v5737 = vpack.c.bf16 %v5726, %v5726
      %5738 = vmatprep.subr.bf16.mxu0 %v2515
      %5739 = vmatpush1.bf16.msra.mxu0 %v2514
      %5740 = vmatprep.subr.bf16.mxu0 %v2519
      %5741 = vmatpush1.bf16.msra.mxu0 %v2518
      %5742 = vmatprep.subr.bf16.mxu0 %v2523
      %5743 = vmatpush1.bf16.msra.mxu0 %v2522
      %5744 = vmatprep.subr.bf16.mxu0 %v2527
      %5745 = vmatpush1.bf16.msra.mxu0 %v2526
      %5746 = vmatprep.subr.bf16.mxu0 %v2531
      %5747 = vmatpush1.bf16.msra.mxu0 %v2530
      %5748 = vmatprep.subr.bf16.mxu0 %v2535
      %5749 = vmatpush1.bf16.msra.mxu0 %v2534
      %5750 = vmatprep.subr.bf16.mxu0 %v2539
      %5751 = vmatpush1.bf16.msra.mxu0 %v2538
      %5752 = vmatprep.subr.bf16.mxu0 %v2543
      %5753 = vmatpush1.bf16.msra.mxu0 %v2542
      %5754 = vmatprep.subr.bf16.mxu0 0
      %5755 = vmatpush1.bf16.msra.mxu0 0
      %5756 = vmatprep.subr.bf16.mxu0 0
      %5757 = vmatpush1.bf16.msra.mxu0 0
      %5758 = vmatprep.subr.bf16.mxu0 0
      %5759 = vmatpush1.bf16.msra.mxu0 0
      %5760 = vmatprep.subr.bf16.mxu0 0
      %5761 = vmatpush1.bf16.msra.mxu0 0
      %5762 = vmatprep.subr.bf16.mxu0 0
      %5763 = vmatpush1.bf16.msra.mxu0 0
      %5764 = vmatprep.subr.bf16.mxu0 0
      %5765 = vmatpush1.bf16.msra.mxu0 0
      %5766 = vmatprep.subr.bf16.mxu0 0
      %5767 = vmatpush1.bf16.msra.mxu0 0
      %5768 = vmatprep.subr.bf16.mxu0 0
      %5769 = vmatpush1.bf16.msra.mxu0 0
      %5770 = vmatprep.mubr.bf16.mxu0 0
      %5771 = vmatmul.mubr.bf16.gmra.mrb[0].mxu0 %v5737
      %v5772 = vpop.f32.mrb[0].mxu0
      %v5773 = vadd.f32 %v5729, %v5772
      %v5774 = vpop.f32.mrb[0].mxu0
      %v5775 = vadd.f32 %v5730, %v5774
      %v5776 = vpop.f32.mrb[0].mxu0
      %v5777 = vpop.f32.mrb[0].mxu0
      %5778 = vdwg.mxu0
      %5779 = vmatprep.subr.bf16.mxu0 %v2517
      %5780 = vmatpush1.bf16.msra.mxu0 %v2516
      %5781 = vmatprep.subr.bf16.mxu0 %v2521
      %5782 = vmatpush1.bf16.msra.mxu0 %v2520
      %5783 = vmatprep.subr.bf16.mxu0 %v2525
      %5784 = vmatpush1.bf16.msra.mxu0 %v2524
      %5785 = vmatprep.subr.bf16.mxu0 %v2529
      %5786 = vmatpush1.bf16.msra.mxu0 %v2528
      %5787 = vmatprep.subr.bf16.mxu0 %v2533
      %5788 = vmatpush1.bf16.msra.mxu0 %v2532
      %5789 = vmatprep.subr.bf16.mxu0 %v2537
      %5790 = vmatpush1.bf16.msra.mxu0 %v2536
      %5791 = vmatprep.subr.bf16.mxu0 %v2541
      %5792 = vmatpush1.bf16.msra.mxu0 %v2540
      %5793 = vmatprep.subr.bf16.mxu0 %v2545
      %5794 = vmatpush1.bf16.msra.mxu0 %v2544
      %5795 = vmatprep.subr.bf16.mxu0 0
      %5796 = vmatpush1.bf16.msra.mxu0 0
      %5797 = vmatprep.subr.bf16.mxu0 0
      %5798 = vmatpush1.bf16.msra.mxu0 0
      %5799 = vmatprep.subr.bf16.mxu0 0
      %5800 = vmatpush1.bf16.msra.mxu0 0
      %5801 = vmatprep.subr.bf16.mxu0 0
      %5802 = vmatpush1.bf16.msra.mxu0 0
      %5803 = vmatprep.subr.bf16.mxu0 0
      %5804 = vmatpush1.bf16.msra.mxu0 0
      %5805 = vmatprep.subr.bf16.mxu0 0
      %5806 = vmatpush1.bf16.msra.mxu0 0
      %5807 = vmatprep.subr.bf16.mxu0 0
      %5808 = vmatpush1.bf16.msra.mxu0 0
      %5809 = vmatprep.subr.bf16.mxu0 0
      %5810 = vmatpush1.bf16.msra.mxu0 0
      %5811 = vmatprep.mubr.bf16.mxu0 0
      %5812 = vmatmul.mubr.bf16.gmra.mrb[0].mxu0 %v5737
      %v5813 = vpop.f32.mrb[0].mxu0
      %v5814 = vadd.f32 %v5731, %v5813
      %v5815 = vpop.f32.mrb[0].mxu0
      %v5816 = vadd.f32 %v5732, %v5815
      %v5817 = vpop.f32.mrb[0].mxu0
      %v5818 = vpop.f32.mrb[0].mxu0
      %5819 = vdwg.mxu0
      %v5820 = vadd.f32 %v5773, %v2664
      %v5821 = vadd.f32 %v5775, %v2668
      %v5822 = vadd.f32 %v5814, %v2672
      %v5823 = vadd.f32 %v5816, %v2676
      %v5824 = vtanh.pop %v5820
      %v5825 = vmul.f32 %v5824, 0.5
      %v5826 = vadd.f32 %v5825, 0.5
      %v5827 = vtanh.pop %v5821
      %v5828 = vmul.f32 %v5827, 0.5
      %v5829 = vadd.f32 %v5828, 0.5
      %v5830 = vtanh.pop %v5822
      %v5831 = vtanh.pop %v5823
      %v5832 = vmul.f32 %v5831, 0.5
      %v5833 = vadd.f32 %v5832, 0.5
      %v5834 = vmul.f32 %v5829, %v5727
      %v5835 = vmul.f32 %v5826, %v5830
      %v5836 = vadd.f32 %v5834, %v5835
      %v5837 = vtanh.pop %v5836
      %v5838 = vmul.f32 %v5833, %v5837
      %v5839 = vpack.c.bf16 %v5838, %v5838
      %5840 = vmatprep.subr.bf16.mxu0 %v2029
      %5841 = vmatpush1.bf16.msra.mxu0 %v2028
      %5842 = vmatprep.subr.bf16.mxu0 %v2033
      %5843 = vmatpush1.bf16.msra.mxu0 %v2032
      %5844 = vmatprep.subr.bf16.mxu0 %v2037
      %5845 = vmatpush1.bf16.msra.mxu0 %v2036
      %5846 = vmatprep.subr.bf16.mxu0 %v2041
      %5847 = vmatpush1.bf16.msra.mxu0 %v2040
      %5848 = vmatprep.subr.bf16.mxu0 %v2045
      %5849 = vmatpush1.bf16.msra.mxu0 %v2044
      %5850 = vmatprep.subr.bf16.mxu0 %v2049
      %5851 = vmatpush1.bf16.msra.mxu0 %v2048
      %5852 = vmatprep.subr.bf16.mxu0 %v2053
      %5853 = vmatpush1.bf16.msra.mxu0 %v2052
      %5854 = vmatprep.subr.bf16.mxu0 %v2057
      %5855 = vmatpush1.bf16.msra.mxu0 %v2056
      %5856 = vmatprep.subr.bf16.mxu0 0
      %5857 = vmatpush1.bf16.msra.mxu0 0
      %5858 = vmatprep.subr.bf16.mxu0 0
      %5859 = vmatpush1.bf16.msra.mxu0 0
      %5860 = vmatprep.subr.bf16.mxu0 0
      %5861 = vmatpush1.bf16.msra.mxu0 0
      %5862 = vmatprep.subr.bf16.mxu0 0
      %5863 = vmatpush1.bf16.msra.mxu0 0
      %5864 = vmatprep.subr.bf16.mxu0 0
      %5865 = vmatpush1.bf16.msra.mxu0 0
      %5866 = vmatprep.subr.bf16.mxu0 0
      %5867 = vmatpush1.bf16.msra.mxu0 0
      %5868 = vmatprep.subr.bf16.mxu0 0
      %5869 = vmatpush1.bf16.msra.mxu0 0
      %5870 = vmatprep.subr.bf16.mxu0 0
      %5871 = vmatpush1.bf16.msra.mxu0 0
      %5872 = vmatprep.mubr.bf16.mxu0 0
      %5873 = vmatmul.mubr.bf16.gmra.mrb[0].mxu0 %v5839
      %v5874 = vpop.f32.mrb[0].mxu0
      %v5875 = vadd.f32 0.0, %v5874
      %v5876 = vpop.f32.mrb[0].mxu0
      %v5877 = vadd.f32 0.0, %v5876
      %v5878 = vpop.f32.mrb[0].mxu0
      %v5879 = vpop.f32.mrb[0].mxu0
      %5880 = vdwg.mxu0
      %5881 = vmatprep.subr.bf16.mxu0 %v2031
      %5882 = vmatpush1.bf16.msra.mxu0 %v2030
      %5883 = vmatprep.subr.bf16.mxu0 %v2035
      %5884 = vmatpush1.bf16.msra.mxu0 %v2034
      %5885 = vmatprep.subr.bf16.mxu0 %v2039
      %5886 = vmatpush1.bf16.msra.mxu0 %v2038
      %5887 = vmatprep.subr.bf16.mxu0 %v2043
      %5888 = vmatpush1.bf16.msra.mxu0 %v2042
      %5889 = vmatprep.subr.bf16.mxu0 %v2047
      %5890 = vmatpush1.bf16.msra.mxu0 %v2046
      %5891 = vmatprep.subr.bf16.mxu0 %v2051
      %5892 = vmatpush1.bf16.msra.mxu0 %v2050
      %5893 = vmatprep.subr.bf16.mxu0 %v2055
      %5894 = vmatpush1.bf16.msra.mxu0 %v2054
      %5895 = vmatprep.subr.bf16.mxu0 %v2059
      %5896 = vmatpush1.bf16.msra.mxu0 %v2058
      %5897 = vmatprep.subr.bf16.mxu0 0
      %5898 = vmatpush1.bf16.msra.mxu0 0
      %5899 = vmatprep.subr.bf16.mxu0 0
      %5900 = vmatpush1.bf16.msra.mxu0 0
      %5901 = vmatprep.subr.bf16.mxu0 0
      %5902 = vmatpush1.bf16.msra.mxu0 0
      %5903 = vmatprep.subr.bf16.mxu0 0
      %5904 = vmatpush1.bf16.msra.mxu0 0
      %5905 = vmatprep.subr.bf16.mxu0 0
      %5906 = vmatpush1.bf16.msra.mxu0 0
      %5907 = vmatprep.subr.bf16.mxu0 0
      %5908 = vmatpush1.bf16.msra.mxu0 0
      %5909 = vmatprep.subr.bf16.mxu0 0
      %5910 = vmatpush1.bf16.msra.mxu0 0
      %5911 = vmatprep.subr.bf16.mxu0 0
      %5912 = vmatpush1.bf16.msra.mxu0 0
      %5913 = vmatprep.mubr.bf16.mxu0 0
      %5914 = vmatmul.mubr.bf16.gmra.mrb[0].mxu0 %v5839
      %v5915 = vpop.f32.mrb[0].mxu0
      %v5916 = vadd.f32 0.0, %v5915
      %v5917 = vpop.f32.mrb[0].mxu0
      %v5918 = vadd.f32 0.0, %v5917
      %v5919 = vpop.f32.mrb[0].mxu0
      %v5920 = vpop.f32.mrb[0].mxu0
      %5921 = vdwg.mxu0
      %5922 = vmatprep.subr.bf16.mxu0 %v2880
      %5923 = vmatpush1.bf16.msra.mxu0 %v2879
      %5924 = vmatprep.subr.bf16.mxu0 %v2884
      %5925 = vmatpush1.bf16.msra.mxu0 %v2883
      %5926 = vmatprep.subr.bf16.mxu0 %v2888
      %5927 = vmatpush1.bf16.msra.mxu0 %v2887
      %5928 = vmatprep.subr.bf16.mxu0 %v2892
      %5929 = vmatpush1.bf16.msra.mxu0 %v2891
      %5930 = vmatprep.subr.bf16.mxu0 %v2896
      %5931 = vmatpush1.bf16.msra.mxu0 %v2895
      %5932 = vmatprep.subr.bf16.mxu0 %v2900
      %5933 = vmatpush1.bf16.msra.mxu0 %v2899
      %5934 = vmatprep.subr.bf16.mxu0 %v2904
      %5935 = vmatpush1.bf16.msra.mxu0 %v2903
      %5936 = vmatprep.subr.bf16.mxu0 %v2908
      %5937 = vmatpush1.bf16.msra.mxu0 %v2907
      %5938 = vmatprep.subr.bf16.mxu0 0
      %5939 = vmatpush1.bf16.msra.mxu0 0
      %5940 = vmatprep.subr.bf16.mxu0 0
      %5941 = vmatpush1.bf16.msra.mxu0 0
      %5942 = vmatprep.subr.bf16.mxu0 0
      %5943 = vmatpush1.bf16.msra.mxu0 0
      %5944 = vmatprep.subr.bf16.mxu0 0
      %5945 = vmatpush1.bf16.msra.mxu0 0
      %5946 = vmatprep.subr.bf16.mxu0 0
      %5947 = vmatpush1.bf16.msra.mxu0 0
      %5948 = vmatprep.subr.bf16.mxu0 0
      %5949 = vmatpush1.bf16.msra.mxu0 0
      %5950 = vmatprep.subr.bf16.mxu0 0
      %5951 = vmatpush1.bf16.msra.mxu0 0
      %5952 = vmatprep.subr.bf16.mxu0 0
      %5953 = vmatpush1.bf16.msra.mxu0 0
      %5954 = vmatprep.mubr.bf16.mxu0 0
      %5955 = vmatmul.mubr.bf16.gmra.mrb[0].mxu0 %v5839
      %v5956 = vpop.f32.mrb[0].mxu0
      %v5957 = vadd.f32 %v5733, %v5956
      %v5958 = vpop.f32.mrb[0].mxu0
      %v5959 = vadd.f32 %v5734, %v5958
      %v5960 = vpop.f32.mrb[0].mxu0
      %v5961 = vpop.f32.mrb[0].mxu0
      %5962 = vdwg.mxu0
      %5963 = vmatprep.subr.bf16.mxu0 %v2882
      %5964 = vmatpush1.bf16.msra.mxu0 %v2881
      %5965 = vmatprep.subr.bf16.mxu0 %v2886
      %5966 = vmatpush1.bf16.msra.mxu0 %v2885
      %5967 = vmatprep.subr.bf16.mxu0 %v2890
      %5968 = vmatpush1.bf16.msra.mxu0 %v2889
      %5969 = vmatprep.subr.bf16.mxu0 %v2894
      %5970 = vmatpush1.bf16.msra.mxu0 %v2893
      %5971 = vmatprep.subr.bf16.mxu0 %v2898
      %5972 = vmatpush1.bf16.msra.mxu0 %v2897
      %5973 = vmatprep.subr.bf16.mxu0 %v2902
      %5974 = vmatpush1.bf16.msra.mxu0 %v2901
      %5975 = vmatprep.subr.bf16.mxu0 %v2906
      %5976 = vmatpush1.bf16.msra.mxu0 %v2905
      %5977 = vmatprep.subr.bf16.mxu0 %v2910
      %5978 = vmatpush1.bf16.msra.mxu0 %v2909
      %5979 = vmatprep.subr.bf16.mxu0 0
      %5980 = vmatpush1.bf16.msra.mxu0 0
      %5981 = vmatprep.subr.bf16.mxu0 0
      %5982 = vmatpush1.bf16.msra.mxu0 0
      %5983 = vmatprep.subr.bf16.mxu0 0
      %5984 = vmatpush1.bf16.msra.mxu0 0
      %5985 = vmatprep.subr.bf16.mxu0 0
      %5986 = vmatpush1.bf16.msra.mxu0 0
      %5987 = vmatprep.subr.bf16.mxu0 0
      %5988 = vmatpush1.bf16.msra.mxu0 0
      %5989 = vmatprep.subr.bf16.mxu0 0
      %5990 = vmatpush1.bf16.msra.mxu0 0
      %5991 = vmatprep.subr.bf16.mxu0 0
      %5992 = vmatpush1.bf16.msra.mxu0 0
      %5993 = vmatprep.subr.bf16.mxu0 0
      %5994 = vmatpush1.bf16.msra.mxu0 0
      %5995 = vmatprep.mubr.bf16.mxu0 0
      %5996 = vmatmul.mubr.bf16.gmra.mrb[0].mxu0 %v5839
      %v5997 = vpop.f32.mrb[0].mxu0
      %v5998 = vadd.f32 %v5735, %v5997
      %v5999 = vpop.f32.mrb[0].mxu0
      %v6000 = vadd.f32 %v5736, %v5999
      %v6001 = vpop.f32.mrb[0].mxu0
      %v6002 = vpop.f32.mrb[0].mxu0
      %6003 = vdwg.mxu0
      %v6004 = vadd.f32 %v5957, %v3029
      %v6005 = vadd.f32 %v5959, %v3033
      %v6006 = vadd.f32 %v5998, %v3037
      %v6007 = vadd.f32 %v6000, %v3041
      %v6008 = vtanh.pop %v6004
      %v6009 = vmul.f32 %v6008, 0.5
      %v6010 = vadd.f32 %v6009, 0.5
      %v6011 = vtanh.pop %v6005
      %v6012 = vmul.f32 %v6011, 0.5
      %v6013 = vadd.f32 %v6012, 0.5
      %v6014 = vtanh.pop %v6006
      %v6015 = vtanh.pop %v6007
      %v6016 = vmul.f32 %v6015, 0.5
      %v6017 = vadd.f32 %v6016, 0.5
      %v6018 = vmul.f32 %v6013, %v5728
      %v6019 = vmul.f32 %v6010, %v6014
      %v6020 = vadd.f32 %v6018, %v6019
      %v6021 = vtanh.pop %v6020
      %v6022 = vmul.f32 %v6017, %v6021
      %v6023 = vpack.c.bf16 %v6022, %v6022
      %6024 = vmatprep.subr.bf16.mxu0 %v2272
      %6025 = vmatpush1.bf16.msra.mxu0 %v2271
      %6026 = vmatprep.subr.bf16.mxu0 %v2276
      %6027 = vmatpush1.bf16.msra.mxu0 %v2275
      %6028 = vmatprep.subr.bf16.mxu0 %v2280
      %6029 = vmatpush1.bf16.msra.mxu0 %v2279
      %6030 = vmatprep.subr.bf16.mxu0 %v2284
      %6031 = vmatpush1.bf16.msra.mxu0 %v2283
      %6032 = vmatprep.subr.bf16.mxu0 %v2288
      %6033 = vmatpush1.bf16.msra.mxu0 %v2287
      %6034 = vmatprep.subr.bf16.mxu0 %v2292
      %6035 = vmatpush1.bf16.msra.mxu0 %v2291
      %6036 = vmatprep.subr.bf16.mxu0 %v2296
      %6037 = vmatpush1.bf16.msra.mxu0 %v2295
      %6038 = vmatprep.subr.bf16.mxu0 %v2300
      %6039 = vmatpush1.bf16.msra.mxu0 %v2299
      %6040 = vmatprep.subr.bf16.mxu0 0
      %6041 = vmatpush1.bf16.msra.mxu0 0
      %6042 = vmatprep.subr.bf16.mxu0 0
      %6043 = vmatpush1.bf16.msra.mxu0 0
      %6044 = vmatprep.subr.bf16.mxu0 0
      %6045 = vmatpush1.bf16.msra.mxu0 0
      %6046 = vmatprep.subr.bf16.mxu0 0
      %6047 = vmatpush1.bf16.msra.mxu0 0
      %6048 = vmatprep.subr.bf16.mxu0 0
      %6049 = vmatpush1.bf16.msra.mxu0 0
      %6050 = vmatprep.subr.bf16.mxu0 0
      %6051 = vmatpush1.bf16.msra.mxu0 0
      %6052 = vmatprep.subr.bf16.mxu0 0
      %6053 = vmatpush1.bf16.msra.mxu0 0
      %6054 = vmatprep.subr.bf16.mxu0 0
      %6055 = vmatpush1.bf16.msra.mxu0 0
      %6056 = vmatprep.mubr.bf16.mxu0 0
      %6057 = vmatmul.mubr.bf16.gmra.mrb[0].mxu0 %v6023
      %v6058 = vpop.f32.mrb[0].mxu0
      %v6059 = vadd.f32 0.0, %v6058
      %v6060 = vpop.f32.mrb[0].mxu0
      %v6061 = vadd.f32 0.0, %v6060
      %v6062 = vpop.f32.mrb[0].mxu0
      %v6063 = vpop.f32.mrb[0].mxu0
      %6064 = vdwg.mxu0
      %6065 = vmatprep.subr.bf16.mxu0 %v2274
      %6066 = vmatpush1.bf16.msra.mxu0 %v2273
      %6067 = vmatprep.subr.bf16.mxu0 %v2278
      %6068 = vmatpush1.bf16.msra.mxu0 %v2277
      %6069 = vmatprep.subr.bf16.mxu0 %v2282
      %6070 = vmatpush1.bf16.msra.mxu0 %v2281
      %6071 = vmatprep.subr.bf16.mxu0 %v2286
      %6072 = vmatpush1.bf16.msra.mxu0 %v2285
      %6073 = vmatprep.subr.bf16.mxu0 %v2290
      %6074 = vmatpush1.bf16.msra.mxu0 %v2289
      %6075 = vmatprep.subr.bf16.mxu0 %v2294
      %6076 = vmatpush1.bf16.msra.mxu0 %v2293
      %6077 = vmatprep.subr.bf16.mxu0 %v2298
      %6078 = vmatpush1.bf16.msra.mxu0 %v2297
      %6079 = vmatprep.subr.bf16.mxu0 %v2302
      %6080 = vmatpush1.bf16.msra.mxu0 %v2301
      %6081 = vmatprep.subr.bf16.mxu0 0
      %6082 = vmatpush1.bf16.msra.mxu0 0
      %6083 = vmatprep.subr.bf16.mxu0 0
      %6084 = vmatpush1.bf16.msra.mxu0 0
      %6085 = vmatprep.subr.bf16.mxu0 0
      %6086 = vmatpush1.bf16.msra.mxu0 0
      %6087 = vmatprep.subr.bf16.mxu0 0
      %6088 = vmatpush1.bf16.msra.mxu0 0
      %6089 = vmatprep.subr.bf16.mxu0 0
      %6090 = vmatpush1.bf16.msra.mxu0 0
      %6091 = vmatprep.subr.bf16.mxu0 0
      %6092 = vmatpush1.bf16.msra.mxu0 0
      %6093 = vmatprep.subr.bf16.mxu0 0
      %6094 = vmatpush1.bf16.msra.mxu0 0
      %6095 = vmatprep.subr.bf16.mxu0 0
      %6096 = vmatpush1.bf16.msra.mxu0 0
      %6097 = vmatprep.mubr.bf16.mxu0 0
      %6098 = vmatmul.mubr.bf16.gmra.mrb[0].mxu0 %v6023
      %v6099 = vpop.f32.mrb[0].mxu0
      %v6100 = vadd.f32 0.0, %v6099
      %v6101 = vpop.f32.mrb[0].mxu0
      %v6102 = vadd.f32 0.0, %v6101
      %v6103 = vpop.f32.mrb[0].mxu0
      %v6104 = vpop.f32.mrb[0].mxu0
      %6105 = vdwg.mxu0
      %6106 = vmatprep.subr.bf16.mxu0 0
      %6107 = vmatpush1.bf16.msra.mxu0 %v3180
      %6108 = vmatprep.subr.bf16.mxu0 0
      %6109 = vmatpush1.bf16.msra.mxu0 %v3181
      %6110 = vmatprep.subr.bf16.mxu0 0
      %6111 = vmatpush1.bf16.msra.mxu0 %v3182
      %6112 = vmatprep.subr.bf16.mxu0 0
      %6113 = vmatpush1.bf16.msra.mxu0 %v3183
      %6114 = vmatprep.subr.bf16.mxu0 0
      %6115 = vmatpush1.bf16.msra.mxu0 %v3184
      %6116 = vmatprep.subr.bf16.mxu0 0
      %6117 = vmatpush1.bf16.msra.mxu0 %v3185
      %6118 = vmatprep.subr.bf16.mxu0 0
      %6119 = vmatpush1.bf16.msra.mxu0 %v3186
      %6120 = vmatprep.subr.bf16.mxu0 0
      %6121 = vmatpush1.bf16.msra.mxu0 %v3187
      %6122 = vmatprep.subr.bf16.mxu0 0
      %6123 = vmatpush1.bf16.msra.mxu0 0
      %6124 = vmatprep.subr.bf16.mxu0 0
      %6125 = vmatpush1.bf16.msra.mxu0 0
      %6126 = vmatprep.subr.bf16.mxu0 0
      %6127 = vmatpush1.bf16.msra.mxu0 0
      %6128 = vmatprep.subr.bf16.mxu0 0
      %6129 = vmatpush1.bf16.msra.mxu0 0
      %6130 = vmatprep.subr.bf16.mxu0 0
      %6131 = vmatpush1.bf16.msra.mxu0 0
      %6132 = vmatprep.subr.bf16.mxu0 0
      %6133 = vmatpush1.bf16.msra.mxu0 0
      %6134 = vmatprep.subr.bf16.mxu0 0
      %6135 = vmatpush1.bf16.msra.mxu0 0
      %6136 = vmatprep.subr.bf16.mxu0 0
      %6137 = vmatpush1.bf16.msra.mxu0 0
      %6138 = vmatprep.mubr.bf16.mxu0 0
      %6139 = vmatmul.mubr.bf16.gmra.mrb[0].mxu0 %v6023
      %v6140 = vpop.f32.mrb[0].mxu0
      %v6141 = vadd.f32 %v454, %v6140
      %v6142 = vpop.f32.mrb[0].mxu0
      %v6143 = vpop.f32.mrb[0].mxu0
      %v6144 = vpop.f32.mrb[0].mxu0
      %6145 = vdwg.mxu0
      %v6146 = vtanh.pop %v6141
      %v6147 = vmul.f32 %v6146, 0.5
      %v6148 = vadd.f32 %v6147, 0.5
      %6149 = vst [vmem:[#allocation2] sm:$0x1] %v6148
      %v6150 = vpack.c.bf16 %v6148, %v6148
      %6151 = vmatprep.subr.bf16.mxu0 %v2515
      %6152 = vmatpush1.bf16.msra.mxu0 %v2514
      %6153 = vmatprep.subr.bf16.mxu0 %v2519
      %6154 = vmatpush1.bf16.msra.mxu0 %v2518
      %6155 = vmatprep.subr.bf16.mxu0 %v2523
      %6156 = vmatpush1.bf16.msra.mxu0 %v2522
      %6157 = vmatprep.subr.bf16.mxu0 %v2527
      %6158 = vmatpush1.bf16.msra.mxu0 %v2526
      %6159 = vmatprep.subr.bf16.mxu0 %v2531
      %6160 = vmatpush1.bf16.msra.mxu0 %v2530
      %6161 = vmatprep.subr.bf16.mxu0 %v2535
      %6162 = vmatpush1.bf16.msra.mxu0 %v2534
      %6163 = vmatprep.subr.bf16.mxu0 %v2539
      %6164 = vmatpush1.bf16.msra.mxu0 %v2538
      %6165 = vmatprep.subr.bf16.mxu0 %v2543
      %6166 = vmatpush1.bf16.msra.mxu0 %v2542
      %6167 = vmatprep.subr.bf16.mxu0 0
      %6168 = vmatpush1.bf16.msra.mxu0 0
      %6169 = vmatprep.subr.bf16.mxu0 0
      %6170 = vmatpush1.bf16.msra.mxu0 0
      %6171 = vmatprep.subr.bf16.mxu0 0
      %6172 = vmatpush1.bf16.msra.mxu0 0
      %6173 = vmatprep.subr.bf16.mxu0 0
      %6174 = vmatpush1.bf16.msra.mxu0 0
      %6175 = vmatprep.subr.bf16.mxu0 0
      %6176 = vmatpush1.bf16.msra.mxu0 0
      %6177 = vmatprep.subr.bf16.mxu0 0
      %6178 = vmatpush1.bf16.msra.mxu0 0
      %6179 = vmatprep.subr.bf16.mxu0 0
      %6180 = vmatpush1.bf16.msra.mxu0 0
      %6181 = vmatprep.subr.bf16.mxu0 0
      %6182 = vmatpush1.bf16.msra.mxu0 0
      %6183 = vmatprep.mubr.bf16.mxu0 0
      %6184 = vmatmul.mubr.bf16.gmra.mrb[0].mxu0 %v6150
      %v6185 = vpop.f32.mrb[0].mxu0
      %v6186 = vadd.f32 %v5875, %v6185
      %v6187 = vpop.f32.mrb[0].mxu0
      %v6188 = vadd.f32 %v5877, %v6187
      %v6189 = vpop.f32.mrb[0].mxu0
      %v6190 = vpop.f32.mrb[0].mxu0
      %6191 = vdwg.mxu0
      %6192 = vmatprep.subr.bf16.mxu0 %v2517
      %6193 = vmatpush1.bf16.msra.mxu0 %v2516
      %6194 = vmatprep.subr.bf16.mxu0 %v2521
      %6195 = vmatpush1.bf16.msra.mxu0 %v2520
      %6196 = vmatprep.subr.bf16.mxu0 %v2525
      %6197 = vmatpush1.bf16.msra.mxu0 %v2524
      %6198 = vmatprep.subr.bf16.mxu0 %v2529
      %6199 = vmatpush1.bf16.msra.mxu0 %v2528
      %6200 = vmatprep.subr.bf16.mxu0 %v2533
      %6201 = vmatpush1.bf16.msra.mxu0 %v2532
      %6202 = vmatprep.subr.bf16.mxu0 %v2537
      %6203 = vmatpush1.bf16.msra.mxu0 %v2536
      %6204 = vmatprep.subr.bf16.mxu0 %v2541
      %6205 = vmatpush1.bf16.msra.mxu0 %v2540
      %6206 = vmatprep.subr.bf16.mxu0 %v2545
      %6207 = vmatpush1.bf16.msra.mxu0 %v2544
      %6208 = vmatprep.subr.bf16.mxu0 0
      %6209 = vmatpush1.bf16.msra.mxu0 0
      %6210 = vmatprep.subr.bf16.mxu0 0
      %6211 = vmatpush1.bf16.msra.mxu0 0
      %6212 = vmatprep.subr.bf16.mxu0 0
      %6213 = vmatpush1.bf16.msra.mxu0 0
      %6214 = vmatprep.subr.bf16.mxu0 0
      %6215 = vmatpush1.bf16.msra.mxu0 0
      %6216 = vmatprep.subr.bf16.mxu0 0
      %6217 = vmatpush1.bf16.msra.mxu0 0
      %6218 = vmatprep.subr.bf16.mxu0 0
      %6219 = vmatpush1.bf16.msra.mxu0 0
      %6220 = vmatprep.subr.bf16.mxu0 0
      %6221 = vmatpush1.bf16.msra.mxu0 0
      %6222 = vmatprep.subr.bf16.mxu0 0
      %6223 = vmatpush1.bf16.msra.mxu0 0
      %6224 = vmatprep.mubr.bf16.mxu0 0
      %6225 = vmatmul.mubr.bf16.gmra.mrb[0].mxu0 %v6150
      %v6226 = vpop.f32.mrb[0].mxu0
      %v6227 = vadd.f32 %v5916, %v6226
      %v6228 = vpop.f32.mrb[0].mxu0
      %v6229 = vadd.f32 %v5918, %v6228
      %v6230 = vpop.f32.mrb[0].mxu0
      %v6231 = vpop.f32.mrb[0].mxu0
      %6232 = vdwg.mxu0
      %v6233 = vadd.f32 %v6186, %v2664
      %v6234 = vadd.f32 %v6188, %v2668
      %v6235 = vadd.f32 %v6227, %v2672
      %v6236 = vadd.f32 %v6229, %v2676
      %v6237 = vtanh.pop %v6233
      %v6238 = vmul.f32 %v6237, 0.5
      %v6239 = vadd.f32 %v6238, 0.5
      %v6240 = vtanh.pop %v6234
      %v6241 = vmul.f32 %v6240, 0.5
      %v6242 = vadd.f32 %v6241, 0.5
      %v6243 = vtanh.pop %v6235
      %v6244 = vtanh.pop %v6236
      %v6245 = vmul.f32 %v6244, 0.5
      %v6246 = vadd.f32 %v6245, 0.5
      %v6247 = vmul.f32 %v6242, %v5836
      %v6248 = vmul.f32 %v6239, %v6243
      %v6249 = vadd.f32 %v6247, %v6248
      %v6250 = vtanh.pop %v6249
      %v6251 = vmul.f32 %v6246, %v6250
      %v6252 = vpack.c.bf16 %v6251, %v6251
      %6253 = vmatprep.subr.bf16.mxu0 %v2029
      %6254 = vmatpush1.bf16.msra.mxu0 %v2028
      %6255 = vmatprep.subr.bf16.mxu0 %v2033
      %6256 = vmatpush1.bf16.msra.mxu0 %v2032
      %6257 = vmatprep.subr.bf16.mxu0 %v2037
      %6258 = vmatpush1.bf16.msra.mxu0 %v2036
      %6259 = vmatprep.subr.bf16.mxu0 %v2041
      %6260 = vmatpush1.bf16.msra.mxu0 %v2040
      %6261 = vmatprep.subr.bf16.mxu0 %v2045
      %6262 = vmatpush1.bf16.msra.mxu0 %v2044
      %6263 = vmatprep.subr.bf16.mxu0 %v2049
      %6264 = vmatpush1.bf16.msra.mxu0 %v2048
      %6265 = vmatprep.subr.bf16.mxu0 %v2053
      %6266 = vmatpush1.bf16.msra.mxu0 %v2052
      %6267 = vmatprep.subr.bf16.mxu0 %v2057
      %6268 = vmatpush1.bf16.msra.mxu0 %v2056
      %6269 = vmatprep.subr.bf16.mxu0 0
      %6270 = vmatpush1.bf16.msra.mxu0 0
      %6271 = vmatprep.subr.bf16.mxu0 0
      %6272 = vmatpush1.bf16.msra.mxu0 0
      %6273 = vmatprep.subr.bf16.mxu0 0
      %6274 = vmatpush1.bf16.msra.mxu0 0
      %6275 = vmatprep.subr.bf16.mxu0 0
      %6276 = vmatpush1.bf16.msra.mxu0 0
      %6277 = vmatprep.subr.bf16.mxu0 0
      %6278 = vmatpush1.bf16.msra.mxu0 0
      %6279 = vmatprep.subr.bf16.mxu0 0
      %6280 = vmatpush1.bf16.msra.mxu0 0
      %6281 = vmatprep.subr.bf16.mxu0 0
      %6282 = vmatpush1.bf16.msra.mxu0 0
      %6283 = vmatprep.subr.bf16.mxu0 0
      %6284 = vmatpush1.bf16.msra.mxu0 0
      %6285 = vmatprep.mubr.bf16.mxu0 0
      %6286 = vmatmul.mubr.bf16.gmra.mrb[0].mxu0 %v6252
      %v6287 = vpop.f32.mrb[0].mxu0
      %v6288 = vadd.f32 0.0, %v6287
      %v6289 = vpop.f32.mrb[0].mxu0
      %v6290 = vadd.f32 0.0, %v6289
      %v6291 = vpop.f32.mrb[0].mxu0
      %v6292 = vpop.f32.mrb[0].mxu0
      %6293 = vdwg.mxu0
      %6294 = vmatprep.subr.bf16.mxu0 %v2031
      %6295 = vmatpush1.bf16.msra.mxu0 %v2030
      %6296 = vmatprep.subr.bf16.mxu0 %v2035
      %6297 = vmatpush1.bf16.msra.mxu0 %v2034
      %6298 = vmatprep.subr.bf16.mxu0 %v2039
      %6299 = vmatpush1.bf16.msra.mxu0 %v2038
      %6300 = vmatprep.subr.bf16.mxu0 %v2043
      %6301 = vmatpush1.bf16.msra.mxu0 %v2042
      %6302 = vmatprep.subr.bf16.mxu0 %v2047
      %6303 = vmatpush1.bf16.msra.mxu0 %v2046
      %6304 = vmatprep.subr.bf16.mxu0 %v2051
      %6305 = vmatpush1.bf16.msra.mxu0 %v2050
      %6306 = vmatprep.subr.bf16.mxu0 %v2055
      %6307 = vmatpush1.bf16.msra.mxu0 %v2054
      %6308 = vmatprep.subr.bf16.mxu0 %v2059
      %6309 = vmatpush1.bf16.msra.mxu0 %v2058
      %6310 = vmatprep.subr.bf16.mxu0 0
      %6311 = vmatpush1.bf16.msra.mxu0 0
      %6312 = vmatprep.subr.bf16.mxu0 0
      %6313 = vmatpush1.bf16.msra.mxu0 0
      %6314 = vmatprep.subr.bf16.mxu0 0
      %6315 = vmatpush1.bf16.msra.mxu0 0
      %6316 = vmatprep.subr.bf16.mxu0 0
      %6317 = vmatpush1.bf16.msra.mxu0 0
      %6318 = vmatprep.subr.bf16.mxu0 0
      %6319 = vmatpush1.bf16.msra.mxu0 0
      %6320 = vmatprep.subr.bf16.mxu0 0
      %6321 = vmatpush1.bf16.msra.mxu0 0
      %6322 = vmatprep.subr.bf16.mxu0 0
      %6323 = vmatpush1.bf16.msra.mxu0 0
      %6324 = vmatprep.subr.bf16.mxu0 0
      %6325 = vmatpush1.bf16.msra.mxu0 0
      %6326 = vmatprep.mubr.bf16.mxu0 0
      %6327 = vmatmul.mubr.bf16.gmra.mrb[0].mxu0 %v6252
      %v6328 = vpop.f32.mrb[0].mxu0
      %v6329 = vadd.f32 0.0, %v6328
      %v6330 = vpop.f32.mrb[0].mxu0
      %v6331 = vadd.f32 0.0, %v6330
      %v6332 = vpop.f32.mrb[0].mxu0
      %v6333 = vpop.f32.mrb[0].mxu0
      %6334 = vdwg.mxu0
      %6335 = vmatprep.subr.bf16.mxu0 %v2880
      %6336 = vmatpush1.bf16.msra.mxu0 %v2879
      %6337 = vmatprep.subr.bf16.mxu0 %v2884
      %6338 = vmatpush1.bf16.msra.mxu0 %v2883
      %6339 = vmatprep.subr.bf16.mxu0 %v2888
      %6340 = vmatpush1.bf16.msra.mxu0 %v2887
      %6341 = vmatprep.subr.bf16.mxu0 %v2892
      %6342 = vmatpush1.bf16.msra.mxu0 %v2891
      %6343 = vmatprep.subr.bf16.mxu0 %v2896
      %6344 = vmatpush1.bf16.msra.mxu0 %v2895
      %6345 = vmatprep.subr.bf16.mxu0 %v2900
      %6346 = vmatpush1.bf16.msra.mxu0 %v2899
      %6347 = vmatprep.subr.bf16.mxu0 %v2904
      %6348 = vmatpush1.bf16.msra.mxu0 %v2903
      %6349 = vmatprep.subr.bf16.mxu0 %v2908
      %6350 = vmatpush1.bf16.msra.mxu0 %v2907
      %6351 = vmatprep.subr.bf16.mxu0 0
      %6352 = vmatpush1.bf16.msra.mxu0 0
      %6353 = vmatprep.subr.bf16.mxu0 0
      %6354 = vmatpush1.bf16.msra.mxu0 0
      %6355 = vmatprep.subr.bf16.mxu0 0
      %6356 = vmatpush1.bf16.msra.mxu0 0
      %6357 = vmatprep.subr.bf16.mxu0 0
      %6358 = vmatpush1.bf16.msra.mxu0 0
      %6359 = vmatprep.subr.bf16.mxu0 0
      %6360 = vmatpush1.bf16.msra.mxu0 0
      %6361 = vmatprep.subr.bf16.mxu0 0
      %6362 = vmatpush1.bf16.msra.mxu0 0
      %6363 = vmatprep.subr.bf16.mxu0 0
      %6364 = vmatpush1.bf16.msra.mxu0 0
      %6365 = vmatprep.subr.bf16.mxu0 0
      %6366 = vmatpush1.bf16.msra.mxu0 0
      %6367 = vmatprep.mubr.bf16.mxu0 0
      %6368 = vmatmul.mubr.bf16.gmra.mrb[0].mxu0 %v6252
      %v6369 = vpop.f32.mrb[0].mxu0
      %v6370 = vadd.f32 %v6059, %v6369
      %v6371 = vpop.f32.mrb[0].mxu0
      %v6372 = vadd.f32 %v6061, %v6371
      %v6373 = vpop.f32.mrb[0].mxu0
      %v6374 = vpop.f32.mrb[0].mxu0
      %6375 = vdwg.mxu0
      %6376 = vmatprep.subr.bf16.mxu0 %v2882
      %6377 = vmatpush1.bf16.msra.mxu0 %v2881
      %6378 = vmatprep.subr.bf16.mxu0 %v2886
      %6379 = vmatpush1.bf16.msra.mxu0 %v2885
      %6380 = vmatprep.subr.bf16.mxu0 %v2890
      %6381 = vmatpush1.bf16.msra.mxu0 %v2889
      %6382 = vmatprep.subr.bf16.mxu0 %v2894
      %6383 = vmatpush1.bf16.msra.mxu0 %v2893
      %6384 = vmatprep.subr.bf16.mxu0 %v2898
      %6385 = vmatpush1.bf16.msra.mxu0 %v2897
      %6386 = vmatprep.subr.bf16.mxu0 %v2902
      %6387 = vmatpush1.bf16.msra.mxu0 %v2901
      %6388 = vmatprep.subr.bf16.mxu0 %v2906
      %6389 = vmatpush1.bf16.msra.mxu0 %v2905
      %6390 = vmatprep.subr.bf16.mxu0 %v2910
      %6391 = vmatpush1.bf16.msra.mxu0 %v2909
      %6392 = vmatprep.subr.bf16.mxu0 0
      %6393 = vmatpush1.bf16.msra.mxu0 0
      %6394 = vmatprep.subr.bf16.mxu0 0
      %6395 = vmatpush1.bf16.msra.mxu0 0
      %6396 = vmatprep.subr.bf16.mxu0 0
      %6397 = vmatpush1.bf16.msra.mxu0 0
      %6398 = vmatprep.subr.bf16.mxu0 0
      %6399 = vmatpush1.bf16.msra.mxu0 0
      %6400 = vmatprep.subr.bf16.mxu0 0
      %6401 = vmatpush1.bf16.msra.mxu0 0
      %6402 = vmatprep.subr.bf16.mxu0 0
      %6403 = vmatpush1.bf16.msra.mxu0 0
      %6404 = vmatprep.subr.bf16.mxu0 0
      %6405 = vmatpush1.bf16.msra.mxu0 0
      %6406 = vmatprep.subr.bf16.mxu0 0
      %6407 = vmatpush1.bf16.msra.mxu0 0
      %6408 = vmatprep.mubr.bf16.mxu0 0
      %6409 = vmatmul.mubr.bf16.gmra.mrb[0].mxu0 %v6252
      %v6410 = vpop.f32.mrb[0].mxu0
      %v6411 = vadd.f32 %v6100, %v6410
      %v6412 = vpop.f32.mrb[0].mxu0
      %v6413 = vadd.f32 %v6102, %v6412
      %v6414 = vpop.f32.mrb[0].mxu0
      %v6415 = vpop.f32.mrb[0].mxu0
      %6416 = vdwg.mxu0
      %v6417 = vadd.f32 %v6370, %v3029
      %v6418 = vadd.f32 %v6372, %v3033
      %v6419 = vadd.f32 %v6411, %v3037
      %v6420 = vadd.f32 %v6413, %v3041
      %v6421 = vtanh.pop %v6417
      %v6422 = vmul.f32 %v6421, 0.5
      %v6423 = vadd.f32 %v6422, 0.5
      %v6424 = vtanh.pop %v6418
      %v6425 = vmul.f32 %v6424, 0.5
      %v6426 = vadd.f32 %v6425, 0.5
      %v6427 = vtanh.pop %v6419
      %v6428 = vtanh.pop %v6420
      %v6429 = vmul.f32 %v6428, 0.5
      %v6430 = vadd.f32 %v6429, 0.5
      %v6431 = vmul.f32 %v6426, %v6020
      %v6432 = vmul.f32 %v6423, %v6427
      %v6433 = vadd.f32 %v6431, %v6432
      %v6434 = vtanh.pop %v6433
      %v6435 = vmul.f32 %v6430, %v6434
      %v6436 = vpack.c.bf16 %v6435, %v6435
      %6437 = vmatprep.subr.bf16.mxu0 %v2272
      %6438 = vmatpush1.bf16.msra.mxu0 %v2271
      %6439 = vmatprep.subr.bf16.mxu0 %v2276
      %6440 = vmatpush1.bf16.msra.mxu0 %v2275
      %6441 = vmatprep.subr.bf16.mxu0 %v2280
      %6442 = vmatpush1.bf16.msra.mxu0 %v2279
      %6443 = vmatprep.subr.bf16.mxu0 %v2284
      %6444 = vmatpush1.bf16.msra.mxu0 %v2283
      %6445 = vmatprep.subr.bf16.mxu0 %v2288
      %6446 = vmatpush1.bf16.msra.mxu0 %v2287
      %6447 = vmatprep.subr.bf16.mxu0 %v2292
      %6448 = vmatpush1.bf16.msra.mxu0 %v2291
      %6449 = vmatprep.subr.bf16.mxu0 %v2296
      %6450 = vmatpush1.bf16.msra.mxu0 %v2295
      %6451 = vmatprep.subr.bf16.mxu0 %v2300
      %6452 = vmatpush1.bf16.msra.mxu0 %v2299
      %6453 = vmatprep.subr.bf16.mxu0 0
      %6454 = vmatpush1.bf16.msra.mxu0 0
      %6455 = vmatprep.subr.bf16.mxu0 0
      %6456 = vmatpush1.bf16.msra.mxu0 0
      %6457 = vmatprep.subr.bf16.mxu0 0
      %6458 = vmatpush1.bf16.msra.mxu0 0
      %6459 = vmatprep.subr.bf16.mxu0 0
      %6460 = vmatpush1.bf16.msra.mxu0 0
      %6461 = vmatprep.subr.bf16.mxu0 0
      %6462 = vmatpush1.bf16.msra.mxu0 0
      %6463 = vmatprep.subr.bf16.mxu0 0
      %6464 = vmatpush1.bf16.msra.mxu0 0
      %6465 = vmatprep.subr.bf16.mxu0 0
      %6466 = vmatpush1.bf16.msra.mxu0 0
      %6467 = vmatprep.subr.bf16.mxu0 0
      %6468 = vmatpush1.bf16.msra.mxu0 0
      %6469 = vmatprep.mubr.bf16.mxu0 0
      %6470 = vmatmul.mubr.bf16.gmra.mrb[0].mxu0 %v6436
      %v6471 = vpop.f32.mrb[0].mxu0
      %v6472 = vadd.f32 0.0, %v6471
      %v6473 = vpop.f32.mrb[0].mxu0
      %v6474 = vadd.f32 0.0, %v6473
      %v6475 = vpop.f32.mrb[0].mxu0
      %v6476 = vpop.f32.mrb[0].mxu0
      %6477 = vdwg.mxu0
      %6478 = vmatprep.subr.bf16.mxu0 %v2274
      %6479 = vmatpush1.bf16.msra.mxu0 %v2273
      %6480 = vmatprep.subr.bf16.mxu0 %v2278
      %6481 = vmatpush1.bf16.msra.mxu0 %v2277
      %6482 = vmatprep.subr.bf16.mxu0 %v2282
      %6483 = vmatpush1.bf16.msra.mxu0 %v2281
      %6484 = vmatprep.subr.bf16.mxu0 %v2286
      %6485 = vmatpush1.bf16.msra.mxu0 %v2285
      %6486 = vmatprep.subr.bf16.mxu0 %v2290
      %6487 = vmatpush1.bf16.msra.mxu0 %v2289
      %6488 = vmatprep.subr.bf16.mxu0 %v2294
      %6489 = vmatpush1.bf16.msra.mxu0 %v2293
      %6490 = vmatprep.subr.bf16.mxu0 %v2298
      %6491 = vmatpush1.bf16.msra.mxu0 %v2297
      %6492 = vmatprep.subr.bf16.mxu0 %v2302
      %6493 = vmatpush1.bf16.msra.mxu0 %v2301
      %6494 = vmatprep.subr.bf16.mxu0 0
      %6495 = vmatpush1.bf16.msra.mxu0 0
      %6496 = vmatprep.subr.bf16.mxu0 0
      %6497 = vmatpush1.bf16.msra.mxu0 0
      %6498 = vmatprep.subr.bf16.mxu0 0
      %6499 = vmatpush1.bf16.msra.mxu0 0
      %6500 = vmatprep.subr.bf16.mxu0 0
      %6501 = vmatpush1.bf16.msra.mxu0 0
      %6502 = vmatprep.subr.bf16.mxu0 0
      %6503 = vmatpush1.bf16.msra.mxu0 0
      %6504 = vmatprep.subr.bf16.mxu0 0
      %6505 = vmatpush1.bf16.msra.mxu0 0
      %6506 = vmatprep.subr.bf16.mxu0 0
      %6507 = vmatpush1.bf16.msra.mxu0 0
      %6508 = vmatprep.subr.bf16.mxu0 0
      %6509 = vmatpush1.bf16.msra.mxu0 0
      %6510 = vmatprep.mubr.bf16.mxu0 0
      %6511 = vmatmul.mubr.bf16.gmra.mrb[0].mxu0 %v6436
      %v6512 = vpop.f32.mrb[0].mxu0
      %v6513 = vadd.f32 0.0, %v6512
      %v6514 = vpop.f32.mrb[0].mxu0
      %v6515 = vadd.f32 0.0, %v6514
      %v6516 = vpop.f32.mrb[0].mxu0
      %v6517 = vpop.f32.mrb[0].mxu0
      %6518 = vdwg.mxu0
      %6519 = vmatprep.subr.bf16.mxu0 0
      %6520 = vmatpush1.bf16.msra.mxu0 %v3180
      %6521 = vmatprep.subr.bf16.mxu0 0
      %6522 = vmatpush1.bf16.msra.mxu0 %v3181
      %6523 = vmatprep.subr.bf16.mxu0 0
      %6524 = vmatpush1.bf16.msra.mxu0 %v3182
      %6525 = vmatprep.subr.bf16.mxu0 0
      %6526 = vmatpush1.bf16.msra.mxu0 %v3183
      %6527 = vmatprep.subr.bf16.mxu0 0
      %6528 = vmatpush1.bf16.msra.mxu0 %v3184
      %6529 = vmatprep.subr.bf16.mxu0 0
      %6530 = vmatpush1.bf16.msra.mxu0 %v3185
      %6531 = vmatprep.subr.bf16.mxu0 0
      %6532 = vmatpush1.bf16.msra.mxu0 %v3186
      %6533 = vmatprep.subr.bf16.mxu0 0
      %6534 = vmatpush1.bf16.msra.mxu0 %v3187
      %6535 = vmatprep.subr.bf16.mxu0 0
      %6536 = vmatpush1.bf16.msra.mxu0 0
      %6537 = vmatprep.subr.bf16.mxu0 0
      %6538 = vmatpush1.bf16.msra.mxu0 0
      %6539 = vmatprep.subr.bf16.mxu0 0
      %6540 = vmatpush1.bf16.msra.mxu0 0
      %6541 = vmatprep.subr.bf16.mxu0 0
      %6542 = vmatpush1.bf16.msra.mxu0 0
      %6543 = vmatprep.subr.bf16.mxu0 0
      %6544 = vmatpush1.bf16.msra.mxu0 0
      %6545 = vmatprep.subr.bf16.mxu0 0
      %6546 = vmatpush1.bf16.msra.mxu0 0
      %6547 = vmatprep.subr.bf16.mxu0 0
      %6548 = vmatpush1.bf16.msra.mxu0 0
      %6549 = vmatprep.subr.bf16.mxu0 0
      %6550 = vmatpush1.bf16.msra.mxu0 0
      %6551 = vmatprep.mubr.bf16.mxu0 0
      %6552 = vmatmul.mubr.bf16.gmra.mrb[0].mxu0 %v6436
      %v6553 = vpop.f32.mrb[0].mxu0
      %v6554 = vadd.f32 %v454, %v6553
      %v6555 = vpop.f32.mrb[0].mxu0
      %v6556 = vpop.f32.mrb[0].mxu0
      %v6557 = vpop.f32.mrb[0].mxu0
      %6558 = vdwg.mxu0
      %v6559 = vtanh.pop %v6554
      %v6560 = vmul.f32 %v6559, 0.5
      %v6561 = vadd.f32 %v6560, 0.5
      %6562 = vst [vmem:[#allocation2 + $0x1] sm:$0x1] %v6561
      %v6563 = vpack.c.bf16 %v6561, %v6561
      %6564 = vmatprep.subr.bf16.mxu0 %v2515
      %6565 = vmatpush1.bf16.msra.mxu0 %v2514
      %6566 = vmatprep.subr.bf16.mxu0 %v2519
      %6567 = vmatpush1.bf16.msra.mxu0 %v2518
      %6568 = vmatprep.subr.bf16.mxu0 %v2523
      %6569 = vmatpush1.bf16.msra.mxu0 %v2522
      %6570 = vmatprep.subr.bf16.mxu0 %v2527
      %6571 = vmatpush1.bf16.msra.mxu0 %v2526
      %6572 = vmatprep.subr.bf16.mxu0 %v2531
      %6573 = vmatpush1.bf16.msra.mxu0 %v2530
      %6574 = vmatprep.subr.bf16.mxu0 %v2535
      %6575 = vmatpush1.bf16.msra.mxu0 %v2534
      %6576 = vmatprep.subr.bf16.mxu0 %v2539
      %6577 = vmatpush1.bf16.msra.mxu0 %v2538
      %6578 = vmatprep.subr.bf16.mxu0 %v2543
      %6579 = vmatpush1.bf16.msra.mxu0 %v2542
      %6580 = vmatprep.subr.bf16.mxu0 0
      %6581 = vmatpush1.bf16.msra.mxu0 0
      %6582 = vmatprep.subr.bf16.mxu0 0
      %6583 = vmatpush1.bf16.msra.mxu0 0
      %6584 = vmatprep.subr.bf16.mxu0 0
      %6585 = vmatpush1.bf16.msra.mxu0 0
      %6586 = vmatprep.subr.bf16.mxu0 0
      %6587 = vmatpush1.bf16.msra.mxu0 0
      %6588 = vmatprep.subr.bf16.mxu0 0
      %6589 = vmatpush1.bf16.msra.mxu0 0
      %6590 = vmatprep.subr.bf16.mxu0 0
      %6591 = vmatpush1.bf16.msra.mxu0 0
      %6592 = vmatprep.subr.bf16.mxu0 0
      %6593 = vmatpush1.bf16.msra.mxu0 0
      %6594 = vmatprep.subr.bf16.mxu0 0
      %6595 = vmatpush1.bf16.msra.mxu0 0
      %6596 = vmatprep.mubr.bf16.mxu0 0
      %6597 = vmatmul.mubr.bf16.gmra.mrb[0].mxu0 %v6563
      %v6598 = vpop.f32.mrb[0].mxu0
      %v6599 = vadd.f32 %v6288, %v6598
      %v6600 = vpop.f32.mrb[0].mxu0
      %v6601 = vadd.f32 %v6290, %v6600
      %v6602 = vpop.f32.mrb[0].mxu0
      %v6603 = vpop.f32.mrb[0].mxu0
      %6604 = vdwg.mxu0
      %6605 = vmatprep.subr.bf16.mxu0 %v2517
      %6606 = vmatpush1.bf16.msra.mxu0 %v2516
      %6607 = vmatprep.subr.bf16.mxu0 %v2521
      %6608 = vmatpush1.bf16.msra.mxu0 %v2520
      %6609 = vmatprep.subr.bf16.mxu0 %v2525
      %6610 = vmatpush1.bf16.msra.mxu0 %v2524
      %6611 = vmatprep.subr.bf16.mxu0 %v2529
      %6612 = vmatpush1.bf16.msra.mxu0 %v2528
      %6613 = vmatprep.subr.bf16.mxu0 %v2533
      %6614 = vmatpush1.bf16.msra.mxu0 %v2532
      %6615 = vmatprep.subr.bf16.mxu0 %v2537
      %6616 = vmatpush1.bf16.msra.mxu0 %v2536
      %6617 = vmatprep.subr.bf16.mxu0 %v2541
      %6618 = vmatpush1.bf16.msra.mxu0 %v2540
      %6619 = vmatprep.subr.bf16.mxu0 %v2545
      %6620 = vmatpush1.bf16.msra.mxu0 %v2544
      %6621 = vmatprep.subr.bf16.mxu0 0
      %6622 = vmatpush1.bf16.msra.mxu0 0
      %6623 = vmatprep.subr.bf16.mxu0 0
      %6624 = vmatpush1.bf16.msra.mxu0 0
      %6625 = vmatprep.subr.bf16.mxu0 0
      %6626 = vmatpush1.bf16.msra.mxu0 0
      %6627 = vmatprep.subr.bf16.mxu0 0
      %6628 = vmatpush1.bf16.msra.mxu0 0
      %6629 = vmatprep.subr.bf16.mxu0 0
      %6630 = vmatpush1.bf16.msra.mxu0 0
      %6631 = vmatprep.subr.bf16.mxu0 0
      %6632 = vmatpush1.bf16.msra.mxu0 0
      %6633 = vmatprep.subr.bf16.mxu0 0
      %6634 = vmatpush1.bf16.msra.mxu0 0
      %6635 = vmatprep.subr.bf16.mxu0 0
      %6636 = vmatpush1.bf16.msra.mxu0 0
      %6637 = vmatprep.mubr.bf16.mxu0 0
      %6638 = vmatmul.mubr.bf16.gmra.mrb[0].mxu0 %v6563
      %v6639 = vpop.f32.mrb[0].mxu0
      %v6640 = vadd.f32 %v6329, %v6639
      %v6641 = vpop.f32.mrb[0].mxu0
      %v6642 = vadd.f32 %v6331, %v6641
      %v6643 = vpop.f32.mrb[0].mxu0
      %v6644 = vpop.f32.mrb[0].mxu0
      %6645 = vdwg.mxu0
      %v6646 = vadd.f32 %v6599, %v2664
      %v6647 = vadd.f32 %v6601, %v2668
      %v6648 = vadd.f32 %v6640, %v2672
      %v6649 = vadd.f32 %v6642, %v2676
      %v6650 = vtanh.pop %v6646
      %v6651 = vmul.f32 %v6650, 0.5
      %v6652 = vadd.f32 %v6651, 0.5
      %v6653 = vtanh.pop %v6647
      %v6654 = vmul.f32 %v6653, 0.5
      %v6655 = vadd.f32 %v6654, 0.5
      %v6656 = vtanh.pop %v6648
      %v6657 = vtanh.pop %v6649
      %v6658 = vmul.f32 %v6657, 0.5
      %v6659 = vadd.f32 %v6658, 0.5
      %v6660 = vmul.f32 %v6655, %v6249
      %v6661 = vmul.f32 %v6652, %v6656
      %v6662 = vadd.f32 %v6660, %v6661
      %v6663 = vtanh.pop %v6662
      %v6664 = vmul.f32 %v6659, %v6663
      %v6665 = vpack.c.bf16 %v6664, %v6664
      %6666 = vmatprep.subr.bf16.mxu0 %v2029
      %6667 = vmatpush1.bf16.msra.mxu0 %v2028
      %6668 = vmatprep.subr.bf16.mxu0 %v2033
      %6669 = vmatpush1.bf16.msra.mxu0 %v2032
      %6670 = vmatprep.subr.bf16.mxu0 %v2037
      %6671 = vmatpush1.bf16.msra.mxu0 %v2036
      %6672 = vmatprep.subr.bf16.mxu0 %v2041
      %6673 = vmatpush1.bf16.msra.mxu0 %v2040
      %6674 = vmatprep.subr.bf16.mxu0 %v2045
      %6675 = vmatpush1.bf16.msra.mxu0 %v2044
      %6676 = vmatprep.subr.bf16.mxu0 %v2049
      %6677 = vmatpush1.bf16.msra.mxu0 %v2048
      %6678 = vmatprep.subr.bf16.mxu0 %v2053
      %6679 = vmatpush1.bf16.msra.mxu0 %v2052
      %6680 = vmatprep.subr.bf16.mxu0 %v2057
      %6681 = vmatpush1.bf16.msra.mxu0 %v2056
      %6682 = vmatprep.subr.bf16.mxu0 0
      %6683 = vmatpush1.bf16.msra.mxu0 0
      %6684 = vmatprep.subr.bf16.mxu0 0
      %6685 = vmatpush1.bf16.msra.mxu0 0
      %6686 = vmatprep.subr.bf16.mxu0 0
      %6687 = vmatpush1.bf16.msra.mxu0 0
      %6688 = vmatprep.subr.bf16.mxu0 0
      %6689 = vmatpush1.bf16.msra.mxu0 0
      %6690 = vmatprep.subr.bf16.mxu0 0
      %6691 = vmatpush1.bf16.msra.mxu0 0
      %6692 = vmatprep.subr.bf16.mxu0 0
      %6693 = vmatpush1.bf16.msra.mxu0 0
      %6694 = vmatprep.subr.bf16.mxu0 0
      %6695 = vmatpush1.bf16.msra.mxu0 0
      %6696 = vmatprep.subr.bf16.mxu0 0
      %6697 = vmatpush1.bf16.msra.mxu0 0
      %6698 = vmatprep.mubr.bf16.mxu0 0
      %6699 = vmatmul.mubr.bf16.gmra.mrb[0].mxu0 %v6665
      %v6700 = vpop.f32.mrb[0].mxu0
      %v6701 = vadd.f32 0.0, %v6700
      %v6702 = vpop.f32.mrb[0].mxu0
      %v6703 = vadd.f32 0.0, %v6702
      %v6704 = vpop.f32.mrb[0].mxu0
      %v6705 = vpop.f32.mrb[0].mxu0
      %6706 = vdwg.mxu0
      %6707 = vmatprep.subr.bf16.mxu0 %v2031
      %6708 = vmatpush1.bf16.msra.mxu0 %v2030
      %6709 = vmatprep.subr.bf16.mxu0 %v2035
      %6710 = vmatpush1.bf16.msra.mxu0 %v2034
      %6711 = vmatprep.subr.bf16.mxu0 %v2039
      %6712 = vmatpush1.bf16.msra.mxu0 %v2038
      %6713 = vmatprep.subr.bf16.mxu0 %v2043
      %6714 = vmatpush1.bf16.msra.mxu0 %v2042
      %6715 = vmatprep.subr.bf16.mxu0 %v2047
      %6716 = vmatpush1.bf16.msra.mxu0 %v2046
      %6717 = vmatprep.subr.bf16.mxu0 %v2051
      %6718 = vmatpush1.bf16.msra.mxu0 %v2050
      %6719 = vmatprep.subr.bf16.mxu0 %v2055
      %6720 = vmatpush1.bf16.msra.mxu0 %v2054
      %6721 = vmatprep.subr.bf16.mxu0 %v2059
      %6722 = vmatpush1.bf16.msra.mxu0 %v2058
      %6723 = vmatprep.subr.bf16.mxu0 0
      %6724 = vmatpush1.bf16.msra.mxu0 0
      %6725 = vmatprep.subr.bf16.mxu0 0
      %6726 = vmatpush1.bf16.msra.mxu0 0
      %6727 = vmatprep.subr.bf16.mxu0 0
      %6728 = vmatpush1.bf16.msra.mxu0 0
      %6729 = vmatprep.subr.bf16.mxu0 0
      %6730 = vmatpush1.bf16.msra.mxu0 0
      %6731 = vmatprep.subr.bf16.mxu0 0
      %6732 = vmatpush1.bf16.msra.mxu0 0
      %6733 = vmatprep.subr.bf16.mxu0 0
      %6734 = vmatpush1.bf16.msra.mxu0 0
      %6735 = vmatprep.subr.bf16.mxu0 0
      %6736 = vmatpush1.bf16.msra.mxu0 0
      %6737 = vmatprep.subr.bf16.mxu0 0
      %6738 = vmatpush1.bf16.msra.mxu0 0
      %6739 = vmatprep.mubr.bf16.mxu0 0
      %6740 = vmatmul.mubr.bf16.gmra.mrb[0].mxu0 %v6665
      %v6741 = vpop.f32.mrb[0].mxu0
      %v6742 = vadd.f32 0.0, %v6741
      %v6743 = vpop.f32.mrb[0].mxu0
      %v6744 = vadd.f32 0.0, %v6743
      %v6745 = vpop.f32.mrb[0].mxu0
      %v6746 = vpop.f32.mrb[0].mxu0
      %6747 = vdwg.mxu0
      %6748 = vmatprep.subr.bf16.mxu0 %v2880
      %6749 = vmatpush1.bf16.msra.mxu0 %v2879
      %6750 = vmatprep.subr.bf16.mxu0 %v2884
      %6751 = vmatpush1.bf16.msra.mxu0 %v2883
      %6752 = vmatprep.subr.bf16.mxu0 %v2888
      %6753 = vmatpush1.bf16.msra.mxu0 %v2887
      %6754 = vmatprep.subr.bf16.mxu0 %v2892
      %6755 = vmatpush1.bf16.msra.mxu0 %v2891
      %6756 = vmatprep.subr.bf16.mxu0 %v2896
      %6757 = vmatpush1.bf16.msra.mxu0 %v2895
      %6758 = vmatprep.subr.bf16.mxu0 %v2900
      %6759 = vmatpush1.bf16.msra.mxu0 %v2899
      %6760 = vmatprep.subr.bf16.mxu0 %v2904
      %6761 = vmatpush1.bf16.msra.mxu0 %v2903
      %6762 = vmatprep.subr.bf16.mxu0 %v2908
      %6763 = vmatpush1.bf16.msra.mxu0 %v2907
      %6764 = vmatprep.subr.bf16.mxu0 0
      %6765 = vmatpush1.bf16.msra.mxu0 0
      %6766 = vmatprep.subr.bf16.mxu0 0
      %6767 = vmatpush1.bf16.msra.mxu0 0
      %6768 = vmatprep.subr.bf16.mxu0 0
      %6769 = vmatpush1.bf16.msra.mxu0 0
      %6770 = vmatprep.subr.bf16.mxu0 0
      %6771 = vmatpush1.bf16.msra.mxu0 0
      %6772 = vmatprep.subr.bf16.mxu0 0
      %6773 = vmatpush1.bf16.msra.mxu0 0
      %6774 = vmatprep.subr.bf16.mxu0 0
      %6775 = vmatpush1.bf16.msra.mxu0 0
      %6776 = vmatprep.subr.bf16.mxu0 0
      %6777 = vmatpush1.bf16.msra.mxu0 0
      %6778 = vmatprep.subr.bf16.mxu0 0
      %6779 = vmatpush1.bf16.msra.mxu0 0
      %6780 = vmatprep.mubr.bf16.mxu0 0
      %6781 = vmatmul.mubr.bf16.gmra.mrb[0].mxu0 %v6665
      %v6782 = vpop.f32.mrb[0].mxu0
      %v6783 = vadd.f32 %v6472, %v6782
      %v6784 = vpop.f32.mrb[0].mxu0
      %v6785 = vadd.f32 %v6474, %v6784
      %v6786 = vpop.f32.mrb[0].mxu0
      %v6787 = vpop.f32.mrb[0].mxu0
      %6788 = vdwg.mxu0
      %6789 = vmatprep.subr.bf16.mxu0 %v2882
      %6790 = vmatpush1.bf16.msra.mxu0 %v2881
      %6791 = vmatprep.subr.bf16.mxu0 %v2886
      %6792 = vmatpush1.bf16.msra.mxu0 %v2885
      %6793 = vmatprep.subr.bf16.mxu0 %v2890
      %6794 = vmatpush1.bf16.msra.mxu0 %v2889
      %6795 = vmatprep.subr.bf16.mxu0 %v2894
      %6796 = vmatpush1.bf16.msra.mxu0 %v2893
      %6797 = vmatprep.subr.bf16.mxu0 %v2898
      %6798 = vmatpush1.bf16.msra.mxu0 %v2897
      %6799 = vmatprep.subr.bf16.mxu0 %v2902
      %6800 = vmatpush1.bf16.msra.mxu0 %v2901
      %6801 = vmatprep.subr.bf16.mxu0 %v2906
      %6802 = vmatpush1.bf16.msra.mxu0 %v2905
      %6803 = vmatprep.subr.bf16.mxu0 %v2910
      %6804 = vmatpush1.bf16.msra.mxu0 %v2909
      %6805 = vmatprep.subr.bf16.mxu0 0
      %6806 = vmatpush1.bf16.msra.mxu0 0
      %6807 = vmatprep.subr.bf16.mxu0 0
      %6808 = vmatpush1.bf16.msra.mxu0 0
      %6809 = vmatprep.subr.bf16.mxu0 0
      %6810 = vmatpush1.bf16.msra.mxu0 0
      %6811 = vmatprep.subr.bf16.mxu0 0
      %6812 = vmatpush1.bf16.msra.mxu0 0
      %6813 = vmatprep.subr.bf16.mxu0 0
      %6814 = vmatpush1.bf16.msra.mxu0 0
      %6815 = vmatprep.subr.bf16.mxu0 0
      %6816 = vmatpush1.bf16.msra.mxu0 0
      %6817 = vmatprep.subr.bf16.mxu0 0
      %6818 = vmatpush1.bf16.msra.mxu0 0
      %6819 = vmatprep.subr.bf16.mxu0 0
      %6820 = vmatpush1.bf16.msra.mxu0 0
      %6821 = vmatprep.mubr.bf16.mxu0 0
      %6822 = vmatmul.mubr.bf16.gmra.mrb[0].mxu0 %v6665
      %v6823 = vpop.f32.mrb[0].mxu0
      %v6824 = vadd.f32 %v6513, %v6823
      %v6825 = vpop.f32.mrb[0].mxu0
      %v6826 = vadd.f32 %v6515, %v6825
      %v6827 = vpop.f32.mrb[0].mxu0
      %v6828 = vpop.f32.mrb[0].mxu0
      %6829 = vdwg.mxu0
      %v6830 = vadd.f32 %v6783, %v3029
      %v6831 = vadd.f32 %v6785, %v3033
      %v6832 = vadd.f32 %v6824, %v3037
      %v6833 = vadd.f32 %v6826, %v3041
      %v6834 = vtanh.pop %v6830
      %v6835 = vmul.f32 %v6834, 0.5
      %v6836 = vadd.f32 %v6835, 0.5
      %v6837 = vtanh.pop %v6831
      %v6838 = vmul.f32 %v6837, 0.5
      %v6839 = vadd.f32 %v6838, 0.5
      %v6840 = vtanh.pop %v6832
      %v6841 = vtanh.pop %v6833
      %v6842 = vmul.f32 %v6841, 0.5
      %v6843 = vadd.f32 %v6842, 0.5
      %v6844 = vmul.f32 %v6839, %v6433
      %v6845 = vmul.f32 %v6836, %v6840
      %v6846 = vadd.f32 %v6844, %v6845
      %v6847 = vtanh.pop %v6846
      %v6848 = vmul.f32 %v6843, %v6847
      %v6849 = vpack.c.bf16 %v6848, %v6848
      %6850 = vmatprep.subr.bf16.mxu0 %v2272
      %6851 = vmatpush1.bf16.msra.mxu0 %v2271
      %6852 = vmatprep.subr.bf16.mxu0 %v2276
      %6853 = vmatpush1.bf16.msra.mxu0 %v2275
      %6854 = vmatprep.subr.bf16.mxu0 %v2280
      %6855 = vmatpush1.bf16.msra.mxu0 %v2279
      %6856 = vmatprep.subr.bf16.mxu0 %v2284
      %6857 = vmatpush1.bf16.msra.mxu0 %v2283
      %6858 = vmatprep.subr.bf16.mxu0 %v2288
      %6859 = vmatpush1.bf16.msra.mxu0 %v2287
      %6860 = vmatprep.subr.bf16.mxu0 %v2292
      %6861 = vmatpush1.bf16.msra.mxu0 %v2291
      %6862 = vmatprep.subr.bf16.mxu0 %v2296
      %6863 = vmatpush1.bf16.msra.mxu0 %v2295
      %6864 = vmatprep.subr.bf16.mxu0 %v2300
      %6865 = vmatpush1.bf16.msra.mxu0 %v2299
      %6866 = vmatprep.subr.bf16.mxu0 0
      %6867 = vmatpush1.bf16.msra.mxu0 0
      %6868 = vmatprep.subr.bf16.mxu0 0
      %6869 = vmatpush1.bf16.msra.mxu0 0
      %6870 = vmatprep.subr.bf16.mxu0 0
      %6871 = vmatpush1.bf16.msra.mxu0 0
      %6872 = vmatprep.subr.bf16.mxu0 0
      %6873 = vmatpush1.bf16.msra.mxu0 0
      %6874 = vmatprep.subr.bf16.mxu0 0
      %6875 = vmatpush1.bf16.msra.mxu0 0
      %6876 = vmatprep.subr.bf16.mxu0 0
      %6877 = vmatpush1.bf16.msra.mxu0 0
      %6878 = vmatprep.subr.bf16.mxu0 0
      %6879 = vmatpush1.bf16.msra.mxu0 0
      %6880 = vmatprep.subr.bf16.mxu0 0
      %6881 = vmatpush1.bf16.msra.mxu0 0
      %6882 = vmatprep.mubr.bf16.mxu0 0
      %6883 = vmatmul.mubr.bf16.gmra.mrb[0].mxu0 %v6849
      %v6884 = vpop.f32.mrb[0].mxu0
      %v6885 = vadd.f32 0.0, %v6884
      %v6886 = vpop.f32.mrb[0].mxu0
      %v6887 = vadd.f32 0.0, %v6886
      %v6888 = vpop.f32.mrb[0].mxu0
      %v6889 = vpop.f32.mrb[0].mxu0
      %6890 = vdwg.mxu0
      %6891 = vmatprep.subr.bf16.mxu0 %v2274
      %6892 = vmatpush1.bf16.msra.mxu0 %v2273
      %6893 = vmatprep.subr.bf16.mxu0 %v2278
      %6894 = vmatpush1.bf16.msra.mxu0 %v2277
      %6895 = vmatprep.subr.bf16.mxu0 %v2282
      %6896 = vmatpush1.bf16.msra.mxu0 %v2281
      %6897 = vmatprep.subr.bf16.mxu0 %v2286
      %6898 = vmatpush1.bf16.msra.mxu0 %v2285
      %6899 = vmatprep.subr.bf16.mxu0 %v2290
      %6900 = vmatpush1.bf16.msra.mxu0 %v2289
      %6901 = vmatprep.subr.bf16.mxu0 %v2294
      %6902 = vmatpush1.bf16.msra.mxu0 %v2293
      %6903 = vmatprep.subr.bf16.mxu0 %v2298
      %6904 = vmatpush1.bf16.msra.mxu0 %v2297
      %6905 = vmatprep.subr.bf16.mxu0 %v2302
      %6906 = vmatpush1.bf16.msra.mxu0 %v2301
      %6907 = vmatprep.subr.bf16.mxu0 0
      %6908 = vmatpush1.bf16.msra.mxu0 0
      %6909 = vmatprep.subr.bf16.mxu0 0
      %6910 = vmatpush1.bf16.msra.mxu0 0
      %6911 = vmatprep.subr.bf16.mxu0 0
      %6912 = vmatpush1.bf16.msra.mxu0 0
      %6913 = vmatprep.subr.bf16.mxu0 0
      %6914 = vmatpush1.bf16.msra.mxu0 0
      %6915 = vmatprep.subr.bf16.mxu0 0
      %6916 = vmatpush1.bf16.msra.mxu0 0
      %6917 = vmatprep.subr.bf16.mxu0 0
      %6918 = vmatpush1.bf16.msra.mxu0 0
      %6919 = vmatprep.subr.bf16.mxu0 0
      %6920 = vmatpush1.bf16.msra.mxu0 0
      %6921 = vmatprep.subr.bf16.mxu0 0
      %6922 = vmatpush1.bf16.msra.mxu0 0
      %6923 = vmatprep.mubr.bf16.mxu0 0
      %6924 = vmatmul.mubr.bf16.gmra.mrb[0].mxu0 %v6849
      %v6925 = vpop.f32.mrb[0].mxu0
      %v6926 = vadd.f32 0.0, %v6925
      %v6927 = vpop.f32.mrb[0].mxu0
      %v6928 = vadd.f32 0.0, %v6927
      %v6929 = vpop.f32.mrb[0].mxu0
      %v6930 = vpop.f32.mrb[0].mxu0
      %6931 = vdwg.mxu0
      %6932 = vmatprep.subr.bf16.mxu0 0
      %6933 = vmatpush1.bf16.msra.mxu0 %v3180
      %6934 = vmatprep.subr.bf16.mxu0 0
      %6935 = vmatpush1.bf16.msra.mxu0 %v3181
      %6936 = vmatprep.subr.bf16.mxu0 0
      %6937 = vmatpush1.bf16.msra.mxu0 %v3182
      %6938 = vmatprep.subr.bf16.mxu0 0
      %6939 = vmatpush1.bf16.msra.mxu0 %v3183
      %6940 = vmatprep.subr.bf16.mxu0 0
      %6941 = vmatpush1.bf16.msra.mxu0 %v3184
      %6942 = vmatprep.subr.bf16.mxu0 0
      %6943 = vmatpush1.bf16.msra.mxu0 %v3185
      %6944 = vmatprep.subr.bf16.mxu0 0
      %6945 = vmatpush1.bf16.msra.mxu0 %v3186
      %6946 = vmatprep.subr.bf16.mxu0 0
      %6947 = vmatpush1.bf16.msra.mxu0 %v3187
      %6948 = vmatprep.subr.bf16.mxu0 0
      %6949 = vmatpush1.bf16.msra.mxu0 0
      %6950 = vmatprep.subr.bf16.mxu0 0
      %6951 = vmatpush1.bf16.msra.mxu0 0
      %6952 = vmatprep.subr.bf16.mxu0 0
      %6953 = vmatpush1.bf16.msra.mxu0 0
      %6954 = vmatprep.subr.bf16.mxu0 0
      %6955 = vmatpush1.bf16.msra.mxu0 0
      %6956 = vmatprep.subr.bf16.mxu0 0
      %6957 = vmatpush1.bf16.msra.mxu0 0
      %6958 = vmatprep.subr.bf16.mxu0 0
      %6959 = vmatpush1.bf16.msra.mxu0 0
      %6960 = vmatprep.subr.bf16.mxu0 0
      %6961 = vmatpush1.bf16.msra.mxu0 0
      %6962 = vmatprep.subr.bf16.mxu0 0
      %6963 = vmatpush1.bf16.msra.mxu0 0
      %6964 = vmatprep.mubr.bf16.mxu0 0
      %6965 = vmatmul.mubr.bf16.gmra.mrb[0].mxu0 %v6849
      %v6966 = vpop.f32.mrb[0].mxu0
      %v6967 = vadd.f32 %v454, %v6966
      %v6968 = vpop.f32.mrb[0].mxu0
      %v6969 = vpop.f32.mrb[0].mxu0
      %v6970 = vpop.f32.mrb[0].mxu0
      %6971 = vdwg.mxu0
      %v6972 = vtanh.pop %v6967
      %v6973 = vmul.f32 %v6972, 0.5
      %v6974 = vadd.f32 %v6973, 0.5
      %6975 = vst [vmem:[#allocation2 + $0x2] sm:$0x1] %v6974
      %v6976 = vpack.c.bf16 %v6974, %v6974
      %6977 = vmatprep.subr.bf16.mxu0 %v2515
      %6978 = vmatpush1.bf16.msra.mxu0 %v2514
      %6979 = vmatprep.subr.bf16.mxu0 %v2519
      %6980 = vmatpush1.bf16.msra.mxu0 %v2518
      %6981 = vmatprep.subr.bf16.mxu0 %v2523
      %6982 = vmatpush1.bf16.msra.mxu0 %v2522
      %6983 = vmatprep.subr.bf16.mxu0 %v2527
      %6984 = vmatpush1.bf16.msra.mxu0 %v2526
      %6985 = vmatprep.subr.bf16.mxu0 %v2531
      %6986 = vmatpush1.bf16.msra.mxu0 %v2530
      %6987 = vmatprep.subr.bf16.mxu0 %v2535
      %6988 = vmatpush1.bf16.msra.mxu0 %v2534
      %6989 = vmatprep.subr.bf16.mxu0 %v2539
      %6990 = vmatpush1.bf16.msra.mxu0 %v2538
      %6991 = vmatprep.subr.bf16.mxu0 %v2543
      %6992 = vmatpush1.bf16.msra.mxu0 %v2542
      %6993 = vmatprep.subr.bf16.mxu0 0
      %6994 = vmatpush1.bf16.msra.mxu0 0
      %6995 = vmatprep.subr.bf16.mxu0 0
      %6996 = vmatpush1.bf16.msra.mxu0 0
      %6997 = vmatprep.subr.bf16.mxu0 0
      %6998 = vmatpush1.bf16.msra.mxu0 0
      %6999 = vmatprep.subr.bf16.mxu0 0
      %7000 = vmatpush1.bf16.msra.mxu0 0
      %7001 = vmatprep.subr.bf16.mxu0 0
      %7002 = vmatpush1.bf16.msra.mxu0 0
      %7003 = vmatprep.subr.bf16.mxu0 0
      %7004 = vmatpush1.bf16.msra.mxu0 0
      %7005 = vmatprep.subr.bf16.mxu0 0
      %7006 = vmatpush1.bf16.msra.mxu0 0
      %7007 = vmatprep.subr.bf16.mxu0 0
      %7008 = vmatpush1.bf16.msra.mxu0 0
      %7009 = vmatprep.mubr.bf16.mxu0 0
      %7010 = vmatmul.mubr.bf16.gmra.mrb[0].mxu0 %v6976
      %v7011 = vpop.f32.mrb[0].mxu0
      %v7012 = vadd.f32 %v6701, %v7011
      %v7013 = vpop.f32.mrb[0].mxu0
      %v7014 = vadd.f32 %v6703, %v7013
      %v7015 = vpop.f32.mrb[0].mxu0
      %v7016 = vpop.f32.mrb[0].mxu0
      %7017 = vdwg.mxu0
      %7018 = vmatprep.subr.bf16.mxu0 %v2517
      %7019 = vmatpush1.bf16.msra.mxu0 %v2516
      %7020 = vmatprep.subr.bf16.mxu0 %v2521
      %7021 = vmatpush1.bf16.msra.mxu0 %v2520
      %7022 = vmatprep.subr.bf16.mxu0 %v2525
      %7023 = vmatpush1.bf16.msra.mxu0 %v2524
      %7024 = vmatprep.subr.bf16.mxu0 %v2529
      %7025 = vmatpush1.bf16.msra.mxu0 %v2528
      %7026 = vmatprep.subr.bf16.mxu0 %v2533
      %7027 = vmatpush1.bf16.msra.mxu0 %v2532
      %7028 = vmatprep.subr.bf16.mxu0 %v2537
      %7029 = vmatpush1.bf16.msra.mxu0 %v2536
      %7030 = vmatprep.subr.bf16.mxu0 %v2541
      %7031 = vmatpush1.bf16.msra.mxu0 %v2540
      %7032 = vmatprep.subr.bf16.mxu0 %v2545
      %7033 = vmatpush1.bf16.msra.mxu0 %v2544
      %7034 = vmatprep.subr.bf16.mxu0 0
      %7035 = vmatpush1.bf16.msra.mxu0 0
      %7036 = vmatprep.subr.bf16.mxu0 0
      %7037 = vmatpush1.bf16.msra.mxu0 0
      %7038 = vmatprep.subr.bf16.mxu0 0
      %7039 = vmatpush1.bf16.msra.mxu0 0
      %7040 = vmatprep.subr.bf16.mxu0 0
      %7041 = vmatpush1.bf16.msra.mxu0 0
      %7042 = vmatprep.subr.bf16.mxu0 0
      %7043 = vmatpush1.bf16.msra.mxu0 0
      %7044 = vmatprep.subr.bf16.mxu0 0
      %7045 = vmatpush1.bf16.msra.mxu0 0
      %7046 = vmatprep.subr.bf16.mxu0 0
      %7047 = vmatpush1.bf16.msra.mxu0 0
      %7048 = vmatprep.subr.bf16.mxu0 0
      %7049 = vmatpush1.bf16.msra.mxu0 0
      %7050 = vmatprep.mubr.bf16.mxu0 0
      %7051 = vmatmul.mubr.bf16.gmra.mrb[0].mxu0 %v6976
      %v7052 = vpop.f32.mrb[0].mxu0
      %v7053 = vadd.f32 %v6742, %v7052
      %v7054 = vpop.f32.mrb[0].mxu0
      %v7055 = vadd.f32 %v6744, %v7054
      %v7056 = vpop.f32.mrb[0].mxu0
      %v7057 = vpop.f32.mrb[0].mxu0
      %7058 = vdwg.mxu0
      %v7059 = vadd.f32 %v7012, %v2664
      %v7060 = vadd.f32 %v7014, %v2668
      %v7061 = vadd.f32 %v7053, %v2672
      %v7062 = vadd.f32 %v7055, %v2676
      %v7063 = vtanh.pop %v7059
      %v7064 = vmul.f32 %v7063, 0.5
      %v7065 = vadd.f32 %v7064, 0.5
      %v7066 = vtanh.pop %v7060
      %v7067 = vmul.f32 %v7066, 0.5
      %v7068 = vadd.f32 %v7067, 0.5
      %v7069 = vtanh.pop %v7061
      %v7070 = vtanh.pop %v7062
      %v7071 = vmul.f32 %v7070, 0.5
      %v7072 = vadd.f32 %v7071, 0.5
      %v7073 = vmul.f32 %v7068, %v6662
      %v7074 = vmul.f32 %v7065, %v7069
      %v7075 = vadd.f32 %v7073, %v7074
      %v7076 = vtanh.pop %v7075
      %v7077 = vmul.f32 %v7072, %v7076
      %v7078 = vpack.c.bf16 %v7077, %v7077
      %7079 = vmatprep.subr.bf16.mxu0 %v2029
      %7080 = vmatpush1.bf16.msra.mxu0 %v2028
      %7081 = vmatprep.subr.bf16.mxu0 %v2033
      %7082 = vmatpush1.bf16.msra.mxu0 %v2032
      %7083 = vmatprep.subr.bf16.mxu0 %v2037
      %7084 = vmatpush1.bf16.msra.mxu0 %v2036
      %7085 = vmatprep.subr.bf16.mxu0 %v2041
      %7086 = vmatpush1.bf16.msra.mxu0 %v2040
      %7087 = vmatprep.subr.bf16.mxu0 %v2045
      %7088 = vmatpush1.bf16.msra.mxu0 %v2044
      %7089 = vmatprep.subr.bf16.mxu0 %v2049
      %7090 = vmatpush1.bf16.msra.mxu0 %v2048
      %7091 = vmatprep.subr.bf16.mxu0 %v2053
      %7092 = vmatpush1.bf16.msra.mxu0 %v2052
      %7093 = vmatprep.subr.bf16.mxu0 %v2057
      %7094 = vmatpush1.bf16.msra.mxu0 %v2056
      %7095 = vmatprep.subr.bf16.mxu0 0
      %7096 = vmatpush1.bf16.msra.mxu0 0
      %7097 = vmatprep.subr.bf16.mxu0 0
      %7098 = vmatpush1.bf16.msra.mxu0 0
      %7099 = vmatprep.subr.bf16.mxu0 0
      %7100 = vmatpush1.bf16.msra.mxu0 0
      %7101 = vmatprep.subr.bf16.mxu0 0
      %7102 = vmatpush1.bf16.msra.mxu0 0
      %7103 = vmatprep.subr.bf16.mxu0 0
      %7104 = vmatpush1.bf16.msra.mxu0 0
      %7105 = vmatprep.subr.bf16.mxu0 0
      %7106 = vmatpush1.bf16.msra.mxu0 0
      %7107 = vmatprep.subr.bf16.mxu0 0
      %7108 = vmatpush1.bf16.msra.mxu0 0
      %7109 = vmatprep.subr.bf16.mxu0 0
      %7110 = vmatpush1.bf16.msra.mxu0 0
      %7111 = vmatprep.mubr.bf16.mxu0 0
      %7112 = vmatmul.mubr.bf16.gmra.mrb[0].mxu0 %v7078
      %v7113 = vpop.f32.mrb[0].mxu0
      %v7114 = vadd.f32 0.0, %v7113
      %v7115 = vpop.f32.mrb[0].mxu0
      %v7116 = vadd.f32 0.0, %v7115
      %v7117 = vpop.f32.mrb[0].mxu0
      %v7118 = vpop.f32.mrb[0].mxu0
      %7119 = vdwg.mxu0
      %7120 = vmatprep.subr.bf16.mxu0 %v2031
      %7121 = vmatpush1.bf16.msra.mxu0 %v2030
      %7122 = vmatprep.subr.bf16.mxu0 %v2035
      %7123 = vmatpush1.bf16.msra.mxu0 %v2034
      %7124 = vmatprep.subr.bf16.mxu0 %v2039
      %7125 = vmatpush1.bf16.msra.mxu0 %v2038
      %7126 = vmatprep.subr.bf16.mxu0 %v2043
      %7127 = vmatpush1.bf16.msra.mxu0 %v2042
      %7128 = vmatprep.subr.bf16.mxu0 %v2047
      %7129 = vmatpush1.bf16.msra.mxu0 %v2046
      %7130 = vmatprep.subr.bf16.mxu0 %v2051
      %7131 = vmatpush1.bf16.msra.mxu0 %v2050
      %7132 = vmatprep.subr.bf16.mxu0 %v2055
      %7133 = vmatpush1.bf16.msra.mxu0 %v2054
      %7134 = vmatprep.subr.bf16.mxu0 %v2059
      %7135 = vmatpush1.bf16.msra.mxu0 %v2058
      %7136 = vmatprep.subr.bf16.mxu0 0
      %7137 = vmatpush1.bf16.msra.mxu0 0
      %7138 = vmatprep.subr.bf16.mxu0 0
      %7139 = vmatpush1.bf16.msra.mxu0 0
      %7140 = vmatprep.subr.bf16.mxu0 0
      %7141 = vmatpush1.bf16.msra.mxu0 0
      %7142 = vmatprep.subr.bf16.mxu0 0
      %7143 = vmatpush1.bf16.msra.mxu0 0
      %7144 = vmatprep.subr.bf16.mxu0 0
      %7145 = vmatpush1.bf16.msra.mxu0 0
      %7146 = vmatprep.subr.bf16.mxu0 0
      %7147 = vmatpush1.bf16.msra.mxu0 0
      %7148 = vmatprep.subr.bf16.mxu0 0
      %7149 = vmatpush1.bf16.msra.mxu0 0
      %7150 = vmatprep.subr.bf16.mxu0 0
      %7151 = vmatpush1.bf16.msra.mxu0 0
      %7152 = vmatprep.mubr.bf16.mxu0 0
      %7153 = vmatmul.mubr.bf16.gmra.mrb[0].mxu0 %v7078
      %v7154 = vpop.f32.mrb[0].mxu0
      %v7155 = vadd.f32 0.0, %v7154
      %v7156 = vpop.f32.mrb[0].mxu0
      %v7157 = vadd.f32 0.0, %v7156
      %v7158 = vpop.f32.mrb[0].mxu0
      %v7159 = vpop.f32.mrb[0].mxu0
      %7160 = vdwg.mxu0
      %7161 = vmatprep.subr.bf16.mxu0 %v2880
      %7162 = vmatpush1.bf16.msra.mxu0 %v2879
      %7163 = vmatprep.subr.bf16.mxu0 %v2884
      %7164 = vmatpush1.bf16.msra.mxu0 %v2883
      %7165 = vmatprep.subr.bf16.mxu0 %v2888
      %7166 = vmatpush1.bf16.msra.mxu0 %v2887
      %7167 = vmatprep.subr.bf16.mxu0 %v2892
      %7168 = vmatpush1.bf16.msra.mxu0 %v2891
      %7169 = vmatprep.subr.bf16.mxu0 %v2896
      %7170 = vmatpush1.bf16.msra.mxu0 %v2895
      %7171 = vmatprep.subr.bf16.mxu0 %v2900
      %7172 = vmatpush1.bf16.msra.mxu0 %v2899
      %7173 = vmatprep.subr.bf16.mxu0 %v2904
      %7174 = vmatpush1.bf16.msra.mxu0 %v2903
      %7175 = vmatprep.subr.bf16.mxu0 %v2908
      %7176 = vmatpush1.bf16.msra.mxu0 %v2907
      %7177 = vmatprep.subr.bf16.mxu0 0
      %7178 = vmatpush1.bf16.msra.mxu0 0
      %7179 = vmatprep.subr.bf16.mxu0 0
      %7180 = vmatpush1.bf16.msra.mxu0 0
      %7181 = vmatprep.subr.bf16.mxu0 0
      %7182 = vmatpush1.bf16.msra.mxu0 0
      %7183 = vmatprep.subr.bf16.mxu0 0
      %7184 = vmatpush1.bf16.msra.mxu0 0
      %7185 = vmatprep.subr.bf16.mxu0 0
      %7186 = vmatpush1.bf16.msra.mxu0 0
      %7187 = vmatprep.subr.bf16.mxu0 0
      %7188 = vmatpush1.bf16.msra.mxu0 0
      %7189 = vmatprep.subr.bf16.mxu0 0
      %7190 = vmatpush1.bf16.msra.mxu0 0
      %7191 = vmatprep.subr.bf16.mxu0 0
      %7192 = vmatpush1.bf16.msra.mxu0 0
      %7193 = vmatprep.mubr.bf16.mxu0 0
      %7194 = vmatmul.mubr.bf16.gmra.mrb[0].mxu0 %v7078
      %v7195 = vpop.f32.mrb[0].mxu0
      %v7196 = vadd.f32 %v6885, %v7195
      %v7197 = vpop.f32.mrb[0].mxu0
      %v7198 = vadd.f32 %v6887, %v7197
      %v7199 = vpop.f32.mrb[0].mxu0
      %v7200 = vpop.f32.mrb[0].mxu0
      %7201 = vdwg.mxu0
      %7202 = vmatprep.subr.bf16.mxu0 %v2882
      %7203 = vmatpush1.bf16.msra.mxu0 %v2881
      %7204 = vmatprep.subr.bf16.mxu0 %v2886
      %7205 = vmatpush1.bf16.msra.mxu0 %v2885
      %7206 = vmatprep.subr.bf16.mxu0 %v2890
      %7207 = vmatpush1.bf16.msra.mxu0 %v2889
      %7208 = vmatprep.subr.bf16.mxu0 %v2894
      %7209 = vmatpush1.bf16.msra.mxu0 %v2893
      %7210 = vmatprep.subr.bf16.mxu0 %v2898
      %7211 = vmatpush1.bf16.msra.mxu0 %v2897
      %7212 = vmatprep.subr.bf16.mxu0 %v2902
      %7213 = vmatpush1.bf16.msra.mxu0 %v2901
      %7214 = vmatprep.subr.bf16.mxu0 %v2906
      %7215 = vmatpush1.bf16.msra.mxu0 %v2905
      %7216 = vmatprep.subr.bf16.mxu0 %v2910
      %7217 = vmatpush1.bf16.msra.mxu0 %v2909
      %7218 = vmatprep.subr.bf16.mxu0 0
      %7219 = vmatpush1.bf16.msra.mxu0 0
      %7220 = vmatprep.subr.bf16.mxu0 0
      %7221 = vmatpush1.bf16.msra.mxu0 0
      %7222 = vmatprep.subr.bf16.mxu0 0
      %7223 = vmatpush1.bf16.msra.mxu0 0
      %7224 = vmatprep.subr.bf16.mxu0 0
      %7225 = vmatpush1.bf16.msra.mxu0 0
      %7226 = vmatprep.subr.bf16.mxu0 0
      %7227 = vmatpush1.bf16.msra.mxu0 0
      %7228 = vmatprep.subr.bf16.mxu0 0
      %7229 = vmatpush1.bf16.msra.mxu0 0
      %7230 = vmatprep.subr.bf16.mxu0 0
      %7231 = vmatpush1.bf16.msra.mxu0 0
      %7232 = vmatprep.subr.bf16.mxu0 0
      %7233 = vmatpush1.bf16.msra.mxu0 0
      %7234 = vmatprep.mubr.bf16.mxu0 0
      %7235 = vmatmul.mubr.bf16.gmra.mrb[0].mxu0 %v7078
      %v7236 = vpop.f32.mrb[0].mxu0
      %v7237 = vadd.f32 %v6926, %v7236
      %v7238 = vpop.f32.mrb[0].mxu0
      %v7239 = vadd.f32 %v6928, %v7238
      %v7240 = vpop.f32.mrb[0].mxu0
      %v7241 = vpop.f32.mrb[0].mxu0
      %7242 = vdwg.mxu0
      %v7243 = vadd.f32 %v7196, %v3029
      %v7244 = vadd.f32 %v7198, %v3033
      %v7245 = vadd.f32 %v7237, %v3037
      %v7246 = vadd.f32 %v7239, %v3041
      %v7247 = vtanh.pop %v7243
      %v7248 = vmul.f32 %v7247, 0.5
      %v7249 = vadd.f32 %v7248, 0.5
      %v7250 = vtanh.pop %v7244
      %v7251 = vmul.f32 %v7250, 0.5
      %v7252 = vadd.f32 %v7251, 0.5
      %v7253 = vtanh.pop %v7245
      %v7254 = vtanh.pop %v7246
      %v7255 = vmul.f32 %v7254, 0.5
      %v7256 = vadd.f32 %v7255, 0.5
      %v7257 = vmul.f32 %v7252, %v6846
      %v7258 = vmul.f32 %v7249, %v7253
      %v7259 = vadd.f32 %v7257, %v7258
      %v7260 = vtanh.pop %v7259
      %v7261 = vmul.f32 %v7256, %v7260
      %v7262 = vpack.c.bf16 %v7261, %v7261
      %7263 = vmatprep.subr.bf16.mxu0 %v2272
      %7264 = vmatpush1.bf16.msra.mxu0 %v2271
      %7265 = vmatprep.subr.bf16.mxu0 %v2276
      %7266 = vmatpush1.bf16.msra.mxu0 %v2275
      %7267 = vmatprep.subr.bf16.mxu0 %v2280
      %7268 = vmatpush1.bf16.msra.mxu0 %v2279
      %7269 = vmatprep.subr.bf16.mxu0 %v2284
      %7270 = vmatpush1.bf16.msra.mxu0 %v2283
      %7271 = vmatprep.subr.bf16.mxu0 %v2288
      %7272 = vmatpush1.bf16.msra.mxu0 %v2287
      %7273 = vmatprep.subr.bf16.mxu0 %v2292
      %7274 = vmatpush1.bf16.msra.mxu0 %v2291
      %7275 = vmatprep.subr.bf16.mxu0 %v2296
      %7276 = vmatpush1.bf16.msra.mxu0 %v2295
      %7277 = vmatprep.subr.bf16.mxu0 %v2300
      %7278 = vmatpush1.bf16.msra.mxu0 %v2299
      %7279 = vmatprep.subr.bf16.mxu0 0
      %7280 = vmatpush1.bf16.msra.mxu0 0
      %7281 = vmatprep.subr.bf16.mxu0 0
      %7282 = vmatpush1.bf16.msra.mxu0 0
      %7283 = vmatprep.subr.bf16.mxu0 0
      %7284 = vmatpush1.bf16.msra.mxu0 0
      %7285 = vmatprep.subr.bf16.mxu0 0
      %7286 = vmatpush1.bf16.msra.mxu0 0
      %7287 = vmatprep.subr.bf16.mxu0 0
      %7288 = vmatpush1.bf16.msra.mxu0 0
      %7289 = vmatprep.subr.bf16.mxu0 0
      %7290 = vmatpush1.bf16.msra.mxu0 0
      %7291 = vmatprep.subr.bf16.mxu0 0
      %7292 = vmatpush1.bf16.msra.mxu0 0
      %7293 = vmatprep.subr.bf16.mxu0 0
      %7294 = vmatpush1.bf16.msra.mxu0 0
      %7295 = vmatprep.mubr.bf16.mxu0 0
      %7296 = vmatmul.mubr.bf16.gmra.mrb[0].mxu0 %v7262
      %v7297 = vpop.f32.mrb[0].mxu0
      %v7298 = vadd.f32 0.0, %v7297
      %v7299 = vpop.f32.mrb[0].mxu0
      %v7300 = vadd.f32 0.0, %v7299
      %v7301 = vpop.f32.mrb[0].mxu0
      %v7302 = vpop.f32.mrb[0].mxu0
      %7303 = vdwg.mxu0
      %7304 = vmatprep.subr.bf16.mxu0 %v2274
      %7305 = vmatpush1.bf16.msra.mxu0 %v2273
      %7306 = vmatprep.subr.bf16.mxu0 %v2278
      %7307 = vmatpush1.bf16.msra.mxu0 %v2277
      %7308 = vmatprep.subr.bf16.mxu0 %v2282
      %7309 = vmatpush1.bf16.msra.mxu0 %v2281
      %7310 = vmatprep.subr.bf16.mxu0 %v2286
      %7311 = vmatpush1.bf16.msra.mxu0 %v2285
      %7312 = vmatprep.subr.bf16.mxu0 %v2290
      %7313 = vmatpush1.bf16.msra.mxu0 %v2289
      %7314 = vmatprep.subr.bf16.mxu0 %v2294
      %7315 = vmatpush1.bf16.msra.mxu0 %v2293
      %7316 = vmatprep.subr.bf16.mxu0 %v2298
      %7317 = vmatpush1.bf16.msra.mxu0 %v2297
      %7318 = vmatprep.subr.bf16.mxu0 %v2302
      %7319 = vmatpush1.bf16.msra.mxu0 %v2301
      %7320 = vmatprep.subr.bf16.mxu0 0
      %7321 = vmatpush1.bf16.msra.mxu0 0
      %7322 = vmatprep.subr.bf16.mxu0 0
      %7323 = vmatpush1.bf16.msra.mxu0 0
      %7324 = vmatprep.subr.bf16.mxu0 0
      %7325 = vmatpush1.bf16.msra.mxu0 0
      %7326 = vmatprep.subr.bf16.mxu0 0
      %7327 = vmatpush1.bf16.msra.mxu0 0
      %7328 = vmatprep.subr.bf16.mxu0 0
      %7329 = vmatpush1.bf16.msra.mxu0 0
      %7330 = vmatprep.subr.bf16.mxu0 0
      %7331 = vmatpush1.bf16.msra.mxu0 0
      %7332 = vmatprep.subr.bf16.mxu0 0
      %7333 = vmatpush1.bf16.msra.mxu0 0
      %7334 = vmatprep.subr.bf16.mxu0 0
      %7335 = vmatpush1.bf16.msra.mxu0 0
      %7336 = vmatprep.mubr.bf16.mxu0 0
      %7337 = vmatmul.mubr.bf16.gmra.mrb[0].mxu0 %v7262
      %v7338 = vpop.f32.mrb[0].mxu0
      %v7339 = vadd.f32 0.0, %v7338
      %v7340 = vpop.f32.mrb[0].mxu0
      %v7341 = vadd.f32 0.0, %v7340
      %v7342 = vpop.f32.mrb[0].mxu0
      %v7343 = vpop.f32.mrb[0].mxu0
      %7344 = vdwg.mxu0
      %7345 = vmatprep.subr.bf16.mxu0 0
      %7346 = vmatpush1.bf16.msra.mxu0 %v3180
      %7347 = vmatprep.subr.bf16.mxu0 0
      %7348 = vmatpush1.bf16.msra.mxu0 %v3181
      %7349 = vmatprep.subr.bf16.mxu0 0
      %7350 = vmatpush1.bf16.msra.mxu0 %v3182
      %7351 = vmatprep.subr.bf16.mxu0 0
      %7352 = vmatpush1.bf16.msra.mxu0 %v3183
      %7353 = vmatprep.subr.bf16.mxu0 0
      %7354 = vmatpush1.bf16.msra.mxu0 %v3184
      %7355 = vmatprep.subr.bf16.mxu0 0
      %7356 = vmatpush1.bf16.msra.mxu0 %v3185
      %7357 = vmatprep.subr.bf16.mxu0 0
      %7358 = vmatpush1.bf16.msra.mxu0 %v3186
      %7359 = vmatprep.subr.bf16.mxu0 0
      %7360 = vmatpush1.bf16.msra.mxu0 %v3187
      %7361 = vmatprep.subr.bf16.mxu0 0
      %7362 = vmatpush1.bf16.msra.mxu0 0
      %7363 = vmatprep.subr.bf16.mxu0 0
      %7364 = vmatpush1.bf16.msra.mxu0 0
      %7365 = vmatprep.subr.bf16.mxu0 0
      %7366 = vmatpush1.bf16.msra.mxu0 0
      %7367 = vmatprep.subr.bf16.mxu0 0
      %7368 = vmatpush1.bf16.msra.mxu0 0
      %7369 = vmatprep.subr.bf16.mxu0 0
      %7370 = vmatpush1.bf16.msra.mxu0 0
      %7371 = vmatprep.subr.bf16.mxu0 0
      %7372 = vmatpush1.bf16.msra.mxu0 0
      %7373 = vmatprep.subr.bf16.mxu0 0
      %7374 = vmatpush1.bf16.msra.mxu0 0
      %7375 = vmatprep.subr.bf16.mxu0 0
      %7376 = vmatpush1.bf16.msra.mxu0 0
      %7377 = vmatprep.mubr.bf16.mxu0 0
      %7378 = vmatmul.mubr.bf16.gmra.mrb[0].mxu0 %v7262
      %v7379 = vpop.f32.mrb[0].mxu0
      %v7380 = vadd.f32 %v454, %v7379
      %v7381 = vpop.f32.mrb[0].mxu0
      %v7382 = vpop.f32.mrb[0].mxu0
      %v7383 = vpop.f32.mrb[0].mxu0
      %7384 = vdwg.mxu0
      %v7385 = vtanh.pop %v7380
      %v7386 = vmul.f32 %v7385, 0.5
      %v7387 = vadd.f32 %v7386, 0.5
      %7388 = vst [vmem:[#allocation2 + $0x3] sm:$0x1] %v7387
      %v7389 = vpack.c.bf16 %v7387, %v7387
      %7390 = vmatprep.subr.bf16.mxu0 %v2515
      %7391 = vmatpush1.bf16.msra.mxu0 %v2514
      %7392 = vmatprep.subr.bf16.mxu0 %v2519
      %7393 = vmatpush1.bf16.msra.mxu0 %v2518
      %7394 = vmatprep.subr.bf16.mxu0 %v2523
      %7395 = vmatpush1.bf16.msra.mxu0 %v2522
      %7396 = vmatprep.subr.bf16.mxu0 %v2527
      %7397 = vmatpush1.bf16.msra.mxu0 %v2526
      %7398 = vmatprep.subr.bf16.mxu0 %v2531
      %7399 = vmatpush1.bf16.msra.mxu0 %v2530
      %7400 = vmatprep.subr.bf16.mxu0 %v2535
      %7401 = vmatpush1.bf16.msra.mxu0 %v2534
      %7402 = vmatprep.subr.bf16.mxu0 %v2539
      %7403 = vmatpush1.bf16.msra.mxu0 %v2538
      %7404 = vmatprep.subr.bf16.mxu0 %v2543
      %7405 = vmatpush1.bf16.msra.mxu0 %v2542
      %7406 = vmatprep.subr.bf16.mxu0 0
      %7407 = vmatpush1.bf16.msra.mxu0 0
      %7408 = vmatprep.subr.bf16.mxu0 0
      %7409 = vmatpush1.bf16.msra.mxu0 0
      %7410 = vmatprep.subr.bf16.mxu0 0
      %7411 = vmatpush1.bf16.msra.mxu0 0
      %7412 = vmatprep.subr.bf16.mxu0 0
      %7413 = vmatpush1.bf16.msra.mxu0 0
      %7414 = vmatprep.subr.bf16.mxu0 0
      %7415 = vmatpush1.bf16.msra.mxu0 0
      %7416 = vmatprep.subr.bf16.mxu0 0
      %7417 = vmatpush1.bf16.msra.mxu0 0
      %7418 = vmatprep.subr.bf16.mxu0 0
      %7419 = vmatpush1.bf16.msra.mxu0 0
      %7420 = vmatprep.subr.bf16.mxu0 0
      %7421 = vmatpush1.bf16.msra.mxu0 0
      %7422 = vmatprep.mubr.bf16.mxu0 0
      %7423 = vmatmul.mubr.bf16.gmra.mrb[0].mxu0 %v7389
      %v7424 = vpop.f32.mrb[0].mxu0
      %v7425 = vadd.f32 %v7114, %v7424
      %v7426 = vpop.f32.mrb[0].mxu0
      %v7427 = vadd.f32 %v7116, %v7426
      %v7428 = vpop.f32.mrb[0].mxu0
      %v7429 = vpop.f32.mrb[0].mxu0
      %7430 = vdwg.mxu0
      %7431 = vmatprep.subr.bf16.mxu0 %v2517
      %7432 = vmatpush1.bf16.msra.mxu0 %v2516
      %7433 = vmatprep.subr.bf16.mxu0 %v2521
      %7434 = vmatpush1.bf16.msra.mxu0 %v2520
      %7435 = vmatprep.subr.bf16.mxu0 %v2525
      %7436 = vmatpush1.bf16.msra.mxu0 %v2524
      %7437 = vmatprep.subr.bf16.mxu0 %v2529
      %7438 = vmatpush1.bf16.msra.mxu0 %v2528
      %7439 = vmatprep.subr.bf16.mxu0 %v2533
      %7440 = vmatpush1.bf16.msra.mxu0 %v2532
      %7441 = vmatprep.subr.bf16.mxu0 %v2537
      %7442 = vmatpush1.bf16.msra.mxu0 %v2536
      %7443 = vmatprep.subr.bf16.mxu0 %v2541
      %7444 = vmatpush1.bf16.msra.mxu0 %v2540
      %7445 = vmatprep.subr.bf16.mxu0 %v2545
      %7446 = vmatpush1.bf16.msra.mxu0 %v2544
      %7447 = vmatprep.subr.bf16.mxu0 0
      %7448 = vmatpush1.bf16.msra.mxu0 0
      %7449 = vmatprep.subr.bf16.mxu0 0
      %7450 = vmatpush1.bf16.msra.mxu0 0
      %7451 = vmatprep.subr.bf16.mxu0 0
      %7452 = vmatpush1.bf16.msra.mxu0 0
      %7453 = vmatprep.subr.bf16.mxu0 0
      %7454 = vmatpush1.bf16.msra.mxu0 0
      %7455 = vmatprep.subr.bf16.mxu0 0
      %7456 = vmatpush1.bf16.msra.mxu0 0
      %7457 = vmatprep.subr.bf16.mxu0 0
      %7458 = vmatpush1.bf16.msra.mxu0 0
      %7459 = vmatprep.subr.bf16.mxu0 0
      %7460 = vmatpush1.bf16.msra.mxu0 0
      %7461 = vmatprep.subr.bf16.mxu0 0
      %7462 = vmatpush1.bf16.msra.mxu0 0
      %7463 = vmatprep.mubr.bf16.mxu0 0
      %7464 = vmatmul.mubr.bf16.gmra.mrb[0].mxu0 %v7389
      %v7465 = vpop.f32.mrb[0].mxu0
      %v7466 = vadd.f32 %v7155, %v7465
      %v7467 = vpop.f32.mrb[0].mxu0
      %v7468 = vadd.f32 %v7157, %v7467
      %v7469 = vpop.f32.mrb[0].mxu0
      %v7470 = vpop.f32.mrb[0].mxu0
      %7471 = vdwg.mxu0
      %v7472 = vadd.f32 %v7425, %v2664
      %v7473 = vadd.f32 %v7427, %v2668
      %v7474 = vadd.f32 %v7466, %v2672
      %v7475 = vadd.f32 %v7468, %v2676
      %v7476 = vtanh.pop %v7472
      %v7477 = vmul.f32 %v7476, 0.5
      %v7478 = vadd.f32 %v7477, 0.5
      %v7479 = vtanh.pop %v7473
      %v7480 = vmul.f32 %v7479, 0.5
      %v7481 = vadd.f32 %v7480, 0.5
      %v7482 = vtanh.pop %v7474
      %v7483 = vtanh.pop %v7475
      %v7484 = vmul.f32 %v7483, 0.5
      %v7485 = vadd.f32 %v7484, 0.5
      %v7486 = vmul.f32 %v7481, %v7075
      %v7487 = vmul.f32 %v7478, %v7482
      %v7488 = vadd.f32 %v7486, %v7487
      %v7489 = vtanh.pop %v7488
      %v7490 = vmul.f32 %v7485, %v7489
      %v7491 = vpack.c.bf16 %v7490, %v7490
      %7492 = vmatprep.subr.bf16.mxu0 %v2029
      %7493 = vmatpush1.bf16.msra.mxu0 %v2028
      %7494 = vmatprep.subr.bf16.mxu0 %v2033
      %7495 = vmatpush1.bf16.msra.mxu0 %v2032
      %7496 = vmatprep.subr.bf16.mxu0 %v2037
      %7497 = vmatpush1.bf16.msra.mxu0 %v2036
      %7498 = vmatprep.subr.bf16.mxu0 %v2041
      %7499 = vmatpush1.bf16.msra.mxu0 %v2040
      %7500 = vmatprep.subr.bf16.mxu0 %v2045
      %7501 = vmatpush1.bf16.msra.mxu0 %v2044
      %7502 = vmatprep.subr.bf16.mxu0 %v2049
      %7503 = vmatpush1.bf16.msra.mxu0 %v2048
      %7504 = vmatprep.subr.bf16.mxu0 %v2053
      %7505 = vmatpush1.bf16.msra.mxu0 %v2052
      %7506 = vmatprep.subr.bf16.mxu0 %v2057
      %7507 = vmatpush1.bf16.msra.mxu0 %v2056
      %7508 = vmatprep.subr.bf16.mxu0 0
      %7509 = vmatpush1.bf16.msra.mxu0 0
      %7510 = vmatprep.subr.bf16.mxu0 0
      %7511 = vmatpush1.bf16.msra.mxu0 0
      %7512 = vmatprep.subr.bf16.mxu0 0
      %7513 = vmatpush1.bf16.msra.mxu0 0
      %7514 = vmatprep.subr.bf16.mxu0 0
      %7515 = vmatpush1.bf16.msra.mxu0 0
      %7516 = vmatprep.subr.bf16.mxu0 0
      %7517 = vmatpush1.bf16.msra.mxu0 0
      %7518 = vmatprep.subr.bf16.mxu0 0
      %7519 = vmatpush1.bf16.msra.mxu0 0
      %7520 = vmatprep.subr.bf16.mxu0 0
      %7521 = vmatpush1.bf16.msra.mxu0 0
      %7522 = vmatprep.subr.bf16.mxu0 0
      %7523 = vmatpush1.bf16.msra.mxu0 0
      %7524 = vmatprep.mubr.bf16.mxu0 0
      %7525 = vmatmul.mubr.bf16.gmra.mrb[0].mxu0 %v7491
      %v7526 = vpop.f32.mrb[0].mxu0
      %v7527 = vadd.f32 0.0, %v7526
      %v7528 = vpop.f32.mrb[0].mxu0
      %v7529 = vadd.f32 0.0, %v7528
      %v7530 = vpop.f32.mrb[0].mxu0
      %v7531 = vpop.f32.mrb[0].mxu0
      %7532 = vdwg.mxu0
      %7533 = vmatprep.subr.bf16.mxu0 %v2031
      %7534 = vmatpush1.bf16.msra.mxu0 %v2030
      %7535 = vmatprep.subr.bf16.mxu0 %v2035
      %7536 = vmatpush1.bf16.msra.mxu0 %v2034
      %7537 = vmatprep.subr.bf16.mxu0 %v2039
      %7538 = vmatpush1.bf16.msra.mxu0 %v2038
      %7539 = vmatprep.subr.bf16.mxu0 %v2043
      %7540 = vmatpush1.bf16.msra.mxu0 %v2042
      %7541 = vmatprep.subr.bf16.mxu0 %v2047
      %7542 = vmatpush1.bf16.msra.mxu0 %v2046
      %7543 = vmatprep.subr.bf16.mxu0 %v2051
      %7544 = vmatpush1.bf16.msra.mxu0 %v2050
      %7545 = vmatprep.subr.bf16.mxu0 %v2055
      %7546 = vmatpush1.bf16.msra.mxu0 %v2054
      %7547 = vmatprep.subr.bf16.mxu0 %v2059
      %7548 = vmatpush1.bf16.msra.mxu0 %v2058
      %7549 = vmatprep.subr.bf16.mxu0 0
      %7550 = vmatpush1.bf16.msra.mxu0 0
      %7551 = vmatprep.subr.bf16.mxu0 0
      %7552 = vmatpush1.bf16.msra.mxu0 0
      %7553 = vmatprep.subr.bf16.mxu0 0
      %7554 = vmatpush1.bf16.msra.mxu0 0
      %7555 = vmatprep.subr.bf16.mxu0 0
      %7556 = vmatpush1.bf16.msra.mxu0 0
      %7557 = vmatprep.subr.bf16.mxu0 0
      %7558 = vmatpush1.bf16.msra.mxu0 0
      %7559 = vmatprep.subr.bf16.mxu0 0
      %7560 = vmatpush1.bf16.msra.mxu0 0
      %7561 = vmatprep.subr.bf16.mxu0 0
      %7562 = vmatpush1.bf16.msra.mxu0 0
      %7563 = vmatprep.subr.bf16.mxu0 0
      %7564 = vmatpush1.bf16.msra.mxu0 0
      %7565 = vmatprep.mubr.bf16.mxu0 0
      %7566 = vmatmul.mubr.bf16.gmra.mrb[0].mxu0 %v7491
      %v7567 = vpop.f32.mrb[0].mxu0
      %v7568 = vadd.f32 0.0, %v7567
      %v7569 = vpop.f32.mrb[0].mxu0
      %v7570 = vadd.f32 0.0, %v7569
      %v7571 = vpop.f32.mrb[0].mxu0
      %v7572 = vpop.f32.mrb[0].mxu0
      %7573 = vdwg.mxu0
      %7574 = vmatprep.subr.bf16.mxu0 %v2880
      %7575 = vmatpush1.bf16.msra.mxu0 %v2879
      %7576 = vmatprep.subr.bf16.mxu0 %v2884
      %7577 = vmatpush1.bf16.msra.mxu0 %v2883
      %7578 = vmatprep.subr.bf16.mxu0 %v2888
      %7579 = vmatpush1.bf16.msra.mxu0 %v2887
      %7580 = vmatprep.subr.bf16.mxu0 %v2892
      %7581 = vmatpush1.bf16.msra.mxu0 %v2891
      %7582 = vmatprep.subr.bf16.mxu0 %v2896
      %7583 = vmatpush1.bf16.msra.mxu0 %v2895
      %7584 = vmatprep.subr.bf16.mxu0 %v2900
      %7585 = vmatpush1.bf16.msra.mxu0 %v2899
      %7586 = vmatprep.subr.bf16.mxu0 %v2904
      %7587 = vmatpush1.bf16.msra.mxu0 %v2903
      %7588 = vmatprep.subr.bf16.mxu0 %v2908
      %7589 = vmatpush1.bf16.msra.mxu0 %v2907
      %7590 = vmatprep.subr.bf16.mxu0 0
      %7591 = vmatpush1.bf16.msra.mxu0 0
      %7592 = vmatprep.subr.bf16.mxu0 0
      %7593 = vmatpush1.bf16.msra.mxu0 0
      %7594 = vmatprep.subr.bf16.mxu0 0
      %7595 = vmatpush1.bf16.msra.mxu0 0
      %7596 = vmatprep.subr.bf16.mxu0 0
      %7597 = vmatpush1.bf16.msra.mxu0 0
      %7598 = vmatprep.subr.bf16.mxu0 0
      %7599 = vmatpush1.bf16.msra.mxu0 0
      %7600 = vmatprep.subr.bf16.mxu0 0
      %7601 = vmatpush1.bf16.msra.mxu0 0
      %7602 = vmatprep.subr.bf16.mxu0 0
      %7603 = vmatpush1.bf16.msra.mxu0 0
      %7604 = vmatprep.subr.bf16.mxu0 0
      %7605 = vmatpush1.bf16.msra.mxu0 0
      %7606 = vmatprep.mubr.bf16.mxu0 0
      %7607 = vmatmul.mubr.bf16.gmra.mrb[0].mxu0 %v7491
      %v7608 = vpop.f32.mrb[0].mxu0
      %v7609 = vadd.f32 %v7298, %v7608
      %v7610 = vpop.f32.mrb[0].mxu0
      %v7611 = vadd.f32 %v7300, %v7610
      %v7612 = vpop.f32.mrb[0].mxu0
      %v7613 = vpop.f32.mrb[0].mxu0
      %7614 = vdwg.mxu0
      %7615 = vmatprep.subr.bf16.mxu0 %v2882
      %7616 = vmatpush1.bf16.msra.mxu0 %v2881
      %7617 = vmatprep.subr.bf16.mxu0 %v2886
      %7618 = vmatpush1.bf16.msra.mxu0 %v2885
      %7619 = vmatprep.subr.bf16.mxu0 %v2890
      %7620 = vmatpush1.bf16.msra.mxu0 %v2889
      %7621 = vmatprep.subr.bf16.mxu0 %v2894
      %7622 = vmatpush1.bf16.msra.mxu0 %v2893
      %7623 = vmatprep.subr.bf16.mxu0 %v2898
      %7624 = vmatpush1.bf16.msra.mxu0 %v2897
      %7625 = vmatprep.subr.bf16.mxu0 %v2902
      %7626 = vmatpush1.bf16.msra.mxu0 %v2901
      %7627 = vmatprep.subr.bf16.mxu0 %v2906
      %7628 = vmatpush1.bf16.msra.mxu0 %v2905
      %7629 = vmatprep.subr.bf16.mxu0 %v2910
      %7630 = vmatpush1.bf16.msra.mxu0 %v2909
      %7631 = vmatprep.subr.bf16.mxu0 0
      %7632 = vmatpush1.bf16.msra.mxu0 0
      %7633 = vmatprep.subr.bf16.mxu0 0
      %7634 = vmatpush1.bf16.msra.mxu0 0
      %7635 = vmatprep.subr.bf16.mxu0 0
      %7636 = vmatpush1.bf16.msra.mxu0 0
      %7637 = vmatprep.subr.bf16.mxu0 0
      %7638 = vmatpush1.bf16.msra.mxu0 0
      %7639 = vmatprep.subr.bf16.mxu0 0
      %7640 = vmatpush1.bf16.msra.mxu0 0
      %7641 = vmatprep.subr.bf16.mxu0 0
      %7642 = vmatpush1.bf16.msra.mxu0 0
      %7643 = vmatprep.subr.bf16.mxu0 0
      %7644 = vmatpush1.bf16.msra.mxu0 0
      %7645 = vmatprep.subr.bf16.mxu0 0
      %7646 = vmatpush1.bf16.msra.mxu0 0
      %7647 = vmatprep.mubr.bf16.mxu0 0
      %7648 = vmatmul.mubr.bf16.gmra.mrb[0].mxu0 %v7491
      %v7649 = vpop.f32.mrb[0].mxu0
      %v7650 = vadd.f32 %v7339, %v7649
      %v7651 = vpop.f32.mrb[0].mxu0
      %v7652 = vadd.f32 %v7341, %v7651
      %v7653 = vpop.f32.mrb[0].mxu0
      %v7654 = vpop.f32.mrb[0].mxu0
      %7655 = vdwg.mxu0
      %v7656 = vadd.f32 %v7609, %v3029
      %v7657 = vadd.f32 %v7611, %v3033
      %v7658 = vadd.f32 %v7650, %v3037
      %v7659 = vadd.f32 %v7652, %v3041
      %v7660 = vtanh.pop %v7656
      %v7661 = vmul.f32 %v7660, 0.5
      %v7662 = vadd.f32 %v7661, 0.5
      %v7663 = vtanh.pop %v7657
      %v7664 = vmul.f32 %v7663, 0.5
      %v7665 = vadd.f32 %v7664, 0.5
      %v7666 = vtanh.pop %v7658
      %v7667 = vtanh.pop %v7659
      %v7668 = vmul.f32 %v7667, 0.5
      %v7669 = vadd.f32 %v7668, 0.5
      %v7670 = vmul.f32 %v7665, %v7259
      %v7671 = vmul.f32 %v7662, %v7666
      %v7672 = vadd.f32 %v7670, %v7671
      %v7673 = vtanh.pop %v7672
      %v7674 = vmul.f32 %v7669, %v7673
      %v7675 = vpack.c.bf16 %v7674, %v7674
      %7676 = vmatprep.subr.bf16.mxu0 %v2272
      %7677 = vmatpush1.bf16.msra.mxu0 %v2271
      %7678 = vmatprep.subr.bf16.mxu0 %v2276
      %7679 = vmatpush1.bf16.msra.mxu0 %v2275
      %7680 = vmatprep.subr.bf16.mxu0 %v2280
      %7681 = vmatpush1.bf16.msra.mxu0 %v2279
      %7682 = vmatprep.subr.bf16.mxu0 %v2284
      %7683 = vmatpush1.bf16.msra.mxu0 %v2283
      %7684 = vmatprep.subr.bf16.mxu0 %v2288
      %7685 = vmatpush1.bf16.msra.mxu0 %v2287
      %7686 = vmatprep.subr.bf16.mxu0 %v2292
      %7687 = vmatpush1.bf16.msra.mxu0 %v2291
      %7688 = vmatprep.subr.bf16.mxu0 %v2296
      %7689 = vmatpush1.bf16.msra.mxu0 %v2295
      %7690 = vmatprep.subr.bf16.mxu0 %v2300
      %7691 = vmatpush1.bf16.msra.mxu0 %v2299
      %7692 = vmatprep.subr.bf16.mxu0 0
      %7693 = vmatpush1.bf16.msra.mxu0 0
      %7694 = vmatprep.subr.bf16.mxu0 0
      %7695 = vmatpush1.bf16.msra.mxu0 0
      %7696 = vmatprep.subr.bf16.mxu0 0
      %7697 = vmatpush1.bf16.msra.mxu0 0
      %7698 = vmatprep.subr.bf16.mxu0 0
      %7699 = vmatpush1.bf16.msra.mxu0 0
      %7700 = vmatprep.subr.bf16.mxu0 0
      %7701 = vmatpush1.bf16.msra.mxu0 0
      %7702 = vmatprep.subr.bf16.mxu0 0
      %7703 = vmatpush1.bf16.msra.mxu0 0
      %7704 = vmatprep.subr.bf16.mxu0 0
      %7705 = vmatpush1.bf16.msra.mxu0 0
      %7706 = vmatprep.subr.bf16.mxu0 0
      %7707 = vmatpush1.bf16.msra.mxu0 0
      %7708 = vmatprep.mubr.bf16.mxu0 0
      %7709 = vmatmul.mubr.bf16.gmra.mrb[0].mxu0 %v7675
      %v7710 = vpop.f32.mrb[0].mxu0
      %v7711 = vadd.f32 0.0, %v7710
      %v7712 = vpop.f32.mrb[0].mxu0
      %v7713 = vadd.f32 0.0, %v7712
      %v7714 = vpop.f32.mrb[0].mxu0
      %v7715 = vpop.f32.mrb[0].mxu0
      %7716 = vdwg.mxu0
      %7717 = vmatprep.subr.bf16.mxu0 %v2274
      %7718 = vmatpush1.bf16.msra.mxu0 %v2273
      %7719 = vmatprep.subr.bf16.mxu0 %v2278
      %7720 = vmatpush1.bf16.msra.mxu0 %v2277
      %7721 = vmatprep.subr.bf16.mxu0 %v2282
      %7722 = vmatpush1.bf16.msra.mxu0 %v2281
      %7723 = vmatprep.subr.bf16.mxu0 %v2286
      %7724 = vmatpush1.bf16.msra.mxu0 %v2285
      %7725 = vmatprep.subr.bf16.mxu0 %v2290
      %7726 = vmatpush1.bf16.msra.mxu0 %v2289
      %7727 = vmatprep.subr.bf16.mxu0 %v2294
      %7728 = vmatpush1.bf16.msra.mxu0 %v2293
      %7729 = vmatprep.subr.bf16.mxu0 %v2298
      %7730 = vmatpush1.bf16.msra.mxu0 %v2297
      %7731 = vmatprep.subr.bf16.mxu0 %v2302
      %7732 = vmatpush1.bf16.msra.mxu0 %v2301
      %7733 = vmatprep.subr.bf16.mxu0 0
      %7734 = vmatpush1.bf16.msra.mxu0 0
      %7735 = vmatprep.subr.bf16.mxu0 0
      %7736 = vmatpush1.bf16.msra.mxu0 0
      %7737 = vmatprep.subr.bf16.mxu0 0
      %7738 = vmatpush1.bf16.msra.mxu0 0
      %7739 = vmatprep.subr.bf16.mxu0 0
      %7740 = vmatpush1.bf16.msra.mxu0 0
      %7741 = vmatprep.subr.bf16.mxu0 0
      %7742 = vmatpush1.bf16.msra.mxu0 0
      %7743 = vmatprep.subr.bf16.mxu0 0
      %7744 = vmatpush1.bf16.msra.mxu0 0
      %7745 = vmatprep.subr.bf16.mxu0 0
      %7746 = vmatpush1.bf16.msra.mxu0 0
      %7747 = vmatprep.subr.bf16.mxu0 0
      %7748 = vmatpush1.bf16.msra.mxu0 0
      %7749 = vmatprep.mubr.bf16.mxu0 0
      %7750 = vmatmul.mubr.bf16.gmra.mrb[0].mxu0 %v7675
      %v7751 = vpop.f32.mrb[0].mxu0
      %v7752 = vadd.f32 0.0, %v7751
      %v7753 = vpop.f32.mrb[0].mxu0
      %v7754 = vadd.f32 0.0, %v7753
      %v7755 = vpop.f32.mrb[0].mxu0
      %v7756 = vpop.f32.mrb[0].mxu0
      %7757 = vdwg.mxu0
      %7758 = vmatprep.subr.bf16.mxu0 0
      %7759 = vmatpush1.bf16.msra.mxu0 %v3180
      %7760 = vmatprep.subr.bf16.mxu0 0
      %7761 = vmatpush1.bf16.msra.mxu0 %v3181
      %7762 = vmatprep.subr.bf16.mxu0 0
      %7763 = vmatpush1.bf16.msra.mxu0 %v3182
      %7764 = vmatprep.subr.bf16.mxu0 0
      %7765 = vmatpush1.bf16.msra.mxu0 %v3183
      %7766 = vmatprep.subr.bf16.mxu0 0
      %7767 = vmatpush1.bf16.msra.mxu0 %v3184
      %7768 = vmatprep.subr.bf16.mxu0 0
      %7769 = vmatpush1.bf16.msra.mxu0 %v3185
      %7770 = vmatprep.subr.bf16.mxu0 0
      %7771 = vmatpush1.bf16.msra.mxu0 %v3186
      %7772 = vmatprep.subr.bf16.mxu0 0
      %7773 = vmatpush1.bf16.msra.mxu0 %v3187
      %7774 = vmatprep.subr.bf16.mxu0 0
      %7775 = vmatpush1.bf16.msra.mxu0 0
      %7776 = vmatprep.subr.bf16.mxu0 0
      %7777 = vmatpush1.bf16.msra.mxu0 0
      %7778 = vmatprep.subr.bf16.mxu0 0
      %7779 = vmatpush1.bf16.msra.mxu0 0
      %7780 = vmatprep.subr.bf16.mxu0 0
      %7781 = vmatpush1.bf16.msra.mxu0 0
      %7782 = vmatprep.subr.bf16.mxu0 0
      %7783 = vmatpush1.bf16.msra.mxu0 0
      %7784 = vmatprep.subr.bf16.mxu0 0
      %7785 = vmatpush1.bf16.msra.mxu0 0
      %7786 = vmatprep.subr.bf16.mxu0 0
      %7787 = vmatpush1.bf16.msra.mxu0 0
      %7788 = vmatprep.subr.bf16.mxu0 0
      %7789 = vmatpush1.bf16.msra.mxu0 0
      %7790 = vmatprep.mubr.bf16.mxu0 0
      %7791 = vmatmul.mubr.bf16.gmra.mrb[0].mxu0 %v7675
      %v7792 = vpop.f32.mrb[0].mxu0
      %v7793 = vadd.f32 %v454, %v7792
      %v7794 = vpop.f32.mrb[0].mxu0
      %v7795 = vpop.f32.mrb[0].mxu0
      %v7796 = vpop.f32.mrb[0].mxu0
      %7797 = vdwg.mxu0
      %v7798 = vtanh.pop %v7793
      %v7799 = vmul.f32 %v7798, 0.5
      %v7800 = vadd.f32 %v7799, 0.5
      %7801 = vst [vmem:[#allocation2 + $0x4] sm:$0x1] %v7800
      %v7802 = vpack.c.bf16 %v7800, %v7800
      %7803 = vmatprep.subr.bf16.mxu0 %v2515
      %7804 = vmatpush1.bf16.msra.mxu0 %v2514
      %7805 = vmatprep.subr.bf16.mxu0 %v2519
      %7806 = vmatpush1.bf16.msra.mxu0 %v2518
      %7807 = vmatprep.subr.bf16.mxu0 %v2523
      %7808 = vmatpush1.bf16.msra.mxu0 %v2522
      %7809 = vmatprep.subr.bf16.mxu0 %v2527
      %7810 = vmatpush1.bf16.msra.mxu0 %v2526
      %7811 = vmatprep.subr.bf16.mxu0 %v2531
      %7812 = vmatpush1.bf16.msra.mxu0 %v2530
      %7813 = vmatprep.subr.bf16.mxu0 %v2535
      %7814 = vmatpush1.bf16.msra.mxu0 %v2534
      %7815 = vmatprep.subr.bf16.mxu0 %v2539
      %7816 = vmatpush1.bf16.msra.mxu0 %v2538
      %7817 = vmatprep.subr.bf16.mxu0 %v2543
      %7818 = vmatpush1.bf16.msra.mxu0 %v2542
      %7819 = vmatprep.subr.bf16.mxu0 0
      %7820 = vmatpush1.bf16.msra.mxu0 0
      %7821 = vmatprep.subr.bf16.mxu0 0
      %7822 = vmatpush1.bf16.msra.mxu0 0
      %7823 = vmatprep.subr.bf16.mxu0 0
      %7824 = vmatpush1.bf16.msra.mxu0 0
      %7825 = vmatprep.subr.bf16.mxu0 0
      %7826 = vmatpush1.bf16.msra.mxu0 0
      %7827 = vmatprep.subr.bf16.mxu0 0
      %7828 = vmatpush1.bf16.msra.mxu0 0
      %7829 = vmatprep.subr.bf16.mxu0 0
      %7830 = vmatpush1.bf16.msra.mxu0 0
      %7831 = vmatprep.subr.bf16.mxu0 0
      %7832 = vmatpush1.bf16.msra.mxu0 0
      %7833 = vmatprep.subr.bf16.mxu0 0
      %7834 = vmatpush1.bf16.msra.mxu0 0
      %7835 = vmatprep.mubr.bf16.mxu0 0
      %7836 = vmatmul.mubr.bf16.gmra.mrb[0].mxu0 %v7802
      %v7837 = vpop.f32.mrb[0].mxu0
      %v7838 = vadd.f32 %v7527, %v7837
      %v7839 = vpop.f32.mrb[0].mxu0
      %v7840 = vadd.f32 %v7529, %v7839
      %v7841 = vpop.f32.mrb[0].mxu0
      %v7842 = vpop.f32.mrb[0].mxu0
      %7843 = vdwg.mxu0
      %7844 = vmatprep.subr.bf16.mxu0 %v2517
      %7845 = vmatpush1.bf16.msra.mxu0 %v2516
      %7846 = vmatprep.subr.bf16.mxu0 %v2521
      %7847 = vmatpush1.bf16.msra.mxu0 %v2520
      %7848 = vmatprep.subr.bf16.mxu0 %v2525
      %7849 = vmatpush1.bf16.msra.mxu0 %v2524
      %7850 = vmatprep.subr.bf16.mxu0 %v2529
      %7851 = vmatpush1.bf16.msra.mxu0 %v2528
      %7852 = vmatprep.subr.bf16.mxu0 %v2533
      %7853 = vmatpush1.bf16.msra.mxu0 %v2532
      %7854 = vmatprep.subr.bf16.mxu0 %v2537
      %7855 = vmatpush1.bf16.msra.mxu0 %v2536
      %7856 = vmatprep.subr.bf16.mxu0 %v2541
      %7857 = vmatpush1.bf16.msra.mxu0 %v2540
      %7858 = vmatprep.subr.bf16.mxu0 %v2545
      %7859 = vmatpush1.bf16.msra.mxu0 %v2544
      %7860 = vmatprep.subr.bf16.mxu0 0
      %7861 = vmatpush1.bf16.msra.mxu0 0
      %7862 = vmatprep.subr.bf16.mxu0 0
      %7863 = vmatpush1.bf16.msra.mxu0 0
      %7864 = vmatprep.subr.bf16.mxu0 0
      %7865 = vmatpush1.bf16.msra.mxu0 0
      %7866 = vmatprep.subr.bf16.mxu0 0
      %7867 = vmatpush1.bf16.msra.mxu0 0
      %7868 = vmatprep.subr.bf16.mxu0 0
      %7869 = vmatpush1.bf16.msra.mxu0 0
      %7870 = vmatprep.subr.bf16.mxu0 0
      %7871 = vmatpush1.bf16.msra.mxu0 0
      %7872 = vmatprep.subr.bf16.mxu0 0
      %7873 = vmatpush1.bf16.msra.mxu0 0
      %7874 = vmatprep.subr.bf16.mxu0 0
      %7875 = vmatpush1.bf16.msra.mxu0 0
      %7876 = vmatprep.mubr.bf16.mxu0 0
      %7877 = vmatmul.mubr.bf16.gmra.mrb[0].mxu0 %v7802
      %v7878 = vpop.f32.mrb[0].mxu0
      %v7879 = vadd.f32 %v7568, %v7878
      %v7880 = vpop.f32.mrb[0].mxu0
      %v7881 = vadd.f32 %v7570, %v7880
      %v7882 = vpop.f32.mrb[0].mxu0
      %v7883 = vpop.f32.mrb[0].mxu0
      %7884 = vdwg.mxu0
      %v7885 = vadd.f32 %v7838, %v2664
      %v7886 = vadd.f32 %v7840, %v2668
      %v7887 = vadd.f32 %v7879, %v2672
      %v7888 = vadd.f32 %v7881, %v2676
      %v7889 = vtanh.pop %v7885
      %v7890 = vmul.f32 %v7889, 0.5
      %v7891 = vadd.f32 %v7890, 0.5
      %v7892 = vtanh.pop %v7886
      %v7893 = vmul.f32 %v7892, 0.5
      %v7894 = vadd.f32 %v7893, 0.5
      %v7895 = vtanh.pop %v7887
      %v7896 = vtanh.pop %v7888
      %v7897 = vmul.f32 %v7896, 0.5
      %v7898 = vadd.f32 %v7897, 0.5
      %v7899 = vmul.f32 %v7894, %v7488
      %v7900 = vmul.f32 %v7891, %v7895
      %v7901 = vadd.f32 %v7899, %v7900
      %v7902 = vtanh.pop %v7901
      %v7903 = vmul.f32 %v7898, %v7902
      %v7904 = vpack.c.bf16 %v7903, %v7903
      %7905 = vmatprep.subr.bf16.mxu0 %v2029
      %7906 = vmatpush1.bf16.msra.mxu0 %v2028
      %7907 = vmatprep.subr.bf16.mxu0 %v2033
      %7908 = vmatpush1.bf16.msra.mxu0 %v2032
      %7909 = vmatprep.subr.bf16.mxu0 %v2037
      %7910 = vmatpush1.bf16.msra.mxu0 %v2036
      %7911 = vmatprep.subr.bf16.mxu0 %v2041
      %7912 = vmatpush1.bf16.msra.mxu0 %v2040
      %7913 = vmatprep.subr.bf16.mxu0 %v2045
      %7914 = vmatpush1.bf16.msra.mxu0 %v2044
      %7915 = vmatprep.subr.bf16.mxu0 %v2049
      %7916 = vmatpush1.bf16.msra.mxu0 %v2048
      %7917 = vmatprep.subr.bf16.mxu0 %v2053
      %7918 = vmatpush1.bf16.msra.mxu0 %v2052
      %7919 = vmatprep.subr.bf16.mxu0 %v2057
      %7920 = vmatpush1.bf16.msra.mxu0 %v2056
      %7921 = vmatprep.subr.bf16.mxu0 0
      %7922 = vmatpush1.bf16.msra.mxu0 0
      %7923 = vmatprep.subr.bf16.mxu0 0
      %7924 = vmatpush1.bf16.msra.mxu0 0
      %7925 = vmatprep.subr.bf16.mxu0 0
      %7926 = vmatpush1.bf16.msra.mxu0 0
      %7927 = vmatprep.subr.bf16.mxu0 0
      %7928 = vmatpush1.bf16.msra.mxu0 0
      %7929 = vmatprep.subr.bf16.mxu0 0
      %7930 = vmatpush1.bf16.msra.mxu0 0
      %7931 = vmatprep.subr.bf16.mxu0 0
      %7932 = vmatpush1.bf16.msra.mxu0 0
      %7933 = vmatprep.subr.bf16.mxu0 0
      %7934 = vmatpush1.bf16.msra.mxu0 0
      %7935 = vmatprep.subr.bf16.mxu0 0
      %7936 = vmatpush1.bf16.msra.mxu0 0
      %7937 = vmatprep.mubr.bf16.mxu0 0
      %7938 = vmatmul.mubr.bf16.gmra.mrb[0].mxu0 %v7904
      %v7939 = vpop.f32.mrb[0].mxu0
      %v7940 = vadd.f32 0.0, %v7939
      %v7941 = vpop.f32.mrb[0].mxu0
      %v7942 = vadd.f32 0.0, %v7941
      %v7943 = vpop.f32.mrb[0].mxu0
      %v7944 = vpop.f32.mrb[0].mxu0
      %7945 = vdwg.mxu0
      %7946 = vmatprep.subr.bf16.mxu0 %v2031
      %7947 = vmatpush1.bf16.msra.mxu0 %v2030
      %7948 = vmatprep.subr.bf16.mxu0 %v2035
      %7949 = vmatpush1.bf16.msra.mxu0 %v2034
      %7950 = vmatprep.subr.bf16.mxu0 %v2039
      %7951 = vmatpush1.bf16.msra.mxu0 %v2038
      %7952 = vmatprep.subr.bf16.mxu0 %v2043
      %7953 = vmatpush1.bf16.msra.mxu0 %v2042
      %7954 = vmatprep.subr.bf16.mxu0 %v2047
      %7955 = vmatpush1.bf16.msra.mxu0 %v2046
      %7956 = vmatprep.subr.bf16.mxu0 %v2051
      %7957 = vmatpush1.bf16.msra.mxu0 %v2050
      %7958 = vmatprep.subr.bf16.mxu0 %v2055
      %7959 = vmatpush1.bf16.msra.mxu0 %v2054
      %7960 = vmatprep.subr.bf16.mxu0 %v2059
      %7961 = vmatpush1.bf16.msra.mxu0 %v2058
      %7962 = vmatprep.subr.bf16.mxu0 0
      %7963 = vmatpush1.bf16.msra.mxu0 0
      %7964 = vmatprep.subr.bf16.mxu0 0
      %7965 = vmatpush1.bf16.msra.mxu0 0
      %7966 = vmatprep.subr.bf16.mxu0 0
      %7967 = vmatpush1.bf16.msra.mxu0 0
      %7968 = vmatprep.subr.bf16.mxu0 0
      %7969 = vmatpush1.bf16.msra.mxu0 0
      %7970 = vmatprep.subr.bf16.mxu0 0
      %7971 = vmatpush1.bf16.msra.mxu0 0
      %7972 = vmatprep.subr.bf16.mxu0 0
      %7973 = vmatpush1.bf16.msra.mxu0 0
      %7974 = vmatprep.subr.bf16.mxu0 0
      %7975 = vmatpush1.bf16.msra.mxu0 0
      %7976 = vmatprep.subr.bf16.mxu0 0
      %7977 = vmatpush1.bf16.msra.mxu0 0
      %7978 = vmatprep.mubr.bf16.mxu0 0
      %7979 = vmatmul.mubr.bf16.gmra.mrb[0].mxu0 %v7904
      %v7980 = vpop.f32.mrb[0].mxu0
      %v7981 = vadd.f32 0.0, %v7980
      %v7982 = vpop.f32.mrb[0].mxu0
      %v7983 = vadd.f32 0.0, %v7982
      %v7984 = vpop.f32.mrb[0].mxu0
      %v7985 = vpop.f32.mrb[0].mxu0
      %7986 = vdwg.mxu0
      %7987 = vmatprep.subr.bf16.mxu0 %v2880
      %7988 = vmatpush1.bf16.msra.mxu0 %v2879
      %7989 = vmatprep.subr.bf16.mxu0 %v2884
      %7990 = vmatpush1.bf16.msra.mxu0 %v2883
      %7991 = vmatprep.subr.bf16.mxu0 %v2888
      %7992 = vmatpush1.bf16.msra.mxu0 %v2887
      %7993 = vmatprep.subr.bf16.mxu0 %v2892
      %7994 = vmatpush1.bf16.msra.mxu0 %v2891
      %7995 = vmatprep.subr.bf16.mxu0 %v2896
      %7996 = vmatpush1.bf16.msra.mxu0 %v2895
      %7997 = vmatprep.subr.bf16.mxu0 %v2900
      %7998 = vmatpush1.bf16.msra.mxu0 %v2899
      %7999 = vmatprep.subr.bf16.mxu0 %v2904
      %8000 = vmatpush1.bf16.msra.mxu0 %v2903
      %8001 = vmatprep.subr.bf16.mxu0 %v2908
      %8002 = vmatpush1.bf16.msra.mxu0 %v2907
      %8003 = vmatprep.subr.bf16.mxu0 0
      %8004 = vmatpush1.bf16.msra.mxu0 0
      %8005 = vmatprep.subr.bf16.mxu0 0
      %8006 = vmatpush1.bf16.msra.mxu0 0
      %8007 = vmatprep.subr.bf16.mxu0 0
      %8008 = vmatpush1.bf16.msra.mxu0 0
      %8009 = vmatprep.subr.bf16.mxu0 0
      %8010 = vmatpush1.bf16.msra.mxu0 0
      %8011 = vmatprep.subr.bf16.mxu0 0
      %8012 = vmatpush1.bf16.msra.mxu0 0
      %8013 = vmatprep.subr.bf16.mxu0 0
      %8014 = vmatpush1.bf16.msra.mxu0 0
      %8015 = vmatprep.subr.bf16.mxu0 0
      %8016 = vmatpush1.bf16.msra.mxu0 0
      %8017 = vmatprep.subr.bf16.mxu0 0
      %8018 = vmatpush1.bf16.msra.mxu0 0
      %8019 = vmatprep.mubr.bf16.mxu0 0
      %8020 = vmatmul.mubr.bf16.gmra.mrb[0].mxu0 %v7904
      %v8021 = vpop.f32.mrb[0].mxu0
      %v8022 = vadd.f32 %v7711, %v8021
      %v8023 = vpop.f32.mrb[0].mxu0
      %v8024 = vadd.f32 %v7713, %v8023
      %v8025 = vpop.f32.mrb[0].mxu0
      %v8026 = vpop.f32.mrb[0].mxu0
      %8027 = vdwg.mxu0
      %8028 = vmatprep.subr.bf16.mxu0 %v2882
      %8029 = vmatpush1.bf16.msra.mxu0 %v2881
      %8030 = vmatprep.subr.bf16.mxu0 %v2886
      %8031 = vmatpush1.bf16.msra.mxu0 %v2885
      %8032 = vmatprep.subr.bf16.mxu0 %v2890
      %8033 = vmatpush1.bf16.msra.mxu0 %v2889
      %8034 = vmatprep.subr.bf16.mxu0 %v2894
      %8035 = vmatpush1.bf16.msra.mxu0 %v2893
      %8036 = vmatprep.subr.bf16.mxu0 %v2898
      %8037 = vmatpush1.bf16.msra.mxu0 %v2897
      %8038 = vmatprep.subr.bf16.mxu0 %v2902
      %8039 = vmatpush1.bf16.msra.mxu0 %v2901
      %8040 = vmatprep.subr.bf16.mxu0 %v2906
      %8041 = vmatpush1.bf16.msra.mxu0 %v2905
      %8042 = vmatprep.subr.bf16.mxu0 %v2910
      %8043 = vmatpush1.bf16.msra.mxu0 %v2909
      %8044 = vmatprep.subr.bf16.mxu0 0
      %8045 = vmatpush1.bf16.msra.mxu0 0
      %8046 = vmatprep.subr.bf16.mxu0 0
      %8047 = vmatpush1.bf16.msra.mxu0 0
      %8048 = vmatprep.subr.bf16.mxu0 0
      %8049 = vmatpush1.bf16.msra.mxu0 0
      %8050 = vmatprep.subr.bf16.mxu0 0
      %8051 = vmatpush1.bf16.msra.mxu0 0
      %8052 = vmatprep.subr.bf16.mxu0 0
      %8053 = vmatpush1.bf16.msra.mxu0 0
      %8054 = vmatprep.subr.bf16.mxu0 0
      %8055 = vmatpush1.bf16.msra.mxu0 0
      %8056 = vmatprep.subr.bf16.mxu0 0
      %8057 = vmatpush1.bf16.msra.mxu0 0
      %8058 = vmatprep.subr.bf16.mxu0 0
      %8059 = vmatpush1.bf16.msra.mxu0 0
      %8060 = vmatprep.mubr.bf16.mxu0 0
      %8061 = vmatmul.mubr.bf16.gmra.mrb[0].mxu0 %v7904
      %v8062 = vpop.f32.mrb[0].mxu0
      %v8063 = vadd.f32 %v7752, %v8062
      %v8064 = vpop.f32.mrb[0].mxu0
      %v8065 = vadd.f32 %v7754, %v8064
      %v8066 = vpop.f32.mrb[0].mxu0
      %v8067 = vpop.f32.mrb[0].mxu0
      %8068 = vdwg.mxu0
      %v8069 = vadd.f32 %v8022, %v3029
      %v8070 = vadd.f32 %v8024, %v3033
      %v8071 = vadd.f32 %v8063, %v3037
      %v8072 = vadd.f32 %v8065, %v3041
      %v8073 = vtanh.pop %v8069
      %v8074 = vmul.f32 %v8073, 0.5
      %v8075 = vadd.f32 %v8074, 0.5
      %v8076 = vtanh.pop %v8070
      %v8077 = vmul.f32 %v8076, 0.5
      %v8078 = vadd.f32 %v8077, 0.5
      %v8079 = vtanh.pop %v8071
      %v8080 = vtanh.pop %v8072
      %v8081 = vmul.f32 %v8080, 0.5
      %v8082 = vadd.f32 %v8081, 0.5
      %v8083 = vmul.f32 %v8078, %v7672
      %v8084 = vmul.f32 %v8075, %v8079
      %v8085 = vadd.f32 %v8083, %v8084
      %v8086 = vtanh.pop %v8085
      %v8087 = vmul.f32 %v8082, %v8086
      %v8088 = vpack.c.bf16 %v8087, %v8087
      %8089 = vmatprep.subr.bf16.mxu0 %v2272
      %8090 = vmatpush1.bf16.msra.mxu0 %v2271
      %8091 = vmatprep.subr.bf16.mxu0 %v2276
      %8092 = vmatpush1.bf16.msra.mxu0 %v2275
      %8093 = vmatprep.subr.bf16.mxu0 %v2280
      %8094 = vmatpush1.bf16.msra.mxu0 %v2279
      %8095 = vmatprep.subr.bf16.mxu0 %v2284
      %8096 = vmatpush1.bf16.msra.mxu0 %v2283
      %8097 = vmatprep.subr.bf16.mxu0 %v2288
      %8098 = vmatpush1.bf16.msra.mxu0 %v2287
      %8099 = vmatprep.subr.bf16.mxu0 %v2292
      %8100 = vmatpush1.bf16.msra.mxu0 %v2291
      %8101 = vmatprep.subr.bf16.mxu0 %v2296
      %8102 = vmatpush1.bf16.msra.mxu0 %v2295
      %8103 = vmatprep.subr.bf16.mxu0 %v2300
      %8104 = vmatpush1.bf16.msra.mxu0 %v2299
      %8105 = vmatprep.subr.bf16.mxu0 0
      %8106 = vmatpush1.bf16.msra.mxu0 0
      %8107 = vmatprep.subr.bf16.mxu0 0
      %8108 = vmatpush1.bf16.msra.mxu0 0
      %8109 = vmatprep.subr.bf16.mxu0 0
      %8110 = vmatpush1.bf16.msra.mxu0 0
      %8111 = vmatprep.subr.bf16.mxu0 0
      %8112 = vmatpush1.bf16.msra.mxu0 0
      %8113 = vmatprep.subr.bf16.mxu0 0
      %8114 = vmatpush1.bf16.msra.mxu0 0
      %8115 = vmatprep.subr.bf16.mxu0 0
      %8116 = vmatpush1.bf16.msra.mxu0 0
      %8117 = vmatprep.subr.bf16.mxu0 0
      %8118 = vmatpush1.bf16.msra.mxu0 0
      %8119 = vmatprep.subr.bf16.mxu0 0
      %8120 = vmatpush1.bf16.msra.mxu0 0
      %8121 = vmatprep.mubr.bf16.mxu0 0
      %8122 = vmatmul.mubr.bf16.gmra.mrb[0].mxu0 %v8088
      %v8123 = vpop.f32.mrb[0].mxu0
      %v8124 = vadd.f32 0.0, %v8123
      %v8125 = vpop.f32.mrb[0].mxu0
      %v8126 = vadd.f32 0.0, %v8125
      %v8127 = vpop.f32.mrb[0].mxu0
      %v8128 = vpop.f32.mrb[0].mxu0
      %8129 = vdwg.mxu0
      %8130 = vmatprep.subr.bf16.mxu0 %v2274
      %8131 = vmatpush1.bf16.msra.mxu0 %v2273
      %8132 = vmatprep.subr.bf16.mxu0 %v2278
      %8133 = vmatpush1.bf16.msra.mxu0 %v2277
      %8134 = vmatprep.subr.bf16.mxu0 %v2282
      %8135 = vmatpush1.bf16.msra.mxu0 %v2281
      %8136 = vmatprep.subr.bf16.mxu0 %v2286
      %8137 = vmatpush1.bf16.msra.mxu0 %v2285
      %8138 = vmatprep.subr.bf16.mxu0 %v2290
      %8139 = vmatpush1.bf16.msra.mxu0 %v2289
      %8140 = vmatprep.subr.bf16.mxu0 %v2294
      %8141 = vmatpush1.bf16.msra.mxu0 %v2293
      %8142 = vmatprep.subr.bf16.mxu0 %v2298
      %8143 = vmatpush1.bf16.msra.mxu0 %v2297
      %8144 = vmatprep.subr.bf16.mxu0 %v2302
      %8145 = vmatpush1.bf16.msra.mxu0 %v2301
      %8146 = vmatprep.subr.bf16.mxu0 0
      %8147 = vmatpush1.bf16.msra.mxu0 0
      %8148 = vmatprep.subr.bf16.mxu0 0
      %8149 = vmatpush1.bf16.msra.mxu0 0
      %8150 = vmatprep.subr.bf16.mxu0 0
      %8151 = vmatpush1.bf16.msra.mxu0 0
      %8152 = vmatprep.subr.bf16.mxu0 0
      %8153 = vmatpush1.bf16.msra.mxu0 0
      %8154 = vmatprep.subr.bf16.mxu0 0
      %8155 = vmatpush1.bf16.msra.mxu0 0
      %8156 = vmatprep.subr.bf16.mxu0 0
      %8157 = vmatpush1.bf16.msra.mxu0 0
      %8158 = vmatprep.subr.bf16.mxu0 0
      %8159 = vmatpush1.bf16.msra.mxu0 0
      %8160 = vmatprep.subr.bf16.mxu0 0
      %8161 = vmatpush1.bf16.msra.mxu0 0
      %8162 = vmatprep.mubr.bf16.mxu0 0
      %8163 = vmatmul.mubr.bf16.gmra.mrb[0].mxu0 %v8088
      %v8164 = vpop.f32.mrb[0].mxu0
      %v8165 = vadd.f32 0.0, %v8164
      %v8166 = vpop.f32.mrb[0].mxu0
      %v8167 = vadd.f32 0.0, %v8166
      %v8168 = vpop.f32.mrb[0].mxu0
      %v8169 = vpop.f32.mrb[0].mxu0
      %8170 = vdwg.mxu0
      %8171 = vmatprep.subr.bf16.mxu0 0
      %8172 = vmatpush1.bf16.msra.mxu0 %v3180
      %8173 = vmatprep.subr.bf16.mxu0 0
      %8174 = vmatpush1.bf16.msra.mxu0 %v3181
      %8175 = vmatprep.subr.bf16.mxu0 0
      %8176 = vmatpush1.bf16.msra.mxu0 %v3182
      %8177 = vmatprep.subr.bf16.mxu0 0
      %8178 = vmatpush1.bf16.msra.mxu0 %v3183
      %8179 = vmatprep.subr.bf16.mxu0 0
      %8180 = vmatpush1.bf16.msra.mxu0 %v3184
      %8181 = vmatprep.subr.bf16.mxu0 0
      %8182 = vmatpush1.bf16.msra.mxu0 %v3185
      %8183 = vmatprep.subr.bf16.mxu0 0
      %8184 = vmatpush1.bf16.msra.mxu0 %v3186
      %8185 = vmatprep.subr.bf16.mxu0 0
      %8186 = vmatpush1.bf16.msra.mxu0 %v3187
      %8187 = vmatprep.subr.bf16.mxu0 0
      %8188 = vmatpush1.bf16.msra.mxu0 0
      %8189 = vmatprep.subr.bf16.mxu0 0
      %8190 = vmatpush1.bf16.msra.mxu0 0
      %8191 = vmatprep.subr.bf16.mxu0 0
      %8192 = vmatpush1.bf16.msra.mxu0 0
      %8193 = vmatprep.subr.bf16.mxu0 0
      %8194 = vmatpush1.bf16.msra.mxu0 0
      %8195 = vmatprep.subr.bf16.mxu0 0
      %8196 = vmatpush1.bf16.msra.mxu0 0
      %8197 = vmatprep.subr.bf16.mxu0 0
      %8198 = vmatpush1.bf16.msra.mxu0 0
      %8199 = vmatprep.subr.bf16.mxu0 0
      %8200 = vmatpush1.bf16.msra.mxu0 0
      %8201 = vmatprep.subr.bf16.mxu0 0
      %8202 = vmatpush1.bf16.msra.mxu0 0
      %8203 = vmatprep.mubr.bf16.mxu0 0
      %8204 = vmatmul.mubr.bf16.gmra.mrb[0].mxu0 %v8088
      %v8205 = vpop.f32.mrb[0].mxu0
      %v8206 = vadd.f32 %v454, %v8205
      %v8207 = vpop.f32.mrb[0].mxu0
      %v8208 = vpop.f32.mrb[0].mxu0
      %v8209 = vpop.f32.mrb[0].mxu0
      %8210 = vdwg.mxu0
      %v8211 = vtanh.pop %v8206
      %v8212 = vmul.f32 %v8211, 0.5
      %v8213 = vadd.f32 %v8212, 0.5
      %8214 = vst [vmem:[#allocation2 + $0x5] sm:$0x1] %v8213
      %v8215 = vpack.c.bf16 %v8213, %v8213
      %8216 = vmatprep.subr.bf16.mxu0 %v2515
      %8217 = vmatpush1.bf16.msra.mxu0 %v2514
      %8218 = vmatprep.subr.bf16.mxu0 %v2519
      %8219 = vmatpush1.bf16.msra.mxu0 %v2518
      %8220 = vmatprep.subr.bf16.mxu0 %v2523
      %8221 = vmatpush1.bf16.msra.mxu0 %v2522
      %8222 = vmatprep.subr.bf16.mxu0 %v2527
      %8223 = vmatpush1.bf16.msra.mxu0 %v2526
      %8224 = vmatprep.subr.bf16.mxu0 %v2531
      %8225 = vmatpush1.bf16.msra.mxu0 %v2530
      %8226 = vmatprep.subr.bf16.mxu0 %v2535
      %8227 = vmatpush1.bf16.msra.mxu0 %v2534
      %8228 = vmatprep.subr.bf16.mxu0 %v2539
      %8229 = vmatpush1.bf16.msra.mxu0 %v2538
      %8230 = vmatprep.subr.bf16.mxu0 %v2543
      %8231 = vmatpush1.bf16.msra.mxu0 %v2542
      %8232 = vmatprep.subr.bf16.mxu0 0
      %8233 = vmatpush1.bf16.msra.mxu0 0
      %8234 = vmatprep.subr.bf16.mxu0 0
      %8235 = vmatpush1.bf16.msra.mxu0 0
      %8236 = vmatprep.subr.bf16.mxu0 0
      %8237 = vmatpush1.bf16.msra.mxu0 0
      %8238 = vmatprep.subr.bf16.mxu0 0
      %8239 = vmatpush1.bf16.msra.mxu0 0
      %8240 = vmatprep.subr.bf16.mxu0 0
      %8241 = vmatpush1.bf16.msra.mxu0 0
      %8242 = vmatprep.subr.bf16.mxu0 0
      %8243 = vmatpush1.bf16.msra.mxu0 0
      %8244 = vmatprep.subr.bf16.mxu0 0
      %8245 = vmatpush1.bf16.msra.mxu0 0
      %8246 = vmatprep.subr.bf16.mxu0 0
      %8247 = vmatpush1.bf16.msra.mxu0 0
      %8248 = vmatprep.mubr.bf16.mxu0 0
      %8249 = vmatmul.mubr.bf16.gmra.mrb[0].mxu0 %v8215
      %v8250 = vpop.f32.mrb[0].mxu0
      %v8251 = vadd.f32 %v7940, %v8250
      %v8252 = vpop.f32.mrb[0].mxu0
      %v8253 = vadd.f32 %v7942, %v8252
      %v8254 = vpop.f32.mrb[0].mxu0
      %v8255 = vpop.f32.mrb[0].mxu0
      %8256 = vdwg.mxu0
      %8257 = vmatprep.subr.bf16.mxu0 %v2517
      %8258 = vmatpush1.bf16.msra.mxu0 %v2516
      %8259 = vmatprep.subr.bf16.mxu0 %v2521
      %8260 = vmatpush1.bf16.msra.mxu0 %v2520
      %8261 = vmatprep.subr.bf16.mxu0 %v2525
      %8262 = vmatpush1.bf16.msra.mxu0 %v2524
      %8263 = vmatprep.subr.bf16.mxu0 %v2529
      %8264 = vmatpush1.bf16.msra.mxu0 %v2528
      %8265 = vmatprep.subr.bf16.mxu0 %v2533
      %8266 = vmatpush1.bf16.msra.mxu0 %v2532
      %8267 = vmatprep.subr.bf16.mxu0 %v2537
      %8268 = vmatpush1.bf16.msra.mxu0 %v2536
      %8269 = vmatprep.subr.bf16.mxu0 %v2541
      %8270 = vmatpush1.bf16.msra.mxu0 %v2540
      %8271 = vmatprep.subr.bf16.mxu0 %v2545
      %8272 = vmatpush1.bf16.msra.mxu0 %v2544
      %8273 = vmatprep.subr.bf16.mxu0 0
      %8274 = vmatpush1.bf16.msra.mxu0 0
      %8275 = vmatprep.subr.bf16.mxu0 0
      %8276 = vmatpush1.bf16.msra.mxu0 0
      %8277 = vmatprep.subr.bf16.mxu0 0
      %8278 = vmatpush1.bf16.msra.mxu0 0
      %8279 = vmatprep.subr.bf16.mxu0 0
      %8280 = vmatpush1.bf16.msra.mxu0 0
      %8281 = vmatprep.subr.bf16.mxu0 0
      %8282 = vmatpush1.bf16.msra.mxu0 0
      %8283 = vmatprep.subr.bf16.mxu0 0
      %8284 = vmatpush1.bf16.msra.mxu0 0
      %8285 = vmatprep.subr.bf16.mxu0 0
      %8286 = vmatpush1.bf16.msra.mxu0 0
      %8287 = vmatprep.subr.bf16.mxu0 0
      %8288 = vmatpush1.bf16.msra.mxu0 0
      %8289 = vmatprep.mubr.bf16.mxu0 0
      %8290 = vmatmul.mubr.bf16.gmra.mrb[0].mxu0 %v8215
      %v8291 = vpop.f32.mrb[0].mxu0
      %v8292 = vadd.f32 %v7981, %v8291
      %v8293 = vpop.f32.mrb[0].mxu0
      %v8294 = vadd.f32 %v7983, %v8293
      %v8295 = vpop.f32.mrb[0].mxu0
      %v8296 = vpop.f32.mrb[0].mxu0
      %8297 = vdwg.mxu0
      %v8298 = vadd.f32 %v8251, %v2664
      %v8299 = vadd.f32 %v8253, %v2668
      %v8300 = vadd.f32 %v8292, %v2672
      %v8301 = vadd.f32 %v8294, %v2676
      %v8302 = vtanh.pop %v8298
      %v8303 = vmul.f32 %v8302, 0.5
      %v8304 = vadd.f32 %v8303, 0.5
      %v8305 = vtanh.pop %v8299
      %v8306 = vmul.f32 %v8305, 0.5
      %v8307 = vadd.f32 %v8306, 0.5
      %v8308 = vtanh.pop %v8300
      %v8309 = vtanh.pop %v8301
      %v8310 = vmul.f32 %v8309, 0.5
      %v8311 = vadd.f32 %v8310, 0.5
      %v8312 = vmul.f32 %v8307, %v7901
      %v8313 = vmul.f32 %v8304, %v8308
      %v8314 = vadd.f32 %v8312, %v8313
      %v8315 = vtanh.pop %v8314
      %v8316 = vmul.f32 %v8311, %v8315
      %v8317 = vpack.c.bf16 %v8316, %v8316
      %8318 = vmatprep.subr.bf16.mxu0 %v2029
      %8319 = vmatpush1.bf16.msra.mxu0 %v2028
      %8320 = vmatprep.subr.bf16.mxu0 %v2033
      %8321 = vmatpush1.bf16.msra.mxu0 %v2032
      %8322 = vmatprep.subr.bf16.mxu0 %v2037
      %8323 = vmatpush1.bf16.msra.mxu0 %v2036
      %8324 = vmatprep.subr.bf16.mxu0 %v2041
      %8325 = vmatpush1.bf16.msra.mxu0 %v2040
      %8326 = vmatprep.subr.bf16.mxu0 %v2045
      %8327 = vmatpush1.bf16.msra.mxu0 %v2044
      %8328 = vmatprep.subr.bf16.mxu0 %v2049
      %8329 = vmatpush1.bf16.msra.mxu0 %v2048
      %8330 = vmatprep.subr.bf16.mxu0 %v2053
      %8331 = vmatpush1.bf16.msra.mxu0 %v2052
      %8332 = vmatprep.subr.bf16.mxu0 %v2057
      %8333 = vmatpush1.bf16.msra.mxu0 %v2056
      %8334 = vmatprep.subr.bf16.mxu0 0
      %8335 = vmatpush1.bf16.msra.mxu0 0
      %8336 = vmatprep.subr.bf16.mxu0 0
      %8337 = vmatpush1.bf16.msra.mxu0 0
      %8338 = vmatprep.subr.bf16.mxu0 0
      %8339 = vmatpush1.bf16.msra.mxu0 0
      %8340 = vmatprep.subr.bf16.mxu0 0
      %8341 = vmatpush1.bf16.msra.mxu0 0
      %8342 = vmatprep.subr.bf16.mxu0 0
      %8343 = vmatpush1.bf16.msra.mxu0 0
      %8344 = vmatprep.subr.bf16.mxu0 0
      %8345 = vmatpush1.bf16.msra.mxu0 0
      %8346 = vmatprep.subr.bf16.mxu0 0
      %8347 = vmatpush1.bf16.msra.mxu0 0
      %8348 = vmatprep.subr.bf16.mxu0 0
      %8349 = vmatpush1.bf16.msra.mxu0 0
      %8350 = vmatprep.mubr.bf16.mxu0 0
      %8351 = vmatmul.mubr.bf16.gmra.mrb[0].mxu0 %v8317
      %v8352 = vpop.f32.mrb[0].mxu0
      %v8353 = vadd.f32 0.0, %v8352
      %v8354 = vpop.f32.mrb[0].mxu0
      %v8355 = vadd.f32 0.0, %v8354
      %v8356 = vpop.f32.mrb[0].mxu0
      %v8357 = vpop.f32.mrb[0].mxu0
      %8358 = vdwg.mxu0
      %8359 = vmatprep.subr.bf16.mxu0 %v2031
      %8360 = vmatpush1.bf16.msra.mxu0 %v2030
      %8361 = vmatprep.subr.bf16.mxu0 %v2035
      %8362 = vmatpush1.bf16.msra.mxu0 %v2034
      %8363 = vmatprep.subr.bf16.mxu0 %v2039
      %8364 = vmatpush1.bf16.msra.mxu0 %v2038
      %8365 = vmatprep.subr.bf16.mxu0 %v2043
      %8366 = vmatpush1.bf16.msra.mxu0 %v2042
      %8367 = vmatprep.subr.bf16.mxu0 %v2047
      %8368 = vmatpush1.bf16.msra.mxu0 %v2046
      %8369 = vmatprep.subr.bf16.mxu0 %v2051
      %8370 = vmatpush1.bf16.msra.mxu0 %v2050
      %8371 = vmatprep.subr.bf16.mxu0 %v2055
      %8372 = vmatpush1.bf16.msra.mxu0 %v2054
      %8373 = vmatprep.subr.bf16.mxu0 %v2059
      %8374 = vmatpush1.bf16.msra.mxu0 %v2058
      %8375 = vmatprep.subr.bf16.mxu0 0
      %8376 = vmatpush1.bf16.msra.mxu0 0
      %8377 = vmatprep.subr.bf16.mxu0 0
      %8378 = vmatpush1.bf16.msra.mxu0 0
      %8379 = vmatprep.subr.bf16.mxu0 0
      %8380 = vmatpush1.bf16.msra.mxu0 0
      %8381 = vmatprep.subr.bf16.mxu0 0
      %8382 = vmatpush1.bf16.msra.mxu0 0
      %8383 = vmatprep.subr.bf16.mxu0 0
      %8384 = vmatpush1.bf16.msra.mxu0 0
      %8385 = vmatprep.subr.bf16.mxu0 0
      %8386 = vmatpush1.bf16.msra.mxu0 0
      %8387 = vmatprep.subr.bf16.mxu0 0
      %8388 = vmatpush1.bf16.msra.mxu0 0
      %8389 = vmatprep.subr.bf16.mxu0 0
      %8390 = vmatpush1.bf16.msra.mxu0 0
      %8391 = vmatprep.mubr.bf16.mxu0 0
      %8392 = vmatmul.mubr.bf16.gmra.mrb[0].mxu0 %v8317
      %v8393 = vpop.f32.mrb[0].mxu0
      %v8394 = vadd.f32 0.0, %v8393
      %v8395 = vpop.f32.mrb[0].mxu0
      %v8396 = vadd.f32 0.0, %v8395
      %v8397 = vpop.f32.mrb[0].mxu0
      %v8398 = vpop.f32.mrb[0].mxu0
      %8399 = vdwg.mxu0
      %8400 = vmatprep.subr.bf16.mxu0 %v2880
      %8401 = vmatpush1.bf16.msra.mxu0 %v2879
      %8402 = vmatprep.subr.bf16.mxu0 %v2884
      %8403 = vmatpush1.bf16.msra.mxu0 %v2883
      %8404 = vmatprep.subr.bf16.mxu0 %v2888
      %8405 = vmatpush1.bf16.msra.mxu0 %v2887
      %8406 = vmatprep.subr.bf16.mxu0 %v2892
      %8407 = vmatpush1.bf16.msra.mxu0 %v2891
      %8408 = vmatprep.subr.bf16.mxu0 %v2896
      %8409 = vmatpush1.bf16.msra.mxu0 %v2895
      %8410 = vmatprep.subr.bf16.mxu0 %v2900
      %8411 = vmatpush1.bf16.msra.mxu0 %v2899
      %8412 = vmatprep.subr.bf16.mxu0 %v2904
      %8413 = vmatpush1.bf16.msra.mxu0 %v2903
      %8414 = vmatprep.subr.bf16.mxu0 %v2908
      %8415 = vmatpush1.bf16.msra.mxu0 %v2907
      %8416 = vmatprep.subr.bf16.mxu0 0
      %8417 = vmatpush1.bf16.msra.mxu0 0
      %8418 = vmatprep.subr.bf16.mxu0 0
      %8419 = vmatpush1.bf16.msra.mxu0 0
      %8420 = vmatprep.subr.bf16.mxu0 0
      %8421 = vmatpush1.bf16.msra.mxu0 0
      %8422 = vmatprep.subr.bf16.mxu0 0
      %8423 = vmatpush1.bf16.msra.mxu0 0
      %8424 = vmatprep.subr.bf16.mxu0 0
      %8425 = vmatpush1.bf16.msra.mxu0 0
      %8426 = vmatprep.subr.bf16.mxu0 0
      %8427 = vmatpush1.bf16.msra.mxu0 0
      %8428 = vmatprep.subr.bf16.mxu0 0
      %8429 = vmatpush1.bf16.msra.mxu0 0
      %8430 = vmatprep.subr.bf16.mxu0 0
      %8431 = vmatpush1.bf16.msra.mxu0 0
      %8432 = vmatprep.mubr.bf16.mxu0 0
      %8433 = vmatmul.mubr.bf16.gmra.mrb[0].mxu0 %v8317
      %v8434 = vpop.f32.mrb[0].mxu0
      %v8435 = vadd.f32 %v8124, %v8434
      %v8436 = vpop.f32.mrb[0].mxu0
      %v8437 = vadd.f32 %v8126, %v8436
      %v8438 = vpop.f32.mrb[0].mxu0
      %v8439 = vpop.f32.mrb[0].mxu0
      %8440 = vdwg.mxu0
      %8441 = vmatprep.subr.bf16.mxu0 %v2882
      %8442 = vmatpush1.bf16.msra.mxu0 %v2881
      %8443 = vmatprep.subr.bf16.mxu0 %v2886
      %8444 = vmatpush1.bf16.msra.mxu0 %v2885
      %8445 = vmatprep.subr.bf16.mxu0 %v2890
      %8446 = vmatpush1.bf16.msra.mxu0 %v2889
      %8447 = vmatprep.subr.bf16.mxu0 %v2894
      %8448 = vmatpush1.bf16.msra.mxu0 %v2893
      %8449 = vmatprep.subr.bf16.mxu0 %v2898
      %8450 = vmatpush1.bf16.msra.mxu0 %v2897
      %8451 = vmatprep.subr.bf16.mxu0 %v2902
      %8452 = vmatpush1.bf16.msra.mxu0 %v2901
      %8453 = vmatprep.subr.bf16.mxu0 %v2906
      %8454 = vmatpush1.bf16.msra.mxu0 %v2905
      %8455 = vmatprep.subr.bf16.mxu0 %v2910
      %8456 = vmatpush1.bf16.msra.mxu0 %v2909
      %8457 = vmatprep.subr.bf16.mxu0 0
      %8458 = vmatpush1.bf16.msra.mxu0 0
      %8459 = vmatprep.subr.bf16.mxu0 0
      %8460 = vmatpush1.bf16.msra.mxu0 0
      %8461 = vmatprep.subr.bf16.mxu0 0
      %8462 = vmatpush1.bf16.msra.mxu0 0
      %8463 = vmatprep.subr.bf16.mxu0 0
      %8464 = vmatpush1.bf16.msra.mxu0 0
      %8465 = vmatprep.subr.bf16.mxu0 0
      %8466 = vmatpush1.bf16.msra.mxu0 0
      %8467 = vmatprep.subr.bf16.mxu0 0
      %8468 = vmatpush1.bf16.msra.mxu0 0
      %8469 = vmatprep.subr.bf16.mxu0 0
      %8470 = vmatpush1.bf16.msra.mxu0 0
      %8471 = vmatprep.subr.bf16.mxu0 0
      %8472 = vmatpush1.bf16.msra.mxu0 0
      %8473 = vmatprep.mubr.bf16.mxu0 0
      %8474 = vmatmul.mubr.bf16.gmra.mrb[0].mxu0 %v8317
      %v8475 = vpop.f32.mrb[0].mxu0
      %v8476 = vadd.f32 %v8165, %v8475
      %v8477 = vpop.f32.mrb[0].mxu0
      %v8478 = vadd.f32 %v8167, %v8477
      %v8479 = vpop.f32.mrb[0].mxu0
      %v8480 = vpop.f32.mrb[0].mxu0
      %8481 = vdwg.mxu0
      %v8482 = vadd.f32 %v8435, %v3029
      %v8483 = vadd.f32 %v8437, %v3033
      %v8484 = vadd.f32 %v8476, %v3037
      %v8485 = vadd.f32 %v8478, %v3041
      %v8486 = vtanh.pop %v8482
      %v8487 = vmul.f32 %v8486, 0.5
      %v8488 = vadd.f32 %v8487, 0.5
      %v8489 = vtanh.pop %v8483
      %v8490 = vmul.f32 %v8489, 0.5
      %v8491 = vadd.f32 %v8490, 0.5
      %v8492 = vtanh.pop %v8484
      %v8493 = vtanh.pop %v8485
      %v8494 = vmul.f32 %v8493, 0.5
      %v8495 = vadd.f32 %v8494, 0.5
      %v8496 = vmul.f32 %v8491, %v8085
      %v8497 = vmul.f32 %v8488, %v8492
      %v8498 = vadd.f32 %v8496, %v8497
      %v8499 = vtanh.pop %v8498
      %v8500 = vmul.f32 %v8495, %v8499
      %v8501 = vpack.c.bf16 %v8500, %v8500
      %8502 = vmatprep.subr.bf16.mxu0 %v2272
      %8503 = vmatpush1.bf16.msra.mxu0 %v2271
      %8504 = vmatprep.subr.bf16.mxu0 %v2276
      %8505 = vmatpush1.bf16.msra.mxu0 %v2275
      %8506 = vmatprep.subr.bf16.mxu0 %v2280
      %8507 = vmatpush1.bf16.msra.mxu0 %v2279
      %8508 = vmatprep.subr.bf16.mxu0 %v2284
      %8509 = vmatpush1.bf16.msra.mxu0 %v2283
      %8510 = vmatprep.subr.bf16.mxu0 %v2288
      %8511 = vmatpush1.bf16.msra.mxu0 %v2287
      %8512 = vmatprep.subr.bf16.mxu0 %v2292
      %8513 = vmatpush1.bf16.msra.mxu0 %v2291
      %8514 = vmatprep.subr.bf16.mxu0 %v2296
      %8515 = vmatpush1.bf16.msra.mxu0 %v2295
      %8516 = vmatprep.subr.bf16.mxu0 %v2300
      %8517 = vmatpush1.bf16.msra.mxu0 %v2299
      %8518 = vmatprep.subr.bf16.mxu0 0
      %8519 = vmatpush1.bf16.msra.mxu0 0
      %8520 = vmatprep.subr.bf16.mxu0 0
      %8521 = vmatpush1.bf16.msra.mxu0 0
      %8522 = vmatprep.subr.bf16.mxu0 0
      %8523 = vmatpush1.bf16.msra.mxu0 0
      %8524 = vmatprep.subr.bf16.mxu0 0
      %8525 = vmatpush1.bf16.msra.mxu0 0
      %8526 = vmatprep.subr.bf16.mxu0 0
      %8527 = vmatpush1.bf16.msra.mxu0 0
      %8528 = vmatprep.subr.bf16.mxu0 0
      %8529 = vmatpush1.bf16.msra.mxu0 0
      %8530 = vmatprep.subr.bf16.mxu0 0
      %8531 = vmatpush1.bf16.msra.mxu0 0
      %8532 = vmatprep.subr.bf16.mxu0 0
      %8533 = vmatpush1.bf16.msra.mxu0 0
      %8534 = vmatprep.mubr.bf16.mxu0 0
      %8535 = vmatmul.mubr.bf16.gmra.mrb[0].mxu0 %v8501
      %v8536 = vpop.f32.mrb[0].mxu0
      %v8537 = vadd.f32 0.0, %v8536
      %v8538 = vpop.f32.mrb[0].mxu0
      %v8539 = vadd.f32 0.0, %v8538
      %v8540 = vpop.f32.mrb[0].mxu0
      %v8541 = vpop.f32.mrb[0].mxu0
      %8542 = vdwg.mxu0
      %8543 = vmatprep.subr.bf16.mxu0 %v2274
      %8544 = vmatpush1.bf16.msra.mxu0 %v2273
      %8545 = vmatprep.subr.bf16.mxu0 %v2278
      %8546 = vmatpush1.bf16.msra.mxu0 %v2277
      %8547 = vmatprep.subr.bf16.mxu0 %v2282
      %8548 = vmatpush1.bf16.msra.mxu0 %v2281
      %8549 = vmatprep.subr.bf16.mxu0 %v2286
      %8550 = vmatpush1.bf16.msra.mxu0 %v2285
      %8551 = vmatprep.subr.bf16.mxu0 %v2290
      %8552 = vmatpush1.bf16.msra.mxu0 %v2289
      %8553 = vmatprep.subr.bf16.mxu0 %v2294
      %8554 = vmatpush1.bf16.msra.mxu0 %v2293
      %8555 = vmatprep.subr.bf16.mxu0 %v2298
      %8556 = vmatpush1.bf16.msra.mxu0 %v2297
      %8557 = vmatprep.subr.bf16.mxu0 %v2302
      %8558 = vmatpush1.bf16.msra.mxu0 %v2301
      %8559 = vmatprep.subr.bf16.mxu0 0
      %8560 = vmatpush1.bf16.msra.mxu0 0
      %8561 = vmatprep.subr.bf16.mxu0 0
      %8562 = vmatpush1.bf16.msra.mxu0 0
      %8563 = vmatprep.subr.bf16.mxu0 0
      %8564 = vmatpush1.bf16.msra.mxu0 0
      %8565 = vmatprep.subr.bf16.mxu0 0
      %8566 = vmatpush1.bf16.msra.mxu0 0
      %8567 = vmatprep.subr.bf16.mxu0 0
      %8568 = vmatpush1.bf16.msra.mxu0 0
      %8569 = vmatprep.subr.bf16.mxu0 0
      %8570 = vmatpush1.bf16.msra.mxu0 0
      %8571 = vmatprep.subr.bf16.mxu0 0
      %8572 = vmatpush1.bf16.msra.mxu0 0
      %8573 = vmatprep.subr.bf16.mxu0 0
      %8574 = vmatpush1.bf16.msra.mxu0 0
      %8575 = vmatprep.mubr.bf16.mxu0 0
      %8576 = vmatmul.mubr.bf16.gmra.mrb[0].mxu0 %v8501
      %v8577 = vpop.f32.mrb[0].mxu0
      %v8578 = vadd.f32 0.0, %v8577
      %v8579 = vpop.f32.mrb[0].mxu0
      %v8580 = vadd.f32 0.0, %v8579
      %v8581 = vpop.f32.mrb[0].mxu0
      %v8582 = vpop.f32.mrb[0].mxu0
      %8583 = vdwg.mxu0
      %8584 = vmatprep.subr.bf16.mxu0 0
      %8585 = vmatpush1.bf16.msra.mxu0 %v3180
      %8586 = vmatprep.subr.bf16.mxu0 0
      %8587 = vmatpush1.bf16.msra.mxu0 %v3181
      %8588 = vmatprep.subr.bf16.mxu0 0
      %8589 = vmatpush1.bf16.msra.mxu0 %v3182
      %8590 = vmatprep.subr.bf16.mxu0 0
      %8591 = vmatpush1.bf16.msra.mxu0 %v3183
      %8592 = vmatprep.subr.bf16.mxu0 0
      %8593 = vmatpush1.bf16.msra.mxu0 %v3184
      %8594 = vmatprep.subr.bf16.mxu0 0
      %8595 = vmatpush1.bf16.msra.mxu0 %v3185
      %8596 = vmatprep.subr.bf16.mxu0 0
      %8597 = vmatpush1.bf16.msra.mxu0 %v3186
      %8598 = vmatprep.subr.bf16.mxu0 0
      %8599 = vmatpush1.bf16.msra.mxu0 %v3187
      %8600 = vmatprep.subr.bf16.mxu0 0
      %8601 = vmatpush1.bf16.msra.mxu0 0
      %8602 = vmatprep.subr.bf16.mxu0 0
      %8603 = vmatpush1.bf16.msra.mxu0 0
      %8604 = vmatprep.subr.bf16.mxu0 0
      %8605 = vmatpush1.bf16.msra.mxu0 0
      %8606 = vmatprep.subr.bf16.mxu0 0
      %8607 = vmatpush1.bf16.msra.mxu0 0
      %8608 = vmatprep.subr.bf16.mxu0 0
      %8609 = vmatpush1.bf16.msra.mxu0 0
      %8610 = vmatprep.subr.bf16.mxu0 0
      %8611 = vmatpush1.bf16.msra.mxu0 0
      %8612 = vmatprep.subr.bf16.mxu0 0
      %8613 = vmatpush1.bf16.msra.mxu0 0
      %8614 = vmatprep.subr.bf16.mxu0 0
      %8615 = vmatpush1.bf16.msra.mxu0 0
      %8616 = vmatprep.mubr.bf16.mxu0 0
      %8617 = vmatmul.mubr.bf16.gmra.mrb[0].mxu0 %v8501
      %v8618 = vpop.f32.mrb[0].mxu0
      %v8619 = vadd.f32 %v454, %v8618
      %v8620 = vpop.f32.mrb[0].mxu0
      %v8621 = vpop.f32.mrb[0].mxu0
      %v8622 = vpop.f32.mrb[0].mxu0
      %8623 = vdwg.mxu0
      %v8624 = vtanh.pop %v8619
      %v8625 = vmul.f32 %v8624, 0.5
      %v8626 = vadd.f32 %v8625, 0.5
      %8627 = vst [vmem:[#allocation2 + $0x6] sm:$0x1] %v8626
      %v8628 = vpack.c.bf16 %v8626, %v8626
      %8629 = vmatprep.subr.bf16.mxu0 %v2515
      %8630 = vmatpush1.bf16.msra.mxu0 %v2514
      %8631 = vmatprep.subr.bf16.mxu0 %v2519
      %8632 = vmatpush1.bf16.msra.mxu0 %v2518
      %8633 = vmatprep.subr.bf16.mxu0 %v2523
      %8634 = vmatpush1.bf16.msra.mxu0 %v2522
      %8635 = vmatprep.subr.bf16.mxu0 %v2527
      %8636 = vmatpush1.bf16.msra.mxu0 %v2526
      %8637 = vmatprep.subr.bf16.mxu0 %v2531
      %8638 = vmatpush1.bf16.msra.mxu0 %v2530
      %8639 = vmatprep.subr.bf16.mxu0 %v2535
      %8640 = vmatpush1.bf16.msra.mxu0 %v2534
      %8641 = vmatprep.subr.bf16.mxu0 %v2539
      %8642 = vmatpush1.bf16.msra.mxu0 %v2538
      %8643 = vmatprep.subr.bf16.mxu0 %v2543
      %8644 = vmatpush1.bf16.msra.mxu0 %v2542
      %8645 = vmatprep.subr.bf16.mxu0 0
      %8646 = vmatpush1.bf16.msra.mxu0 0
      %8647 = vmatprep.subr.bf16.mxu0 0
      %8648 = vmatpush1.bf16.msra.mxu0 0
      %8649 = vmatprep.subr.bf16.mxu0 0
      %8650 = vmatpush1.bf16.msra.mxu0 0
      %8651 = vmatprep.subr.bf16.mxu0 0
      %8652 = vmatpush1.bf16.msra.mxu0 0
      %8653 = vmatprep.subr.bf16.mxu0 0
      %8654 = vmatpush1.bf16.msra.mxu0 0
      %8655 = vmatprep.subr.bf16.mxu0 0
      %8656 = vmatpush1.bf16.msra.mxu0 0
      %8657 = vmatprep.subr.bf16.mxu0 0
      %8658 = vmatpush1.bf16.msra.mxu0 0
      %8659 = vmatprep.subr.bf16.mxu0 0
      %8660 = vmatpush1.bf16.msra.mxu0 0
      %8661 = vmatprep.mubr.bf16.mxu0 0
      %8662 = vmatmul.mubr.bf16.gmra.mrb[0].mxu0 %v8628
      %v8663 = vpop.f32.mrb[0].mxu0
      %v8664 = vadd.f32 %v8353, %v8663
      %v8665 = vpop.f32.mrb[0].mxu0
      %v8666 = vadd.f32 %v8355, %v8665
      %v8667 = vpop.f32.mrb[0].mxu0
      %v8668 = vpop.f32.mrb[0].mxu0
      %8669 = vdwg.mxu0
      %8670 = vmatprep.subr.bf16.mxu0 %v2517
      %8671 = vmatpush1.bf16.msra.mxu0 %v2516
      %8672 = vmatprep.subr.bf16.mxu0 %v2521
      %8673 = vmatpush1.bf16.msra.mxu0 %v2520
      %8674 = vmatprep.subr.bf16.mxu0 %v2525
      %8675 = vmatpush1.bf16.msra.mxu0 %v2524
      %8676 = vmatprep.subr.bf16.mxu0 %v2529
      %8677 = vmatpush1.bf16.msra.mxu0 %v2528
      %8678 = vmatprep.subr.bf16.mxu0 %v2533
      %8679 = vmatpush1.bf16.msra.mxu0 %v2532
      %8680 = vmatprep.subr.bf16.mxu0 %v2537
      %8681 = vmatpush1.bf16.msra.mxu0 %v2536
      %8682 = vmatprep.subr.bf16.mxu0 %v2541
      %8683 = vmatpush1.bf16.msra.mxu0 %v2540
      %8684 = vmatprep.subr.bf16.mxu0 %v2545
      %8685 = vmatpush1.bf16.msra.mxu0 %v2544
      %8686 = vmatprep.subr.bf16.mxu0 0
      %8687 = vmatpush1.bf16.msra.mxu0 0
      %8688 = vmatprep.subr.bf16.mxu0 0
      %8689 = vmatpush1.bf16.msra.mxu0 0
      %8690 = vmatprep.subr.bf16.mxu0 0
      %8691 = vmatpush1.bf16.msra.mxu0 0
      %8692 = vmatprep.subr.bf16.mxu0 0
      %8693 = vmatpush1.bf16.msra.mxu0 0
      %8694 = vmatprep.subr.bf16.mxu0 0
      %8695 = vmatpush1.bf16.msra.mxu0 0
      %8696 = vmatprep.subr.bf16.mxu0 0
      %8697 = vmatpush1.bf16.msra.mxu0 0
      %8698 = vmatprep.subr.bf16.mxu0 0
      %8699 = vmatpush1.bf16.msra.mxu0 0
      %8700 = vmatprep.subr.bf16.mxu0 0
      %8701 = vmatpush1.bf16.msra.mxu0 0
      %8702 = vmatprep.mubr.bf16.mxu0 0
      %8703 = vmatmul.mubr.bf16.gmra.mrb[0].mxu0 %v8628
      %v8704 = vpop.f32.mrb[0].mxu0
      %v8705 = vadd.f32 %v8394, %v8704
      %v8706 = vpop.f32.mrb[0].mxu0
      %v8707 = vadd.f32 %v8396, %v8706
      %v8708 = vpop.f32.mrb[0].mxu0
      %v8709 = vpop.f32.mrb[0].mxu0
      %8710 = vdwg.mxu0
      %v8711 = vadd.f32 %v8664, %v2664
      %v8712 = vadd.f32 %v8666, %v2668
      %v8713 = vadd.f32 %v8705, %v2672
      %v8714 = vadd.f32 %v8707, %v2676
      %v8715 = vtanh.pop %v8711
      %v8716 = vmul.f32 %v8715, 0.5
      %v8717 = vadd.f32 %v8716, 0.5
      %v8718 = vtanh.pop %v8712
      %v8719 = vmul.f32 %v8718, 0.5
      %v8720 = vadd.f32 %v8719, 0.5
      %v8721 = vtanh.pop %v8713
      %v8722 = vtanh.pop %v8714
      %v8723 = vmul.f32 %v8722, 0.5
      %v8724 = vadd.f32 %v8723, 0.5
      %v8725 = vmul.f32 %v8720, %v8314
      %v8726 = vmul.f32 %v8717, %v8721
      %v8727 = vadd.f32 %v8725, %v8726
      %v8728 = vtanh.pop %v8727
      %v8729 = vmul.f32 %v8724, %v8728
      %v8730 = vpack.c.bf16 %v8729, %v8729
      %8731 = vmatprep.subr.bf16.mxu0 %v2029
      %8732 = vmatpush1.bf16.msra.mxu0 %v2028
      %8733 = vmatprep.subr.bf16.mxu0 %v2033
      %8734 = vmatpush1.bf16.msra.mxu0 %v2032
      %8735 = vmatprep.subr.bf16.mxu0 %v2037
      %8736 = vmatpush1.bf16.msra.mxu0 %v2036
      %8737 = vmatprep.subr.bf16.mxu0 %v2041
      %8738 = vmatpush1.bf16.msra.mxu0 %v2040
      %8739 = vmatprep.subr.bf16.mxu0 %v2045
      %8740 = vmatpush1.bf16.msra.mxu0 %v2044
      %8741 = vmatprep.subr.bf16.mxu0 %v2049
      %8742 = vmatpush1.bf16.msra.mxu0 %v2048
      %8743 = vmatprep.subr.bf16.mxu0 %v2053
      %8744 = vmatpush1.bf16.msra.mxu0 %v2052
      %8745 = vmatprep.subr.bf16.mxu0 %v2057
      %8746 = vmatpush1.bf16.msra.mxu0 %v2056
      %8747 = vmatprep.subr.bf16.mxu0 0
      %8748 = vmatpush1.bf16.msra.mxu0 0
      %8749 = vmatprep.subr.bf16.mxu0 0
      %8750 = vmatpush1.bf16.msra.mxu0 0
      %8751 = vmatprep.subr.bf16.mxu0 0
      %8752 = vmatpush1.bf16.msra.mxu0 0
      %8753 = vmatprep.subr.bf16.mxu0 0
      %8754 = vmatpush1.bf16.msra.mxu0 0
      %8755 = vmatprep.subr.bf16.mxu0 0
      %8756 = vmatpush1.bf16.msra.mxu0 0
      %8757 = vmatprep.subr.bf16.mxu0 0
      %8758 = vmatpush1.bf16.msra.mxu0 0
      %8759 = vmatprep.subr.bf16.mxu0 0
      %8760 = vmatpush1.bf16.msra.mxu0 0
      %8761 = vmatprep.subr.bf16.mxu0 0
      %8762 = vmatpush1.bf16.msra.mxu0 0
      %8763 = vmatprep.mubr.bf16.mxu0 0
      %8764 = vmatmul.mubr.bf16.gmra.mrb[0].mxu0 %v8730
      %v8765 = vpop.f32.mrb[0].mxu0
      %v8766 = vadd.f32 0.0, %v8765
      %v8767 = vpop.f32.mrb[0].mxu0
      %v8768 = vadd.f32 0.0, %v8767
      %v8769 = vpop.f32.mrb[0].mxu0
      %v8770 = vpop.f32.mrb[0].mxu0
      %8771 = vdwg.mxu0
      %8772 = vmatprep.subr.bf16.mxu0 %v2031
      %8773 = vmatpush1.bf16.msra.mxu0 %v2030
      %8774 = vmatprep.subr.bf16.mxu0 %v2035
      %8775 = vmatpush1.bf16.msra.mxu0 %v2034
      %8776 = vmatprep.subr.bf16.mxu0 %v2039
      %8777 = vmatpush1.bf16.msra.mxu0 %v2038
      %8778 = vmatprep.subr.bf16.mxu0 %v2043
      %8779 = vmatpush1.bf16.msra.mxu0 %v2042
      %8780 = vmatprep.subr.bf16.mxu0 %v2047
      %8781 = vmatpush1.bf16.msra.mxu0 %v2046
      %8782 = vmatprep.subr.bf16.mxu0 %v2051
      %8783 = vmatpush1.bf16.msra.mxu0 %v2050
      %8784 = vmatprep.subr.bf16.mxu0 %v2055
      %8785 = vmatpush1.bf16.msra.mxu0 %v2054
      %8786 = vmatprep.subr.bf16.mxu0 %v2059
      %8787 = vmatpush1.bf16.msra.mxu0 %v2058
      %8788 = vmatprep.subr.bf16.mxu0 0
      %8789 = vmatpush1.bf16.msra.mxu0 0
      %8790 = vmatprep.subr.bf16.mxu0 0
      %8791 = vmatpush1.bf16.msra.mxu0 0
      %8792 = vmatprep.subr.bf16.mxu0 0
      %8793 = vmatpush1.bf16.msra.mxu0 0
      %8794 = vmatprep.subr.bf16.mxu0 0
      %8795 = vmatpush1.bf16.msra.mxu0 0
      %8796 = vmatprep.subr.bf16.mxu0 0
      %8797 = vmatpush1.bf16.msra.mxu0 0
      %8798 = vmatprep.subr.bf16.mxu0 0
      %8799 = vmatpush1.bf16.msra.mxu0 0
      %8800 = vmatprep.subr.bf16.mxu0 0
      %8801 = vmatpush1.bf16.msra.mxu0 0
      %8802 = vmatprep.subr.bf16.mxu0 0
      %8803 = vmatpush1.bf16.msra.mxu0 0
      %8804 = vmatprep.mubr.bf16.mxu0 0
      %8805 = vmatmul.mubr.bf16.gmra.mrb[0].mxu0 %v8730
      %v8806 = vpop.f32.mrb[0].mxu0
      %v8807 = vadd.f32 0.0, %v8806
      %v8808 = vpop.f32.mrb[0].mxu0
      %v8809 = vadd.f32 0.0, %v8808
      %v8810 = vpop.f32.mrb[0].mxu0
      %v8811 = vpop.f32.mrb[0].mxu0
      %8812 = vdwg.mxu0
      %8813 = vmatprep.subr.bf16.mxu0 %v2880
      %8814 = vmatpush1.bf16.msra.mxu0 %v2879
      %8815 = vmatprep.subr.bf16.mxu0 %v2884
      %8816 = vmatpush1.bf16.msra.mxu0 %v2883
      %8817 = vmatprep.subr.bf16.mxu0 %v2888
      %8818 = vmatpush1.bf16.msra.mxu0 %v2887
      %8819 = vmatprep.subr.bf16.mxu0 %v2892
      %8820 = vmatpush1.bf16.msra.mxu0 %v2891
      %8821 = vmatprep.subr.bf16.mxu0 %v2896
      %8822 = vmatpush1.bf16.msra.mxu0 %v2895
      %8823 = vmatprep.subr.bf16.mxu0 %v2900
      %8824 = vmatpush1.bf16.msra.mxu0 %v2899
      %8825 = vmatprep.subr.bf16.mxu0 %v2904
      %8826 = vmatpush1.bf16.msra.mxu0 %v2903
      %8827 = vmatprep.subr.bf16.mxu0 %v2908
      %8828 = vmatpush1.bf16.msra.mxu0 %v2907
      %8829 = vmatprep.subr.bf16.mxu0 0
      %8830 = vmatpush1.bf16.msra.mxu0 0
      %8831 = vmatprep.subr.bf16.mxu0 0
      %8832 = vmatpush1.bf16.msra.mxu0 0
      %8833 = vmatprep.subr.bf16.mxu0 0
      %8834 = vmatpush1.bf16.msra.mxu0 0
      %8835 = vmatprep.subr.bf16.mxu0 0
      %8836 = vmatpush1.bf16.msra.mxu0 0
      %8837 = vmatprep.subr.bf16.mxu0 0
      %8838 = vmatpush1.bf16.msra.mxu0 0
      %8839 = vmatprep.subr.bf16.mxu0 0
      %8840 = vmatpush1.bf16.msra.mxu0 0
      %8841 = vmatprep.subr.bf16.mxu0 0
      %8842 = vmatpush1.bf16.msra.mxu0 0
      %8843 = vmatprep.subr.bf16.mxu0 0
      %8844 = vmatpush1.bf16.msra.mxu0 0
      %8845 = vmatprep.mubr.bf16.mxu0 0
      %8846 = vmatmul.mubr.bf16.gmra.mrb[0].mxu0 %v8730
      %v8847 = vpop.f32.mrb[0].mxu0
      %v8848 = vadd.f32 %v8537, %v8847
      %v8849 = vpop.f32.mrb[0].mxu0
      %v8850 = vadd.f32 %v8539, %v8849
      %v8851 = vpop.f32.mrb[0].mxu0
      %v8852 = vpop.f32.mrb[0].mxu0
      %8853 = vdwg.mxu0
      %8854 = vmatprep.subr.bf16.mxu0 %v2882
      %8855 = vmatpush1.bf16.msra.mxu0 %v2881
      %8856 = vmatprep.subr.bf16.mxu0 %v2886
      %8857 = vmatpush1.bf16.msra.mxu0 %v2885
      %8858 = vmatprep.subr.bf16.mxu0 %v2890
      %8859 = vmatpush1.bf16.msra.mxu0 %v2889
      %8860 = vmatprep.subr.bf16.mxu0 %v2894
      %8861 = vmatpush1.bf16.msra.mxu0 %v2893
      %8862 = vmatprep.subr.bf16.mxu0 %v2898
      %8863 = vmatpush1.bf16.msra.mxu0 %v2897
      %8864 = vmatprep.subr.bf16.mxu0 %v2902
      %8865 = vmatpush1.bf16.msra.mxu0 %v2901
      %8866 = vmatprep.subr.bf16.mxu0 %v2906
      %8867 = vmatpush1.bf16.msra.mxu0 %v2905
      %8868 = vmatprep.subr.bf16.mxu0 %v2910
      %8869 = vmatpush1.bf16.msra.mxu0 %v2909
      %8870 = vmatprep.subr.bf16.mxu0 0
      %8871 = vmatpush1.bf16.msra.mxu0 0
      %8872 = vmatprep.subr.bf16.mxu0 0
      %8873 = vmatpush1.bf16.msra.mxu0 0
      %8874 = vmatprep.subr.bf16.mxu0 0
      %8875 = vmatpush1.bf16.msra.mxu0 0
      %8876 = vmatprep.subr.bf16.mxu0 0
      %8877 = vmatpush1.bf16.msra.mxu0 0
      %8878 = vmatprep.subr.bf16.mxu0 0
      %8879 = vmatpush1.bf16.msra.mxu0 0
      %8880 = vmatprep.subr.bf16.mxu0 0
      %8881 = vmatpush1.bf16.msra.mxu0 0
      %8882 = vmatprep.subr.bf16.mxu0 0
      %8883 = vmatpush1.bf16.msra.mxu0 0
      %8884 = vmatprep.subr.bf16.mxu0 0
      %8885 = vmatpush1.bf16.msra.mxu0 0
      %8886 = vmatprep.mubr.bf16.mxu0 0
      %8887 = vmatmul.mubr.bf16.gmra.mrb[0].mxu0 %v8730
      %v8888 = vpop.f32.mrb[0].mxu0
      %v8889 = vadd.f32 %v8578, %v8888
      %v8890 = vpop.f32.mrb[0].mxu0
      %v8891 = vadd.f32 %v8580, %v8890
      %v8892 = vpop.f32.mrb[0].mxu0
      %v8893 = vpop.f32.mrb[0].mxu0
      %8894 = vdwg.mxu0
      %v8895 = vadd.f32 %v8848, %v3029
      %v8896 = vadd.f32 %v8850, %v3033
      %v8897 = vadd.f32 %v8889, %v3037
      %v8898 = vadd.f32 %v8891, %v3041
      %v8899 = vtanh.pop %v8895
      %v8900 = vmul.f32 %v8899, 0.5
      %v8901 = vadd.f32 %v8900, 0.5
      %v8902 = vtanh.pop %v8896
      %v8903 = vmul.f32 %v8902, 0.5
      %v8904 = vadd.f32 %v8903, 0.5
      %v8905 = vtanh.pop %v8897
      %v8906 = vtanh.pop %v8898
      %v8907 = vmul.f32 %v8906, 0.5
      %v8908 = vadd.f32 %v8907, 0.5
      %v8909 = vmul.f32 %v8904, %v8498
      %v8910 = vmul.f32 %v8901, %v8905
      %v8911 = vadd.f32 %v8909, %v8910
      %v8912 = vtanh.pop %v8911
      %v8913 = vmul.f32 %v8908, %v8912
      %v8914 = vpack.c.bf16 %v8913, %v8913
      %8915 = vmatprep.subr.bf16.mxu0 %v2272
      %8916 = vmatpush1.bf16.msra.mxu0 %v2271
      %8917 = vmatprep.subr.bf16.mxu0 %v2276
      %8918 = vmatpush1.bf16.msra.mxu0 %v2275
      %8919 = vmatprep.subr.bf16.mxu0 %v2280
      %8920 = vmatpush1.bf16.msra.mxu0 %v2279
      %8921 = vmatprep.subr.bf16.mxu0 %v2284
      %8922 = vmatpush1.bf16.msra.mxu0 %v2283
      %8923 = vmatprep.subr.bf16.mxu0 %v2288
      %8924 = vmatpush1.bf16.msra.mxu0 %v2287
      %8925 = vmatprep.subr.bf16.mxu0 %v2292
      %8926 = vmatpush1.bf16.msra.mxu0 %v2291
      %8927 = vmatprep.subr.bf16.mxu0 %v2296
      %8928 = vmatpush1.bf16.msra.mxu0 %v2295
      %8929 = vmatprep.subr.bf16.mxu0 %v2300
      %8930 = vmatpush1.bf16.msra.mxu0 %v2299
      %8931 = vmatprep.subr.bf16.mxu0 0
      %8932 = vmatpush1.bf16.msra.mxu0 0
      %8933 = vmatprep.subr.bf16.mxu0 0
      %8934 = vmatpush1.bf16.msra.mxu0 0
      %8935 = vmatprep.subr.bf16.mxu0 0
      %8936 = vmatpush1.bf16.msra.mxu0 0
      %8937 = vmatprep.subr.bf16.mxu0 0
      %8938 = vmatpush1.bf16.msra.mxu0 0
      %8939 = vmatprep.subr.bf16.mxu0 0
      %8940 = vmatpush1.bf16.msra.mxu0 0
      %8941 = vmatprep.subr.bf16.mxu0 0
      %8942 = vmatpush1.bf16.msra.mxu0 0
      %8943 = vmatprep.subr.bf16.mxu0 0
      %8944 = vmatpush1.bf16.msra.mxu0 0
      %8945 = vmatprep.subr.bf16.mxu0 0
      %8946 = vmatpush1.bf16.msra.mxu0 0
      %8947 = vmatprep.mubr.bf16.mxu0 0
      %8948 = vmatmul.mubr.bf16.gmra.mrb[0].mxu0 %v8914
      %v8949 = vpop.f32.mrb[0].mxu0
      %v8950 = vadd.f32 0.0, %v8949
      %v8951 = vpop.f32.mrb[0].mxu0
      %v8952 = vadd.f32 0.0, %v8951
      %v8953 = vpop.f32.mrb[0].mxu0
      %v8954 = vpop.f32.mrb[0].mxu0
      %8955 = vdwg.mxu0
      %8956 = vmatprep.subr.bf16.mxu0 %v2274
      %8957 = vmatpush1.bf16.msra.mxu0 %v2273
      %8958 = vmatprep.subr.bf16.mxu0 %v2278
      %8959 = vmatpush1.bf16.msra.mxu0 %v2277
      %8960 = vmatprep.subr.bf16.mxu0 %v2282
      %8961 = vmatpush1.bf16.msra.mxu0 %v2281
      %8962 = vmatprep.subr.bf16.mxu0 %v2286
      %8963 = vmatpush1.bf16.msra.mxu0 %v2285
      %8964 = vmatprep.subr.bf16.mxu0 %v2290
      %8965 = vmatpush1.bf16.msra.mxu0 %v2289
      %8966 = vmatprep.subr.bf16.mxu0 %v2294
      %8967 = vmatpush1.bf16.msra.mxu0 %v2293
      %8968 = vmatprep.subr.bf16.mxu0 %v2298
      %8969 = vmatpush1.bf16.msra.mxu0 %v2297
      %8970 = vmatprep.subr.bf16.mxu0 %v2302
      %8971 = vmatpush1.bf16.msra.mxu0 %v2301
      %8972 = vmatprep.subr.bf16.mxu0 0
      %8973 = vmatpush1.bf16.msra.mxu0 0
      %8974 = vmatprep.subr.bf16.mxu0 0
      %8975 = vmatpush1.bf16.msra.mxu0 0
      %8976 = vmatprep.subr.bf16.mxu0 0
      %8977 = vmatpush1.bf16.msra.mxu0 0
      %8978 = vmatprep.subr.bf16.mxu0 0
      %8979 = vmatpush1.bf16.msra.mxu0 0
      %8980 = vmatprep.subr.bf16.mxu0 0
      %8981 = vmatpush1.bf16.msra.mxu0 0
      %8982 = vmatprep.subr.bf16.mxu0 0
      %8983 = vmatpush1.bf16.msra.mxu0 0
      %8984 = vmatprep.subr.bf16.mxu0 0
      %8985 = vmatpush1.bf16.msra.mxu0 0
      %8986 = vmatprep.subr.bf16.mxu0 0
      %8987 = vmatpush1.bf16.msra.mxu0 0
      %8988 = vmatprep.mubr.bf16.mxu0 0
      %8989 = vmatmul.mubr.bf16.gmra.mrb[0].mxu0 %v8914
      %v8990 = vpop.f32.mrb[0].mxu0
      %v8991 = vadd.f32 0.0, %v8990
      %v8992 = vpop.f32.mrb[0].mxu0
      %v8993 = vadd.f32 0.0, %v8992
      %v8994 = vpop.f32.mrb[0].mxu0
      %v8995 = vpop.f32.mrb[0].mxu0
      %8996 = vdwg.mxu0
      %8997 = vmatprep.subr.bf16.mxu0 0
      %8998 = vmatpush1.bf16.msra.mxu0 %v3180
      %8999 = vmatprep.subr.bf16.mxu0 0
      %9000 = vmatpush1.bf16.msra.mxu0 %v3181
      %9001 = vmatprep.subr.bf16.mxu0 0
      %9002 = vmatpush1.bf16.msra.mxu0 %v3182
      %9003 = vmatprep.subr.bf16.mxu0 0
      %9004 = vmatpush1.bf16.msra.mxu0 %v3183
      %9005 = vmatprep.subr.bf16.mxu0 0
      %9006 = vmatpush1.bf16.msra.mxu0 %v3184
      %9007 = vmatprep.subr.bf16.mxu0 0
      %9008 = vmatpush1.bf16.msra.mxu0 %v3185
      %9009 = vmatprep.subr.bf16.mxu0 0
      %9010 = vmatpush1.bf16.msra.mxu0 %v3186
      %9011 = vmatprep.subr.bf16.mxu0 0
      %9012 = vmatpush1.bf16.msra.mxu0 %v3187
      %9013 = vmatprep.subr.bf16.mxu0 0
      %9014 = vmatpush1.bf16.msra.mxu0 0
      %9015 = vmatprep.subr.bf16.mxu0 0
      %9016 = vmatpush1.bf16.msra.mxu0 0
      %9017 = vmatprep.subr.bf16.mxu0 0
      %9018 = vmatpush1.bf16.msra.mxu0 0
      %9019 = vmatprep.subr.bf16.mxu0 0
      %9020 = vmatpush1.bf16.msra.mxu0 0
      %9021 = vmatprep.subr.bf16.mxu0 0
      %9022 = vmatpush1.bf16.msra.mxu0 0
      %9023 = vmatprep.subr.bf16.mxu0 0
      %9024 = vmatpush1.bf16.msra.mxu0 0
      %9025 = vmatprep.subr.bf16.mxu0 0
      %9026 = vmatpush1.bf16.msra.mxu0 0
      %9027 = vmatprep.subr.bf16.mxu0 0
      %9028 = vmatpush1.bf16.msra.mxu0 0
      %9029 = vmatprep.mubr.bf16.mxu0 0
      %9030 = vmatmul.mubr.bf16.gmra.mrb[0].mxu0 %v8914
      %v9031 = vpop.f32.mrb[0].mxu0
      %v9032 = vadd.f32 %v454, %v9031
      %v9033 = vpop.f32.mrb[0].mxu0
      %v9034 = vpop.f32.mrb[0].mxu0
      %v9035 = vpop.f32.mrb[0].mxu0
      %9036 = vdwg.mxu0
      %v9037 = vtanh.pop %v9032
      %v9038 = vmul.f32 %v9037, 0.5
      %v9039 = vadd.f32 %v9038, 0.5
      %9040 = vst [vmem:[#allocation2 + $0x7] sm:$0x1] %v9039
      %s9041 = sadd.s32 %s5721, 1
      %s9042 = smul.u32 %s9041, 8
      %v9043 = vld [vmem:[#allocation2] sm:$0xff]
      %s9044 = scalar_lea.vmem [#allocation20], %s9042
      %9045 = vst [vmem:[%s9044] sm:$0xff] %v9043
    $region98: #{seq2seq_forward.1} parent=1 // loop_footer
      %s5725 = sadd.s32 1, %s5721
    $region99: #{seq2seq_forward.1} parent=1 // loop_footer_branch
      %5720 = sbr.rel target = $region95
    $region100: #{seq2seq_forward.1} parent=1 // loop_exit
      _
    // Predicated region
    $region101: #{seq2seq_forward.1} parent=1 // pred_check
      _
    $region102: #{seq2seq_forward.1} parent=1 // pred_check_branch
      %9047 = sbr.rel (0) target = $region104
    $region103: #{seq2seq_forward.1} parent=1 // pred_region
      %s9049 = ssub.s32 1408, 1408
      %9050 = vsyncadd [#allocation5], %s9049
      %s9051 = sshll.u32 [#allocation20], 4
      %s9052 = int_to_ptr.vmem [resolvable:$true] %s9051
      %9057 = dma.vmem_to_hbm [thread:$0]  %s9052, 1408, %s13, [#allocation5], 128, 128, 8
    $region104: #{seq2seq_forward.1} parent=1 // pred_fallthru
      _
    // Predicated region
    $region105: #{seq2seq_forward.1} parent=1 // pred_check
      _
    $region106: #{seq2seq_forward.1} parent=1 // pred_check_branch
      %9059 = sbr.rel (0) target = $region108
    $region107: #{seq2seq_forward.1} parent=1 // pred_region
      %9060 = dma.done [#allocation5], 1408
    $region108: #{seq2seq_forward.1} parent=1 // pred_fallthru
      _
    %9061 = vsyncpa [#allocation4], 1
    %9062 = vsyncpa [#allocation7], 1
    %9063 = vsyncpa [#allocation10], 1
    %9064 = vsyncpa [#allocation13], 1
    %9065 = vsyncpa [#allocation16], 1
    %9066 = vsyncpa [#allocation19], 1
    %9067 = vsyncpa [#allocation5], 1

</llo_original>
